<compile_context>
chip_gen: v7x
topology: tpu7x:2x2x1
jax: 0.10.0
libtpu: 0.0.40
codegen_flags: <defaults>
</compile_context>

<pallas_src>
import functools

import jax
import jax.numpy as jnp
from jax.experimental import pallas as pl
from jax.experimental.pallas import tpu as pltpu


# --------------------------------------------------------------------------------------
# kernel bodies
# --------------------------------------------------------------------------------------
def _leaky_relu(x, slope=0.2):
    return jnp.where(x >= 0, x, slope * x)


def _write_stats(st_ref, z, *, m_true, block_m, needs_mask):
    """Per-tile per-channel (sum, sum_sq) of z (f32) into a (1, 2, C) block.

    Only the final row tile can contain M-padding rows, so every other tile takes the
    unmasked fast path (no (block_m, C) f32 mask multiply / extra temporaries).
    """
    def _unmasked():
        st_ref[0, 0:1, :] = jnp.sum(z, axis=0, keepdims=True)
        st_ref[0, 1:2, :] = jnp.sum(z * z, axis=0, keepdims=True)

    if not needs_mask:              # static: M was already a multiple of the tile size
        _unmasked()
        return

    is_last = pl.program_id(0) == pl.num_programs(0) - 1

    @pl.when(jnp.logical_not(is_last))
    def _():
        _unmasked()

    @pl.when(is_last)
    def _():
        row = (jax.lax.broadcasted_iota(jnp.int32, (block_m, 1), 0)
               + pl.program_id(0) * block_m)
        mask = (row < m_true).astype(jnp.float32)
        zm = z * mask
        st_ref[0, 0:1, :] = jnp.sum(zm, axis=0, keepdims=True)
        st_ref[0, 1:2, :] = jnp.sum(zm * z, axis=0, keepdims=True)   # mask is 0/1


def _pass1_kernel(x_ref, w1_ref, b1_ref, w2_ref, h2_ref, st_ref, *,
                  m_true, block_m, needs_mask):
    # conv1(+bias) -> LeakyReLU -> conv2 ; stage conv2 output (bf16) + BN2 partials.
    h1 = jnp.dot(x_ref[...], w1_ref[...], preferred_element_type=jnp.float32)
    h1 = _leaky_relu(h1 + b1_ref[...])
    z2 = jnp.dot(h1.astype(jnp.bfloat16), w2_ref[...],
                 preferred_element_type=jnp.float32)
    h2_ref[...] = z2.astype(jnp.bfloat16)
    _write_stats(st_ref, z2, m_true=m_true, block_m=block_m, needs_mask=needs_mask)


def _pass2_kernel(h2_ref, sc2_ref, sh2_ref, w3_ref, h3_ref, st_ref, *,
                  m_true, block_m, needs_mask):
    # BN2-apply -> LeakyReLU -> conv3 ; stage conv3 output (bf16) + BN3 partials.
    a2 = _leaky_relu(h2_ref[...].astype(jnp.float32) * sc2_ref[...] + sh2_ref[...])
    z3 = jnp.dot(a2.astype(jnp.bfloat16), w3_ref[...],
                 preferred_element_type=jnp.float32)
    h3_ref[...] = z3.astype(jnp.bfloat16)
    _write_stats(st_ref, z3, m_true=m_true, block_m=block_m, needs_mask=needs_mask)


def _pass3_kernel(h3_ref, sc3_ref, sh3_ref, w4_ref, st_ref, *,
                  m_true, block_m, needs_mask):
    # BN3-apply -> LeakyReLU -> conv4 ; emit ONLY the BN4 partial stats (h4 never
    # touches HBM; pass 4 recomputes it from the same bf16 h3).
    a3 = _leaky_relu(h3_ref[...].astype(jnp.float32) * sc3_ref[...] + sh3_ref[...])
    z4 = jnp.dot(a3.astype(jnp.bfloat16), w4_ref[...],
                 preferred_element_type=jnp.float32)
    _write_stats(st_ref, z4, m_true=m_true, block_m=block_m, needs_mask=needs_mask)


def _pass4_kernel(h3_ref, sc3_ref, sh3_ref, w4_ref, sc4_ref, sh4_ref,
                  wrow_ref, b5_ref, o_ref):
    # Recompute BN3 -> lrelu -> conv4 from h3 (w4 VMEM-resident via constant index_map),
    # then BN4 -> lrelu -> conv5(+bias, Cout=1 as VPU multiply + lane reduce) -> logits.
    a3 = _leaky_relu(h3_ref[...].astype(jnp.float32) * sc3_ref[...] + sh3_ref[...])
    z4 = jnp.dot(a3.astype(jnp.bfloat16), w4_ref[...],
                 preferred_element_type=jnp.float32)
    a4 = _leaky_relu(z4 * sc4_ref[...] + sh4_ref[...])
    logit = jnp.sum(a4 * wrow_ref[...], axis=1, keepdims=True) + b5_ref[...]
    o_ref[...] = logit


# --------------------------------------------------------------------------------------
# host-side helpers
# --------------------------------------------------------------------------------------
def _round_up(x, m):
    return (x + m - 1) // m * m


def _finalize_bn(partial_stats, gamma, beta, m_true, eps):
    """Reduce per-tile (sum, sum_sq) partials -> per-channel affine scale/shift (f32)."""
    s = jnp.sum(partial_stats[:, 0, :], axis=0)
    sq = jnp.sum(partial_stats[:, 1, :], axis=0)
    mean = s / m_true
    var = jnp.maximum(sq / m_true - mean * mean, 0.0)   # biased variance (PyTorch BN train)
    rstd = jax.lax.rsqrt(var + eps)
    scale = gamma.astype(jnp.float32) * rstd
    shift = beta.astype(jnp.float32) - mean * scale
    return scale.reshape(1, -1), shift.reshape(1, -1)


def nlayer_discriminator_forward(x, lbl, params, *, block_m=2048, eps=1e-5,
                                 vmem_limit_bytes=48 * 1024 * 1024):
    """Forward pass of NLayerDiscriminator(input_nc, ndf=64, n_layers=3, BatchNorm3d).

    Returns (logits of shape (N,1,D,H,W), loss of shape (1,)) like the PyTorch module.
    params: dict with w1(C,ndf), b1(ndf,), w2(ndf,2ndf), g2/be2(2ndf,), w3(2ndf,4ndf),
            g3/be3(4ndf,), w4(4ndf,8ndf), g4/be4(8ndf,), w5(8ndf,1), b5(1,).
    """
    N, C, D, H, W = x.shape
    M = N * D * H * W
    ndf = params["w1"].shape[1]
    c2, c3, c4 = 2 * ndf, 4 * ndf, 8 * ndf

    # Row tiling.  block_m=2048 keeps HBM DMAs big (~0.35 us fixed cost per grid step)
    # while fitting the raised VMEM budget on all generations; for large M the grid has
    # >= 2 tiles so the "parallel" axis still splits across both v7x TensorCores.
    tm = min(block_m, _round_up(M, 8))
    m_pad = _round_up(M, tm)
    g = m_pad // tm
    needs_mask = (m_pad != M)

    # NCDHW -> channels-last (M, C), bf16, channels padded to the sublane granule only
    # (3 -> 8; never to 128 — that would 16x the x read).  Single fused XLA op under jit.
    c_pad = _round_up(C, 8)
    xm = jnp.transpose(x, (0, 2, 3, 4, 1)).reshape(M, C).astype(jnp.bfloat16)
    xm = jnp.pad(xm, ((0, m_pad - M), (0, c_pad - C)))

    # Parameter prep (weights bf16 for the MXU, biases / BN params f32).
    w1 = jnp.pad(params["w1"].astype(jnp.float32),
                 ((0, c_pad - C), (0, 0))).astype(jnp.bfloat16)          # (c_pad, ndf)
    b1 = params["b1"].reshape(1, ndf).astype(jnp.float32)
    w2 = params["w2"].astype(jnp.bfloat16)                               # (ndf, 2ndf)
    w3 = params["w3"].astype(jnp.bfloat16)                               # (2ndf, 4ndf)
    w4 = params["w4"].astype(jnp.bfloat16)                               # (4ndf, 8ndf)
    w5_row = params["w5"].reshape(1, c4).astype(jnp.float32)             # (1, 8ndf)
    b5 = params["b5"].reshape(1, 1).astype(jnp.float32)

    cparams = pltpu.CompilerParams(
        dimension_semantics=("parallel",),
        vmem_limit_bytes=vmem_limit_bytes,
    )
    kw = dict(m_true=M, block_m=tm, needs_mask=needs_mask)

    # ---- pass 1: conv1(+bias) -> lrelu -> conv2, stage h2 (bf16) + BN2 partial stats.
    h2, st2 = pl.pallas_call(
        functools.partial(_pass1_kernel, **kw),
        grid=(g,),
        in_specs=[
            pl.BlockSpec((tm, c_pad), lambda i: (i, 0)),
            pl.BlockSpec((c_pad, ndf), lambda i: (0, 0)),   # VMEM-resident weights
            pl.BlockSpec((1, ndf), lambda i: (0, 0)),
            pl.BlockSpec((ndf, c2), lambda i: (0, 0)),
        ],
        out_specs=[
            pl.BlockSpec((tm, c2), lambda i: (i, 0)),
            pl.BlockSpec((1, 2, c2), lambda i: (i, 0, 0)),
        ],
        out_shape=[
            jax.ShapeDtypeStruct((m_pad, c2), jnp.bfloat16),
            jax.ShapeDtypeStruct((g, 2, c2), jnp.float32),
        ],
        compiler_params=cparams,
        cost_estimate=pl.CostEstimate(
            flops=2 * m_pad * (c_pad * ndf + ndf * c2),
            transcendentals=0,
            bytes_accessed=(m_pad * c_pad * 2 + c_pad * ndf * 2 + ndf * 4
                            + ndf * c2 * 2 + m_pad * c2 * 2 + g * 2 * c2 * 4),
        ),
    )(xm, w1, b1, w2)

    # ---- pass 2: BN2 -> lrelu -> conv3, stage h3 (bf16) + BN3 partial stats.
    scale2, shift2 = _finalize_bn(st2, params["g2"], params["be2"], M, eps)
    h3, st3 = pl.pallas_call(
        functools.partial(_pass2_kernel, **kw),
        grid=(g,),
        in_specs=[
            pl.BlockSpec((tm, c2), lambda i: (i, 0)),
            pl.BlockSpec((1, c2), lambda i: (0, 0)),
            pl.BlockSpec((1, c2), lambda i: (0, 0)),
            pl.BlockSpec((c2, c3), lambda i: (0, 0)),
        ],
        out_specs=[
            pl.BlockSpec((tm, c3), lambda i: (i, 0)),
            pl.BlockSpec((1, 2, c3), lambda i: (i, 0, 0)),
        ],
        out_shape=[
            jax.ShapeDtypeStruct((m_pad, c3), jnp.bfloat16),
            jax.ShapeDtypeStruct((g, 2, c3), jnp.float32),
        ],
        compiler_params=cparams,
        cost_estimate=pl.CostEstimate(
            flops=2 * m_pad * c2 * c3,
            transcendentals=0,
            bytes_accessed=(m_pad * c2 * 2 + 2 * c2 * 4 + c2 * c3 * 2
                            + m_pad * c3 * 2 + g * 2 * c3 * 4),
        ),
    )(h2, scale2, shift2, w3)

    # ---- pass 3: BN3 -> lrelu -> conv4, emit ONLY BN4 partial stats (no h4 staging).
    scale3, shift3 = _finalize_bn(st3, params["g3"], params["be3"], M, eps)
    st4 = pl.pallas_call(
        functools.partial(_pass3_kernel, **kw),
        grid=(g,),
        in_specs=[
            pl.BlockSpec((tm, c3), lambda i: (i, 0)),
            pl.BlockSpec((1, c3), lambda i: (0, 0)),
            pl.BlockSpec((1, c3), lambda i: (0, 0)),
            pl.BlockSpec((c3, c4), lambda i: (0, 0)),
        ],
        out_specs=pl.BlockSpec((1, 2, c4), lambda i: (i, 0, 0)),
        out_shape=jax.ShapeDtypeStruct((g, 2, c4), jnp.float32),
        compiler_params=cparams,
        cost_estimate=pl.CostEstimate(
            flops=2 * m_pad * c3 * c4,
            transcendentals=0,
            bytes_accessed=(m_pad * c3 * 2 + 2 * c3 * 4 + c3 * c4 * 2
                            + g * 2 * c4 * 4),
        ),
    )(h3, scale3, shift3, w4)

    # ---- pass 4: recompute BN3 -> lrelu -> conv4, then BN4 -> lrelu -> conv5 -> logits.
    scale4, shift4 = _finalize_bn(st4, params["g4"], params["be4"], M, eps)
    logits_pad = pl.pallas_call(
        _pass4_kernel,
        grid=(g,),
        in_specs=[
            pl.BlockSpec((tm, c3), lambda i: (i, 0)),
            pl.BlockSpec((1, c3), lambda i: (0, 0)),
            pl.BlockSpec((1, c3), lambda i: (0, 0)),
            pl.BlockSpec((c3, c4), lambda i: (0, 0)),
            pl.BlockSpec((1, c4), lambda i: (0, 0)),
            pl.BlockSpec((1, c4), lambda i: (0, 0)),
            pl.BlockSpec((1, c4), lambda i: (0, 0)),
            pl.BlockSpec((1, 1), lambda i: (0, 0)),
        ],
        out_specs=pl.BlockSpec((tm, 1), lambda i: (i, 0)),
        out_shape=jax.ShapeDtypeStruct((m_pad, 1), jnp.float32),
        compiler_params=cparams,
        cost_estimate=pl.CostEstimate(
            flops=2 * m_pad * (c3 * c4 + c4),
            transcendentals=0,
            bytes_accessed=(m_pad * c3 * 2 + 2 * c3 * 4 + c3 * c4 * 2
                            + 3 * c4 * 4 + 4 + m_pad * 4),
        ),
    )(h3, scale3, shift3, w4, scale4, shift4, w5_row, b5)

    # Back to (N, 1, D, H, W) and drop padded rows.
    lx = logits_pad[:M, 0]
    logits = lx.reshape(N, D, H, W)[:, None, :, :, :].astype(jnp.float32)

    # BCEWithLogitsLoss vs a constant target filled with `lbl`, mean reduction
    # (numerically stable: max(x,0) - x*z + log1p(exp(-|x|))).
    z = jnp.asarray(lbl, jnp.float32)
    loss_el = jnp.maximum(lx, 0.0) - lx * z + jnp.log1p(jnp.exp(-jnp.abs(lx)))
    loss = jnp.mean(loss_el)
    return logits, loss[None]


# --------------------------------------------------------------------------------------
# demo / smoke test
# --------------------------------------------------------------------------------------
if __name__ == "__main__":
    key = jax.random.PRNGKey(0)
    N, Cin, D, H, W = 2, 3, 4, 8, 8          # M = N*D*H*W = 512 rows
    ndf = 64
    ks = jax.random.split(key, 16)

    def _w(k, cin, cout):
        return jax.random.normal(k, (cin, cout), jnp.float32) / jnp.sqrt(float(cin))

    params = dict(
        w1=_w(ks[1], Cin, ndf),
        b1=0.05 * jax.random.normal(ks[2], (ndf,), jnp.float32),
        w2=_w(ks[3], ndf, 2 * ndf),
        g2=1.0 + 0.05 * jax.random.normal(ks[4], (2 * ndf,), jnp.float32),
        be2=0.05 * jax.random.normal(ks[5], (2 * ndf,), jnp.float32),
        w3=_w(ks[6], 2 * ndf, 4 * ndf),
        g3=1.0 + 0.05 * jax.random.normal(ks[7], (4 * ndf,), jnp.float32),
        be3=0.05 * jax.random.normal(ks[8], (4 * ndf,), jnp.float32),
        w4=_w(ks[9], 4 * ndf, 8 * ndf),
        g4=1.0 + 0.05 * jax.random.normal(ks[10], (8 * ndf,), jnp.float32),
        be4=0.05 * jax.random.normal(ks[11], (8 * ndf,), jnp.float32),
        w5=_w(ks[12], 8 * ndf, 1),
        b5=0.05 * jax.random.normal(ks[13], (1,), jnp.float32),
    )

    x = jax.random.normal(ks[0], (N, Cin, D, H, W), jnp.float32)
    lbl = 1.0

    fwd = jax.jit(nlayer_discriminator_forward)
    logits, loss = fwd(x, lbl, params)
    jax.block_until_ready((logits, loss))

    assert logits.shape == (N, 1, D, H, W), logits.shape
    assert loss.shape == (1,), loss.shape
    assert bool(jnp.all(jnp.isfinite(logits))) and bool(jnp.isfinite(loss[0]))
    print("KERNEL_OK")
</pallas_src>

<mosaic_0001>
module attributes {stable_mosaic.version = 11 : i64} {
  func.func @_pass1_kernel(%arg0: i32, %arg1: memref<512x8xbf16, #tpu.memory_space<vmem>>, %arg2: memref<8x64xbf16, #tpu.memory_space<vmem>>, %arg3: memref<1x64xf32, #tpu.memory_space<vmem>>, %arg4: memref<64x128xbf16, #tpu.memory_space<vmem>>, %arg5: memref<512x128xbf16, #tpu.memory_space<vmem>>, %arg6: memref<1x2x128xf32, #tpu.memory_space<vmem>>) attributes {dimension_semantics = [#tpu.dimension_semantics<parallel>], iteration_bounds = array<i64: 1>, scalar_prefetch = 0 : i64, scratch_operands = 0 : i64, tpu.core_type = #tpu.core_type<tc>, window_params = [{transform_indices = @transform_0, window_bounds = array<i64: 512, 8>}, {pipeline_mode = #tpu.pipeline_mode<synchronous>, transform_indices = @transform_1, window_bounds = array<i64: 8, 64>}, {pipeline_mode = #tpu.pipeline_mode<synchronous>, transform_indices = @transform_2, window_bounds = array<i64: 1, 64>}, {pipeline_mode = #tpu.pipeline_mode<synchronous>, transform_indices = @transform_3, window_bounds = array<i64: 64, 128>}, {transform_indices = @transform_4, window_bounds = array<i64: 512, 128>}, {transform_indices = @transform_5, window_bounds = array<i64: 1, 2, 128>}]} {
    %c0 = arith.constant 0 : index
    %c0_0 = arith.constant 0 : index
    %0 = vector.load %arg1[%c0, %c0_0] : memref<512x8xbf16, #tpu.memory_space<vmem>>, vector<512x8xbf16>
    %c0_1 = arith.constant 0 : index
    %c0_2 = arith.constant 0 : index
    %1 = vector.load %arg2[%c0_1, %c0_2] : memref<8x64xbf16, #tpu.memory_space<vmem>>, vector<8x64xbf16>
    %cst = arith.constant dense<0.000000e+00> : vector<512x64xf32>
    %2 = tpu.matmul %0, %1, %cst {dimension_numbers = #tpu.dot_dimension_numbers<[1], [0], [0], [1], [0, 0, 1, 1], [], []>} : vector<512x8xbf16>, vector<8x64xbf16>, vector<512x64xf32> -> vector<512x64xf32>
    %c0_3 = arith.constant 0 : index
    %c0_4 = arith.constant 0 : index
    %3 = vector.load %arg3[%c0_3, %c0_4] : memref<1x64xf32, #tpu.memory_space<vmem>>, vector<1x64xf32>
    %4 = vector.broadcast %3 : vector<1x64xf32> to vector<512x64xf32>
    %5 = arith.addf %2, %4 : vector<512x64xf32>
    %cst_5 = arith.constant 0.000000e+00 : f32
    %6 = vector.broadcast %cst_5 : f32 to vector<512x64xf32>
    %7 = arith.cmpf oge, %5, %6 : vector<512x64xf32>
    %cst_6 = arith.constant 2.000000e-01 : f32
    %8 = vector.broadcast %cst_6 : f32 to vector<512x64xf32>
    %9 = arith.mulf %8, %5 : vector<512x64xf32>
    %10 = arith.select %7, %5, %9 : vector<512x64xi1>, vector<512x64xf32>
    %11 = arith.truncf %10 : vector<512x64xf32> to vector<512x64xbf16>
    %c0_7 = arith.constant 0 : index
    %c0_8 = arith.constant 0 : index
    %12 = vector.load %arg4[%c0_7, %c0_8] : memref<64x128xbf16, #tpu.memory_space<vmem>>, vector<64x128xbf16>
    %cst_9 = arith.constant dense<0.000000e+00> : vector<512x128xf32>
    %13 = tpu.matmul %11, %12, %cst_9 {dimension_numbers = #tpu.dot_dimension_numbers<[1], [0], [0], [1], [0, 0, 1, 1], [], []>} : vector<512x64xbf16>, vector<64x128xbf16>, vector<512x128xf32> -> vector<512x128xf32>
    %14 = arith.truncf %13 : vector<512x128xf32> to vector<512x128xbf16>
    %c0_10 = arith.constant 0 : index
    %c0_11 = arith.constant 0 : index
    %15 = vector.load %arg5[%c0_10, %c0_11] : memref<512x128xbf16, #tpu.memory_space<vmem>>, vector<512x128xbf16>
    tpu.vector_store %arg5[%c0_10, %c0_11], %14 {strides = array<i32>} : memref<512x128xbf16, #tpu.memory_space<vmem>>, vector<512x128xbf16>,
    %cst_12 = arith.constant dense<0.000000e+00> : vector<128xf32>
    %16 = vector.multi_reduction <add>, %13, %cst_12 [0] : vector<512x128xf32> to vector<128xf32>
    %17 = vector.shape_cast %16 : vector<128xf32> to vector<1x128xf32>
    %c0_13 = arith.constant 0 : index
    %c0_14 = arith.constant 0 : index
    %c0_15 = arith.constant 0 : index
    %18 = vector.load %arg6[%c0_13, %c0_14, %c0_15] : memref<1x2x128xf32, #tpu.memory_space<vmem>>, vector<1x1x128xf32>
    %19 = vector.shape_cast %18 : vector<1x1x128xf32> to vector<1x128xf32>
    %20 = vector.shape_cast %17 : vector<1x128xf32> to vector<1x1x128xf32>
    tpu.vector_store %arg6[%c0_13, %c0_14, %c0_15], %20 {strides = array<i32>} : memref<1x2x128xf32, #tpu.memory_space<vmem>>, vector<1x1x128xf32>,
    %21 = arith.mulf %13, %13 : vector<512x128xf32>
    %cst_16 = arith.constant dense<0.000000e+00> : vector<128xf32>
    %22 = vector.multi_reduction <add>, %21, %cst_16 [0] : vector<512x128xf32> to vector<128xf32>
    %23 = vector.shape_cast %22 : vector<128xf32> to vector<1x128xf32>
    %c0_17 = arith.constant 0 : index
    %c1 = arith.constant 1 : index
    %c0_18 = arith.constant 0 : index
    %24 = vector.load %arg6[%c0_17, %c1, %c0_18] : memref<1x2x128xf32, #tpu.memory_space<vmem>>, vector<1x1x128xf32>
    %25 = vector.shape_cast %24 : vector<1x1x128xf32> to vector<1x128xf32>
    %26 = vector.shape_cast %23 : vector<1x128xf32> to vector<1x1x128xf32>
    tpu.vector_store %arg6[%c0_17, %c1, %c0_18], %26 {strides = array<i32>} : memref<1x2x128xf32, #tpu.memory_space<vmem>>, vector<1x1x128xf32>,
    return
  }
  func.func @transform_0(%arg0: i32) -> (i32, i32) {
    %c0_i32 = arith.constant 0 : i32
    %c0_i32_0 = arith.constant 0 : i32
    return %arg0, %c0_i32 : i32, i32
  }
  func.func @transform_1(%arg0: i32) -> (i32, i32) {
    %c0_i32 = arith.constant 0 : i32
    %c0_i32_0 = arith.constant 0 : i32
    %c0_i32_1 = arith.constant 0 : i32
    return %c0_i32, %c0_i32_0 : i32, i32
  }
  func.func @transform_2(%arg0: i32) -> (i32, i32) {
    %c0_i32 = arith.constant 0 : i32
    %c0_i32_0 = arith.constant 0 : i32
    %c0_i32_1 = arith.constant 0 : i32
    return %c0_i32, %c0_i32_0 : i32, i32
  }
  func.func @transform_3(%arg0: i32) -> (i32, i32) {
    %c0_i32 = arith.constant 0 : i32
    %c0_i32_0 = arith.constant 0 : i32
    %c0_i32_1 = arith.constant 0 : i32
    return %c0_i32, %c0_i32_0 : i32, i32
  }
  func.func @transform_4(%arg0: i32) -> (i32, i32) {
    %c0_i32 = arith.constant 0 : i32
    %c0_i32_0 = arith.constant 0 : i32
    return %arg0, %c0_i32 : i32, i32
  }
  func.func @transform_5(%arg0: i32) -> (i32, i32, i32) {
    %c0_i32 = arith.constant 0 : i32
    %c0_i32_0 = arith.constant 0 : i32
    %c0_i32_1 = arith.constant 0 : i32
    return %arg0, %c0_i32, %c0_i32_0 : i32, i32, i32
  }
}

module attributes {stable_mosaic.version = 11 : i64} {
  func.func @_pass2_kernel(%arg0: i32, %arg1: memref<512x128xbf16, #tpu.memory_space<vmem>>, %arg2: memref<1x128xf32, #tpu.memory_space<vmem>>, %arg3: memref<1x128xf32, #tpu.memory_space<vmem>>, %arg4: memref<128x256xbf16, #tpu.memory_space<vmem>>, %arg5: memref<512x256xbf16, #tpu.memory_space<vmem>>, %arg6: memref<1x2x256xf32, #tpu.memory_space<vmem>>) attributes {dimension_semantics = [#tpu.dimension_semantics<parallel>], iteration_bounds = array<i64: 1>, scalar_prefetch = 0 : i64, scratch_operands = 0 : i64, tpu.core_type = #tpu.core_type<tc>, window_params = [{transform_indices = @transform_0, window_bounds = array<i64: 512, 128>}, {pipeline_mode = #tpu.pipeline_mode<synchronous>, transform_indices = @transform_1, window_bounds = array<i64: 1, 128>}, {pipeline_mode = #tpu.pipeline_mode<synchronous>, transform_indices = @transform_2, window_bounds = array<i64: 1, 128>}, {pipeline_mode = #tpu.pipeline_mode<synchronous>, transform_indices = @transform_3, window_bounds = array<i64: 128, 256>}, {transform_indices = @transform_4, window_bounds = array<i64: 512, 256>}, {transform_indices = @transform_5, window_bounds = array<i64: 1, 2, 256>}]} {
    %c0 = arith.constant 0 : index
    %c0_0 = arith.constant 0 : index
    %0 = vector.load %arg1[%c0, %c0_0] : memref<512x128xbf16, #tpu.memory_space<vmem>>, vector<512x128xbf16>
    %1 = arith.extf %0 : vector<512x128xbf16> to vector<512x128xf32>
    %c0_1 = arith.constant 0 : index
    %c0_2 = arith.constant 0 : index
    %2 = vector.load %arg2[%c0_1, %c0_2] : memref<1x128xf32, #tpu.memory_space<vmem>>, vector<1x128xf32>
    %3 = vector.broadcast %2 : vector<1x128xf32> to vector<512x128xf32>
    %4 = arith.mulf %1, %3 : vector<512x128xf32>
    %c0_3 = arith.constant 0 : index
    %c0_4 = arith.constant 0 : index
    %5 = vector.load %arg3[%c0_3, %c0_4] : memref<1x128xf32, #tpu.memory_space<vmem>>, vector<1x128xf32>
    %6 = vector.broadcast %5 : vector<1x128xf32> to vector<512x128xf32>
    %7 = arith.addf %4, %6 : vector<512x128xf32>
    %cst = arith.constant 0.000000e+00 : f32
    %8 = vector.broadcast %cst : f32 to vector<512x128xf32>
    %9 = arith.cmpf oge, %7, %8 : vector<512x128xf32>
    %cst_5 = arith.constant 2.000000e-01 : f32
    %10 = vector.broadcast %cst_5 : f32 to vector<512x128xf32>
    %11 = arith.mulf %10, %7 : vector<512x128xf32>
    %12 = arith.select %9, %7, %11 : vector<512x128xi1>, vector<512x128xf32>
    %13 = arith.truncf %12 : vector<512x128xf32> to vector<512x128xbf16>
    %c0_6 = arith.constant 0 : index
    %c0_7 = arith.constant 0 : index
    %14 = vector.load %arg4[%c0_6, %c0_7] : memref<128x256xbf16, #tpu.memory_space<vmem>>, vector<128x256xbf16>
    %cst_8 = arith.constant dense<0.000000e+00> : vector<512x256xf32>
    %15 = tpu.matmul %13, %14, %cst_8 {dimension_numbers = #tpu.dot_dimension_numbers<[1], [0], [0], [1], [0, 0, 1, 1], [], []>} : vector<512x128xbf16>, vector<128x256xbf16>, vector<512x256xf32> -> vector<512x256xf32>
    %16 = arith.truncf %15 : vector<512x256xf32> to vector<512x256xbf16>
    %c0_9 = arith.constant 0 : index
    %c0_10 = arith.constant 0 : index
    %17 = vector.load %arg5[%c0_9, %c0_10] : memref<512x256xbf16, #tpu.memory_space<vmem>>, vector<512x256xbf16>
    tpu.vector_store %arg5[%c0_9, %c0_10], %16 {strides = array<i32>} : memref<512x256xbf16, #tpu.memory_space<vmem>>, vector<512x256xbf16>,
    %cst_11 = arith.constant dense<0.000000e+00> : vector<256xf32>
    %18 = vector.multi_reduction <add>, %15, %cst_11 [0] : vector<512x256xf32> to vector<256xf32>
    %19 = vector.shape_cast %18 : vector<256xf32> to vector<1x256xf32>
    %c0_12 = arith.constant 0 : index
    %c0_13 = arith.constant 0 : index
    %c0_14 = arith.constant 0 : index
    %20 = vector.load %arg6[%c0_12, %c0_13, %c0_14] : memref<1x2x256xf32, #tpu.memory_space<vmem>>, vector<1x1x256xf32>
    %21 = vector.shape_cast %20 : vector<1x1x256xf32> to vector<1x256xf32>
    %22 = vector.shape_cast %19 : vector<1x256xf32> to vector<1x1x256xf32>
    tpu.vector_store %arg6[%c0_12, %c0_13, %c0_14], %22 {strides = array<i32>} : memref<1x2x256xf32, #tpu.memory_space<vmem>>, vector<1x1x256xf32>,
    %23 = arith.mulf %15, %15 : vector<512x256xf32>
    %cst_15 = arith.constant dense<0.000000e+00> : vector<256xf32>
    %24 = vector.multi_reduction <add>, %23, %cst_15 [0] : vector<512x256xf32> to vector<256xf32>
    %25 = vector.shape_cast %24 : vector<256xf32> to vector<1x256xf32>
    %c0_16 = arith.constant 0 : index
    %c1 = arith.constant 1 : index
    %c0_17 = arith.constant 0 : index
    %26 = vector.load %arg6[%c0_16, %c1, %c0_17] : memref<1x2x256xf32, #tpu.memory_space<vmem>>, vector<1x1x256xf32>
    %27 = vector.shape_cast %26 : vector<1x1x256xf32> to vector<1x256xf32>
    %28 = vector.shape_cast %25 : vector<1x256xf32> to vector<1x1x256xf32>
    tpu.vector_store %arg6[%c0_16, %c1, %c0_17], %28 {strides = array<i32>} : memref<1x2x256xf32, #tpu.memory_space<vmem>>, vector<1x1x256xf32>,
    return
  }
  func.func @transform_0(%arg0: i32) -> (i32, i32) {
    %c0_i32 = arith.constant 0 : i32
    %c0_i32_0 = arith.constant 0 : i32
    return %arg0, %c0_i32 : i32, i32
  }
  func.func @transform_1(%arg0: i32) -> (i32, i32) {
    %c0_i32 = arith.constant 0 : i32
    %c0_i32_0 = arith.constant 0 : i32
    %c0_i32_1 = arith.constant 0 : i32
    return %c0_i32, %c0_i32_0 : i32, i32
  }
  func.func @transform_2(%arg0: i32) -> (i32, i32) {
    %c0_i32 = arith.constant 0 : i32
    %c0_i32_0 = arith.constant 0 : i32
    %c0_i32_1 = arith.constant 0 : i32
    return %c0_i32, %c0_i32_0 : i32, i32
  }
  func.func @transform_3(%arg0: i32) -> (i32, i32) {
    %c0_i32 = arith.constant 0 : i32
    %c0_i32_0 = arith.constant 0 : i32
    %c0_i32_1 = arith.constant 0 : i32
    return %c0_i32, %c0_i32_0 : i32, i32
  }
  func.func @transform_4(%arg0: i32) -> (i32, i32) {
    %c0_i32 = arith.constant 0 : i32
    %c0_i32_0 = arith.constant 0 : i32
    return %arg0, %c0_i32 : i32, i32
  }
  func.func @transform_5(%arg0: i32) -> (i32, i32, i32) {
    %c0_i32 = arith.constant 0 : i32
    %c0_i32_0 = arith.constant 0 : i32
    %c0_i32_1 = arith.constant 0 : i32
    return %arg0, %c0_i32, %c0_i32_0 : i32, i32, i32
  }
}

module attributes {stable_mosaic.version = 11 : i64} {
  func.func @_pass3_kernel(%arg0: i32, %arg1: memref<512x256xbf16, #tpu.memory_space<vmem>>, %arg2: memref<1x256xf32, #tpu.memory_space<vmem>>, %arg3: memref<1x256xf32, #tpu.memory_space<vmem>>, %arg4: memref<256x512xbf16, #tpu.memory_space<vmem>>, %arg5: memref<1x2x512xf32, #tpu.memory_space<vmem>>) attributes {dimension_semantics = [#tpu.dimension_semantics<parallel>], iteration_bounds = array<i64: 1>, scalar_prefetch = 0 : i64, scratch_operands = 0 : i64, tpu.core_type = #tpu.core_type<tc>, window_params = [{transform_indices = @transform_0, window_bounds = array<i64: 512, 256>}, {pipeline_mode = #tpu.pipeline_mode<synchronous>, transform_indices = @transform_1, window_bounds = array<i64: 1, 256>}, {pipeline_mode = #tpu.pipeline_mode<synchronous>, transform_indices = @transform_2, window_bounds = array<i64: 1, 256>}, {pipeline_mode = #tpu.pipeline_mode<synchronous>, transform_indices = @transform_3, window_bounds = array<i64: 256, 512>}, {transform_indices = @transform_4, window_bounds = array<i64: 1, 2, 512>}]} {
    %c0 = arith.constant 0 : index
    %c0_0 = arith.constant 0 : index
    %0 = vector.load %arg1[%c0, %c0_0] : memref<512x256xbf16, #tpu.memory_space<vmem>>, vector<512x256xbf16>
    %1 = arith.extf %0 : vector<512x256xbf16> to vector<512x256xf32>
    %c0_1 = arith.constant 0 : index
    %c0_2 = arith.constant 0 : index
    %2 = vector.load %arg2[%c0_1, %c0_2] : memref<1x256xf32, #tpu.memory_space<vmem>>, vector<1x256xf32>
    %3 = vector.broadcast %2 : vector<1x256xf32> to vector<512x256xf32>
    %4 = arith.mulf %1, %3 : vector<512x256xf32>
    %c0_3 = arith.constant 0 : index
    %c0_4 = arith.constant 0 : index
    %5 = vector.load %arg3[%c0_3, %c0_4] : memref<1x256xf32, #tpu.memory_space<vmem>>, vector<1x256xf32>
    %6 = vector.broadcast %5 : vector<1x256xf32> to vector<512x256xf32>
    %7 = arith.addf %4, %6 : vector<512x256xf32>
    %cst = arith.constant 0.000000e+00 : f32
    %8 = vector.broadcast %cst : f32 to vector<512x256xf32>
    %9 = arith.cmpf oge, %7, %8 : vector<512x256xf32>
    %cst_5 = arith.constant 2.000000e-01 : f32
    %10 = vector.broadcast %cst_5 : f32 to vector<512x256xf32>
    %11 = arith.mulf %10, %7 : vector<512x256xf32>
    %12 = arith.select %9, %7, %11 : vector<512x256xi1>, vector<512x256xf32>
    %13 = arith.truncf %12 : vector<512x256xf32> to vector<512x256xbf16>
    %c0_6 = arith.constant 0 : index
    %c0_7 = arith.constant 0 : index
    %14 = vector.load %arg4[%c0_6, %c0_7] : memref<256x512xbf16, #tpu.memory_space<vmem>>, vector<256x512xbf16>
    %cst_8 = arith.constant dense<0.000000e+00> : vector<512x512xf32>
    %15 = tpu.matmul %13, %14, %cst_8 {dimension_numbers = #tpu.dot_dimension_numbers<[1], [0], [0], [1], [0, 0, 1, 1], [], []>} : vector<512x256xbf16>, vector<256x512xbf16>, vector<512x512xf32> -> vector<512x512xf32>
    %cst_9 = arith.constant dense<0.000000e+00> : vector<512xf32>
    %16 = vector.multi_reduction <add>, %15, %cst_9 [0] : vector<512x512xf32> to vector<512xf32>
    %17 = vector.shape_cast %16 : vector<512xf32> to vector<1x512xf32>
    %c0_10 = arith.constant 0 : index
    %c0_11 = arith.constant 0 : index
    %c0_12 = arith.constant 0 : index
    %18 = vector.load %arg5[%c0_10, %c0_11, %c0_12] : memref<1x2x512xf32, #tpu.memory_space<vmem>>, vector<1x1x512xf32>
    %19 = vector.shape_cast %18 : vector<1x1x512xf32> to vector<1x512xf32>
    %20 = vector.shape_cast %17 : vector<1x512xf32> to vector<1x1x512xf32>
    tpu.vector_store %arg5[%c0_10, %c0_11, %c0_12], %20 {strides = array<i32>} : memref<1x2x512xf32, #tpu.memory_space<vmem>>, vector<1x1x512xf32>,
    %21 = arith.mulf %15, %15 : vector<512x512xf32>
    %cst_13 = arith.constant dense<0.000000e+00> : vector<512xf32>
    %22 = vector.multi_reduction <add>, %21, %cst_13 [0] : vector<512x512xf32> to vector<512xf32>
    %23 = vector.shape_cast %22 : vector<512xf32> to vector<1x512xf32>
    %c0_14 = arith.constant 0 : index
    %c1 = arith.constant 1 : index
    %c0_15 = arith.constant 0 : index
    %24 = vector.load %arg5[%c0_14, %c1, %c0_15] : memref<1x2x512xf32, #tpu.memory_space<vmem>>, vector<1x1x512xf32>
    %25 = vector.shape_cast %24 : vector<1x1x512xf32> to vector<1x512xf32>
    %26 = vector.shape_cast %23 : vector<1x512xf32> to vector<1x1x512xf32>
    tpu.vector_store %arg5[%c0_14, %c1, %c0_15], %26 {strides = array<i32>} : memref<1x2x512xf32, #tpu.memory_space<vmem>>, vector<1x1x512xf32>,
    return
  }
  func.func @transform_0(%arg0: i32) -> (i32, i32) {
    %c0_i32 = arith.constant 0 : i32
    %c0_i32_0 = arith.constant 0 : i32
    return %arg0, %c0_i32 : i32, i32
  }
  func.func @transform_1(%arg0: i32) -> (i32, i32) {
    %c0_i32 = arith.constant 0 : i32
    %c0_i32_0 = arith.constant 0 : i32
    %c0_i32_1 = arith.constant 0 : i32
    return %c0_i32, %c0_i32_0 : i32, i32
  }
  func.func @transform_2(%arg0: i32) -> (i32, i32) {
    %c0_i32 = arith.constant 0 : i32
    %c0_i32_0 = arith.constant 0 : i32
    %c0_i32_1 = arith.constant 0 : i32
    return %c0_i32, %c0_i32_0 : i32, i32
  }
  func.func @transform_3(%arg0: i32) -> (i32, i32) {
    %c0_i32 = arith.constant 0 : i32
    %c0_i32_0 = arith.constant 0 : i32
    %c0_i32_1 = arith.constant 0 : i32
    return %c0_i32, %c0_i32_0 : i32, i32
  }
  func.func @transform_4(%arg0: i32) -> (i32, i32, i32) {
    %c0_i32 = arith.constant 0 : i32
    %c0_i32_0 = arith.constant 0 : i32
    %c0_i32_1 = arith.constant 0 : i32
    return %arg0, %c0_i32, %c0_i32_0 : i32, i32, i32
  }
}

module attributes {stable_mosaic.version = 11 : i64} {
  func.func @_pass4_kernel(%arg0: i32, %arg1: memref<512x256xbf16, #tpu.memory_space<vmem>>, %arg2: memref<1x256xf32, #tpu.memory_space<vmem>>, %arg3: memref<1x256xf32, #tpu.memory_space<vmem>>, %arg4: memref<256x512xbf16, #tpu.memory_space<vmem>>, %arg5: memref<1x512xf32, #tpu.memory_space<vmem>>, %arg6: memref<1x512xf32, #tpu.memory_space<vmem>>, %arg7: memref<1x512xf32, #tpu.memory_space<vmem>>, %arg8: memref<1x1xf32, #tpu.memory_space<vmem>>, %arg9: memref<512x1xf32, #tpu.memory_space<vmem>>) attributes {dimension_semantics = [#tpu.dimension_semantics<parallel>], iteration_bounds = array<i64: 1>, scalar_prefetch = 0 : i64, scratch_operands = 0 : i64, tpu.core_type = #tpu.core_type<tc>, window_params = [{transform_indices = @transform_0, window_bounds = array<i64: 512, 256>}, {pipeline_mode = #tpu.pipeline_mode<synchronous>, transform_indices = @transform_1, window_bounds = array<i64: 1, 256>}, {pipeline_mode = #tpu.pipeline_mode<synchronous>, transform_indices = @transform_2, window_bounds = array<i64: 1, 256>}, {pipeline_mode = #tpu.pipeline_mode<synchronous>, transform_indices = @transform_3, window_bounds = array<i64: 256, 512>}, {pipeline_mode = #tpu.pipeline_mode<synchronous>, transform_indices = @transform_4, window_bounds = array<i64: 1, 512>}, {pipeline_mode = #tpu.pipeline_mode<synchronous>, transform_indices = @transform_5, window_bounds = array<i64: 1, 512>}, {pipeline_mode = #tpu.pipeline_mode<synchronous>, transform_indices = @transform_6, window_bounds = array<i64: 1, 512>}, {pipeline_mode = #tpu.pipeline_mode<synchronous>, transform_indices = @transform_7, window_bounds = array<i64: 1, 1>}, {transform_indices = @transform_8, window_bounds = array<i64: 512, 1>}]} {
    %c0 = arith.constant 0 : index
    %c0_0 = arith.constant 0 : index
    %0 = vector.load %arg1[%c0, %c0_0] : memref<512x256xbf16, #tpu.memory_space<vmem>>, vector<512x256xbf16>
    %1 = arith.extf %0 : vector<512x256xbf16> to vector<512x256xf32>
    %c0_1 = arith.constant 0 : index
    %c0_2 = arith.constant 0 : index
    %2 = vector.load %arg2[%c0_1, %c0_2] : memref<1x256xf32, #tpu.memory_space<vmem>>, vector<1x256xf32>
    %3 = vector.broadcast %2 : vector<1x256xf32> to vector<512x256xf32>
    %4 = arith.mulf %1, %3 : vector<512x256xf32>
    %c0_3 = arith.constant 0 : index
    %c0_4 = arith.constant 0 : index
    %5 = vector.load %arg3[%c0_3, %c0_4] : memref<1x256xf32, #tpu.memory_space<vmem>>, vector<1x256xf32>
    %6 = vector.broadcast %5 : vector<1x256xf32> to vector<512x256xf32>
    %7 = arith.addf %4, %6 : vector<512x256xf32>
    %cst = arith.constant 0.000000e+00 : f32
    %8 = vector.broadcast %cst : f32 to vector<512x256xf32>
    %9 = arith.cmpf oge, %7, %8 : vector<512x256xf32>
    %cst_5 = arith.constant 2.000000e-01 : f32
    %10 = vector.broadcast %cst_5 : f32 to vector<512x256xf32>
    %11 = arith.mulf %10, %7 : vector<512x256xf32>
    %12 = arith.select %9, %7, %11 : vector<512x256xi1>, vector<512x256xf32>
    %13 = arith.truncf %12 : vector<512x256xf32> to vector<512x256xbf16>
    %c0_6 = arith.constant 0 : index
    %c0_7 = arith.constant 0 : index
    %14 = vector.load %arg4[%c0_6, %c0_7] : memref<256x512xbf16, #tpu.memory_space<vmem>>, vector<256x512xbf16>
    %cst_8 = arith.constant dense<0.000000e+00> : vector<512x512xf32>
    %15 = tpu.matmul %13, %14, %cst_8 {dimension_numbers = #tpu.dot_dimension_numbers<[1], [0], [0], [1], [0, 0, 1, 1], [], []>} : vector<512x256xbf16>, vector<256x512xbf16>, vector<512x512xf32> -> vector<512x512xf32>
    %c0_9 = arith.constant 0 : index
    %c0_10 = arith.constant 0 : index
    %16 = vector.load %arg5[%c0_9, %c0_10] : memref<1x512xf32, #tpu.memory_space<vmem>>, vector<1x512xf32>
    %17 = vector.broadcast %16 : vector<1x512xf32> to vector<512x512xf32>
    %18 = arith.mulf %15, %17 : vector<512x512xf32>
    %c0_11 = arith.constant 0 : index
    %c0_12 = arith.constant 0 : index
    %19 = vector.load %arg6[%c0_11, %c0_12] : memref<1x512xf32, #tpu.memory_space<vmem>>, vector<1x512xf32>
    %20 = vector.broadcast %19 : vector<1x512xf32> to vector<512x512xf32>
    %21 = arith.addf %18, %20 : vector<512x512xf32>
    %cst_13 = arith.constant 0.000000e+00 : f32
    %22 = vector.broadcast %cst_13 : f32 to vector<512x512xf32>
    %23 = arith.cmpf oge, %21, %22 : vector<512x512xf32>
    %cst_14 = arith.constant 2.000000e-01 : f32
    %24 = vector.broadcast %cst_14 : f32 to vector<512x512xf32>
    %25 = arith.mulf %24, %21 : vector<512x512xf32>
    %26 = arith.select %23, %21, %25 : vector<512x512xi1>, vector<512x512xf32>
    %c0_15 = arith.constant 0 : index
    %c0_16 = arith.constant 0 : index
    %27 = vector.load %arg7[%c0_15, %c0_16] : memref<1x512xf32, #tpu.memory_space<vmem>>, vector<1x512xf32>
    %28 = vector.broadcast %27 : vector<1x512xf32> to vector<512x512xf32>
    %29 = arith.mulf %26, %28 : vector<512x512xf32>
    %cst_17 = arith.constant dense<0.000000e+00> : vector<512xf32>
    %30 = vector.multi_reduction <add>, %29, %cst_17 [1] : vector<512x512xf32> to vector<512xf32>
    %31 = vector.shape_cast %30 : vector<512xf32> to vector<512x1xf32>
    %c0_18 = arith.constant 0 : index
    %c0_19 = arith.constant 0 : index
    %32 = vector.load %arg8[%c0_18, %c0_19] : memref<1x1xf32, #tpu.memory_space<vmem>>, vector<1x1xf32>
    %33 = vector.broadcast %32 : vector<1x1xf32> to vector<512x1xf32>
    %34 = arith.addf %31, %33 : vector<512x1xf32>
    %c0_20 = arith.constant 0 : index
    %c0_21 = arith.constant 0 : index
    %35 = vector.load %arg9[%c0_20, %c0_21] : memref<512x1xf32, #tpu.memory_space<vmem>>, vector<512x1xf32>
    tpu.vector_store %arg9[%c0_20, %c0_21], %34 {strides = array<i32>} : memref<512x1xf32, #tpu.memory_space<vmem>>, vector<512x1xf32>,
    return
  }
  func.func @transform_0(%arg0: i32) -> (i32, i32) {
    %c0_i32 = arith.constant 0 : i32
    %c0_i32_0 = arith.constant 0 : i32
    return %arg0, %c0_i32 : i32, i32
  }
  func.func @transform_1(%arg0: i32) -> (i32, i32) {
    %c0_i32 = arith.constant 0 : i32
    %c0_i32_0 = arith.constant 0 : i32
    %c0_i32_1 = arith.constant 0 : i32
    return %c0_i32, %c0_i32_0 : i32, i32
  }
  func.func @transform_2(%arg0: i32) -> (i32, i32) {
    %c0_i32 = arith.constant 0 : i32
    %c0_i32_0 = arith.constant 0 : i32
    %c0_i32_1 = arith.constant 0 : i32
    return %c0_i32, %c0_i32_0 : i32, i32
  }
  func.func @transform_3(%arg0: i32) -> (i32, i32) {
    %c0_i32 = arith.constant 0 : i32
    %c0_i32_0 = arith.constant 0 : i32
    %c0_i32_1 = arith.constant 0 : i32
    return %c0_i32, %c0_i32_0 : i32, i32
  }
  func.func @transform_4(%arg0: i32) -> (i32, i32) {
    %c0_i32 = arith.constant 0 : i32
    %c0_i32_0 = arith.constant 0 : i32
    %c0_i32_1 = arith.constant 0 : i32
    return %c0_i32, %c0_i32_0 : i32, i32
  }
  func.func @transform_5(%arg0: i32) -> (i32, i32) {
    %c0_i32 = arith.constant 0 : i32
    %c0_i32_0 = arith.constant 0 : i32
    %c0_i32_1 = arith.constant 0 : i32
    return %c0_i32, %c0_i32_0 : i32, i32
  }
  func.func @transform_6(%arg0: i32) -> (i32, i32) {
    %c0_i32 = arith.constant 0 : i32
    %c0_i32_0 = arith.constant 0 : i32
    %c0_i32_1 = arith.constant 0 : i32
    return %c0_i32, %c0_i32_0 : i32, i32
  }
  func.func @transform_7(%arg0: i32) -> (i32, i32) {
    %c0_i32 = arith.constant 0 : i32
    %c0_i32_0 = arith.constant 0 : i32
    %c0_i32_1 = arith.constant 0 : i32
    return %c0_i32, %c0_i32_0 : i32, i32
  }
  func.func @transform_8(%arg0: i32) -> (i32, i32) {
    %c0_i32 = arith.constant 0 : i32
    %c0_i32_0 = arith.constant 0 : i32
    return %arg0, %c0_i32 : i32, i32
  }
}

</mosaic_0001>

<llo_original>
// kernel: nlayer_discriminator_forward.5
$region0: #{nlayer_discriminator_forward.5}
  #allocation0 [shape = 'u32[]', space=smem, size = 0x4, offset = 0x4, fixed_abs, tag = 'smem constant byte address 0x4 - core index']
  #allocation1 [shape = 'u32[144,128]{1,0:T(1,128)}', space=vmem, size = 0x12000, scoped, tag = 'internal scratch']
  %s0 = inlined_call_operand.vmem [shape: bf16[512,128], index: 0, kind: input, shape index: {}]
  %s1 = inlined_call_operand.vmem [shape: f32[1,128], index: 1, kind: input, shape index: {}]
  %s2 = inlined_call_operand.vmem [shape: f32[1,128], index: 2, kind: input, shape index: {}]
  %s3 = inlined_call_operand.vmem [shape: bf16[128,256], index: 3, kind: input, shape index: {}]
  %s4 = inlined_call_operand.vmem [shape: bf16[512,256], index: 4, kind: output, shape index: {0}]
  %s5 = inlined_call_operand.vmem [shape: f32[1,2,256], index: 5, kind: output, shape index: {1}]
  %6 = xla_tuple %s4, %s5
  %s7 = sld [smem:[#allocation0]]
  $region34: #{nlayer_discriminator_forward.5} parent=0
    _
  %s9 = ssub.s32 1, %s7
  %s10 = scalar_select 0, %s9, %s7
  // Predicated region
  $region2: #{nlayer_discriminator_forward.5} parent=0 // pred_check
    _
  $region3: #{nlayer_discriminator_forward.5} parent=0 // pred_check_branch
    %12 = sbr.rel (0) target = $region5
  $region4: #{nlayer_discriminator_forward.5} parent=0 // pred_region
    _
  $region5: #{nlayer_discriminator_forward.5} parent=0 // pred_fallthru
    _
  // Predicated region
  $region6: #{nlayer_discriminator_forward.5} parent=0 // pred_check
    _
  $region7: #{nlayer_discriminator_forward.5} parent=0 // pred_check_branch
    %14 = sbr.rel (0) target = $region9
  $region8: #{nlayer_discriminator_forward.5} parent=0 // pred_region
    _
  $region9: #{nlayer_discriminator_forward.5} parent=0 // pred_fallthru
    _
  // Predicated region
  $region10: #{nlayer_discriminator_forward.5} parent=0 // pred_check
    _
  $region11: #{nlayer_discriminator_forward.5} parent=0 // pred_check_branch
    %16 = sbr.rel (0) target = $region13
  $region12: #{nlayer_discriminator_forward.5} parent=0 // pred_region
    _
  $region13: #{nlayer_discriminator_forward.5} parent=0 // pred_fallthru
    _
  // Predicated region
  $region14: #{nlayer_discriminator_forward.5} parent=0 // pred_check
    _
  $region15: #{nlayer_discriminator_forward.5} parent=0 // pred_check_branch
    %18 = sbr.rel (0) target = $region17
  $region16: #{nlayer_discriminator_forward.5} parent=0 // pred_region
    _
  $region17: #{nlayer_discriminator_forward.5} parent=0 // pred_fallthru
    _
  %v20 = vld [vmem:[%s0] sm:$0xf]
  %v21 = vld [vmem:[%s0 + $0x4] sm:$0xf]
  %v22 = vld [vmem:[%s0 + $0x8] sm:$0xf]
  %v23 = vld [vmem:[%s0 + $0xc] sm:$0xf]
  %v24 = vld [vmem:[%s0 + $0x10] sm:$0xf]
  %v25 = vld [vmem:[%s0 + $0x14] sm:$0xf]
  %v26 = vld [vmem:[%s0 + $0x18] sm:$0xf]
  %v27 = vld [vmem:[%s0 + $0x1c] sm:$0xf]
  %v28 = vld [vmem:[%s0 + $0x20] sm:$0xf]
  %v29 = vld [vmem:[%s0 + $0x24] sm:$0xf]
  %v30 = vld [vmem:[%s0 + $0x28] sm:$0xf]
  %v31 = vld [vmem:[%s0 + $0x2c] sm:$0xf]
  %v32 = vld [vmem:[%s0 + $0x30] sm:$0xf]
  %v33 = vld [vmem:[%s0 + $0x34] sm:$0xf]
  %v34 = vld [vmem:[%s0 + $0x38] sm:$0xf]
  %v35 = vld [vmem:[%s0 + $0x3c] sm:$0xf]
  %v36 = vld [vmem:[%s0 + $0x40] sm:$0xf]
  %v37 = vld [vmem:[%s0 + $0x44] sm:$0xf]
  %v38 = vld [vmem:[%s0 + $0x48] sm:$0xf]
  %v39 = vld [vmem:[%s0 + $0x4c] sm:$0xf]
  %v40 = vld [vmem:[%s0 + $0x50] sm:$0xf]
  %v41 = vld [vmem:[%s0 + $0x54] sm:$0xf]
  %v42 = vld [vmem:[%s0 + $0x58] sm:$0xf]
  %v43 = vld [vmem:[%s0 + $0x5c] sm:$0xf]
  %v44 = vld [vmem:[%s0 + $0x60] sm:$0xf]
  %v45 = vld [vmem:[%s0 + $0x64] sm:$0xf]
  %v46 = vld [vmem:[%s0 + $0x68] sm:$0xf]
  %v47 = vld [vmem:[%s0 + $0x6c] sm:$0xf]
  %v48 = vld [vmem:[%s0 + $0x70] sm:$0xf]
  %v49 = vld [vmem:[%s0 + $0x74] sm:$0xf]
  %v50 = vld [vmem:[%s0 + $0x78] sm:$0xf]
  %v51 = vld [vmem:[%s0 + $0x7c] sm:$0xf]
  %v52 = vld [vmem:[%s0 + $0x80] sm:$0xf]
  %v53 = vld [vmem:[%s0 + $0x84] sm:$0xf]
  %v54 = vld [vmem:[%s0 + $0x88] sm:$0xf]
  %v55 = vld [vmem:[%s0 + $0x8c] sm:$0xf]
  %v56 = vld [vmem:[%s0 + $0x90] sm:$0xf]
  %v57 = vld [vmem:[%s0 + $0x94] sm:$0xf]
  %v58 = vld [vmem:[%s0 + $0x98] sm:$0xf]
  %v59 = vld [vmem:[%s0 + $0x9c] sm:$0xf]
  %v60 = vld [vmem:[%s0 + $0xa0] sm:$0xf]
  %v61 = vld [vmem:[%s0 + $0xa4] sm:$0xf]
  %v62 = vld [vmem:[%s0 + $0xa8] sm:$0xf]
  %v63 = vld [vmem:[%s0 + $0xac] sm:$0xf]
  %v64 = vld [vmem:[%s0 + $0xb0] sm:$0xf]
  %v65 = vld [vmem:[%s0 + $0xb4] sm:$0xf]
  %v66 = vld [vmem:[%s0 + $0xb8] sm:$0xf]
  %v67 = vld [vmem:[%s0 + $0xbc] sm:$0xf]
  %v68 = vld [vmem:[%s0 + $0xc0] sm:$0xf]
  %v69 = vld [vmem:[%s0 + $0xc4] sm:$0xf]
  %v70 = vld [vmem:[%s0 + $0xc8] sm:$0xf]
  %v71 = vld [vmem:[%s0 + $0xcc] sm:$0xf]
  %v72 = vld [vmem:[%s0 + $0xd0] sm:$0xf]
  %v73 = vld [vmem:[%s0 + $0xd4] sm:$0xf]
  %v74 = vld [vmem:[%s0 + $0xd8] sm:$0xf]
  %v75 = vld [vmem:[%s0 + $0xdc] sm:$0xf]
  %v76 = vld [vmem:[%s0 + $0xe0] sm:$0xf]
  %v77 = vld [vmem:[%s0 + $0xe4] sm:$0xf]
  %v78 = vld [vmem:[%s0 + $0xe8] sm:$0xf]
  %v79 = vld [vmem:[%s0 + $0xec] sm:$0xf]
  %v80 = vld [vmem:[%s0 + $0xf0] sm:$0xf]
  %v81 = vld [vmem:[%s0 + $0xf4] sm:$0xf]
  %v82 = vld [vmem:[%s0 + $0xf8] sm:$0xf]
  %v83 = vld [vmem:[%s0 + $0xfc] sm:$0xf]
  %v84 = vunpack.c.l.bf16 %v20
  %v85 = vunpack.c.l.bf16 %v21
  %v86 = vunpack.c.l.bf16 %v22
  %v87 = vunpack.c.l.bf16 %v23
  %v88 = vunpack.c.l.bf16 %v24
  %v89 = vunpack.c.l.bf16 %v25
  %v90 = vunpack.c.l.bf16 %v26
  %v91 = vunpack.c.l.bf16 %v27
  %v92 = vunpack.c.l.bf16 %v28
  %v93 = vunpack.c.l.bf16 %v29
  %v94 = vunpack.c.l.bf16 %v30
  %v95 = vunpack.c.l.bf16 %v31
  %v96 = vunpack.c.l.bf16 %v32
  %v97 = vunpack.c.l.bf16 %v33
  %v98 = vunpack.c.l.bf16 %v34
  %v99 = vunpack.c.l.bf16 %v35
  %v100 = vunpack.c.l.bf16 %v36
  %v101 = vunpack.c.l.bf16 %v37
  %v102 = vunpack.c.l.bf16 %v38
  %v103 = vunpack.c.l.bf16 %v39
  %v104 = vunpack.c.l.bf16 %v40
  %v105 = vunpack.c.l.bf16 %v41
  %v106 = vunpack.c.l.bf16 %v42
  %v107 = vunpack.c.l.bf16 %v43
  %v108 = vunpack.c.l.bf16 %v44
  %v109 = vunpack.c.l.bf16 %v45
  %v110 = vunpack.c.l.bf16 %v46
  %v111 = vunpack.c.l.bf16 %v47
  %v112 = vunpack.c.l.bf16 %v48
  %v113 = vunpack.c.l.bf16 %v49
  %v114 = vunpack.c.l.bf16 %v50
  %v115 = vunpack.c.l.bf16 %v51
  %v116 = vunpack.c.l.bf16 %v52
  %v117 = vunpack.c.l.bf16 %v53
  %v118 = vunpack.c.l.bf16 %v54
  %v119 = vunpack.c.l.bf16 %v55
  %v120 = vunpack.c.l.bf16 %v56
  %v121 = vunpack.c.l.bf16 %v57
  %v122 = vunpack.c.l.bf16 %v58
  %v123 = vunpack.c.l.bf16 %v59
  %v124 = vunpack.c.l.bf16 %v60
  %v125 = vunpack.c.l.bf16 %v61
  %v126 = vunpack.c.l.bf16 %v62
  %v127 = vunpack.c.l.bf16 %v63
  %v128 = vunpack.c.l.bf16 %v64
  %v129 = vunpack.c.l.bf16 %v65
  %v130 = vunpack.c.l.bf16 %v66
  %v131 = vunpack.c.l.bf16 %v67
  %v132 = vunpack.c.l.bf16 %v68
  %v133 = vunpack.c.l.bf16 %v69
  %v134 = vunpack.c.l.bf16 %v70
  %v135 = vunpack.c.l.bf16 %v71
  %v136 = vunpack.c.l.bf16 %v72
  %v137 = vunpack.c.l.bf16 %v73
  %v138 = vunpack.c.l.bf16 %v74
  %v139 = vunpack.c.l.bf16 %v75
  %v140 = vunpack.c.l.bf16 %v76
  %v141 = vunpack.c.l.bf16 %v77
  %v142 = vunpack.c.l.bf16 %v78
  %v143 = vunpack.c.l.bf16 %v79
  %v144 = vunpack.c.l.bf16 %v80
  %v145 = vunpack.c.l.bf16 %v81
  %v146 = vunpack.c.l.bf16 %v82
  %v147 = vunpack.c.l.bf16 %v83
  %v148 = vld [vmem:[%s1] sm:$0x1]
  %v150 = vlaneseq
  %v151 = vshrl.u32 %v150, 7
  %v152 = vsub.s32 0, %v151
  %v153 = vrot.slane %v148, %v152
  %v155 = vmul.f32 %v84, %v153
  %v156 = vmul.f32 %v85, %v153
  %v157 = vmul.f32 %v86, %v153
  %v158 = vmul.f32 %v87, %v153
  %v159 = vmul.f32 %v88, %v153
  %v160 = vmul.f32 %v89, %v153
  %v161 = vmul.f32 %v90, %v153
  %v162 = vmul.f32 %v91, %v153
  %v163 = vmul.f32 %v92, %v153
  %v164 = vmul.f32 %v93, %v153
  %v165 = vmul.f32 %v94, %v153
  %v166 = vmul.f32 %v95, %v153
  %v167 = vmul.f32 %v96, %v153
  %v168 = vmul.f32 %v97, %v153
  %v169 = vmul.f32 %v98, %v153
  %v170 = vmul.f32 %v99, %v153
  %v171 = vmul.f32 %v100, %v153
  %v172 = vmul.f32 %v101, %v153
  %v173 = vmul.f32 %v102, %v153
  %v174 = vmul.f32 %v103, %v153
  %v175 = vmul.f32 %v104, %v153
  %v176 = vmul.f32 %v105, %v153
  %v177 = vmul.f32 %v106, %v153
  %v178 = vmul.f32 %v107, %v153
  %v179 = vmul.f32 %v108, %v153
  %v180 = vmul.f32 %v109, %v153
  %v181 = vmul.f32 %v110, %v153
  %v182 = vmul.f32 %v111, %v153
  %v183 = vmul.f32 %v112, %v153
  %v184 = vmul.f32 %v113, %v153
  %v185 = vmul.f32 %v114, %v153
  %v186 = vmul.f32 %v115, %v153
  %v187 = vmul.f32 %v116, %v153
  %v188 = vmul.f32 %v117, %v153
  %v189 = vmul.f32 %v118, %v153
  %v190 = vmul.f32 %v119, %v153
  %v191 = vmul.f32 %v120, %v153
  %v192 = vmul.f32 %v121, %v153
  %v193 = vmul.f32 %v122, %v153
  %v194 = vmul.f32 %v123, %v153
  %v195 = vmul.f32 %v124, %v153
  %v196 = vmul.f32 %v125, %v153
  %v197 = vmul.f32 %v126, %v153
  %v198 = vmul.f32 %v127, %v153
  %v199 = vmul.f32 %v128, %v153
  %v200 = vmul.f32 %v129, %v153
  %v201 = vmul.f32 %v130, %v153
  %v202 = vmul.f32 %v131, %v153
  %v203 = vmul.f32 %v132, %v153
  %v204 = vmul.f32 %v133, %v153
  %v205 = vmul.f32 %v134, %v153
  %v206 = vmul.f32 %v135, %v153
  %v207 = vmul.f32 %v136, %v153
  %v208 = vmul.f32 %v137, %v153
  %v209 = vmul.f32 %v138, %v153
  %v210 = vmul.f32 %v139, %v153
  %v211 = vmul.f32 %v140, %v153
  %v212 = vmul.f32 %v141, %v153
  %v213 = vmul.f32 %v142, %v153
  %v214 = vmul.f32 %v143, %v153
  %v215 = vmul.f32 %v144, %v153
  %v216 = vmul.f32 %v145, %v153
  %v217 = vmul.f32 %v146, %v153
  %v218 = vmul.f32 %v147, %v153
  %v219 = vld [vmem:[%s2] sm:$0x1]
  %v221 = vlaneseq
  %v222 = vshrl.u32 %v221, 7
  %v223 = vsub.s32 0, %v222
  %v224 = vrot.slane %v219, %v223
  %v226 = vadd.f32 %v155, %v224
  %v227 = vadd.f32 %v156, %v224
  %v228 = vadd.f32 %v157, %v224
  %v229 = vadd.f32 %v158, %v224
  %v230 = vadd.f32 %v159, %v224
  %v231 = vadd.f32 %v160, %v224
  %v232 = vadd.f32 %v161, %v224
  %v233 = vadd.f32 %v162, %v224
  %v234 = vadd.f32 %v163, %v224
  %v235 = vadd.f32 %v164, %v224
  %v236 = vadd.f32 %v165, %v224
  %v237 = vadd.f32 %v166, %v224
  %v238 = vadd.f32 %v167, %v224
  %v239 = vadd.f32 %v168, %v224
  %v240 = vadd.f32 %v169, %v224
  %v241 = vadd.f32 %v170, %v224
  %v242 = vadd.f32 %v171, %v224
  %v243 = vadd.f32 %v172, %v224
  %v244 = vadd.f32 %v173, %v224
  %v245 = vadd.f32 %v174, %v224
  %v246 = vadd.f32 %v175, %v224
  %v247 = vadd.f32 %v176, %v224
  %v248 = vadd.f32 %v177, %v224
  %v249 = vadd.f32 %v178, %v224
  %v250 = vadd.f32 %v179, %v224
  %v251 = vadd.f32 %v180, %v224
  %v252 = vadd.f32 %v181, %v224
  %v253 = vadd.f32 %v182, %v224
  %v254 = vadd.f32 %v183, %v224
  %v255 = vadd.f32 %v184, %v224
  %v256 = vadd.f32 %v185, %v224
  %v257 = vadd.f32 %v186, %v224
  %v258 = vadd.f32 %v187, %v224
  %v259 = vadd.f32 %v188, %v224
  %v260 = vadd.f32 %v189, %v224
  %v261 = vadd.f32 %v190, %v224
  %v262 = vadd.f32 %v191, %v224
  %v263 = vadd.f32 %v192, %v224
  %v264 = vadd.f32 %v193, %v224
  %v265 = vadd.f32 %v194, %v224
  %v266 = vadd.f32 %v195, %v224
  %v267 = vadd.f32 %v196, %v224
  %v268 = vadd.f32 %v197, %v224
  %v269 = vadd.f32 %v198, %v224
  %v270 = vadd.f32 %v199, %v224
  %v271 = vadd.f32 %v200, %v224
  %v272 = vadd.f32 %v201, %v224
  %v273 = vadd.f32 %v202, %v224
  %v274 = vadd.f32 %v203, %v224
  %v275 = vadd.f32 %v204, %v224
  %v276 = vadd.f32 %v205, %v224
  %v277 = vadd.f32 %v206, %v224
  %v278 = vadd.f32 %v207, %v224
  %v279 = vadd.f32 %v208, %v224
  %v280 = vadd.f32 %v209, %v224
  %v281 = vadd.f32 %v210, %v224
  %v282 = vadd.f32 %v211, %v224
  %v283 = vadd.f32 %v212, %v224
  %v284 = vadd.f32 %v213, %v224
  %v285 = vadd.f32 %v214, %v224
  %v286 = vadd.f32 %v215, %v224
  %v287 = vadd.f32 %v216, %v224
  %v288 = vadd.f32 %v217, %v224
  %v289 = vadd.f32 %v218, %v224
  %vm290 = vcmp.ge.f32.partialorder %v226, 0.0
  %vm291 = vcmp.ge.f32.partialorder %v227, 0.0
  %vm292 = vcmp.ge.f32.partialorder %v228, 0.0
  %vm293 = vcmp.ge.f32.partialorder %v229, 0.0
  %vm294 = vcmp.ge.f32.partialorder %v230, 0.0
  %vm295 = vcmp.ge.f32.partialorder %v231, 0.0
  %vm296 = vcmp.ge.f32.partialorder %v232, 0.0
  %vm297 = vcmp.ge.f32.partialorder %v233, 0.0
  %vm298 = vcmp.ge.f32.partialorder %v234, 0.0
  %vm299 = vcmp.ge.f32.partialorder %v235, 0.0
  %vm300 = vcmp.ge.f32.partialorder %v236, 0.0
  %vm301 = vcmp.ge.f32.partialorder %v237, 0.0
  %vm302 = vcmp.ge.f32.partialorder %v238, 0.0
  %vm303 = vcmp.ge.f32.partialorder %v239, 0.0
  %vm304 = vcmp.ge.f32.partialorder %v240, 0.0
  %vm305 = vcmp.ge.f32.partialorder %v241, 0.0
  %vm306 = vcmp.ge.f32.partialorder %v242, 0.0
  %vm307 = vcmp.ge.f32.partialorder %v243, 0.0
  %vm308 = vcmp.ge.f32.partialorder %v244, 0.0
  %vm309 = vcmp.ge.f32.partialorder %v245, 0.0
  %vm310 = vcmp.ge.f32.partialorder %v246, 0.0
  %vm311 = vcmp.ge.f32.partialorder %v247, 0.0
  %vm312 = vcmp.ge.f32.partialorder %v248, 0.0
  %vm313 = vcmp.ge.f32.partialorder %v249, 0.0
  %vm314 = vcmp.ge.f32.partialorder %v250, 0.0
  %vm315 = vcmp.ge.f32.partialorder %v251, 0.0
  %vm316 = vcmp.ge.f32.partialorder %v252, 0.0
  %vm317 = vcmp.ge.f32.partialorder %v253, 0.0
  %vm318 = vcmp.ge.f32.partialorder %v254, 0.0
  %vm319 = vcmp.ge.f32.partialorder %v255, 0.0
  %vm320 = vcmp.ge.f32.partialorder %v256, 0.0
  %vm321 = vcmp.ge.f32.partialorder %v257, 0.0
  %vm322 = vcmp.ge.f32.partialorder %v258, 0.0
  %vm323 = vcmp.ge.f32.partialorder %v259, 0.0
  %vm324 = vcmp.ge.f32.partialorder %v260, 0.0
  %vm325 = vcmp.ge.f32.partialorder %v261, 0.0
  %vm326 = vcmp.ge.f32.partialorder %v262, 0.0
  %vm327 = vcmp.ge.f32.partialorder %v263, 0.0
  %vm328 = vcmp.ge.f32.partialorder %v264, 0.0
  %vm329 = vcmp.ge.f32.partialorder %v265, 0.0
  %vm330 = vcmp.ge.f32.partialorder %v266, 0.0
  %vm331 = vcmp.ge.f32.partialorder %v267, 0.0
  %vm332 = vcmp.ge.f32.partialorder %v268, 0.0
  %vm333 = vcmp.ge.f32.partialorder %v269, 0.0
  %vm334 = vcmp.ge.f32.partialorder %v270, 0.0
  %vm335 = vcmp.ge.f32.partialorder %v271, 0.0
  %vm336 = vcmp.ge.f32.partialorder %v272, 0.0
  %vm337 = vcmp.ge.f32.partialorder %v273, 0.0
  %vm338 = vcmp.ge.f32.partialorder %v274, 0.0
  %vm339 = vcmp.ge.f32.partialorder %v275, 0.0
  %vm340 = vcmp.ge.f32.partialorder %v276, 0.0
  %vm341 = vcmp.ge.f32.partialorder %v277, 0.0
  %vm342 = vcmp.ge.f32.partialorder %v278, 0.0
  %vm343 = vcmp.ge.f32.partialorder %v279, 0.0
  %vm344 = vcmp.ge.f32.partialorder %v280, 0.0
  %vm345 = vcmp.ge.f32.partialorder %v281, 0.0
  %vm346 = vcmp.ge.f32.partialorder %v282, 0.0
  %vm347 = vcmp.ge.f32.partialorder %v283, 0.0
  %vm348 = vcmp.ge.f32.partialorder %v284, 0.0
  %vm349 = vcmp.ge.f32.partialorder %v285, 0.0
  %vm350 = vcmp.ge.f32.partialorder %v286, 0.0
  %vm351 = vcmp.ge.f32.partialorder %v287, 0.0
  %vm352 = vcmp.ge.f32.partialorder %v288, 0.0
  %vm353 = vcmp.ge.f32.partialorder %v289, 0.0
  %v354 = vmul.f32 %v226, 0.2
  %v355 = vmul.f32 %v227, 0.2
  %v356 = vmul.f32 %v228, 0.2
  %v357 = vmul.f32 %v229, 0.2
  %v358 = vmul.f32 %v230, 0.2
  %v359 = vmul.f32 %v231, 0.2
  %v360 = vmul.f32 %v232, 0.2
  %v361 = vmul.f32 %v233, 0.2
  %v362 = vmul.f32 %v234, 0.2
  %v363 = vmul.f32 %v235, 0.2
  %v364 = vmul.f32 %v236, 0.2
  %v365 = vmul.f32 %v237, 0.2
  %v366 = vmul.f32 %v238, 0.2
  %v367 = vmul.f32 %v239, 0.2
  %v368 = vmul.f32 %v240, 0.2
  %v369 = vmul.f32 %v241, 0.2
  %v370 = vmul.f32 %v242, 0.2
  %v371 = vmul.f32 %v243, 0.2
  %v372 = vmul.f32 %v244, 0.2
  %v373 = vmul.f32 %v245, 0.2
  %v374 = vmul.f32 %v246, 0.2
  %v375 = vmul.f32 %v247, 0.2
  %v376 = vmul.f32 %v248, 0.2
  %v377 = vmul.f32 %v249, 0.2
  %v378 = vmul.f32 %v250, 0.2
  %v379 = vmul.f32 %v251, 0.2
  %v380 = vmul.f32 %v252, 0.2
  %v381 = vmul.f32 %v253, 0.2
  %v382 = vmul.f32 %v254, 0.2
  %v383 = vmul.f32 %v255, 0.2
  %v384 = vmul.f32 %v256, 0.2
  %v385 = vmul.f32 %v257, 0.2
  %v386 = vmul.f32 %v258, 0.2
  %v387 = vmul.f32 %v259, 0.2
  %v388 = vmul.f32 %v260, 0.2
  %v389 = vmul.f32 %v261, 0.2
  %v390 = vmul.f32 %v262, 0.2
  %v391 = vmul.f32 %v263, 0.2
  %v392 = vmul.f32 %v264, 0.2
  %v393 = vmul.f32 %v265, 0.2
  %v394 = vmul.f32 %v266, 0.2
  %v395 = vmul.f32 %v267, 0.2
  %v396 = vmul.f32 %v268, 0.2
  %v397 = vmul.f32 %v269, 0.2
  %v398 = vmul.f32 %v270, 0.2
  %v399 = vmul.f32 %v271, 0.2
  %v400 = vmul.f32 %v272, 0.2
  %v401 = vmul.f32 %v273, 0.2
  %v402 = vmul.f32 %v274, 0.2
  %v403 = vmul.f32 %v275, 0.2
  %v404 = vmul.f32 %v276, 0.2
  %v405 = vmul.f32 %v277, 0.2
  %v406 = vmul.f32 %v278, 0.2
  %v407 = vmul.f32 %v279, 0.2
  %v408 = vmul.f32 %v280, 0.2
  %v409 = vmul.f32 %v281, 0.2
  %v410 = vmul.f32 %v282, 0.2
  %v411 = vmul.f32 %v283, 0.2
  %v412 = vmul.f32 %v284, 0.2
  %v413 = vmul.f32 %v285, 0.2
  %v414 = vmul.f32 %v286, 0.2
  %v415 = vmul.f32 %v287, 0.2
  %v416 = vmul.f32 %v288, 0.2
  %v417 = vmul.f32 %v289, 0.2
  %v418 = vsel %vm290, %v226, %v354
  %v419 = vsel %vm291, %v227, %v355
  %v420 = vsel %vm292, %v228, %v356
  %v421 = vsel %vm293, %v229, %v357
  %v422 = vsel %vm294, %v230, %v358
  %v423 = vsel %vm295, %v231, %v359
  %v424 = vsel %vm296, %v232, %v360
  %v425 = vsel %vm297, %v233, %v361
  %v426 = vsel %vm298, %v234, %v362
  %v427 = vsel %vm299, %v235, %v363
  %v428 = vsel %vm300, %v236, %v364
  %v429 = vsel %vm301, %v237, %v365
  %v430 = vsel %vm302, %v238, %v366
  %v431 = vsel %vm303, %v239, %v367
  %v432 = vsel %vm304, %v240, %v368
  %v433 = vsel %vm305, %v241, %v369
  %v434 = vsel %vm306, %v242, %v370
  %v435 = vsel %vm307, %v243, %v371
  %v436 = vsel %vm308, %v244, %v372
  %v437 = vsel %vm309, %v245, %v373
  %v438 = vsel %vm310, %v246, %v374
  %v439 = vsel %vm311, %v247, %v375
  %v440 = vsel %vm312, %v248, %v376
  %v441 = vsel %vm313, %v249, %v377
  %v442 = vsel %vm314, %v250, %v378
  %v443 = vsel %vm315, %v251, %v379
  %v444 = vsel %vm316, %v252, %v380
  %v445 = vsel %vm317, %v253, %v381
  %v446 = vsel %vm318, %v254, %v382
  %v447 = vsel %vm319, %v255, %v383
  %v448 = vsel %vm320, %v256, %v384
  %v449 = vsel %vm321, %v257, %v385
  %v450 = vsel %vm322, %v258, %v386
  %v451 = vsel %vm323, %v259, %v387
  %v452 = vsel %vm324, %v260, %v388
  %v453 = vsel %vm325, %v261, %v389
  %v454 = vsel %vm326, %v262, %v390
  %v455 = vsel %vm327, %v263, %v391
  %v456 = vsel %vm328, %v264, %v392
  %v457 = vsel %vm329, %v265, %v393
  %v458 = vsel %vm330, %v266, %v394
  %v459 = vsel %vm331, %v267, %v395
  %v460 = vsel %vm332, %v268, %v396
  %v461 = vsel %vm333, %v269, %v397
  %v462 = vsel %vm334, %v270, %v398
  %v463 = vsel %vm335, %v271, %v399
  %v464 = vsel %vm336, %v272, %v400
  %v465 = vsel %vm337, %v273, %v401
  %v466 = vsel %vm338, %v274, %v402
  %v467 = vsel %vm339, %v275, %v403
  %v468 = vsel %vm340, %v276, %v404
  %v469 = vsel %vm341, %v277, %v405
  %v470 = vsel %vm342, %v278, %v406
  %v471 = vsel %vm343, %v279, %v407
  %v472 = vsel %vm344, %v280, %v408
  %v473 = vsel %vm345, %v281, %v409
  %v474 = vsel %vm346, %v282, %v410
  %v475 = vsel %vm347, %v283, %v411
  %v476 = vsel %vm348, %v284, %v412
  %v477 = vsel %vm349, %v285, %v413
  %v478 = vsel %vm350, %v286, %v414
  %v479 = vsel %vm351, %v287, %v415
  %v480 = vsel %vm352, %v288, %v416
  %v481 = vsel %vm353, %v289, %v417
  %v482 = vpack.c.bf16 %v419, %v418
  %v483 = vpack.c.bf16 %v421, %v420
  %v484 = vpack.c.bf16 %v423, %v422
  %v485 = vpack.c.bf16 %v425, %v424
  %v486 = vpack.c.bf16 %v427, %v426
  %v487 = vpack.c.bf16 %v429, %v428
  %v488 = vpack.c.bf16 %v431, %v430
  %v489 = vpack.c.bf16 %v433, %v432
  %v490 = vpack.c.bf16 %v435, %v434
  %v491 = vpack.c.bf16 %v437, %v436
  %v492 = vpack.c.bf16 %v439, %v438
  %v493 = vpack.c.bf16 %v441, %v440
  %v494 = vpack.c.bf16 %v443, %v442
  %v495 = vpack.c.bf16 %v445, %v444
  %v496 = vpack.c.bf16 %v447, %v446
  %v497 = vpack.c.bf16 %v449, %v448
  %v498 = vpack.c.bf16 %v451, %v450
  %v499 = vpack.c.bf16 %v453, %v452
  %v500 = vpack.c.bf16 %v455, %v454
  %v501 = vpack.c.bf16 %v457, %v456
  %v502 = vpack.c.bf16 %v459, %v458
  %v503 = vpack.c.bf16 %v461, %v460
  %v504 = vpack.c.bf16 %v463, %v462
  %v505 = vpack.c.bf16 %v465, %v464
  %v506 = vpack.c.bf16 %v467, %v466
  %v507 = vpack.c.bf16 %v469, %v468
  %v508 = vpack.c.bf16 %v471, %v470
  %v509 = vpack.c.bf16 %v473, %v472
  %v510 = vpack.c.bf16 %v475, %v474
  %v511 = vpack.c.bf16 %v477, %v476
  %v512 = vpack.c.bf16 %v479, %v478
  %v513 = vpack.c.bf16 %v481, %v480
  %v514 = vld [vmem:[%s3] sm:$0xff]
  %v515 = vld [vmem:[%s3 + $0x8] sm:$0xff]
  %v516 = vld [vmem:[%s3 + $0x10] sm:$0xff]
  %v517 = vld [vmem:[%s3 + $0x18] sm:$0xff]
  %v518 = vld [vmem:[%s3 + $0x20] sm:$0xff]
  %v519 = vld [vmem:[%s3 + $0x28] sm:$0xff]
  %v520 = vld [vmem:[%s3 + $0x30] sm:$0xff]
  %v521 = vld [vmem:[%s3 + $0x38] sm:$0xff]
  %v522 = vld [vmem:[%s3 + $0x40] sm:$0xff]
  %v523 = vld [vmem:[%s3 + $0x48] sm:$0xff]
  %v524 = vld [vmem:[%s3 + $0x50] sm:$0xff]
  %v525 = vld [vmem:[%s3 + $0x58] sm:$0xff]
  %v526 = vld [vmem:[%s3 + $0x60] sm:$0xff]
  %v527 = vld [vmem:[%s3 + $0x68] sm:$0xff]
  %v528 = vld [vmem:[%s3 + $0x70] sm:$0xff]
  %v529 = vld [vmem:[%s3 + $0x78] sm:$0xff]
  %v546 = vunpack.c.l.b16 %v514
  %v547 = vunpack.c.h.b16 %v514
  %v548 = vunpack.c.l.b16 %v515
  %v549 = vunpack.c.h.b16 %v515
  %v550 = vunpack.c.l.b16 %v516
  %v551 = vunpack.c.h.b16 %v516
  %v552 = vunpack.c.l.b16 %v517
  %v553 = vunpack.c.h.b16 %v517
  %v554 = vunpack.c.l.b16 %v518
  %v555 = vunpack.c.h.b16 %v518
  %v556 = vunpack.c.l.b16 %v519
  %v557 = vunpack.c.h.b16 %v519
  %v558 = vunpack.c.l.b16 %v520
  %v559 = vunpack.c.h.b16 %v520
  %v560 = vunpack.c.l.b16 %v521
  %v561 = vunpack.c.h.b16 %v521
  %v562 = vunpack.c.l.b16 %v522
  %v563 = vunpack.c.h.b16 %v522
  %v564 = vunpack.c.l.b16 %v523
  %v565 = vunpack.c.h.b16 %v523
  %v566 = vunpack.c.l.b16 %v524
  %v567 = vunpack.c.h.b16 %v524
  %v568 = vunpack.c.l.b16 %v525
  %v569 = vunpack.c.h.b16 %v525
  %v570 = vunpack.c.l.b16 %v526
  %v571 = vunpack.c.h.b16 %v526
  %v572 = vunpack.c.l.b16 %v527
  %v573 = vunpack.c.h.b16 %v527
  %v574 = vunpack.c.l.b16 %v528
  %v575 = vunpack.c.h.b16 %v528
  %v576 = vunpack.c.l.b16 %v529
  %v577 = vunpack.c.h.b16 %v529
  %v578 = vpack.c.b16 %v548, %v546
  %v579 = vpack.c.b16 %v549, %v547
  %v580 = vpack.c.b16 %v552, %v550
  %v581 = vpack.c.b16 %v553, %v551
  %v582 = vpack.c.b16 %v556, %v554
  %v583 = vpack.c.b16 %v557, %v555
  %v584 = vpack.c.b16 %v560, %v558
  %v585 = vpack.c.b16 %v561, %v559
  %v586 = vpack.c.b16 %v564, %v562
  %v587 = vpack.c.b16 %v565, %v563
  %v588 = vpack.c.b16 %v568, %v566
  %v589 = vpack.c.b16 %v569, %v567
  %v590 = vpack.c.b16 %v572, %v570
  %v591 = vpack.c.b16 %v573, %v571
  %v592 = vpack.c.b16 %v576, %v574
  %v593 = vpack.c.b16 %v577, %v575
  %610 = vmatprep.subr.bf16.mxu0 %v579
  %611 = vmatpush1.bf16.msra.mxu0 %v578
  %612 = vmatprep.subr.bf16.mxu0 %v581
  %613 = vmatpush1.bf16.msra.mxu0 %v580
  %614 = vmatprep.subr.bf16.mxu0 %v583
  %615 = vmatpush1.bf16.msra.mxu0 %v582
  %616 = vmatprep.subr.bf16.mxu0 %v585
  %617 = vmatpush1.bf16.msra.mxu0 %v584
  %618 = vmatprep.subr.bf16.mxu0 %v587
  %619 = vmatpush1.bf16.msra.mxu0 %v586
  %620 = vmatprep.subr.bf16.mxu0 %v589
  %621 = vmatpush1.bf16.msra.mxu0 %v588
  %622 = vmatprep.subr.bf16.mxu0 %v591
  %623 = vmatpush1.bf16.msra.mxu0 %v590
  %624 = vmatprep.subr.bf16.mxu0 %v593
  %625 = vmatpush1.bf16.msra.mxu0 %v592
  %626 = vmatprep.subr.bf16.mxu0 0
  %627 = vmatpush1.bf16.msra.mxu0 0
  %628 = vmatprep.subr.bf16.mxu0 0
  %629 = vmatpush1.bf16.msra.mxu0 0
  %630 = vmatprep.subr.bf16.mxu0 0
  %631 = vmatpush1.bf16.msra.mxu0 0
  %632 = vmatprep.subr.bf16.mxu0 0
  %633 = vmatpush1.bf16.msra.mxu0 0
  %634 = vmatprep.subr.bf16.mxu0 0
  %635 = vmatpush1.bf16.msra.mxu0 0
  %636 = vmatprep.subr.bf16.mxu0 0
  %637 = vmatpush1.bf16.msra.mxu0 0
  %638 = vmatprep.subr.bf16.mxu0 0
  %639 = vmatpush1.bf16.msra.mxu0 0
  %640 = vmatprep.subr.bf16.mxu0 0
  %641 = vmatpush1.bf16.msra.mxu0 0
  %642 = vmatprep.mubr.bf16.mxu0 0
  %643 = vmatmul.mubr.bf16.gmra.mrb[0].mxu0 %v482
  %v644 = vpop.f32.mrb[0].mxu0
  %v645 = vadd.f32 0.0, %v644
  %v646 = vpop.f32.mrb[0].mxu0
  %v647 = vadd.f32 0.0, %v646
  %v648 = vpop.f32.mrb[0].mxu0
  %v649 = vadd.f32 0.0, %v648
  %v650 = vpop.f32.mrb[0].mxu0
  %v651 = vadd.f32 0.0, %v650
  %652 = vmatprep.mubr.bf16.mxu0 0
  %653 = vmatmul.mubr.bf16.gmra.mrb[0].mxu0 %v483
  %v654 = vpop.f32.mrb[0].mxu0
  %v655 = vadd.f32 0.0, %v654
  %v656 = vpop.f32.mrb[0].mxu0
  %v657 = vadd.f32 0.0, %v656
  %v658 = vpop.f32.mrb[0].mxu0
  %v659 = vadd.f32 0.0, %v658
  %v660 = vpop.f32.mrb[0].mxu0
  %v661 = vadd.f32 0.0, %v660
  %662 = vmatprep.mubr.bf16.mxu0 0
  %663 = vmatmul.mubr.bf16.gmra.mrb[0].mxu0 %v484
  %v664 = vpop.f32.mrb[0].mxu0
  %v665 = vadd.f32 0.0, %v664
  %v666 = vpop.f32.mrb[0].mxu0
  %v667 = vadd.f32 0.0, %v666
  %v668 = vpop.f32.mrb[0].mxu0
  %v669 = vadd.f32 0.0, %v668
  %v670 = vpop.f32.mrb[0].mxu0
  %v671 = vadd.f32 0.0, %v670
  %672 = vmatprep.mubr.bf16.mxu0 0
  %673 = vmatmul.mubr.bf16.gmra.mrb[0].mxu0 %v485
  %v674 = vpop.f32.mrb[0].mxu0
  %v675 = vadd.f32 0.0, %v674
  %v676 = vpop.f32.mrb[0].mxu0
  %v677 = vadd.f32 0.0, %v676
  %v678 = vpop.f32.mrb[0].mxu0
  %v679 = vadd.f32 0.0, %v678
  %v680 = vpop.f32.mrb[0].mxu0
  %v681 = vadd.f32 0.0, %v680
  %682 = vmatprep.mubr.bf16.mxu0 0
  %683 = vmatmul.mubr.bf16.gmra.mrb[0].mxu0 %v486
  %v684 = vpop.f32.mrb[0].mxu0
  %v685 = vadd.f32 0.0, %v684
  %v686 = vpop.f32.mrb[0].mxu0
  %v687 = vadd.f32 0.0, %v686
  %v688 = vpop.f32.mrb[0].mxu0
  %v689 = vadd.f32 0.0, %v688
  %v690 = vpop.f32.mrb[0].mxu0
  %v691 = vadd.f32 0.0, %v690
  %692 = vmatprep.mubr.bf16.mxu0 0
  %693 = vmatmul.mubr.bf16.gmra.mrb[0].mxu0 %v487
  %v694 = vpop.f32.mrb[0].mxu0
  %v695 = vadd.f32 0.0, %v694
  %v696 = vpop.f32.mrb[0].mxu0
  %v697 = vadd.f32 0.0, %v696
  %v698 = vpop.f32.mrb[0].mxu0
  %v699 = vadd.f32 0.0, %v698
  %v700 = vpop.f32.mrb[0].mxu0
  %v701 = vadd.f32 0.0, %v700
  %702 = vmatprep.mubr.bf16.mxu0 0
  %703 = vmatmul.mubr.bf16.gmra.mrb[0].mxu0 %v488
  %v704 = vpop.f32.mrb[0].mxu0
  %v705 = vadd.f32 0.0, %v704
  %v706 = vpop.f32.mrb[0].mxu0
  %v707 = vadd.f32 0.0, %v706
  %v708 = vpop.f32.mrb[0].mxu0
  %v709 = vadd.f32 0.0, %v708
  %v710 = vpop.f32.mrb[0].mxu0
  %v711 = vadd.f32 0.0, %v710
  %712 = vmatprep.mubr.bf16.mxu0 0
  %713 = vmatmul.mubr.bf16.gmra.mrb[0].mxu0 %v489
  %v714 = vpop.f32.mrb[0].mxu0
  %v715 = vadd.f32 0.0, %v714
  %v716 = vpop.f32.mrb[0].mxu0
  %v717 = vadd.f32 0.0, %v716
  %v718 = vpop.f32.mrb[0].mxu0
  %v719 = vadd.f32 0.0, %v718
  %v720 = vpop.f32.mrb[0].mxu0
  %v721 = vadd.f32 0.0, %v720
  %722 = vmatprep.mubr.bf16.mxu0 0
  %723 = vmatmul.mubr.bf16.gmra.mrb[0].mxu0 %v490
  %v724 = vpop.f32.mrb[0].mxu0
  %v725 = vadd.f32 0.0, %v724
  %v726 = vpop.f32.mrb[0].mxu0
  %v727 = vadd.f32 0.0, %v726
  %v728 = vpop.f32.mrb[0].mxu0
  %v729 = vadd.f32 0.0, %v728
  %v730 = vpop.f32.mrb[0].mxu0
  %v731 = vadd.f32 0.0, %v730
  %732 = vmatprep.mubr.bf16.mxu0 0
  %733 = vmatmul.mubr.bf16.gmra.mrb[0].mxu0 %v491
  %v734 = vpop.f32.mrb[0].mxu0
  %v735 = vadd.f32 0.0, %v734
  %v736 = vpop.f32.mrb[0].mxu0
  %v737 = vadd.f32 0.0, %v736
  %v738 = vpop.f32.mrb[0].mxu0
  %v739 = vadd.f32 0.0, %v738
  %v740 = vpop.f32.mrb[0].mxu0
  %v741 = vadd.f32 0.0, %v740
  %742 = vmatprep.mubr.bf16.mxu0 0
  %743 = vmatmul.mubr.bf16.gmra.mrb[0].mxu0 %v492
  %v744 = vpop.f32.mrb[0].mxu0
  %v745 = vadd.f32 0.0, %v744
  %v746 = vpop.f32.mrb[0].mxu0
  %v747 = vadd.f32 0.0, %v746
  %v748 = vpop.f32.mrb[0].mxu0
  %v749 = vadd.f32 0.0, %v748
  %v750 = vpop.f32.mrb[0].mxu0
  %v751 = vadd.f32 0.0, %v750
  %752 = vmatprep.mubr.bf16.mxu0 0
  %753 = vmatmul.mubr.bf16.gmra.mrb[0].mxu0 %v493
  %v754 = vpop.f32.mrb[0].mxu0
  %v755 = vadd.f32 0.0, %v754
  %v756 = vpop.f32.mrb[0].mxu0
  %v757 = vadd.f32 0.0, %v756
  %v758 = vpop.f32.mrb[0].mxu0
  %v759 = vadd.f32 0.0, %v758
  %v760 = vpop.f32.mrb[0].mxu0
  %v761 = vadd.f32 0.0, %v760
  %762 = vmatprep.mubr.bf16.mxu0 0
  %763 = vmatmul.mubr.bf16.gmra.mrb[0].mxu0 %v494
  %v764 = vpop.f32.mrb[0].mxu0
  %v765 = vadd.f32 0.0, %v764
  %v766 = vpop.f32.mrb[0].mxu0
  %v767 = vadd.f32 0.0, %v766
  %v768 = vpop.f32.mrb[0].mxu0
  %v769 = vadd.f32 0.0, %v768
  %v770 = vpop.f32.mrb[0].mxu0
  %v771 = vadd.f32 0.0, %v770
  %772 = vmatprep.mubr.bf16.mxu0 0
  %773 = vmatmul.mubr.bf16.gmra.mrb[0].mxu0 %v495
  %v774 = vpop.f32.mrb[0].mxu0
  %v775 = vadd.f32 0.0, %v774
  %v776 = vpop.f32.mrb[0].mxu0
  %v777 = vadd.f32 0.0, %v776
  %v778 = vpop.f32.mrb[0].mxu0
  %v779 = vadd.f32 0.0, %v778
  %v780 = vpop.f32.mrb[0].mxu0
  %v781 = vadd.f32 0.0, %v780
  %782 = vmatprep.mubr.bf16.mxu0 0
  %783 = vmatmul.mubr.bf16.gmra.mrb[0].mxu0 %v496
  %v784 = vpop.f32.mrb[0].mxu0
  %v785 = vadd.f32 0.0, %v784
  %v786 = vpop.f32.mrb[0].mxu0
  %v787 = vadd.f32 0.0, %v786
  %v788 = vpop.f32.mrb[0].mxu0
  %v789 = vadd.f32 0.0, %v788
  %v790 = vpop.f32.mrb[0].mxu0
  %v791 = vadd.f32 0.0, %v790
  %792 = vmatprep.mubr.bf16.mxu0 0
  %793 = vmatmul.mubr.bf16.gmra.mrb[0].mxu0 %v497
  %v794 = vpop.f32.mrb[0].mxu0
  %v795 = vadd.f32 0.0, %v794
  %v796 = vpop.f32.mrb[0].mxu0
  %v797 = vadd.f32 0.0, %v796
  %v798 = vpop.f32.mrb[0].mxu0
  %v799 = vadd.f32 0.0, %v798
  %v800 = vpop.f32.mrb[0].mxu0
  %v801 = vadd.f32 0.0, %v800
  %802 = vmatprep.mubr.bf16.mxu0 0
  %803 = vmatmul.mubr.bf16.gmra.mrb[0].mxu0 %v498
  %v804 = vpop.f32.mrb[0].mxu0
  %v805 = vadd.f32 0.0, %v804
  %v806 = vpop.f32.mrb[0].mxu0
  %v807 = vadd.f32 0.0, %v806
  %v808 = vpop.f32.mrb[0].mxu0
  %v809 = vadd.f32 0.0, %v808
  %v810 = vpop.f32.mrb[0].mxu0
  %v811 = vadd.f32 0.0, %v810
  %812 = vmatprep.mubr.bf16.mxu0 0
  %813 = vmatmul.mubr.bf16.gmra.mrb[0].mxu0 %v499
  %v814 = vpop.f32.mrb[0].mxu0
  %v815 = vadd.f32 0.0, %v814
  %v816 = vpop.f32.mrb[0].mxu0
  %v817 = vadd.f32 0.0, %v816
  %v818 = vpop.f32.mrb[0].mxu0
  %v819 = vadd.f32 0.0, %v818
  %v820 = vpop.f32.mrb[0].mxu0
  %v821 = vadd.f32 0.0, %v820
  %822 = vmatprep.mubr.bf16.mxu0 0
  %823 = vmatmul.mubr.bf16.gmra.mrb[0].mxu0 %v500
  %v824 = vpop.f32.mrb[0].mxu0
  %v825 = vadd.f32 0.0, %v824
  %v826 = vpop.f32.mrb[0].mxu0
  %v827 = vadd.f32 0.0, %v826
  %v828 = vpop.f32.mrb[0].mxu0
  %v829 = vadd.f32 0.0, %v828
  %v830 = vpop.f32.mrb[0].mxu0
  %v831 = vadd.f32 0.0, %v830
  %832 = vmatprep.mubr.bf16.mxu0 0
  %833 = vmatmul.mubr.bf16.gmra.mrb[0].mxu0 %v501
  %v834 = vpop.f32.mrb[0].mxu0
  %v835 = vadd.f32 0.0, %v834
  %v836 = vpop.f32.mrb[0].mxu0
  %v837 = vadd.f32 0.0, %v836
  %v838 = vpop.f32.mrb[0].mxu0
  %v839 = vadd.f32 0.0, %v838
  %v840 = vpop.f32.mrb[0].mxu0
  %v841 = vadd.f32 0.0, %v840
  %842 = vmatprep.mubr.bf16.mxu0 0
  %843 = vmatmul.mubr.bf16.gmra.mrb[0].mxu0 %v502
  %v844 = vpop.f32.mrb[0].mxu0
  %v845 = vadd.f32 0.0, %v844
  %v846 = vpop.f32.mrb[0].mxu0
  %v847 = vadd.f32 0.0, %v846
  %v848 = vpop.f32.mrb[0].mxu0
  %v849 = vadd.f32 0.0, %v848
  %v850 = vpop.f32.mrb[0].mxu0
  %v851 = vadd.f32 0.0, %v850
  %852 = vmatprep.mubr.bf16.mxu0 0
  %853 = vmatmul.mubr.bf16.gmra.mrb[0].mxu0 %v503
  %v854 = vpop.f32.mrb[0].mxu0
  %v855 = vadd.f32 0.0, %v854
  %v856 = vpop.f32.mrb[0].mxu0
  %v857 = vadd.f32 0.0, %v856
  %v858 = vpop.f32.mrb[0].mxu0
  %v859 = vadd.f32 0.0, %v858
  %v860 = vpop.f32.mrb[0].mxu0
  %v861 = vadd.f32 0.0, %v860
  %862 = vmatprep.mubr.bf16.mxu0 0
  %863 = vmatmul.mubr.bf16.gmra.mrb[0].mxu0 %v504
  %v864 = vpop.f32.mrb[0].mxu0
  %v865 = vadd.f32 0.0, %v864
  %v866 = vpop.f32.mrb[0].mxu0
  %v867 = vadd.f32 0.0, %v866
  %v868 = vpop.f32.mrb[0].mxu0
  %v869 = vadd.f32 0.0, %v868
  %v870 = vpop.f32.mrb[0].mxu0
  %v871 = vadd.f32 0.0, %v870
  %872 = vmatprep.mubr.bf16.mxu0 0
  %873 = vmatmul.mubr.bf16.gmra.mrb[0].mxu0 %v505
  %v874 = vpop.f32.mrb[0].mxu0
  %v875 = vadd.f32 0.0, %v874
  %v876 = vpop.f32.mrb[0].mxu0
  %v877 = vadd.f32 0.0, %v876
  %v878 = vpop.f32.mrb[0].mxu0
  %v879 = vadd.f32 0.0, %v878
  %v880 = vpop.f32.mrb[0].mxu0
  %v881 = vadd.f32 0.0, %v880
  %882 = vmatprep.mubr.bf16.mxu0 0
  %883 = vmatmul.mubr.bf16.gmra.mrb[0].mxu0 %v506
  %v884 = vpop.f32.mrb[0].mxu0
  %v885 = vadd.f32 0.0, %v884
  %v886 = vpop.f32.mrb[0].mxu0
  %v887 = vadd.f32 0.0, %v886
  %v888 = vpop.f32.mrb[0].mxu0
  %v889 = vadd.f32 0.0, %v888
  %v890 = vpop.f32.mrb[0].mxu0
  %v891 = vadd.f32 0.0, %v890
  %892 = vmatprep.mubr.bf16.mxu0 0
  %893 = vmatmul.mubr.bf16.gmra.mrb[0].mxu0 %v507
  %v894 = vpop.f32.mrb[0].mxu0
  %v895 = vadd.f32 0.0, %v894
  %v896 = vpop.f32.mrb[0].mxu0
  %v897 = vadd.f32 0.0, %v896
  %v898 = vpop.f32.mrb[0].mxu0
  %v899 = vadd.f32 0.0, %v898
  %v900 = vpop.f32.mrb[0].mxu0
  %v901 = vadd.f32 0.0, %v900
  %902 = vmatprep.mubr.bf16.mxu0 0
  %903 = vmatmul.mubr.bf16.gmra.mrb[0].mxu0 %v508
  %v904 = vpop.f32.mrb[0].mxu0
  %v905 = vadd.f32 0.0, %v904
  %v906 = vpop.f32.mrb[0].mxu0
  %v907 = vadd.f32 0.0, %v906
  %v908 = vpop.f32.mrb[0].mxu0
  %v909 = vadd.f32 0.0, %v908
  %v910 = vpop.f32.mrb[0].mxu0
  %v911 = vadd.f32 0.0, %v910
  %912 = vmatprep.mubr.bf16.mxu0 0
  %913 = vmatmul.mubr.bf16.gmra.mrb[0].mxu0 %v509
  %v914 = vpop.f32.mrb[0].mxu0
  %v915 = vadd.f32 0.0, %v914
  %v916 = vpop.f32.mrb[0].mxu0
  %v917 = vadd.f32 0.0, %v916
  %v918 = vpop.f32.mrb[0].mxu0
  %v919 = vadd.f32 0.0, %v918
  %v920 = vpop.f32.mrb[0].mxu0
  %v921 = vadd.f32 0.0, %v920
  %922 = vmatprep.mubr.bf16.mxu0 0
  %923 = vmatmul.mubr.bf16.gmra.mrb[0].mxu0 %v510
  %v924 = vpop.f32.mrb[0].mxu0
  %v925 = vadd.f32 0.0, %v924
  %v926 = vpop.f32.mrb[0].mxu0
  %v927 = vadd.f32 0.0, %v926
  %v928 = vpop.f32.mrb[0].mxu0
  %v929 = vadd.f32 0.0, %v928
  %v930 = vpop.f32.mrb[0].mxu0
  %v931 = vadd.f32 0.0, %v930
  %932 = vmatprep.mubr.bf16.mxu0 0
  %933 = vmatmul.mubr.bf16.gmra.mrb[0].mxu0 %v511
  %v934 = vpop.f32.mrb[0].mxu0
  %v935 = vadd.f32 0.0, %v934
  %v936 = vpop.f32.mrb[0].mxu0
  %v937 = vadd.f32 0.0, %v936
  %v938 = vpop.f32.mrb[0].mxu0
  %v939 = vadd.f32 0.0, %v938
  %v940 = vpop.f32.mrb[0].mxu0
  %v941 = vadd.f32 0.0, %v940
  %942 = vmatprep.mubr.bf16.mxu0 0
  %943 = vmatmul.mubr.bf16.gmra.mrb[0].mxu0 %v512
  %v944 = vpop.f32.mrb[0].mxu0
  %v945 = vadd.f32 0.0, %v944
  %v946 = vpop.f32.mrb[0].mxu0
  %v947 = vadd.f32 0.0, %v946
  %v948 = vpop.f32.mrb[0].mxu0
  %v949 = vadd.f32 0.0, %v948
  %v950 = vpop.f32.mrb[0].mxu0
  %v951 = vadd.f32 0.0, %v950
  %952 = vmatprep.mubr.bf16.mxu0 0
  %953 = vmatmul.mubr.bf16.gmra.mrb[0].mxu0 %v513
  %v954 = vpop.f32.mrb[0].mxu0
  %v955 = vadd.f32 0.0, %v954
  %v956 = vpop.f32.mrb[0].mxu0
  %v957 = vadd.f32 0.0, %v956
  %v958 = vpop.f32.mrb[0].mxu0
  %v959 = vadd.f32 0.0, %v958
  %v960 = vpop.f32.mrb[0].mxu0
  %v961 = vadd.f32 0.0, %v960
  %962 = vdwg.mxu0
  %v963 = vpack.c.bf16 %v649, %v645
  %v964 = vpack.c.bf16 %v651, %v647
  %v965 = vpack.c.bf16 %v659, %v655
  %v966 = vpack.c.bf16 %v661, %v657
  %v967 = vpack.c.bf16 %v669, %v665
  %v968 = vpack.c.bf16 %v671, %v667
  %v969 = vpack.c.bf16 %v679, %v675
  %v970 = vpack.c.bf16 %v681, %v677
  %v971 = vpack.c.bf16 %v689, %v685
  %v972 = vpack.c.bf16 %v691, %v687
  %v973 = vpack.c.bf16 %v699, %v695
  %v974 = vpack.c.bf16 %v701, %v697
  %v975 = vpack.c.bf16 %v709, %v705
  %v976 = vpack.c.bf16 %v711, %v707
  %v977 = vpack.c.bf16 %v719, %v715
  %v978 = vpack.c.bf16 %v721, %v717
  %v979 = vpack.c.bf16 %v729, %v725
  %v980 = vpack.c.bf16 %v731, %v727
  %v981 = vpack.c.bf16 %v739, %v735
  %v982 = vpack.c.bf16 %v741, %v737
  %v983 = vpack.c.bf16 %v749, %v745
  %v984 = vpack.c.bf16 %v751, %v747
  %v985 = vpack.c.bf16 %v759, %v755
  %v986 = vpack.c.bf16 %v761, %v757
  %v987 = vpack.c.bf16 %v769, %v765
  %v988 = vpack.c.bf16 %v771, %v767
  %v989 = vpack.c.bf16 %v779, %v775
  %v990 = vpack.c.bf16 %v781, %v777
  %v991 = vpack.c.bf16 %v789, %v785
  %v992 = vpack.c.bf16 %v791, %v787
  %v993 = vpack.c.bf16 %v799, %v795
  %v994 = vpack.c.bf16 %v801, %v797
  %v995 = vpack.c.bf16 %v809, %v805
  %v996 = vpack.c.bf16 %v811, %v807
  %v997 = vpack.c.bf16 %v819, %v815
  %v998 = vpack.c.bf16 %v821, %v817
  %v999 = vpack.c.bf16 %v829, %v825
  %v1000 = vpack.c.bf16 %v831, %v827
  %v1001 = vpack.c.bf16 %v839, %v835
  %v1002 = vpack.c.bf16 %v841, %v837
  %v1003 = vpack.c.bf16 %v849, %v845
  %v1004 = vpack.c.bf16 %v851, %v847
  %v1005 = vpack.c.bf16 %v859, %v855
  %v1006 = vpack.c.bf16 %v861, %v857
  %v1007 = vpack.c.bf16 %v869, %v865
  %v1008 = vpack.c.bf16 %v871, %v867
  %v1009 = vpack.c.bf16 %v879, %v875
  %v1010 = vpack.c.bf16 %v881, %v877
  %v1011 = vpack.c.bf16 %v889, %v885
  %v1012 = vpack.c.bf16 %v891, %v887
  %v1013 = vpack.c.bf16 %v899, %v895
  %v1014 = vpack.c.bf16 %v901, %v897
  %v1015 = vpack.c.bf16 %v909, %v905
  %v1016 = vpack.c.bf16 %v911, %v907
  %v1017 = vpack.c.bf16 %v919, %v915
  %v1018 = vpack.c.bf16 %v921, %v917
  %v1019 = vpack.c.bf16 %v929, %v925
  %v1020 = vpack.c.bf16 %v931, %v927
  %v1021 = vpack.c.bf16 %v939, %v935
  %v1022 = vpack.c.bf16 %v941, %v937
  %v1023 = vpack.c.bf16 %v949, %v945
  %v1024 = vpack.c.bf16 %v951, %v947
  %v1025 = vpack.c.bf16 %v959, %v955
  %v1026 = vpack.c.bf16 %v961, %v957
  %v1091 = vunpack.c.l.b16 %v963
  %v1092 = vunpack.c.l.b16 %v964
  %v1093 = vunpack.c.h.b16 %v963
  %v1094 = vunpack.c.h.b16 %v964
  %v1095 = vunpack.c.l.b16 %v965
  %v1096 = vunpack.c.l.b16 %v966
  %v1097 = vunpack.c.h.b16 %v965
  %v1098 = vunpack.c.h.b16 %v966
  %v1099 = vunpack.c.l.b16 %v967
  %v1100 = vunpack.c.l.b16 %v968
  %v1101 = vunpack.c.h.b16 %v967
  %v1102 = vunpack.c.h.b16 %v968
  %v1103 = vunpack.c.l.b16 %v969
  %v1104 = vunpack.c.l.b16 %v970
  %v1105 = vunpack.c.h.b16 %v969
  %v1106 = vunpack.c.h.b16 %v970
  %v1107 = vunpack.c.l.b16 %v971
  %v1108 = vunpack.c.l.b16 %v972
  %v1109 = vunpack.c.h.b16 %v971
  %v1110 = vunpack.c.h.b16 %v972
  %v1111 = vunpack.c.l.b16 %v973
  %v1112 = vunpack.c.l.b16 %v974
  %v1113 = vunpack.c.h.b16 %v973
  %v1114 = vunpack.c.h.b16 %v974
  %v1115 = vunpack.c.l.b16 %v975
  %v1116 = vunpack.c.l.b16 %v976
  %v1117 = vunpack.c.h.b16 %v975
  %v1118 = vunpack.c.h.b16 %v976
  %v1119 = vunpack.c.l.b16 %v977
  %v1120 = vunpack.c.l.b16 %v978
  %v1121 = vunpack.c.h.b16 %v977
  %v1122 = vunpack.c.h.b16 %v978
  %v1123 = vunpack.c.l.b16 %v979
  %v1124 = vunpack.c.l.b16 %v980
  %v1125 = vunpack.c.h.b16 %v979
  %v1126 = vunpack.c.h.b16 %v980
  %v1127 = vunpack.c.l.b16 %v981
  %v1128 = vunpack.c.l.b16 %v982
  %v1129 = vunpack.c.h.b16 %v981
  %v1130 = vunpack.c.h.b16 %v982
  %v1131 = vunpack.c.l.b16 %v983
  %v1132 = vunpack.c.l.b16 %v984
  %v1133 = vunpack.c.h.b16 %v983
  %v1134 = vunpack.c.h.b16 %v984
  %v1135 = vunpack.c.l.b16 %v985
  %v1136 = vunpack.c.l.b16 %v986
  %v1137 = vunpack.c.h.b16 %v985
  %v1138 = vunpack.c.h.b16 %v986
  %v1139 = vunpack.c.l.b16 %v987
  %v1140 = vunpack.c.l.b16 %v988
  %v1141 = vunpack.c.h.b16 %v987
  %v1142 = vunpack.c.h.b16 %v988
  %v1143 = vunpack.c.l.b16 %v989
  %v1144 = vunpack.c.l.b16 %v990
  %v1145 = vunpack.c.h.b16 %v989
  %v1146 = vunpack.c.h.b16 %v990
  %v1147 = vunpack.c.l.b16 %v991
  %v1148 = vunpack.c.l.b16 %v992
  %v1149 = vunpack.c.h.b16 %v991
  %v1150 = vunpack.c.h.b16 %v992
  %v1151 = vunpack.c.l.b16 %v993
  %v1152 = vunpack.c.l.b16 %v994
  %v1153 = vunpack.c.h.b16 %v993
  %v1154 = vunpack.c.h.b16 %v994
  %v1155 = vunpack.c.l.b16 %v995
  %v1156 = vunpack.c.l.b16 %v996
  %v1157 = vunpack.c.h.b16 %v995
  %v1158 = vunpack.c.h.b16 %v996
  %v1159 = vunpack.c.l.b16 %v997
  %v1160 = vunpack.c.l.b16 %v998
  %v1161 = vunpack.c.h.b16 %v997
  %v1162 = vunpack.c.h.b16 %v998
  %v1163 = vunpack.c.l.b16 %v999
  %v1164 = vunpack.c.l.b16 %v1000
  %v1165 = vunpack.c.h.b16 %v999
  %v1166 = vunpack.c.h.b16 %v1000
  %v1167 = vunpack.c.l.b16 %v1001
  %v1168 = vunpack.c.l.b16 %v1002
  %v1169 = vunpack.c.h.b16 %v1001
  %v1170 = vunpack.c.h.b16 %v1002
  %v1171 = vunpack.c.l.b16 %v1003
  %v1172 = vunpack.c.l.b16 %v1004
  %v1173 = vunpack.c.h.b16 %v1003
  %v1174 = vunpack.c.h.b16 %v1004
  %v1175 = vunpack.c.l.b16 %v1005
  %v1176 = vunpack.c.l.b16 %v1006
  %v1177 = vunpack.c.h.b16 %v1005
  %v1178 = vunpack.c.h.b16 %v1006
  %v1179 = vunpack.c.l.b16 %v1007
  %v1180 = vunpack.c.l.b16 %v1008
  %v1181 = vunpack.c.h.b16 %v1007
  %v1182 = vunpack.c.h.b16 %v1008
  %v1183 = vunpack.c.l.b16 %v1009
  %v1184 = vunpack.c.l.b16 %v1010
  %v1185 = vunpack.c.h.b16 %v1009
  %v1186 = vunpack.c.h.b16 %v1010
  %v1187 = vunpack.c.l.b16 %v1011
  %v1188 = vunpack.c.l.b16 %v1012
  %v1189 = vunpack.c.h.b16 %v1011
  %v1190 = vunpack.c.h.b16 %v1012
  %v1191 = vunpack.c.l.b16 %v1013
  %v1192 = vunpack.c.l.b16 %v1014
  %v1193 = vunpack.c.h.b16 %v1013
  %v1194 = vunpack.c.h.b16 %v1014
  %v1195 = vunpack.c.l.b16 %v1015
  %v1196 = vunpack.c.l.b16 %v1016
  %v1197 = vunpack.c.h.b16 %v1015
  %v1198 = vunpack.c.h.b16 %v1016
  %v1199 = vunpack.c.l.b16 %v1017
  %v1200 = vunpack.c.l.b16 %v1018
  %v1201 = vunpack.c.h.b16 %v1017
  %v1202 = vunpack.c.h.b16 %v1018
  %v1203 = vunpack.c.l.b16 %v1019
  %v1204 = vunpack.c.l.b16 %v1020
  %v1205 = vunpack.c.h.b16 %v1019
  %v1206 = vunpack.c.h.b16 %v1020
  %v1207 = vunpack.c.l.b16 %v1021
  %v1208 = vunpack.c.l.b16 %v1022
  %v1209 = vunpack.c.h.b16 %v1021
  %v1210 = vunpack.c.h.b16 %v1022
  %v1211 = vunpack.c.l.b16 %v1023
  %v1212 = vunpack.c.l.b16 %v1024
  %v1213 = vunpack.c.h.b16 %v1023
  %v1214 = vunpack.c.h.b16 %v1024
  %v1215 = vunpack.c.l.b16 %v1025
  %v1216 = vunpack.c.l.b16 %v1026
  %v1217 = vunpack.c.h.b16 %v1025
  %v1218 = vunpack.c.h.b16 %v1026
  %v1219 = vpack.c.b16 %v1092, %v1091
  %v1220 = vpack.c.b16 %v1094, %v1093
  %v1221 = vpack.c.b16 %v1096, %v1095
  %v1222 = vpack.c.b16 %v1098, %v1097
  %v1223 = vpack.c.b16 %v1100, %v1099
  %v1224 = vpack.c.b16 %v1102, %v1101
  %v1225 = vpack.c.b16 %v1104, %v1103
  %v1226 = vpack.c.b16 %v1106, %v1105
  %v1227 = vpack.c.b16 %v1108, %v1107
  %v1228 = vpack.c.b16 %v1110, %v1109
  %v1229 = vpack.c.b16 %v1112, %v1111
  %v1230 = vpack.c.b16 %v1114, %v1113
  %v1231 = vpack.c.b16 %v1116, %v1115
  %v1232 = vpack.c.b16 %v1118, %v1117
  %v1233 = vpack.c.b16 %v1120, %v1119
  %v1234 = vpack.c.b16 %v1122, %v1121
  %v1235 = vpack.c.b16 %v1124, %v1123
  %v1236 = vpack.c.b16 %v1126, %v1125
  %v1237 = vpack.c.b16 %v1128, %v1127
  %v1238 = vpack.c.b16 %v1130, %v1129
  %v1239 = vpack.c.b16 %v1132, %v1131
  %v1240 = vpack.c.b16 %v1134, %v1133
  %v1241 = vpack.c.b16 %v1136, %v1135
  %v1242 = vpack.c.b16 %v1138, %v1137
  %v1243 = vpack.c.b16 %v1140, %v1139
  %v1244 = vpack.c.b16 %v1142, %v1141
  %v1245 = vpack.c.b16 %v1144, %v1143
  %v1246 = vpack.c.b16 %v1146, %v1145
  %v1247 = vpack.c.b16 %v1148, %v1147
  %v1248 = vpack.c.b16 %v1150, %v1149
  %v1249 = vpack.c.b16 %v1152, %v1151
  %v1250 = vpack.c.b16 %v1154, %v1153
  %v1251 = vpack.c.b16 %v1156, %v1155
  %v1252 = vpack.c.b16 %v1158, %v1157
  %v1253 = vpack.c.b16 %v1160, %v1159
  %v1254 = vpack.c.b16 %v1162, %v1161
  %v1255 = vpack.c.b16 %v1164, %v1163
  %v1256 = vpack.c.b16 %v1166, %v1165
  %v1257 = vpack.c.b16 %v1168, %v1167
  %v1258 = vpack.c.b16 %v1170, %v1169
  %v1259 = vpack.c.b16 %v1172, %v1171
  %v1260 = vpack.c.b16 %v1174, %v1173
  %v1261 = vpack.c.b16 %v1176, %v1175
  %v1262 = vpack.c.b16 %v1178, %v1177
  %v1263 = vpack.c.b16 %v1180, %v1179
  %v1264 = vpack.c.b16 %v1182, %v1181
  %v1265 = vpack.c.b16 %v1184, %v1183
  %v1266 = vpack.c.b16 %v1186, %v1185
  %v1267 = vpack.c.b16 %v1188, %v1187
  %v1268 = vpack.c.b16 %v1190, %v1189
  %v1269 = vpack.c.b16 %v1192, %v1191
  %v1270 = vpack.c.b16 %v1194, %v1193
  %v1271 = vpack.c.b16 %v1196, %v1195
  %v1272 = vpack.c.b16 %v1198, %v1197
  %v1273 = vpack.c.b16 %v1200, %v1199
  %v1274 = vpack.c.b16 %v1202, %v1201
  %v1275 = vpack.c.b16 %v1204, %v1203
  %v1276 = vpack.c.b16 %v1206, %v1205
  %v1277 = vpack.c.b16 %v1208, %v1207
  %v1278 = vpack.c.b16 %v1210, %v1209
  %v1279 = vpack.c.b16 %v1212, %v1211
  %v1280 = vpack.c.b16 %v1214, %v1213
  %v1281 = vpack.c.b16 %v1216, %v1215
  %v1282 = vpack.c.b16 %v1218, %v1217
  %1347 = vst [vmem:[%s4] sm:$0xff] %v1219
  %1348 = vst [vmem:[%s4 + $0x8] sm:$0xff] %v1220
  %1349 = vst [vmem:[%s4 + $0x10] sm:$0xff] %v1221
  %1350 = vst [vmem:[%s4 + $0x18] sm:$0xff] %v1222
  %1351 = vst [vmem:[%s4 + $0x20] sm:$0xff] %v1223
  %1352 = vst [vmem:[%s4 + $0x28] sm:$0xff] %v1224
  %1353 = vst [vmem:[%s4 + $0x30] sm:$0xff] %v1225
  %1354 = vst [vmem:[%s4 + $0x38] sm:$0xff] %v1226
  %1355 = vst [vmem:[%s4 + $0x40] sm:$0xff] %v1227
  %1356 = vst [vmem:[%s4 + $0x48] sm:$0xff] %v1228
  %1357 = vst [vmem:[%s4 + $0x50] sm:$0xff] %v1229
  %1358 = vst [vmem:[%s4 + $0x58] sm:$0xff] %v1230
  %1359 = vst [vmem:[%s4 + $0x60] sm:$0xff] %v1231
  %1360 = vst [vmem:[%s4 + $0x68] sm:$0xff] %v1232
  %1361 = vst [vmem:[%s4 + $0x70] sm:$0xff] %v1233
  %1362 = vst [vmem:[%s4 + $0x78] sm:$0xff] %v1234
  %1363 = vst [vmem:[%s4 + $0x80] sm:$0xff] %v1235
  %1364 = vst [vmem:[%s4 + $0x88] sm:$0xff] %v1236
  %1365 = vst [vmem:[%s4 + $0x90] sm:$0xff] %v1237
  %1366 = vst [vmem:[%s4 + $0x98] sm:$0xff] %v1238
  %1367 = vst [vmem:[%s4 + $0xa0] sm:$0xff] %v1239
  %1368 = vst [vmem:[%s4 + $0xa8] sm:$0xff] %v1240
  %1369 = vst [vmem:[%s4 + $0xb0] sm:$0xff] %v1241
  %1370 = vst [vmem:[%s4 + $0xb8] sm:$0xff] %v1242
  %1371 = vst [vmem:[%s4 + $0xc0] sm:$0xff] %v1243
  %1372 = vst [vmem:[%s4 + $0xc8] sm:$0xff] %v1244
  %1373 = vst [vmem:[%s4 + $0xd0] sm:$0xff] %v1245
  %1374 = vst [vmem:[%s4 + $0xd8] sm:$0xff] %v1246
  %1375 = vst [vmem:[%s4 + $0xe0] sm:$0xff] %v1247
  %1376 = vst [vmem:[%s4 + $0xe8] sm:$0xff] %v1248
  %1377 = vst [vmem:[%s4 + $0xf0] sm:$0xff] %v1249
  %1378 = vst [vmem:[%s4 + $0xf8] sm:$0xff] %v1250
  %1379 = vst [vmem:[%s4 + $0x100] sm:$0xff] %v1251
  %1380 = vst [vmem:[%s4 + $0x108] sm:$0xff] %v1252
  %1381 = vst [vmem:[%s4 + $0x110] sm:$0xff] %v1253
  %1382 = vst [vmem:[%s4 + $0x118] sm:$0xff] %v1254
  %1383 = vst [vmem:[%s4 + $0x120] sm:$0xff] %v1255
  %1384 = vst [vmem:[%s4 + $0x128] sm:$0xff] %v1256
  %1385 = vst [vmem:[%s4 + $0x130] sm:$0xff] %v1257
  %1386 = vst [vmem:[%s4 + $0x138] sm:$0xff] %v1258
  %1387 = vst [vmem:[%s4 + $0x140] sm:$0xff] %v1259
  %1388 = vst [vmem:[%s4 + $0x148] sm:$0xff] %v1260
  %1389 = vst [vmem:[%s4 + $0x150] sm:$0xff] %v1261
  %1390 = vst [vmem:[%s4 + $0x158] sm:$0xff] %v1262
  %1391 = vst [vmem:[%s4 + $0x160] sm:$0xff] %v1263
  %1392 = vst [vmem:[%s4 + $0x168] sm:$0xff] %v1264
  %1393 = vst [vmem:[%s4 + $0x170] sm:$0xff] %v1265
  %1394 = vst [vmem:[%s4 + $0x178] sm:$0xff] %v1266
  %1395 = vst [vmem:[%s4 + $0x180] sm:$0xff] %v1267
  %1396 = vst [vmem:[%s4 + $0x188] sm:$0xff] %v1268
  %1397 = vst [vmem:[%s4 + $0x190] sm:$0xff] %v1269
  %1398 = vst [vmem:[%s4 + $0x198] sm:$0xff] %v1270
  %1399 = vst [vmem:[%s4 + $0x1a0] sm:$0xff] %v1271
  %1400 = vst [vmem:[%s4 + $0x1a8] sm:$0xff] %v1272
  %1401 = vst [vmem:[%s4 + $0x1b0] sm:$0xff] %v1273
  %1402 = vst [vmem:[%s4 + $0x1b8] sm:$0xff] %v1274
  %1403 = vst [vmem:[%s4 + $0x1c0] sm:$0xff] %v1275
  %1404 = vst [vmem:[%s4 + $0x1c8] sm:$0xff] %v1276
  %1405 = vst [vmem:[%s4 + $0x1d0] sm:$0xff] %v1277
  %1406 = vst [vmem:[%s4 + $0x1d8] sm:$0xff] %v1278
  %1407 = vst [vmem:[%s4 + $0x1e0] sm:$0xff] %v1279
  %1408 = vst [vmem:[%s4 + $0x1e8] sm:$0xff] %v1280
  %1409 = vst [vmem:[%s4 + $0x1f0] sm:$0xff] %v1281
  %1410 = vst [vmem:[%s4 + $0x1f8] sm:$0xff] %v1282
  %v1411 = vadd.f32 %v645, %v649
  %v1412 = vadd.f32 %v1411, %v655
  %v1413 = vadd.f32 %v1412, %v659
  %v1414 = vadd.f32 %v1413, %v665
  %v1415 = vadd.f32 %v1414, %v669
  %v1416 = vadd.f32 %v1415, %v675
  %v1417 = vadd.f32 %v1416, %v679
  %v1418 = vadd.f32 %v1417, %v685
  %v1419 = vadd.f32 %v1418, %v689
  %v1420 = vadd.f32 %v1419, %v695
  %v1421 = vadd.f32 %v1420, %v699
  %v1422 = vadd.f32 %v1421, %v705
  %v1423 = vadd.f32 %v1422, %v709
  %v1424 = vadd.f32 %v1423, %v715
  %v1425 = vadd.f32 %v1424, %v719
  %v1426 = vadd.f32 %v1425, %v725
  %v1427 = vadd.f32 %v1426, %v729
  %v1428 = vadd.f32 %v1427, %v735
  %v1429 = vadd.f32 %v1428, %v739
  %v1430 = vadd.f32 %v1429, %v745
  %v1431 = vadd.f32 %v1430, %v749
  %v1432 = vadd.f32 %v1431, %v755
  %v1433 = vadd.f32 %v1432, %v759
  %v1434 = vadd.f32 %v1433, %v765
  %v1435 = vadd.f32 %v1434, %v769
  %v1436 = vadd.f32 %v1435, %v775
  %v1437 = vadd.f32 %v1436, %v779
  %v1438 = vadd.f32 %v1437, %v785
  %v1439 = vadd.f32 %v1438, %v789
  %v1440 = vadd.f32 %v1439, %v795
  %v1441 = vadd.f32 %v1440, %v799
  %v1442 = vadd.f32 %v1441, %v805
  %v1443 = vadd.f32 %v1442, %v809
  %v1444 = vadd.f32 %v1443, %v815
  %v1445 = vadd.f32 %v1444, %v819
  %v1446 = vadd.f32 %v1445, %v825
  %v1447 = vadd.f32 %v1446, %v829
  %v1448 = vadd.f32 %v1447, %v835
  %v1449 = vadd.f32 %v1448, %v839
  %v1450 = vadd.f32 %v1449, %v845
  %v1451 = vadd.f32 %v1450, %v849
  %v1452 = vadd.f32 %v1451, %v855
  %v1453 = vadd.f32 %v1452, %v859
  %v1454 = vadd.f32 %v1453, %v865
  %v1455 = vadd.f32 %v1454, %v869
  %v1456 = vadd.f32 %v1455, %v875
  %v1457 = vadd.f32 %v1456, %v879
  %v1458 = vadd.f32 %v1457, %v885
  %v1459 = vadd.f32 %v1458, %v889
  %v1460 = vadd.f32 %v1459, %v895
  %v1461 = vadd.f32 %v1460, %v899
  %v1462 = vadd.f32 %v1461, %v905
  %v1463 = vadd.f32 %v1462, %v909
  %v1464 = vadd.f32 %v1463, %v915
  %v1465 = vadd.f32 %v1464, %v919
  %v1466 = vadd.f32 %v1465, %v925
  %v1467 = vadd.f32 %v1466, %v929
  %v1468 = vadd.f32 %v1467, %v935
  %v1469 = vadd.f32 %v1468, %v939
  %v1470 = vadd.f32 %v1469, %v945
  %v1471 = vadd.f32 %v1470, %v949
  %v1472 = vadd.f32 %v1471, %v955
  %v1473 = vadd.f32 %v1472, %v959
  %v1474 = vrot.slane %v1473, 4
  %v1475 = vadd.f32 %v1473, %v1474
  %v1476 = vrot.slane %v1475, 2
  %v1477 = vadd.f32 %v1475, %v1476
  %v1478 = vrot.slane %v1477, 1
  %v1479 = vadd.f32 %v1477, %v1478
  %v1480 = vadd.f32 %v647, %v651
  %v1481 = vadd.f32 %v1480, %v657
  %v1482 = vadd.f32 %v1481, %v661
  %v1483 = vadd.f32 %v1482, %v667
  %v1484 = vadd.f32 %v1483, %v671
  %v1485 = vadd.f32 %v1484, %v677
  %v1486 = vadd.f32 %v1485, %v681
  %v1487 = vadd.f32 %v1486, %v687
  %v1488 = vadd.f32 %v1487, %v691
  %v1489 = vadd.f32 %v1488, %v697
  %v1490 = vadd.f32 %v1489, %v701
  %v1491 = vadd.f32 %v1490, %v707
  %v1492 = vadd.f32 %v1491, %v711
  %v1493 = vadd.f32 %v1492, %v717
  %v1494 = vadd.f32 %v1493, %v721
  %v1495 = vadd.f32 %v1494, %v727
  %v1496 = vadd.f32 %v1495, %v731
  %v1497 = vadd.f32 %v1496, %v737
  %v1498 = vadd.f32 %v1497, %v741
  %v1499 = vadd.f32 %v1498, %v747
  %v1500 = vadd.f32 %v1499, %v751
  %v1501 = vadd.f32 %v1500, %v757
  %v1502 = vadd.f32 %v1501, %v761
  %v1503 = vadd.f32 %v1502, %v767
  %v1504 = vadd.f32 %v1503, %v771
  %v1505 = vadd.f32 %v1504, %v777
  %v1506 = vadd.f32 %v1505, %v781
  %v1507 = vadd.f32 %v1506, %v787
  %v1508 = vadd.f32 %v1507, %v791
  %v1509 = vadd.f32 %v1508, %v797
  %v1510 = vadd.f32 %v1509, %v801
  %v1511 = vadd.f32 %v1510, %v807
  %v1512 = vadd.f32 %v1511, %v811
  %v1513 = vadd.f32 %v1512, %v817
  %v1514 = vadd.f32 %v1513, %v821
  %v1515 = vadd.f32 %v1514, %v827
  %v1516 = vadd.f32 %v1515, %v831
  %v1517 = vadd.f32 %v1516, %v837
  %v1518 = vadd.f32 %v1517, %v841
  %v1519 = vadd.f32 %v1518, %v847
  %v1520 = vadd.f32 %v1519, %v851
  %v1521 = vadd.f32 %v1520, %v857
  %v1522 = vadd.f32 %v1521, %v861
  %v1523 = vadd.f32 %v1522, %v867
  %v1524 = vadd.f32 %v1523, %v871
  %v1525 = vadd.f32 %v1524, %v877
  %v1526 = vadd.f32 %v1525, %v881
  %v1527 = vadd.f32 %v1526, %v887
  %v1528 = vadd.f32 %v1527, %v891
  %v1529 = vadd.f32 %v1528, %v897
  %v1530 = vadd.f32 %v1529, %v901
  %v1531 = vadd.f32 %v1530, %v907
  %v1532 = vadd.f32 %v1531, %v911
  %v1533 = vadd.f32 %v1532, %v917
  %v1534 = vadd.f32 %v1533, %v921
  %v1535 = vadd.f32 %v1534, %v927
  %v1536 = vadd.f32 %v1535, %v931
  %v1537 = vadd.f32 %v1536, %v937
  %v1538 = vadd.f32 %v1537, %v941
  %v1539 = vadd.f32 %v1538, %v947
  %v1540 = vadd.f32 %v1539, %v951
  %v1541 = vadd.f32 %v1540, %v957
  %v1542 = vadd.f32 %v1541, %v961
  %v1543 = vrot.slane %v1542, 4
  %v1544 = vadd.f32 %v1542, %v1543
  %v1545 = vrot.slane %v1544, 2
  %v1546 = vadd.f32 %v1544, %v1545
  %v1547 = vrot.slane %v1546, 1
  %v1548 = vadd.f32 %v1546, %v1547
  %v1551 = vcombine.low %v1479, %v1548
  %v1553 = vunpack.c.l.s4 1966171168
  %v1554 = vunpack.c.0.s8 %v1553
  %v1555 = vlaneseq
  %v1556 = vshrl.u32 %v1555, 7
  %v1557 = vsub.s32 %v1554, %v1556
  %v1558 = vrot.slane %v1551, %v1557
  %v1560 = vunpack.c.l.s4 1966171168
  %v1561 = vunpack.c.0.s8 %v1560
  %v1562 = vlaneseq
  %v1563 = vshrl.u32 %v1562, 7
  %v1564 = vsub.s32 %v1561, %v1563
  %v1565 = vrot.slane %v1558, %v1564
  %v1567 = vlaneseq
  %vm1568 = vcmp.ge.s32.totalorder %v1567, 0
  %vm1569 = vcmp.lt.s32.totalorder %v1567, 256
  %vm1570 = vmand %vm1568, %vm1569
  %1571 = vst.msk [vmem:[%s5] ss:$2 sm:$0x3] %vm1570, %v1565
  %v1572 = vmul.f32 %v645, %v645
  %v1573 = vmul.f32 %v647, %v647
  %v1574 = vmul.f32 %v649, %v649
  %v1575 = vmul.f32 %v651, %v651
  %v1576 = vmul.f32 %v655, %v655
  %v1577 = vmul.f32 %v657, %v657
  %v1578 = vmul.f32 %v659, %v659
  %v1579 = vmul.f32 %v661, %v661
  %v1580 = vmul.f32 %v665, %v665
  %v1581 = vmul.f32 %v667, %v667
  %v1582 = vmul.f32 %v669, %v669
  %v1583 = vmul.f32 %v671, %v671
  %v1584 = vmul.f32 %v675, %v675
  %v1585 = vmul.f32 %v677, %v677
  %v1586 = vmul.f32 %v679, %v679
  %v1587 = vmul.f32 %v681, %v681
  %v1588 = vmul.f32 %v685, %v685
  %v1589 = vmul.f32 %v687, %v687
  %v1590 = vmul.f32 %v689, %v689
  %v1591 = vmul.f32 %v691, %v691
  %v1592 = vmul.f32 %v695, %v695
  %v1593 = vmul.f32 %v697, %v697
  %v1594 = vmul.f32 %v699, %v699
  %v1595 = vmul.f32 %v701, %v701
  %v1596 = vmul.f32 %v705, %v705
  %v1597 = vmul.f32 %v707, %v707
  %v1598 = vmul.f32 %v709, %v709
  %v1599 = vmul.f32 %v711, %v711
  %v1600 = vmul.f32 %v715, %v715
  %v1601 = vmul.f32 %v717, %v717
  %v1602 = vmul.f32 %v719, %v719
  %v1603 = vmul.f32 %v721, %v721
  %v1604 = vmul.f32 %v725, %v725
  %v1605 = vmul.f32 %v727, %v727
  %v1606 = vmul.f32 %v729, %v729
  %v1607 = vmul.f32 %v731, %v731
  %v1608 = vmul.f32 %v735, %v735
  %v1609 = vmul.f32 %v737, %v737
  %v1610 = vmul.f32 %v739, %v739
  %v1611 = vmul.f32 %v741, %v741
  %v1612 = vmul.f32 %v745, %v745
  %v1613 = vmul.f32 %v747, %v747
  %v1614 = vmul.f32 %v749, %v749
  %v1615 = vmul.f32 %v751, %v751
  %v1616 = vmul.f32 %v755, %v755
  %v1617 = vmul.f32 %v757, %v757
  %v1618 = vmul.f32 %v759, %v759
  %v1619 = vmul.f32 %v761, %v761
  %v1620 = vmul.f32 %v765, %v765
  %v1621 = vmul.f32 %v767, %v767
  %v1622 = vmul.f32 %v769, %v769
  %v1623 = vmul.f32 %v771, %v771
  %v1624 = vmul.f32 %v775, %v775
  %v1625 = vmul.f32 %v777, %v777
  %v1626 = vmul.f32 %v779, %v779
  %v1627 = vmul.f32 %v781, %v781
  %v1628 = vmul.f32 %v785, %v785
  %v1629 = vmul.f32 %v787, %v787
  %v1630 = vmul.f32 %v789, %v789
  %v1631 = vmul.f32 %v791, %v791
  %v1632 = vmul.f32 %v795, %v795
  %v1633 = vmul.f32 %v797, %v797
  %v1634 = vmul.f32 %v799, %v799
  %v1635 = vmul.f32 %v801, %v801
  %v1636 = vmul.f32 %v805, %v805
  %v1637 = vmul.f32 %v807, %v807
  %v1638 = vmul.f32 %v809, %v809
  %v1639 = vmul.f32 %v811, %v811
  %v1640 = vmul.f32 %v815, %v815
  %v1641 = vmul.f32 %v817, %v817
  %v1642 = vmul.f32 %v819, %v819
  %v1643 = vmul.f32 %v821, %v821
  %v1644 = vmul.f32 %v825, %v825
  %v1645 = vmul.f32 %v827, %v827
  %v1646 = vmul.f32 %v829, %v829
  %v1647 = vmul.f32 %v831, %v831
  %v1648 = vmul.f32 %v835, %v835
  %v1649 = vmul.f32 %v837, %v837
  %v1650 = vmul.f32 %v839, %v839
  %v1651 = vmul.f32 %v841, %v841
  %v1652 = vmul.f32 %v845, %v845
  %v1653 = vmul.f32 %v847, %v847
  %v1654 = vmul.f32 %v849, %v849
  %v1655 = vmul.f32 %v851, %v851
  %v1656 = vmul.f32 %v855, %v855
  %v1657 = vmul.f32 %v857, %v857
  %v1658 = vmul.f32 %v859, %v859
  %v1659 = vmul.f32 %v861, %v861
  %v1660 = vmul.f32 %v865, %v865
  %v1661 = vmul.f32 %v867, %v867
  %v1662 = vmul.f32 %v869, %v869
  %v1663 = vmul.f32 %v871, %v871
  %v1664 = vmul.f32 %v875, %v875
  %v1665 = vmul.f32 %v877, %v877
  %v1666 = vmul.f32 %v879, %v879
  %v1667 = vmul.f32 %v881, %v881
  %v1668 = vmul.f32 %v885, %v885
  %v1669 = vmul.f32 %v887, %v887
  %v1670 = vmul.f32 %v889, %v889
  %v1671 = vmul.f32 %v891, %v891
  %v1672 = vmul.f32 %v895, %v895
  %v1673 = vmul.f32 %v897, %v897
  %v1674 = vmul.f32 %v899, %v899
  %v1675 = vmul.f32 %v901, %v901
  %v1676 = vmul.f32 %v905, %v905
  %v1677 = vmul.f32 %v907, %v907
  %v1678 = vmul.f32 %v909, %v909
  %v1679 = vmul.f32 %v911, %v911
  %v1680 = vmul.f32 %v915, %v915
  %v1681 = vmul.f32 %v917, %v917
  %v1682 = vmul.f32 %v919, %v919
  %v1683 = vmul.f32 %v921, %v921
  %v1684 = vmul.f32 %v925, %v925
  %v1685 = vmul.f32 %v927, %v927
  %v1686 = vmul.f32 %v929, %v929
  %v1687 = vmul.f32 %v931, %v931
  %v1688 = vmul.f32 %v935, %v935
  %v1689 = vmul.f32 %v937, %v937
  %v1690 = vmul.f32 %v939, %v939
  %v1691 = vmul.f32 %v941, %v941
  %v1692 = vmul.f32 %v945, %v945
  %v1693 = vmul.f32 %v947, %v947
  %v1694 = vmul.f32 %v949, %v949
  %v1695 = vmul.f32 %v951, %v951
  %v1696 = vmul.f32 %v955, %v955
  %v1697 = vmul.f32 %v957, %v957
  %v1698 = vmul.f32 %v959, %v959
  %v1699 = vmul.f32 %v961, %v961
  %v1700 = vadd.f32 %v1572, %v1574
  %v1701 = vadd.f32 %v1700, %v1576
  %v1702 = vadd.f32 %v1701, %v1578
  %v1703 = vadd.f32 %v1702, %v1580
  %v1704 = vadd.f32 %v1703, %v1582
  %v1705 = vadd.f32 %v1704, %v1584
  %v1706 = vadd.f32 %v1705, %v1586
  %v1707 = vadd.f32 %v1706, %v1588
  %v1708 = vadd.f32 %v1707, %v1590
  %v1709 = vadd.f32 %v1708, %v1592
  %v1710 = vadd.f32 %v1709, %v1594
  %v1711 = vadd.f32 %v1710, %v1596
  %v1712 = vadd.f32 %v1711, %v1598
  %v1713 = vadd.f32 %v1712, %v1600
  %v1714 = vadd.f32 %v1713, %v1602
  %v1715 = vadd.f32 %v1714, %v1604
  %v1716 = vadd.f32 %v1715, %v1606
  %v1717 = vadd.f32 %v1716, %v1608
  %v1718 = vadd.f32 %v1717, %v1610
  %v1719 = vadd.f32 %v1718, %v1612
  %v1720 = vadd.f32 %v1719, %v1614
  %v1721 = vadd.f32 %v1720, %v1616
  %v1722 = vadd.f32 %v1721, %v1618
  %v1723 = vadd.f32 %v1722, %v1620
  %v1724 = vadd.f32 %v1723, %v1622
  %v1725 = vadd.f32 %v1724, %v1624
  %v1726 = vadd.f32 %v1725, %v1626
  %v1727 = vadd.f32 %v1726, %v1628
  %v1728 = vadd.f32 %v1727, %v1630
  %v1729 = vadd.f32 %v1728, %v1632
  %v1730 = vadd.f32 %v1729, %v1634
  %v1731 = vadd.f32 %v1730, %v1636
  %v1732 = vadd.f32 %v1731, %v1638
  %v1733 = vadd.f32 %v1732, %v1640
  %v1734 = vadd.f32 %v1733, %v1642
  %v1735 = vadd.f32 %v1734, %v1644
  %v1736 = vadd.f32 %v1735, %v1646
  %v1737 = vadd.f32 %v1736, %v1648
  %v1738 = vadd.f32 %v1737, %v1650
  %v1739 = vadd.f32 %v1738, %v1652
  %v1740 = vadd.f32 %v1739, %v1654
  %v1741 = vadd.f32 %v1740, %v1656
  %v1742 = vadd.f32 %v1741, %v1658
  %v1743 = vadd.f32 %v1742, %v1660
  %v1744 = vadd.f32 %v1743, %v1662
  %v1745 = vadd.f32 %v1744, %v1664
  %v1746 = vadd.f32 %v1745, %v1666
  %v1747 = vadd.f32 %v1746, %v1668
  %v1748 = vadd.f32 %v1747, %v1670
  %v1749 = vadd.f32 %v1748, %v1672
  %v1750 = vadd.f32 %v1749, %v1674
  %v1751 = vadd.f32 %v1750, %v1676
  %v1752 = vadd.f32 %v1751, %v1678
  %v1753 = vadd.f32 %v1752, %v1680
  %v1754 = vadd.f32 %v1753, %v1682
  %v1755 = vadd.f32 %v1754, %v1684
  %v1756 = vadd.f32 %v1755, %v1686
  %v1757 = vadd.f32 %v1756, %v1688
  %v1758 = vadd.f32 %v1757, %v1690
  %v1759 = vadd.f32 %v1758, %v1692
  %v1760 = vadd.f32 %v1759, %v1694
  %v1761 = vadd.f32 %v1760, %v1696
  %v1762 = vadd.f32 %v1761, %v1698
  %v1763 = vrot.slane %v1762, 4
  %v1764 = vadd.f32 %v1762, %v1763
  %v1765 = vrot.slane %v1764, 2
  %v1766 = vadd.f32 %v1764, %v1765
  %v1767 = vrot.slane %v1766, 1
  %v1768 = vadd.f32 %v1766, %v1767
  %v1769 = vadd.f32 %v1573, %v1575
  %v1770 = vadd.f32 %v1769, %v1577
  %v1771 = vadd.f32 %v1770, %v1579
  %v1772 = vadd.f32 %v1771, %v1581
  %v1773 = vadd.f32 %v1772, %v1583
  %v1774 = vadd.f32 %v1773, %v1585
  %v1775 = vadd.f32 %v1774, %v1587
  %v1776 = vadd.f32 %v1775, %v1589
  %v1777 = vadd.f32 %v1776, %v1591
  %v1778 = vadd.f32 %v1777, %v1593
  %v1779 = vadd.f32 %v1778, %v1595
  %v1780 = vadd.f32 %v1779, %v1597
  %v1781 = vadd.f32 %v1780, %v1599
  %v1782 = vadd.f32 %v1781, %v1601
  %v1783 = vadd.f32 %v1782, %v1603
  %v1784 = vadd.f32 %v1783, %v1605
  %v1785 = vadd.f32 %v1784, %v1607
  %v1786 = vadd.f32 %v1785, %v1609
  %v1787 = vadd.f32 %v1786, %v1611
  %v1788 = vadd.f32 %v1787, %v1613
  %v1789 = vadd.f32 %v1788, %v1615
  %v1790 = vadd.f32 %v1789, %v1617
  %v1791 = vadd.f32 %v1790, %v1619
  %v1792 = vadd.f32 %v1791, %v1621
  %v1793 = vadd.f32 %v1792, %v1623
  %v1794 = vadd.f32 %v1793, %v1625
  %v1795 = vadd.f32 %v1794, %v1627
  %v1796 = vadd.f32 %v1795, %v1629
  %v1797 = vadd.f32 %v1796, %v1631
  %v1798 = vadd.f32 %v1797, %v1633
  %v1799 = vadd.f32 %v1798, %v1635
  %v1800 = vadd.f32 %v1799, %v1637
  %v1801 = vadd.f32 %v1800, %v1639
  %v1802 = vadd.f32 %v1801, %v1641
  %v1803 = vadd.f32 %v1802, %v1643
  %v1804 = vadd.f32 %v1803, %v1645
  %v1805 = vadd.f32 %v1804, %v1647
  %v1806 = vadd.f32 %v1805, %v1649
  %v1807 = vadd.f32 %v1806, %v1651
  %v1808 = vadd.f32 %v1807, %v1653
  %v1809 = vadd.f32 %v1808, %v1655
  %v1810 = vadd.f32 %v1809, %v1657
  %v1811 = vadd.f32 %v1810, %v1659
  %v1812 = vadd.f32 %v1811, %v1661
  %v1813 = vadd.f32 %v1812, %v1663
  %v1814 = vadd.f32 %v1813, %v1665
  %v1815 = vadd.f32 %v1814, %v1667
  %v1816 = vadd.f32 %v1815, %v1669
  %v1817 = vadd.f32 %v1816, %v1671
  %v1818 = vadd.f32 %v1817, %v1673
  %v1819 = vadd.f32 %v1818, %v1675
  %v1820 = vadd.f32 %v1819, %v1677
  %v1821 = vadd.f32 %v1820, %v1679
  %v1822 = vadd.f32 %v1821, %v1681
  %v1823 = vadd.f32 %v1822, %v1683
  %v1824 = vadd.f32 %v1823, %v1685
  %v1825 = vadd.f32 %v1824, %v1687
  %v1826 = vadd.f32 %v1825, %v1689
  %v1827 = vadd.f32 %v1826, %v1691
  %v1828 = vadd.f32 %v1827, %v1693
  %v1829 = vadd.f32 %v1828, %v1695
  %v1830 = vadd.f32 %v1829, %v1697
  %v1831 = vadd.f32 %v1830, %v1699
  %v1832 = vrot.slane %v1831, 4
  %v1833 = vadd.f32 %v1831, %v1832
  %v1834 = vrot.slane %v1833, 2
  %v1835 = vadd.f32 %v1833, %v1834
  %v1836 = vrot.slane %v1835, 1
  %v1837 = vadd.f32 %v1835, %v1836
  %v1840 = vcombine.low %v1768, %v1837
  %v1842 = vunpack.c.l.s4 1966171168
  %v1843 = vunpack.c.0.s8 %v1842
  %v1844 = vlaneseq
  %v1845 = vshrl.u32 %v1844, 7
  %v1846 = vsub.s32 %v1843, %v1845
  %v1847 = vrot.slane %v1840, %v1846
  %v1849 = vunpack.c.l.s4 1966171168
  %v1850 = vunpack.c.0.s8 %v1849
  %v1851 = vlaneseq
  %v1852 = vshrl.u32 %v1851, 7
  %v1853 = vsub.s32 %v1850, %v1852
  %v1854 = vrot.slane %v1847, %v1853
  %s1856 = scalar_lea.vmem %s5, 1
  %1857 = vst.msk [vmem:[%s1856] ss:$2 sm:$0x3] %vm1570, %v1854
  // Predicated region
  $region18: #{nlayer_discriminator_forward.5} parent=0 // pred_check
    _
  $region19: #{nlayer_discriminator_forward.5} parent=0 // pred_check_branch
    %1859 = sbr.rel (0) target = $region21
  $region20: #{nlayer_discriminator_forward.5} parent=0 // pred_region
    _
  $region21: #{nlayer_discriminator_forward.5} parent=0 // pred_fallthru
    _
  // Predicated region
  $region22: #{nlayer_discriminator_forward.5} parent=0 // pred_check
    _
  $region23: #{nlayer_discriminator_forward.5} parent=0 // pred_check_branch
    %1861 = sbr.rel (0) target = $region25
  $region24: #{nlayer_discriminator_forward.5} parent=0 // pred_region
    _
  $region25: #{nlayer_discriminator_forward.5} parent=0 // pred_fallthru
    _
  // Predicated region
  $region26: #{nlayer_discriminator_forward.5} parent=0 // pred_check
    _
  $region27: #{nlayer_discriminator_forward.5} parent=0 // pred_check_branch
    %1863 = sbr.rel (0) target = $region29
  $region28: #{nlayer_discriminator_forward.5} parent=0 // pred_region
    _
  $region29: #{nlayer_discriminator_forward.5} parent=0 // pred_fallthru
    _
  // Predicated region
  $region30: #{nlayer_discriminator_forward.5} parent=0 // pred_check
    _
  $region31: #{nlayer_discriminator_forward.5} parent=0 // pred_check_branch
    %1865 = sbr.rel (0) target = $region33
  $region32: #{nlayer_discriminator_forward.5} parent=0 // pred_region
    _
  $region33: #{nlayer_discriminator_forward.5} parent=0 // pred_fallthru
    _

// kernel: nlayer_discriminator_forward.4
$region0: #{nlayer_discriminator_forward.4}
  #allocation0 [shape = 'u32[]', space=smem, size = 0x4, offset = 0x4, fixed_abs, tag = 'smem constant byte address 0x4 - core index']
  #allocation1 [shape = 'u32[144,128]{1,0:T(1,128)}', space=vmem, size = 0x12000, scoped, tag = 'internal scratch']
  %s0 = inlined_call_operand.vmem [shape: bf16[512,8], index: 0, kind: input, shape index: {}]
  %s1 = inlined_call_operand.vmem [shape: bf16[8,64], index: 1, kind: input, shape index: {}]
  %s2 = inlined_call_operand.vmem [shape: f32[1,64], index: 2, kind: input, shape index: {}]
  %s3 = inlined_call_operand.vmem [shape: bf16[64,128], index: 3, kind: input, shape index: {}]
  %s4 = inlined_call_operand.vmem [shape: bf16[512,128], index: 4, kind: output, shape index: {0}]
  %s5 = inlined_call_operand.vmem [shape: f32[1,2,128], index: 5, kind: output, shape index: {1}]
  %6 = xla_tuple %s4, %s5
  %s7 = sld [smem:[#allocation0]]
  $region34: #{nlayer_discriminator_forward.4} parent=0
    _
  %s9 = ssub.s32 1, %s7
  %s10 = scalar_select 0, %s9, %s7
  // Predicated region
  $region2: #{nlayer_discriminator_forward.4} parent=0 // pred_check
    _
  $region3: #{nlayer_discriminator_forward.4} parent=0 // pred_check_branch
    %12 = sbr.rel (0) target = $region5
  $region4: #{nlayer_discriminator_forward.4} parent=0 // pred_region
    _
  $region5: #{nlayer_discriminator_forward.4} parent=0 // pred_fallthru
    _
  // Predicated region
  $region6: #{nlayer_discriminator_forward.4} parent=0 // pred_check
    _
  $region7: #{nlayer_discriminator_forward.4} parent=0 // pred_check_branch
    %14 = sbr.rel (0) target = $region9
  $region8: #{nlayer_discriminator_forward.4} parent=0 // pred_region
    _
  $region9: #{nlayer_discriminator_forward.4} parent=0 // pred_fallthru
    _
  // Predicated region
  $region10: #{nlayer_discriminator_forward.4} parent=0 // pred_check
    _
  $region11: #{nlayer_discriminator_forward.4} parent=0 // pred_check_branch
    %16 = sbr.rel (0) target = $region13
  $region12: #{nlayer_discriminator_forward.4} parent=0 // pred_region
    _
  $region13: #{nlayer_discriminator_forward.4} parent=0 // pred_fallthru
    _
  // Predicated region
  $region14: #{nlayer_discriminator_forward.4} parent=0 // pred_check
    _
  $region15: #{nlayer_discriminator_forward.4} parent=0 // pred_check_branch
    %18 = sbr.rel (0) target = $region17
  $region16: #{nlayer_discriminator_forward.4} parent=0 // pred_region
    _
  $region17: #{nlayer_discriminator_forward.4} parent=0 // pred_fallthru
    _
  %v20 = vld [vmem:[%s0] sm:$0xf]
  %v21 = vld [vmem:[%s0 + $0x4] sm:$0xf]
  %v22 = vld [vmem:[%s0 + $0x8] sm:$0xf]
  %v23 = vld [vmem:[%s0 + $0xc] sm:$0xf]
  %v24 = vld [vmem:[%s0 + $0x10] sm:$0xf]
  %v25 = vld [vmem:[%s0 + $0x14] sm:$0xf]
  %v26 = vld [vmem:[%s0 + $0x18] sm:$0xf]
  %v27 = vld [vmem:[%s0 + $0x1c] sm:$0xf]
  %v28 = vld [vmem:[%s0 + $0x20] sm:$0xf]
  %v29 = vld [vmem:[%s0 + $0x24] sm:$0xf]
  %v30 = vld [vmem:[%s0 + $0x28] sm:$0xf]
  %v31 = vld [vmem:[%s0 + $0x2c] sm:$0xf]
  %v32 = vld [vmem:[%s0 + $0x30] sm:$0xf]
  %v33 = vld [vmem:[%s0 + $0x34] sm:$0xf]
  %v34 = vld [vmem:[%s0 + $0x38] sm:$0xf]
  %v35 = vld [vmem:[%s0 + $0x3c] sm:$0xf]
  %v36 = vld [vmem:[%s0 + $0x40] sm:$0xf]
  %v37 = vld [vmem:[%s0 + $0x44] sm:$0xf]
  %v38 = vld [vmem:[%s0 + $0x48] sm:$0xf]
  %v39 = vld [vmem:[%s0 + $0x4c] sm:$0xf]
  %v40 = vld [vmem:[%s0 + $0x50] sm:$0xf]
  %v41 = vld [vmem:[%s0 + $0x54] sm:$0xf]
  %v42 = vld [vmem:[%s0 + $0x58] sm:$0xf]
  %v43 = vld [vmem:[%s0 + $0x5c] sm:$0xf]
  %v44 = vld [vmem:[%s0 + $0x60] sm:$0xf]
  %v45 = vld [vmem:[%s0 + $0x64] sm:$0xf]
  %v46 = vld [vmem:[%s0 + $0x68] sm:$0xf]
  %v47 = vld [vmem:[%s0 + $0x6c] sm:$0xf]
  %v48 = vld [vmem:[%s0 + $0x70] sm:$0xf]
  %v49 = vld [vmem:[%s0 + $0x74] sm:$0xf]
  %v50 = vld [vmem:[%s0 + $0x78] sm:$0xf]
  %v51 = vld [vmem:[%s0 + $0x7c] sm:$0xf]
  %v52 = vld [vmem:[%s0 + $0x80] sm:$0xf]
  %v53 = vld [vmem:[%s0 + $0x84] sm:$0xf]
  %v54 = vld [vmem:[%s0 + $0x88] sm:$0xf]
  %v55 = vld [vmem:[%s0 + $0x8c] sm:$0xf]
  %v56 = vld [vmem:[%s0 + $0x90] sm:$0xf]
  %v57 = vld [vmem:[%s0 + $0x94] sm:$0xf]
  %v58 = vld [vmem:[%s0 + $0x98] sm:$0xf]
  %v59 = vld [vmem:[%s0 + $0x9c] sm:$0xf]
  %v60 = vld [vmem:[%s0 + $0xa0] sm:$0xf]
  %v61 = vld [vmem:[%s0 + $0xa4] sm:$0xf]
  %v62 = vld [vmem:[%s0 + $0xa8] sm:$0xf]
  %v63 = vld [vmem:[%s0 + $0xac] sm:$0xf]
  %v64 = vld [vmem:[%s0 + $0xb0] sm:$0xf]
  %v65 = vld [vmem:[%s0 + $0xb4] sm:$0xf]
  %v66 = vld [vmem:[%s0 + $0xb8] sm:$0xf]
  %v67 = vld [vmem:[%s0 + $0xbc] sm:$0xf]
  %v68 = vld [vmem:[%s0 + $0xc0] sm:$0xf]
  %v69 = vld [vmem:[%s0 + $0xc4] sm:$0xf]
  %v70 = vld [vmem:[%s0 + $0xc8] sm:$0xf]
  %v71 = vld [vmem:[%s0 + $0xcc] sm:$0xf]
  %v72 = vld [vmem:[%s0 + $0xd0] sm:$0xf]
  %v73 = vld [vmem:[%s0 + $0xd4] sm:$0xf]
  %v74 = vld [vmem:[%s0 + $0xd8] sm:$0xf]
  %v75 = vld [vmem:[%s0 + $0xdc] sm:$0xf]
  %v76 = vld [vmem:[%s0 + $0xe0] sm:$0xf]
  %v77 = vld [vmem:[%s0 + $0xe4] sm:$0xf]
  %v78 = vld [vmem:[%s0 + $0xe8] sm:$0xf]
  %v79 = vld [vmem:[%s0 + $0xec] sm:$0xf]
  %v80 = vld [vmem:[%s0 + $0xf0] sm:$0xf]
  %v81 = vld [vmem:[%s0 + $0xf4] sm:$0xf]
  %v82 = vld [vmem:[%s0 + $0xf8] sm:$0xf]
  %v83 = vld [vmem:[%s0 + $0xfc] sm:$0xf]
  %v84 = vld [vmem:[%s1] sm:$0xf]
  %v85 = vld [vmem:[%s2] sm:$0x1]
  %v87 = vlaneseq
  %v88 = vshrl.u32 %v87, 7
  %v89 = vsub.s32 0, %v88
  %v90 = vrot.slane %v85, %v89
  %v156 = vunpack.c.l.b16 %v20
  %v157 = vunpack.c.l.b16 %v21
  %v158 = vunpack.c.l.b16 %v22
  %v159 = vunpack.c.l.b16 %v23
  %v160 = vunpack.c.l.b16 %v24
  %v161 = vunpack.c.l.b16 %v25
  %v162 = vunpack.c.l.b16 %v26
  %v163 = vunpack.c.l.b16 %v27
  %v164 = vunpack.c.l.b16 %v28
  %v165 = vunpack.c.l.b16 %v29
  %v166 = vunpack.c.l.b16 %v30
  %v167 = vunpack.c.l.b16 %v31
  %v168 = vunpack.c.l.b16 %v32
  %v169 = vunpack.c.l.b16 %v33
  %v170 = vunpack.c.l.b16 %v34
  %v171 = vunpack.c.l.b16 %v35
  %v172 = vunpack.c.l.b16 %v36
  %v173 = vunpack.c.l.b16 %v37
  %v174 = vunpack.c.l.b16 %v38
  %v175 = vunpack.c.l.b16 %v39
  %v176 = vunpack.c.l.b16 %v40
  %v177 = vunpack.c.l.b16 %v41
  %v178 = vunpack.c.l.b16 %v42
  %v179 = vunpack.c.l.b16 %v43
  %v180 = vunpack.c.l.b16 %v44
  %v181 = vunpack.c.l.b16 %v45
  %v182 = vunpack.c.l.b16 %v46
  %v183 = vunpack.c.l.b16 %v47
  %v184 = vunpack.c.l.b16 %v48
  %v185 = vunpack.c.l.b16 %v49
  %v186 = vunpack.c.l.b16 %v50
  %v187 = vunpack.c.l.b16 %v51
  %v188 = vunpack.c.l.b16 %v52
  %v189 = vunpack.c.l.b16 %v53
  %v190 = vunpack.c.l.b16 %v54
  %v191 = vunpack.c.l.b16 %v55
  %v192 = vunpack.c.l.b16 %v56
  %v193 = vunpack.c.l.b16 %v57
  %v194 = vunpack.c.l.b16 %v58
  %v195 = vunpack.c.l.b16 %v59
  %v196 = vunpack.c.l.b16 %v60
  %v197 = vunpack.c.l.b16 %v61
  %v198 = vunpack.c.l.b16 %v62
  %v199 = vunpack.c.l.b16 %v63
  %v200 = vunpack.c.l.b16 %v64
  %v201 = vunpack.c.l.b16 %v65
  %v202 = vunpack.c.l.b16 %v66
  %v203 = vunpack.c.l.b16 %v67
  %v204 = vunpack.c.l.b16 %v68
  %v205 = vunpack.c.l.b16 %v69
  %v206 = vunpack.c.l.b16 %v70
  %v207 = vunpack.c.l.b16 %v71
  %v208 = vunpack.c.l.b16 %v72
  %v209 = vunpack.c.l.b16 %v73
  %v210 = vunpack.c.l.b16 %v74
  %v211 = vunpack.c.l.b16 %v75
  %v212 = vunpack.c.l.b16 %v76
  %v213 = vunpack.c.l.b16 %v77
  %v214 = vunpack.c.l.b16 %v78
  %v215 = vunpack.c.l.b16 %v79
  %v216 = vunpack.c.l.b16 %v80
  %v217 = vunpack.c.l.b16 %v81
  %v218 = vunpack.c.l.b16 %v82
  %v219 = vunpack.c.l.b16 %v83
  %v220 = vpack.c.b16 %v157, %v156
  %v221 = vpack.c.b16 %v159, %v158
  %v222 = vpack.c.b16 %v161, %v160
  %v223 = vpack.c.b16 %v163, %v162
  %v224 = vpack.c.b16 %v165, %v164
  %v225 = vpack.c.b16 %v167, %v166
  %v226 = vpack.c.b16 %v169, %v168
  %v227 = vpack.c.b16 %v171, %v170
  %v228 = vpack.c.b16 %v173, %v172
  %v229 = vpack.c.b16 %v175, %v174
  %v230 = vpack.c.b16 %v177, %v176
  %v231 = vpack.c.b16 %v179, %v178
  %v232 = vpack.c.b16 %v181, %v180
  %v233 = vpack.c.b16 %v183, %v182
  %v234 = vpack.c.b16 %v185, %v184
  %v235 = vpack.c.b16 %v187, %v186
  %v236 = vpack.c.b16 %v189, %v188
  %v237 = vpack.c.b16 %v191, %v190
  %v238 = vpack.c.b16 %v193, %v192
  %v239 = vpack.c.b16 %v195, %v194
  %v240 = vpack.c.b16 %v197, %v196
  %v241 = vpack.c.b16 %v199, %v198
  %v242 = vpack.c.b16 %v201, %v200
  %v243 = vpack.c.b16 %v203, %v202
  %v244 = vpack.c.b16 %v205, %v204
  %v245 = vpack.c.b16 %v207, %v206
  %v246 = vpack.c.b16 %v209, %v208
  %v247 = vpack.c.b16 %v211, %v210
  %v248 = vpack.c.b16 %v213, %v212
  %v249 = vpack.c.b16 %v215, %v214
  %v250 = vpack.c.b16 %v217, %v216
  %v251 = vpack.c.b16 %v219, %v218
  %vm252 = vcmask 64512
  %v254 = vsel %vm252, %v220, 0
  %v257 = vsel %vm252, %v221, 0
  %v260 = vsel %vm252, %v222, 0
  %v263 = vsel %vm252, %v223, 0
  %v266 = vsel %vm252, %v224, 0
  %v269 = vsel %vm252, %v225, 0
  %v272 = vsel %vm252, %v226, 0
  %v275 = vsel %vm252, %v227, 0
  %v278 = vsel %vm252, %v228, 0
  %v281 = vsel %vm252, %v229, 0
  %v284 = vsel %vm252, %v230, 0
  %v287 = vsel %vm252, %v231, 0
  %v290 = vsel %vm252, %v232, 0
  %v293 = vsel %vm252, %v233, 0
  %v296 = vsel %vm252, %v234, 0
  %v299 = vsel %vm252, %v235, 0
  %v302 = vsel %vm252, %v236, 0
  %v305 = vsel %vm252, %v237, 0
  %v308 = vsel %vm252, %v238, 0
  %v311 = vsel %vm252, %v239, 0
  %v314 = vsel %vm252, %v240, 0
  %v317 = vsel %vm252, %v241, 0
  %v320 = vsel %vm252, %v242, 0
  %v323 = vsel %vm252, %v243, 0
  %v326 = vsel %vm252, %v244, 0
  %v329 = vsel %vm252, %v245, 0
  %v332 = vsel %vm252, %v246, 0
  %v335 = vsel %vm252, %v247, 0
  %v338 = vsel %vm252, %v248, 0
  %v341 = vsel %vm252, %v249, 0
  %v344 = vsel %vm252, %v250, 0
  %v347 = vsel %vm252, %v251, 0
  %vm349 = vcmask 1043456
  %v351 = vsel %vm349, %v84, 0
  %353 = vmatprep.subr.bf16.mxu0 0
  %354 = vmatpush1.bf16.msra.mxu0 %v351
  %355 = vmatprep.subr.bf16.mxu0 0
  %356 = vmatpush1.bf16.msra.mxu0 0
  %357 = vmatprep.subr.bf16.mxu0 0
  %358 = vmatpush1.bf16.msra.mxu0 0
  %359 = vmatprep.subr.bf16.mxu0 0
  %360 = vmatpush1.bf16.msra.mxu0 0
  %361 = vmatprep.subr.bf16.mxu0 0
  %362 = vmatpush1.bf16.msra.mxu0 0
  %363 = vmatprep.subr.bf16.mxu0 0
  %364 = vmatpush1.bf16.msra.mxu0 0
  %365 = vmatprep.subr.bf16.mxu0 0
  %366 = vmatpush1.bf16.msra.mxu0 0
  %367 = vmatprep.subr.bf16.mxu0 0
  %368 = vmatpush1.bf16.msra.mxu0 0
  %369 = vmatprep.subr.bf16.mxu0 0
  %370 = vmatpush1.bf16.msra.mxu0 0
  %371 = vmatprep.subr.bf16.mxu0 0
  %372 = vmatpush1.bf16.msra.mxu0 0
  %373 = vmatprep.subr.bf16.mxu0 0
  %374 = vmatpush1.bf16.msra.mxu0 0
  %375 = vmatprep.subr.bf16.mxu0 0
  %376 = vmatpush1.bf16.msra.mxu0 0
  %377 = vmatprep.subr.bf16.mxu0 0
  %378 = vmatpush1.bf16.msra.mxu0 0
  %379 = vmatprep.subr.bf16.mxu0 0
  %380 = vmatpush1.bf16.msra.mxu0 0
  %381 = vmatprep.subr.bf16.mxu0 0
  %382 = vmatpush1.bf16.msra.mxu0 0
  %383 = vmatprep.subr.bf16.mxu0 0
  %384 = vmatpush1.bf16.msra.mxu0 0
  %385 = vmatprep.mubr.bf16.mxu0 0
  %386 = vmatmul.mubr.bf16.gmra.mrb[0].mxu0 %v254
  %v387 = vpop.f32.mrb[0].mxu0
  %v388 = vadd.f32 %v90, %v387
  %v389 = vpop.f32.mrb[0].mxu0
  %v390 = vpop.f32.mrb[0].mxu0
  %v391 = vadd.f32 %v90, %v390
  %v392 = vpop.f32.mrb[0].mxu0
  %393 = vmatprep.mubr.bf16.mxu0 0
  %394 = vmatmul.mubr.bf16.gmra.mrb[0].mxu0 %v257
  %v395 = vpop.f32.mrb[0].mxu0
  %v396 = vadd.f32 %v90, %v395
  %v397 = vpop.f32.mrb[0].mxu0
  %v398 = vpop.f32.mrb[0].mxu0
  %v399 = vadd.f32 %v90, %v398
  %v400 = vpop.f32.mrb[0].mxu0
  %401 = vmatprep.mubr.bf16.mxu0 0
  %402 = vmatmul.mubr.bf16.gmra.mrb[0].mxu0 %v260
  %v403 = vpop.f32.mrb[0].mxu0
  %v404 = vadd.f32 %v90, %v403
  %v405 = vpop.f32.mrb[0].mxu0
  %v406 = vpop.f32.mrb[0].mxu0
  %v407 = vadd.f32 %v90, %v406
  %v408 = vpop.f32.mrb[0].mxu0
  %409 = vmatprep.mubr.bf16.mxu0 0
  %410 = vmatmul.mubr.bf16.gmra.mrb[0].mxu0 %v263
  %v411 = vpop.f32.mrb[0].mxu0
  %v412 = vadd.f32 %v90, %v411
  %v413 = vpop.f32.mrb[0].mxu0
  %v414 = vpop.f32.mrb[0].mxu0
  %v415 = vadd.f32 %v90, %v414
  %v416 = vpop.f32.mrb[0].mxu0
  %417 = vmatprep.mubr.bf16.mxu0 0
  %418 = vmatmul.mubr.bf16.gmra.mrb[0].mxu0 %v266
  %v419 = vpop.f32.mrb[0].mxu0
  %v420 = vadd.f32 %v90, %v419
  %v421 = vpop.f32.mrb[0].mxu0
  %v422 = vpop.f32.mrb[0].mxu0
  %v423 = vadd.f32 %v90, %v422
  %v424 = vpop.f32.mrb[0].mxu0
  %425 = vmatprep.mubr.bf16.mxu0 0
  %426 = vmatmul.mubr.bf16.gmra.mrb[0].mxu0 %v269
  %v427 = vpop.f32.mrb[0].mxu0
  %v428 = vadd.f32 %v90, %v427
  %v429 = vpop.f32.mrb[0].mxu0
  %v430 = vpop.f32.mrb[0].mxu0
  %v431 = vadd.f32 %v90, %v430
  %v432 = vpop.f32.mrb[0].mxu0
  %433 = vmatprep.mubr.bf16.mxu0 0
  %434 = vmatmul.mubr.bf16.gmra.mrb[0].mxu0 %v272
  %v435 = vpop.f32.mrb[0].mxu0
  %v436 = vadd.f32 %v90, %v435
  %v437 = vpop.f32.mrb[0].mxu0
  %v438 = vpop.f32.mrb[0].mxu0
  %v439 = vadd.f32 %v90, %v438
  %v440 = vpop.f32.mrb[0].mxu0
  %441 = vmatprep.mubr.bf16.mxu0 0
  %442 = vmatmul.mubr.bf16.gmra.mrb[0].mxu0 %v275
  %v443 = vpop.f32.mrb[0].mxu0
  %v444 = vadd.f32 %v90, %v443
  %v445 = vpop.f32.mrb[0].mxu0
  %v446 = vpop.f32.mrb[0].mxu0
  %v447 = vadd.f32 %v90, %v446
  %v448 = vpop.f32.mrb[0].mxu0
  %449 = vmatprep.mubr.bf16.mxu0 0
  %450 = vmatmul.mubr.bf16.gmra.mrb[0].mxu0 %v278
  %v451 = vpop.f32.mrb[0].mxu0
  %v452 = vadd.f32 %v90, %v451
  %v453 = vpop.f32.mrb[0].mxu0
  %v454 = vpop.f32.mrb[0].mxu0
  %v455 = vadd.f32 %v90, %v454
  %v456 = vpop.f32.mrb[0].mxu0
  %457 = vmatprep.mubr.bf16.mxu0 0
  %458 = vmatmul.mubr.bf16.gmra.mrb[0].mxu0 %v281
  %v459 = vpop.f32.mrb[0].mxu0
  %v460 = vadd.f32 %v90, %v459
  %v461 = vpop.f32.mrb[0].mxu0
  %v462 = vpop.f32.mrb[0].mxu0
  %v463 = vadd.f32 %v90, %v462
  %v464 = vpop.f32.mrb[0].mxu0
  %465 = vmatprep.mubr.bf16.mxu0 0
  %466 = vmatmul.mubr.bf16.gmra.mrb[0].mxu0 %v284
  %v467 = vpop.f32.mrb[0].mxu0
  %v468 = vadd.f32 %v90, %v467
  %v469 = vpop.f32.mrb[0].mxu0
  %v470 = vpop.f32.mrb[0].mxu0
  %v471 = vadd.f32 %v90, %v470
  %v472 = vpop.f32.mrb[0].mxu0
  %473 = vmatprep.mubr.bf16.mxu0 0
  %474 = vmatmul.mubr.bf16.gmra.mrb[0].mxu0 %v287
  %v475 = vpop.f32.mrb[0].mxu0
  %v476 = vadd.f32 %v90, %v475
  %v477 = vpop.f32.mrb[0].mxu0
  %v478 = vpop.f32.mrb[0].mxu0
  %v479 = vadd.f32 %v90, %v478
  %v480 = vpop.f32.mrb[0].mxu0
  %481 = vmatprep.mubr.bf16.mxu0 0
  %482 = vmatmul.mubr.bf16.gmra.mrb[0].mxu0 %v290
  %v483 = vpop.f32.mrb[0].mxu0
  %v484 = vadd.f32 %v90, %v483
  %v485 = vpop.f32.mrb[0].mxu0
  %v486 = vpop.f32.mrb[0].mxu0
  %v487 = vadd.f32 %v90, %v486
  %v488 = vpop.f32.mrb[0].mxu0
  %489 = vmatprep.mubr.bf16.mxu0 0
  %490 = vmatmul.mubr.bf16.gmra.mrb[0].mxu0 %v293
  %v491 = vpop.f32.mrb[0].mxu0
  %v492 = vadd.f32 %v90, %v491
  %v493 = vpop.f32.mrb[0].mxu0
  %v494 = vpop.f32.mrb[0].mxu0
  %v495 = vadd.f32 %v90, %v494
  %v496 = vpop.f32.mrb[0].mxu0
  %497 = vmatprep.mubr.bf16.mxu0 0
  %498 = vmatmul.mubr.bf16.gmra.mrb[0].mxu0 %v296
  %v499 = vpop.f32.mrb[0].mxu0
  %v500 = vadd.f32 %v90, %v499
  %v501 = vpop.f32.mrb[0].mxu0
  %v502 = vpop.f32.mrb[0].mxu0
  %v503 = vadd.f32 %v90, %v502
  %v504 = vpop.f32.mrb[0].mxu0
  %505 = vmatprep.mubr.bf16.mxu0 0
  %506 = vmatmul.mubr.bf16.gmra.mrb[0].mxu0 %v299
  %v507 = vpop.f32.mrb[0].mxu0
  %v508 = vadd.f32 %v90, %v507
  %v509 = vpop.f32.mrb[0].mxu0
  %v510 = vpop.f32.mrb[0].mxu0
  %v511 = vadd.f32 %v90, %v510
  %v512 = vpop.f32.mrb[0].mxu0
  %513 = vmatprep.mubr.bf16.mxu0 0
  %514 = vmatmul.mubr.bf16.gmra.mrb[0].mxu0 %v302
  %v515 = vpop.f32.mrb[0].mxu0
  %v516 = vadd.f32 %v90, %v515
  %v517 = vpop.f32.mrb[0].mxu0
  %v518 = vpop.f32.mrb[0].mxu0
  %v519 = vadd.f32 %v90, %v518
  %v520 = vpop.f32.mrb[0].mxu0
  %521 = vmatprep.mubr.bf16.mxu0 0
  %522 = vmatmul.mubr.bf16.gmra.mrb[0].mxu0 %v305
  %v523 = vpop.f32.mrb[0].mxu0
  %v524 = vadd.f32 %v90, %v523
  %v525 = vpop.f32.mrb[0].mxu0
  %v526 = vpop.f32.mrb[0].mxu0
  %v527 = vadd.f32 %v90, %v526
  %v528 = vpop.f32.mrb[0].mxu0
  %529 = vmatprep.mubr.bf16.mxu0 0
  %530 = vmatmul.mubr.bf16.gmra.mrb[0].mxu0 %v308
  %v531 = vpop.f32.mrb[0].mxu0
  %v532 = vadd.f32 %v90, %v531
  %v533 = vpop.f32.mrb[0].mxu0
  %v534 = vpop.f32.mrb[0].mxu0
  %v535 = vadd.f32 %v90, %v534
  %v536 = vpop.f32.mrb[0].mxu0
  %537 = vmatprep.mubr.bf16.mxu0 0
  %538 = vmatmul.mubr.bf16.gmra.mrb[0].mxu0 %v311
  %v539 = vpop.f32.mrb[0].mxu0
  %v540 = vadd.f32 %v90, %v539
  %v541 = vpop.f32.mrb[0].mxu0
  %v542 = vpop.f32.mrb[0].mxu0
  %v543 = vadd.f32 %v90, %v542
  %v544 = vpop.f32.mrb[0].mxu0
  %545 = vmatprep.mubr.bf16.mxu0 0
  %546 = vmatmul.mubr.bf16.gmra.mrb[0].mxu0 %v314
  %v547 = vpop.f32.mrb[0].mxu0
  %v548 = vadd.f32 %v90, %v547
  %v549 = vpop.f32.mrb[0].mxu0
  %v550 = vpop.f32.mrb[0].mxu0
  %v551 = vadd.f32 %v90, %v550
  %v552 = vpop.f32.mrb[0].mxu0
  %553 = vmatprep.mubr.bf16.mxu0 0
  %554 = vmatmul.mubr.bf16.gmra.mrb[0].mxu0 %v317
  %v555 = vpop.f32.mrb[0].mxu0
  %v556 = vadd.f32 %v90, %v555
  %v557 = vpop.f32.mrb[0].mxu0
  %v558 = vpop.f32.mrb[0].mxu0
  %v559 = vadd.f32 %v90, %v558
  %v560 = vpop.f32.mrb[0].mxu0
  %561 = vmatprep.mubr.bf16.mxu0 0
  %562 = vmatmul.mubr.bf16.gmra.mrb[0].mxu0 %v320
  %v563 = vpop.f32.mrb[0].mxu0
  %v564 = vadd.f32 %v90, %v563
  %v565 = vpop.f32.mrb[0].mxu0
  %v566 = vpop.f32.mrb[0].mxu0
  %v567 = vadd.f32 %v90, %v566
  %v568 = vpop.f32.mrb[0].mxu0
  %569 = vmatprep.mubr.bf16.mxu0 0
  %570 = vmatmul.mubr.bf16.gmra.mrb[0].mxu0 %v323
  %v571 = vpop.f32.mrb[0].mxu0
  %v572 = vadd.f32 %v90, %v571
  %v573 = vpop.f32.mrb[0].mxu0
  %v574 = vpop.f32.mrb[0].mxu0
  %v575 = vadd.f32 %v90, %v574
  %v576 = vpop.f32.mrb[0].mxu0
  %577 = vmatprep.mubr.bf16.mxu0 0
  %578 = vmatmul.mubr.bf16.gmra.mrb[0].mxu0 %v326
  %v579 = vpop.f32.mrb[0].mxu0
  %v580 = vadd.f32 %v90, %v579
  %v581 = vpop.f32.mrb[0].mxu0
  %v582 = vpop.f32.mrb[0].mxu0
  %v583 = vadd.f32 %v90, %v582
  %v584 = vpop.f32.mrb[0].mxu0
  %585 = vmatprep.mubr.bf16.mxu0 0
  %586 = vmatmul.mubr.bf16.gmra.mrb[0].mxu0 %v329
  %v587 = vpop.f32.mrb[0].mxu0
  %v588 = vadd.f32 %v90, %v587
  %v589 = vpop.f32.mrb[0].mxu0
  %v590 = vpop.f32.mrb[0].mxu0
  %v591 = vadd.f32 %v90, %v590
  %v592 = vpop.f32.mrb[0].mxu0
  %593 = vmatprep.mubr.bf16.mxu0 0
  %594 = vmatmul.mubr.bf16.gmra.mrb[0].mxu0 %v332
  %v595 = vpop.f32.mrb[0].mxu0
  %v596 = vadd.f32 %v90, %v595
  %v597 = vpop.f32.mrb[0].mxu0
  %v598 = vpop.f32.mrb[0].mxu0
  %v599 = vadd.f32 %v90, %v598
  %v600 = vpop.f32.mrb[0].mxu0
  %601 = vmatprep.mubr.bf16.mxu0 0
  %602 = vmatmul.mubr.bf16.gmra.mrb[0].mxu0 %v335
  %v603 = vpop.f32.mrb[0].mxu0
  %v604 = vadd.f32 %v90, %v603
  %v605 = vpop.f32.mrb[0].mxu0
  %v606 = vpop.f32.mrb[0].mxu0
  %v607 = vadd.f32 %v90, %v606
  %v608 = vpop.f32.mrb[0].mxu0
  %609 = vmatprep.mubr.bf16.mxu0 0
  %610 = vmatmul.mubr.bf16.gmra.mrb[0].mxu0 %v338
  %v611 = vpop.f32.mrb[0].mxu0
  %v612 = vadd.f32 %v90, %v611
  %v613 = vpop.f32.mrb[0].mxu0
  %v614 = vpop.f32.mrb[0].mxu0
  %v615 = vadd.f32 %v90, %v614
  %v616 = vpop.f32.mrb[0].mxu0
  %617 = vmatprep.mubr.bf16.mxu0 0
  %618 = vmatmul.mubr.bf16.gmra.mrb[0].mxu0 %v341
  %v619 = vpop.f32.mrb[0].mxu0
  %v620 = vadd.f32 %v90, %v619
  %v621 = vpop.f32.mrb[0].mxu0
  %v622 = vpop.f32.mrb[0].mxu0
  %v623 = vadd.f32 %v90, %v622
  %v624 = vpop.f32.mrb[0].mxu0
  %625 = vmatprep.mubr.bf16.mxu0 0
  %626 = vmatmul.mubr.bf16.gmra.mrb[0].mxu0 %v344
  %v627 = vpop.f32.mrb[0].mxu0
  %v628 = vadd.f32 %v90, %v627
  %v629 = vpop.f32.mrb[0].mxu0
  %v630 = vpop.f32.mrb[0].mxu0
  %v631 = vadd.f32 %v90, %v630
  %v632 = vpop.f32.mrb[0].mxu0
  %633 = vmatprep.mubr.bf16.mxu0 0
  %634 = vmatmul.mubr.bf16.gmra.mrb[0].mxu0 %v347
  %v635 = vpop.f32.mrb[0].mxu0
  %v636 = vadd.f32 %v90, %v635
  %v637 = vpop.f32.mrb[0].mxu0
  %v638 = vpop.f32.mrb[0].mxu0
  %v639 = vadd.f32 %v90, %v638
  %v640 = vpop.f32.mrb[0].mxu0
  %641 = vdwg.mxu0
  %vm642 = vcmp.ge.f32.partialorder %v388, 0.0
  %vm643 = vcmp.ge.f32.partialorder %v391, 0.0
  %vm644 = vcmp.ge.f32.partialorder %v396, 0.0
  %vm645 = vcmp.ge.f32.partialorder %v399, 0.0
  %vm646 = vcmp.ge.f32.partialorder %v404, 0.0
  %vm647 = vcmp.ge.f32.partialorder %v407, 0.0
  %vm648 = vcmp.ge.f32.partialorder %v412, 0.0
  %vm649 = vcmp.ge.f32.partialorder %v415, 0.0
  %vm650 = vcmp.ge.f32.partialorder %v420, 0.0
  %vm651 = vcmp.ge.f32.partialorder %v423, 0.0
  %vm652 = vcmp.ge.f32.partialorder %v428, 0.0
  %vm653 = vcmp.ge.f32.partialorder %v431, 0.0
  %vm654 = vcmp.ge.f32.partialorder %v436, 0.0
  %vm655 = vcmp.ge.f32.partialorder %v439, 0.0
  %vm656 = vcmp.ge.f32.partialorder %v444, 0.0
  %vm657 = vcmp.ge.f32.partialorder %v447, 0.0
  %vm658 = vcmp.ge.f32.partialorder %v452, 0.0
  %vm659 = vcmp.ge.f32.partialorder %v455, 0.0
  %vm660 = vcmp.ge.f32.partialorder %v460, 0.0
  %vm661 = vcmp.ge.f32.partialorder %v463, 0.0
  %vm662 = vcmp.ge.f32.partialorder %v468, 0.0
  %vm663 = vcmp.ge.f32.partialorder %v471, 0.0
  %vm664 = vcmp.ge.f32.partialorder %v476, 0.0
  %vm665 = vcmp.ge.f32.partialorder %v479, 0.0
  %vm666 = vcmp.ge.f32.partialorder %v484, 0.0
  %vm667 = vcmp.ge.f32.partialorder %v487, 0.0
  %vm668 = vcmp.ge.f32.partialorder %v492, 0.0
  %vm669 = vcmp.ge.f32.partialorder %v495, 0.0
  %vm670 = vcmp.ge.f32.partialorder %v500, 0.0
  %vm671 = vcmp.ge.f32.partialorder %v503, 0.0
  %vm672 = vcmp.ge.f32.partialorder %v508, 0.0
  %vm673 = vcmp.ge.f32.partialorder %v511, 0.0
  %vm674 = vcmp.ge.f32.partialorder %v516, 0.0
  %vm675 = vcmp.ge.f32.partialorder %v519, 0.0
  %vm676 = vcmp.ge.f32.partialorder %v524, 0.0
  %vm677 = vcmp.ge.f32.partialorder %v527, 0.0
  %vm678 = vcmp.ge.f32.partialorder %v532, 0.0
  %vm679 = vcmp.ge.f32.partialorder %v535, 0.0
  %vm680 = vcmp.ge.f32.partialorder %v540, 0.0
  %vm681 = vcmp.ge.f32.partialorder %v543, 0.0
  %vm682 = vcmp.ge.f32.partialorder %v548, 0.0
  %vm683 = vcmp.ge.f32.partialorder %v551, 0.0
  %vm684 = vcmp.ge.f32.partialorder %v556, 0.0
  %vm685 = vcmp.ge.f32.partialorder %v559, 0.0
  %vm686 = vcmp.ge.f32.partialorder %v564, 0.0
  %vm687 = vcmp.ge.f32.partialorder %v567, 0.0
  %vm688 = vcmp.ge.f32.partialorder %v572, 0.0
  %vm689 = vcmp.ge.f32.partialorder %v575, 0.0
  %vm690 = vcmp.ge.f32.partialorder %v580, 0.0
  %vm691 = vcmp.ge.f32.partialorder %v583, 0.0
  %vm692 = vcmp.ge.f32.partialorder %v588, 0.0
  %vm693 = vcmp.ge.f32.partialorder %v591, 0.0
  %vm694 = vcmp.ge.f32.partialorder %v596, 0.0
  %vm695 = vcmp.ge.f32.partialorder %v599, 0.0
  %vm696 = vcmp.ge.f32.partialorder %v604, 0.0
  %vm697 = vcmp.ge.f32.partialorder %v607, 0.0
  %vm698 = vcmp.ge.f32.partialorder %v612, 0.0
  %vm699 = vcmp.ge.f32.partialorder %v615, 0.0
  %vm700 = vcmp.ge.f32.partialorder %v620, 0.0
  %vm701 = vcmp.ge.f32.partialorder %v623, 0.0
  %vm702 = vcmp.ge.f32.partialorder %v628, 0.0
  %vm703 = vcmp.ge.f32.partialorder %v631, 0.0
  %vm704 = vcmp.ge.f32.partialorder %v636, 0.0
  %vm705 = vcmp.ge.f32.partialorder %v639, 0.0
  %v706 = vmul.f32 %v388, 0.2
  %v707 = vmul.f32 %v391, 0.2
  %v708 = vmul.f32 %v396, 0.2
  %v709 = vmul.f32 %v399, 0.2
  %v710 = vmul.f32 %v404, 0.2
  %v711 = vmul.f32 %v407, 0.2
  %v712 = vmul.f32 %v412, 0.2
  %v713 = vmul.f32 %v415, 0.2
  %v714 = vmul.f32 %v420, 0.2
  %v715 = vmul.f32 %v423, 0.2
  %v716 = vmul.f32 %v428, 0.2
  %v717 = vmul.f32 %v431, 0.2
  %v718 = vmul.f32 %v436, 0.2
  %v719 = vmul.f32 %v439, 0.2
  %v720 = vmul.f32 %v444, 0.2
  %v721 = vmul.f32 %v447, 0.2
  %v722 = vmul.f32 %v452, 0.2
  %v723 = vmul.f32 %v455, 0.2
  %v724 = vmul.f32 %v460, 0.2
  %v725 = vmul.f32 %v463, 0.2
  %v726 = vmul.f32 %v468, 0.2
  %v727 = vmul.f32 %v471, 0.2
  %v728 = vmul.f32 %v476, 0.2
  %v729 = vmul.f32 %v479, 0.2
  %v730 = vmul.f32 %v484, 0.2
  %v731 = vmul.f32 %v487, 0.2
  %v732 = vmul.f32 %v492, 0.2
  %v733 = vmul.f32 %v495, 0.2
  %v734 = vmul.f32 %v500, 0.2
  %v735 = vmul.f32 %v503, 0.2
  %v736 = vmul.f32 %v508, 0.2
  %v737 = vmul.f32 %v511, 0.2
  %v738 = vmul.f32 %v516, 0.2
  %v739 = vmul.f32 %v519, 0.2
  %v740 = vmul.f32 %v524, 0.2
  %v741 = vmul.f32 %v527, 0.2
  %v742 = vmul.f32 %v532, 0.2
  %v743 = vmul.f32 %v535, 0.2
  %v744 = vmul.f32 %v540, 0.2
  %v745 = vmul.f32 %v543, 0.2
  %v746 = vmul.f32 %v548, 0.2
  %v747 = vmul.f32 %v551, 0.2
  %v748 = vmul.f32 %v556, 0.2
  %v749 = vmul.f32 %v559, 0.2
  %v750 = vmul.f32 %v564, 0.2
  %v751 = vmul.f32 %v567, 0.2
  %v752 = vmul.f32 %v572, 0.2
  %v753 = vmul.f32 %v575, 0.2
  %v754 = vmul.f32 %v580, 0.2
  %v755 = vmul.f32 %v583, 0.2
  %v756 = vmul.f32 %v588, 0.2
  %v757 = vmul.f32 %v591, 0.2
  %v758 = vmul.f32 %v596, 0.2
  %v759 = vmul.f32 %v599, 0.2
  %v760 = vmul.f32 %v604, 0.2
  %v761 = vmul.f32 %v607, 0.2
  %v762 = vmul.f32 %v612, 0.2
  %v763 = vmul.f32 %v615, 0.2
  %v764 = vmul.f32 %v620, 0.2
  %v765 = vmul.f32 %v623, 0.2
  %v766 = vmul.f32 %v628, 0.2
  %v767 = vmul.f32 %v631, 0.2
  %v768 = vmul.f32 %v636, 0.2
  %v769 = vmul.f32 %v639, 0.2
  %v770 = vsel %vm642, %v388, %v706
  %v771 = vsel %vm643, %v391, %v707
  %v772 = vsel %vm644, %v396, %v708
  %v773 = vsel %vm645, %v399, %v709
  %v774 = vsel %vm646, %v404, %v710
  %v775 = vsel %vm647, %v407, %v711
  %v776 = vsel %vm648, %v412, %v712
  %v777 = vsel %vm649, %v415, %v713
  %v778 = vsel %vm650, %v420, %v714
  %v779 = vsel %vm651, %v423, %v715
  %v780 = vsel %vm652, %v428, %v716
  %v781 = vsel %vm653, %v431, %v717
  %v782 = vsel %vm654, %v436, %v718
  %v783 = vsel %vm655, %v439, %v719
  %v784 = vsel %vm656, %v444, %v720
  %v785 = vsel %vm657, %v447, %v721
  %v786 = vsel %vm658, %v452, %v722
  %v787 = vsel %vm659, %v455, %v723
  %v788 = vsel %vm660, %v460, %v724
  %v789 = vsel %vm661, %v463, %v725
  %v790 = vsel %vm662, %v468, %v726
  %v791 = vsel %vm663, %v471, %v727
  %v792 = vsel %vm664, %v476, %v728
  %v793 = vsel %vm665, %v479, %v729
  %v794 = vsel %vm666, %v484, %v730
  %v795 = vsel %vm667, %v487, %v731
  %v796 = vsel %vm668, %v492, %v732
  %v797 = vsel %vm669, %v495, %v733
  %v798 = vsel %vm670, %v500, %v734
  %v799 = vsel %vm671, %v503, %v735
  %v800 = vsel %vm672, %v508, %v736
  %v801 = vsel %vm673, %v511, %v737
  %v802 = vsel %vm674, %v516, %v738
  %v803 = vsel %vm675, %v519, %v739
  %v804 = vsel %vm676, %v524, %v740
  %v805 = vsel %vm677, %v527, %v741
  %v806 = vsel %vm678, %v532, %v742
  %v807 = vsel %vm679, %v535, %v743
  %v808 = vsel %vm680, %v540, %v744
  %v809 = vsel %vm681, %v543, %v745
  %v810 = vsel %vm682, %v548, %v746
  %v811 = vsel %vm683, %v551, %v747
  %v812 = vsel %vm684, %v556, %v748
  %v813 = vsel %vm685, %v559, %v749
  %v814 = vsel %vm686, %v564, %v750
  %v815 = vsel %vm687, %v567, %v751
  %v816 = vsel %vm688, %v572, %v752
  %v817 = vsel %vm689, %v575, %v753
  %v818 = vsel %vm690, %v580, %v754
  %v819 = vsel %vm691, %v583, %v755
  %v820 = vsel %vm692, %v588, %v756
  %v821 = vsel %vm693, %v591, %v757
  %v822 = vsel %vm694, %v596, %v758
  %v823 = vsel %vm695, %v599, %v759
  %v824 = vsel %vm696, %v604, %v760
  %v825 = vsel %vm697, %v607, %v761
  %v826 = vsel %vm698, %v612, %v762
  %v827 = vsel %vm699, %v615, %v763
  %v828 = vsel %vm700, %v620, %v764
  %v829 = vsel %vm701, %v623, %v765
  %v830 = vsel %vm702, %v628, %v766
  %v831 = vsel %vm703, %v631, %v767
  %v832 = vsel %vm704, %v636, %v768
  %v833 = vsel %vm705, %v639, %v769
  %v834 = vpack.c.bf16 %v771, %v770
  %v835 = vpack.c.bf16 %v773, %v772
  %v836 = vpack.c.bf16 %v775, %v774
  %v837 = vpack.c.bf16 %v777, %v776
  %v838 = vpack.c.bf16 %v779, %v778
  %v839 = vpack.c.bf16 %v781, %v780
  %v840 = vpack.c.bf16 %v783, %v782
  %v841 = vpack.c.bf16 %v785, %v784
  %v842 = vpack.c.bf16 %v787, %v786
  %v843 = vpack.c.bf16 %v789, %v788
  %v844 = vpack.c.bf16 %v791, %v790
  %v845 = vpack.c.bf16 %v793, %v792
  %v846 = vpack.c.bf16 %v795, %v794
  %v847 = vpack.c.bf16 %v797, %v796
  %v848 = vpack.c.bf16 %v799, %v798
  %v849 = vpack.c.bf16 %v801, %v800
  %v850 = vpack.c.bf16 %v803, %v802
  %v851 = vpack.c.bf16 %v805, %v804
  %v852 = vpack.c.bf16 %v807, %v806
  %v853 = vpack.c.bf16 %v809, %v808
  %v854 = vpack.c.bf16 %v811, %v810
  %v855 = vpack.c.bf16 %v813, %v812
  %v856 = vpack.c.bf16 %v815, %v814
  %v857 = vpack.c.bf16 %v817, %v816
  %v858 = vpack.c.bf16 %v819, %v818
  %v859 = vpack.c.bf16 %v821, %v820
  %v860 = vpack.c.bf16 %v823, %v822
  %v861 = vpack.c.bf16 %v825, %v824
  %v862 = vpack.c.bf16 %v827, %v826
  %v863 = vpack.c.bf16 %v829, %v828
  %v864 = vpack.c.bf16 %v831, %v830
  %v865 = vpack.c.bf16 %v833, %v832
  %v866 = vld [vmem:[%s3] sm:$0xf]
  %v867 = vld [vmem:[%s3 + $0x4] sm:$0xf]
  %v868 = vld [vmem:[%s3 + $0x8] sm:$0xf]
  %v869 = vld [vmem:[%s3 + $0xc] sm:$0xf]
  %v870 = vld [vmem:[%s3 + $0x10] sm:$0xf]
  %v871 = vld [vmem:[%s3 + $0x14] sm:$0xf]
  %v872 = vld [vmem:[%s3 + $0x18] sm:$0xf]
  %v873 = vld [vmem:[%s3 + $0x1c] sm:$0xf]
  %v882 = vunpack.c.l.b16 %v866
  %v883 = vunpack.c.l.b16 %v867
  %v884 = vunpack.c.l.b16 %v868
  %v885 = vunpack.c.l.b16 %v869
  %v886 = vunpack.c.l.b16 %v870
  %v887 = vunpack.c.l.b16 %v871
  %v888 = vunpack.c.l.b16 %v872
  %v889 = vunpack.c.l.b16 %v873
  %v890 = vpack.c.b16 %v883, %v882
  %v891 = vpack.c.b16 %v885, %v884
  %v892 = vpack.c.b16 %v887, %v886
  %v893 = vpack.c.b16 %v889, %v888
  %vm898 = vcmask 523264
  %v900 = vsel %vm898, %v834, 0
  %v903 = vsel %vm898, %v835, 0
  %v906 = vsel %vm898, %v836, 0
  %v909 = vsel %vm898, %v837, 0
  %v912 = vsel %vm898, %v838, 0
  %v915 = vsel %vm898, %v839, 0
  %v918 = vsel %vm898, %v840, 0
  %v921 = vsel %vm898, %v841, 0
  %v924 = vsel %vm898, %v842, 0
  %v927 = vsel %vm898, %v843, 0
  %v930 = vsel %vm898, %v844, 0
  %v933 = vsel %vm898, %v845, 0
  %v936 = vsel %vm898, %v846, 0
  %v939 = vsel %vm898, %v847, 0
  %v942 = vsel %vm898, %v848, 0
  %v945 = vsel %vm898, %v849, 0
  %v948 = vsel %vm898, %v850, 0
  %v951 = vsel %vm898, %v851, 0
  %v954 = vsel %vm898, %v852, 0
  %v957 = vsel %vm898, %v853, 0
  %v960 = vsel %vm898, %v854, 0
  %v963 = vsel %vm898, %v855, 0
  %v966 = vsel %vm898, %v856, 0
  %v969 = vsel %vm898, %v857, 0
  %v972 = vsel %vm898, %v858, 0
  %v975 = vsel %vm898, %v859, 0
  %v978 = vsel %vm898, %v860, 0
  %v981 = vsel %vm898, %v861, 0
  %v984 = vsel %vm898, %v862, 0
  %v987 = vsel %vm898, %v863, 0
  %v990 = vsel %vm898, %v864, 0
  %v993 = vsel %vm898, %v865, 0
  %995 = vmatprep.subr.bf16.mxu0 0
  %996 = vmatpush1.bf16.msra.mxu0 %v890
  %997 = vmatprep.subr.bf16.mxu0 0
  %998 = vmatpush1.bf16.msra.mxu0 %v891
  %999 = vmatprep.subr.bf16.mxu0 0
  %1000 = vmatpush1.bf16.msra.mxu0 %v892
  %1001 = vmatprep.subr.bf16.mxu0 0
  %1002 = vmatpush1.bf16.msra.mxu0 %v893
  %1003 = vmatprep.subr.bf16.mxu0 0
  %1004 = vmatpush1.bf16.msra.mxu0 0
  %1005 = vmatprep.subr.bf16.mxu0 0
  %1006 = vmatpush1.bf16.msra.mxu0 0
  %1007 = vmatprep.subr.bf16.mxu0 0
  %1008 = vmatpush1.bf16.msra.mxu0 0
  %1009 = vmatprep.subr.bf16.mxu0 0
  %1010 = vmatpush1.bf16.msra.mxu0 0
  %1011 = vmatprep.subr.bf16.mxu0 0
  %1012 = vmatpush1.bf16.msra.mxu0 0
  %1013 = vmatprep.subr.bf16.mxu0 0
  %1014 = vmatpush1.bf16.msra.mxu0 0
  %1015 = vmatprep.subr.bf16.mxu0 0
  %1016 = vmatpush1.bf16.msra.mxu0 0
  %1017 = vmatprep.subr.bf16.mxu0 0
  %1018 = vmatpush1.bf16.msra.mxu0 0
  %1019 = vmatprep.subr.bf16.mxu0 0
  %1020 = vmatpush1.bf16.msra.mxu0 0
  %1021 = vmatprep.subr.bf16.mxu0 0
  %1022 = vmatpush1.bf16.msra.mxu0 0
  %1023 = vmatprep.subr.bf16.mxu0 0
  %1024 = vmatpush1.bf16.msra.mxu0 0
  %1025 = vmatprep.subr.bf16.mxu0 0
  %1026 = vmatpush1.bf16.msra.mxu0 0
  %1027 = vmatprep.mubr.bf16.mxu0 0
  %1028 = vmatmul.mubr.bf16.gmra.mrb[0].mxu0 %v900
  %v1029 = vpop.f32.mrb[0].mxu0
  %v1030 = vadd.f32 0.0, %v1029
  %v1031 = vpop.f32.mrb[0].mxu0
  %v1032 = vpop.f32.mrb[0].mxu0
  %v1033 = vadd.f32 0.0, %v1032
  %v1034 = vpop.f32.mrb[0].mxu0
  %1035 = vmatprep.mubr.bf16.mxu0 0
  %1036 = vmatmul.mubr.bf16.gmra.mrb[0].mxu0 %v903
  %v1037 = vpop.f32.mrb[0].mxu0
  %v1038 = vadd.f32 0.0, %v1037
  %v1039 = vpop.f32.mrb[0].mxu0
  %v1040 = vpop.f32.mrb[0].mxu0
  %v1041 = vadd.f32 0.0, %v1040
  %v1042 = vpop.f32.mrb[0].mxu0
  %1043 = vmatprep.mubr.bf16.mxu0 0
  %1044 = vmatmul.mubr.bf16.gmra.mrb[0].mxu0 %v906
  %v1045 = vpop.f32.mrb[0].mxu0
  %v1046 = vadd.f32 0.0, %v1045
  %v1047 = vpop.f32.mrb[0].mxu0
  %v1048 = vpop.f32.mrb[0].mxu0
  %v1049 = vadd.f32 0.0, %v1048
  %v1050 = vpop.f32.mrb[0].mxu0
  %1051 = vmatprep.mubr.bf16.mxu0 0
  %1052 = vmatmul.mubr.bf16.gmra.mrb[0].mxu0 %v909
  %v1053 = vpop.f32.mrb[0].mxu0
  %v1054 = vadd.f32 0.0, %v1053
  %v1055 = vpop.f32.mrb[0].mxu0
  %v1056 = vpop.f32.mrb[0].mxu0
  %v1057 = vadd.f32 0.0, %v1056
  %v1058 = vpop.f32.mrb[0].mxu0
  %1059 = vmatprep.mubr.bf16.mxu0 0
  %1060 = vmatmul.mubr.bf16.gmra.mrb[0].mxu0 %v912
  %v1061 = vpop.f32.mrb[0].mxu0
  %v1062 = vadd.f32 0.0, %v1061
  %v1063 = vpop.f32.mrb[0].mxu0
  %v1064 = vpop.f32.mrb[0].mxu0
  %v1065 = vadd.f32 0.0, %v1064
  %v1066 = vpop.f32.mrb[0].mxu0
  %1067 = vmatprep.mubr.bf16.mxu0 0
  %1068 = vmatmul.mubr.bf16.gmra.mrb[0].mxu0 %v915
  %v1069 = vpop.f32.mrb[0].mxu0
  %v1070 = vadd.f32 0.0, %v1069
  %v1071 = vpop.f32.mrb[0].mxu0
  %v1072 = vpop.f32.mrb[0].mxu0
  %v1073 = vadd.f32 0.0, %v1072
  %v1074 = vpop.f32.mrb[0].mxu0
  %1075 = vmatprep.mubr.bf16.mxu0 0
  %1076 = vmatmul.mubr.bf16.gmra.mrb[0].mxu0 %v918
  %v1077 = vpop.f32.mrb[0].mxu0
  %v1078 = vadd.f32 0.0, %v1077
  %v1079 = vpop.f32.mrb[0].mxu0
  %v1080 = vpop.f32.mrb[0].mxu0
  %v1081 = vadd.f32 0.0, %v1080
  %v1082 = vpop.f32.mrb[0].mxu0
  %1083 = vmatprep.mubr.bf16.mxu0 0
  %1084 = vmatmul.mubr.bf16.gmra.mrb[0].mxu0 %v921
  %v1085 = vpop.f32.mrb[0].mxu0
  %v1086 = vadd.f32 0.0, %v1085
  %v1087 = vpop.f32.mrb[0].mxu0
  %v1088 = vpop.f32.mrb[0].mxu0
  %v1089 = vadd.f32 0.0, %v1088
  %v1090 = vpop.f32.mrb[0].mxu0
  %1091 = vmatprep.mubr.bf16.mxu0 0
  %1092 = vmatmul.mubr.bf16.gmra.mrb[0].mxu0 %v924
  %v1093 = vpop.f32.mrb[0].mxu0
  %v1094 = vadd.f32 0.0, %v1093
  %v1095 = vpop.f32.mrb[0].mxu0
  %v1096 = vpop.f32.mrb[0].mxu0
  %v1097 = vadd.f32 0.0, %v1096
  %v1098 = vpop.f32.mrb[0].mxu0
  %1099 = vmatprep.mubr.bf16.mxu0 0
  %1100 = vmatmul.mubr.bf16.gmra.mrb[0].mxu0 %v927
  %v1101 = vpop.f32.mrb[0].mxu0
  %v1102 = vadd.f32 0.0, %v1101
  %v1103 = vpop.f32.mrb[0].mxu0
  %v1104 = vpop.f32.mrb[0].mxu0
  %v1105 = vadd.f32 0.0, %v1104
  %v1106 = vpop.f32.mrb[0].mxu0
  %1107 = vmatprep.mubr.bf16.mxu0 0
  %1108 = vmatmul.mubr.bf16.gmra.mrb[0].mxu0 %v930
  %v1109 = vpop.f32.mrb[0].mxu0
  %v1110 = vadd.f32 0.0, %v1109
  %v1111 = vpop.f32.mrb[0].mxu0
  %v1112 = vpop.f32.mrb[0].mxu0
  %v1113 = vadd.f32 0.0, %v1112
  %v1114 = vpop.f32.mrb[0].mxu0
  %1115 = vmatprep.mubr.bf16.mxu0 0
  %1116 = vmatmul.mubr.bf16.gmra.mrb[0].mxu0 %v933
  %v1117 = vpop.f32.mrb[0].mxu0
  %v1118 = vadd.f32 0.0, %v1117
  %v1119 = vpop.f32.mrb[0].mxu0
  %v1120 = vpop.f32.mrb[0].mxu0
  %v1121 = vadd.f32 0.0, %v1120
  %v1122 = vpop.f32.mrb[0].mxu0
  %1123 = vmatprep.mubr.bf16.mxu0 0
  %1124 = vmatmul.mubr.bf16.gmra.mrb[0].mxu0 %v936
  %v1125 = vpop.f32.mrb[0].mxu0
  %v1126 = vadd.f32 0.0, %v1125
  %v1127 = vpop.f32.mrb[0].mxu0
  %v1128 = vpop.f32.mrb[0].mxu0
  %v1129 = vadd.f32 0.0, %v1128
  %v1130 = vpop.f32.mrb[0].mxu0
  %1131 = vmatprep.mubr.bf16.mxu0 0
  %1132 = vmatmul.mubr.bf16.gmra.mrb[0].mxu0 %v939
  %v1133 = vpop.f32.mrb[0].mxu0
  %v1134 = vadd.f32 0.0, %v1133
  %v1135 = vpop.f32.mrb[0].mxu0
  %v1136 = vpop.f32.mrb[0].mxu0
  %v1137 = vadd.f32 0.0, %v1136
  %v1138 = vpop.f32.mrb[0].mxu0
  %1139 = vmatprep.mubr.bf16.mxu0 0
  %1140 = vmatmul.mubr.bf16.gmra.mrb[0].mxu0 %v942
  %v1141 = vpop.f32.mrb[0].mxu0
  %v1142 = vadd.f32 0.0, %v1141
  %v1143 = vpop.f32.mrb[0].mxu0
  %v1144 = vpop.f32.mrb[0].mxu0
  %v1145 = vadd.f32 0.0, %v1144
  %v1146 = vpop.f32.mrb[0].mxu0
  %1147 = vmatprep.mubr.bf16.mxu0 0
  %1148 = vmatmul.mubr.bf16.gmra.mrb[0].mxu0 %v945
  %v1149 = vpop.f32.mrb[0].mxu0
  %v1150 = vadd.f32 0.0, %v1149
  %v1151 = vpop.f32.mrb[0].mxu0
  %v1152 = vpop.f32.mrb[0].mxu0
  %v1153 = vadd.f32 0.0, %v1152
  %v1154 = vpop.f32.mrb[0].mxu0
  %1155 = vmatprep.mubr.bf16.mxu0 0
  %1156 = vmatmul.mubr.bf16.gmra.mrb[0].mxu0 %v948
  %v1157 = vpop.f32.mrb[0].mxu0
  %v1158 = vadd.f32 0.0, %v1157
  %v1159 = vpop.f32.mrb[0].mxu0
  %v1160 = vpop.f32.mrb[0].mxu0
  %v1161 = vadd.f32 0.0, %v1160
  %v1162 = vpop.f32.mrb[0].mxu0
  %1163 = vmatprep.mubr.bf16.mxu0 0
  %1164 = vmatmul.mubr.bf16.gmra.mrb[0].mxu0 %v951
  %v1165 = vpop.f32.mrb[0].mxu0
  %v1166 = vadd.f32 0.0, %v1165
  %v1167 = vpop.f32.mrb[0].mxu0
  %v1168 = vpop.f32.mrb[0].mxu0
  %v1169 = vadd.f32 0.0, %v1168
  %v1170 = vpop.f32.mrb[0].mxu0
  %1171 = vmatprep.mubr.bf16.mxu0 0
  %1172 = vmatmul.mubr.bf16.gmra.mrb[0].mxu0 %v954
  %v1173 = vpop.f32.mrb[0].mxu0
  %v1174 = vadd.f32 0.0, %v1173
  %v1175 = vpop.f32.mrb[0].mxu0
  %v1176 = vpop.f32.mrb[0].mxu0
  %v1177 = vadd.f32 0.0, %v1176
  %v1178 = vpop.f32.mrb[0].mxu0
  %1179 = vmatprep.mubr.bf16.mxu0 0
  %1180 = vmatmul.mubr.bf16.gmra.mrb[0].mxu0 %v957
  %v1181 = vpop.f32.mrb[0].mxu0
  %v1182 = vadd.f32 0.0, %v1181
  %v1183 = vpop.f32.mrb[0].mxu0
  %v1184 = vpop.f32.mrb[0].mxu0
  %v1185 = vadd.f32 0.0, %v1184
  %v1186 = vpop.f32.mrb[0].mxu0
  %1187 = vmatprep.mubr.bf16.mxu0 0
  %1188 = vmatmul.mubr.bf16.gmra.mrb[0].mxu0 %v960
  %v1189 = vpop.f32.mrb[0].mxu0
  %v1190 = vadd.f32 0.0, %v1189
  %v1191 = vpop.f32.mrb[0].mxu0
  %v1192 = vpop.f32.mrb[0].mxu0
  %v1193 = vadd.f32 0.0, %v1192
  %v1194 = vpop.f32.mrb[0].mxu0
  %1195 = vmatprep.mubr.bf16.mxu0 0
  %1196 = vmatmul.mubr.bf16.gmra.mrb[0].mxu0 %v963
  %v1197 = vpop.f32.mrb[0].mxu0
  %v1198 = vadd.f32 0.0, %v1197
  %v1199 = vpop.f32.mrb[0].mxu0
  %v1200 = vpop.f32.mrb[0].mxu0
  %v1201 = vadd.f32 0.0, %v1200
  %v1202 = vpop.f32.mrb[0].mxu0
  %1203 = vmatprep.mubr.bf16.mxu0 0
  %1204 = vmatmul.mubr.bf16.gmra.mrb[0].mxu0 %v966
  %v1205 = vpop.f32.mrb[0].mxu0
  %v1206 = vadd.f32 0.0, %v1205
  %v1207 = vpop.f32.mrb[0].mxu0
  %v1208 = vpop.f32.mrb[0].mxu0
  %v1209 = vadd.f32 0.0, %v1208
  %v1210 = vpop.f32.mrb[0].mxu0
  %1211 = vmatprep.mubr.bf16.mxu0 0
  %1212 = vmatmul.mubr.bf16.gmra.mrb[0].mxu0 %v969
  %v1213 = vpop.f32.mrb[0].mxu0
  %v1214 = vadd.f32 0.0, %v1213
  %v1215 = vpop.f32.mrb[0].mxu0
  %v1216 = vpop.f32.mrb[0].mxu0
  %v1217 = vadd.f32 0.0, %v1216
  %v1218 = vpop.f32.mrb[0].mxu0
  %1219 = vmatprep.mubr.bf16.mxu0 0
  %1220 = vmatmul.mubr.bf16.gmra.mrb[0].mxu0 %v972
  %v1221 = vpop.f32.mrb[0].mxu0
  %v1222 = vadd.f32 0.0, %v1221
  %v1223 = vpop.f32.mrb[0].mxu0
  %v1224 = vpop.f32.mrb[0].mxu0
  %v1225 = vadd.f32 0.0, %v1224
  %v1226 = vpop.f32.mrb[0].mxu0
  %1227 = vmatprep.mubr.bf16.mxu0 0
  %1228 = vmatmul.mubr.bf16.gmra.mrb[0].mxu0 %v975
  %v1229 = vpop.f32.mrb[0].mxu0
  %v1230 = vadd.f32 0.0, %v1229
  %v1231 = vpop.f32.mrb[0].mxu0
  %v1232 = vpop.f32.mrb[0].mxu0
  %v1233 = vadd.f32 0.0, %v1232
  %v1234 = vpop.f32.mrb[0].mxu0
  %1235 = vmatprep.mubr.bf16.mxu0 0
  %1236 = vmatmul.mubr.bf16.gmra.mrb[0].mxu0 %v978
  %v1237 = vpop.f32.mrb[0].mxu0
  %v1238 = vadd.f32 0.0, %v1237
  %v1239 = vpop.f32.mrb[0].mxu0
  %v1240 = vpop.f32.mrb[0].mxu0
  %v1241 = vadd.f32 0.0, %v1240
  %v1242 = vpop.f32.mrb[0].mxu0
  %1243 = vmatprep.mubr.bf16.mxu0 0
  %1244 = vmatmul.mubr.bf16.gmra.mrb[0].mxu0 %v981
  %v1245 = vpop.f32.mrb[0].mxu0
  %v1246 = vadd.f32 0.0, %v1245
  %v1247 = vpop.f32.mrb[0].mxu0
  %v1248 = vpop.f32.mrb[0].mxu0
  %v1249 = vadd.f32 0.0, %v1248
  %v1250 = vpop.f32.mrb[0].mxu0
  %1251 = vmatprep.mubr.bf16.mxu0 0
  %1252 = vmatmul.mubr.bf16.gmra.mrb[0].mxu0 %v984
  %v1253 = vpop.f32.mrb[0].mxu0
  %v1254 = vadd.f32 0.0, %v1253
  %v1255 = vpop.f32.mrb[0].mxu0
  %v1256 = vpop.f32.mrb[0].mxu0
  %v1257 = vadd.f32 0.0, %v1256
  %v1258 = vpop.f32.mrb[0].mxu0
  %1259 = vmatprep.mubr.bf16.mxu0 0
  %1260 = vmatmul.mubr.bf16.gmra.mrb[0].mxu0 %v987
  %v1261 = vpop.f32.mrb[0].mxu0
  %v1262 = vadd.f32 0.0, %v1261
  %v1263 = vpop.f32.mrb[0].mxu0
  %v1264 = vpop.f32.mrb[0].mxu0
  %v1265 = vadd.f32 0.0, %v1264
  %v1266 = vpop.f32.mrb[0].mxu0
  %1267 = vmatprep.mubr.bf16.mxu0 0
  %1268 = vmatmul.mubr.bf16.gmra.mrb[0].mxu0 %v990
  %v1269 = vpop.f32.mrb[0].mxu0
  %v1270 = vadd.f32 0.0, %v1269
  %v1271 = vpop.f32.mrb[0].mxu0
  %v1272 = vpop.f32.mrb[0].mxu0
  %v1273 = vadd.f32 0.0, %v1272
  %v1274 = vpop.f32.mrb[0].mxu0
  %1275 = vmatprep.mubr.bf16.mxu0 0
  %1276 = vmatmul.mubr.bf16.gmra.mrb[0].mxu0 %v993
  %v1277 = vpop.f32.mrb[0].mxu0
  %v1278 = vadd.f32 0.0, %v1277
  %v1279 = vpop.f32.mrb[0].mxu0
  %v1280 = vpop.f32.mrb[0].mxu0
  %v1281 = vadd.f32 0.0, %v1280
  %v1282 = vpop.f32.mrb[0].mxu0
  %1283 = vdwg.mxu0
  %v1284 = vpack.c.bf16 %v1033, %v1030
  %v1285 = vpack.c.bf16 %v1041, %v1038
  %v1286 = vpack.c.bf16 %v1049, %v1046
  %v1287 = vpack.c.bf16 %v1057, %v1054
  %v1288 = vpack.c.bf16 %v1065, %v1062
  %v1289 = vpack.c.bf16 %v1073, %v1070
  %v1290 = vpack.c.bf16 %v1081, %v1078
  %v1291 = vpack.c.bf16 %v1089, %v1086
  %v1292 = vpack.c.bf16 %v1097, %v1094
  %v1293 = vpack.c.bf16 %v1105, %v1102
  %v1294 = vpack.c.bf16 %v1113, %v1110
  %v1295 = vpack.c.bf16 %v1121, %v1118
  %v1296 = vpack.c.bf16 %v1129, %v1126
  %v1297 = vpack.c.bf16 %v1137, %v1134
  %v1298 = vpack.c.bf16 %v1145, %v1142
  %v1299 = vpack.c.bf16 %v1153, %v1150
  %v1300 = vpack.c.bf16 %v1161, %v1158
  %v1301 = vpack.c.bf16 %v1169, %v1166
  %v1302 = vpack.c.bf16 %v1177, %v1174
  %v1303 = vpack.c.bf16 %v1185, %v1182
  %v1304 = vpack.c.bf16 %v1193, %v1190
  %v1305 = vpack.c.bf16 %v1201, %v1198
  %v1306 = vpack.c.bf16 %v1209, %v1206
  %v1307 = vpack.c.bf16 %v1217, %v1214
  %v1308 = vpack.c.bf16 %v1225, %v1222
  %v1309 = vpack.c.bf16 %v1233, %v1230
  %v1310 = vpack.c.bf16 %v1241, %v1238
  %v1311 = vpack.c.bf16 %v1249, %v1246
  %v1312 = vpack.c.bf16 %v1257, %v1254
  %v1313 = vpack.c.bf16 %v1265, %v1262
  %v1314 = vpack.c.bf16 %v1273, %v1270
  %v1315 = vpack.c.bf16 %v1281, %v1278
  %v1348 = vunpack.c.l.b16 %v1284
  %v1349 = vunpack.c.h.b16 %v1284
  %v1350 = vunpack.c.l.b16 %v1285
  %v1351 = vunpack.c.h.b16 %v1285
  %v1352 = vunpack.c.l.b16 %v1286
  %v1353 = vunpack.c.h.b16 %v1286
  %v1354 = vunpack.c.l.b16 %v1287
  %v1355 = vunpack.c.h.b16 %v1287
  %v1356 = vunpack.c.l.b16 %v1288
  %v1357 = vunpack.c.h.b16 %v1288
  %v1358 = vunpack.c.l.b16 %v1289
  %v1359 = vunpack.c.h.b16 %v1289
  %v1360 = vunpack.c.l.b16 %v1290
  %v1361 = vunpack.c.h.b16 %v1290
  %v1362 = vunpack.c.l.b16 %v1291
  %v1363 = vunpack.c.h.b16 %v1291
  %v1364 = vunpack.c.l.b16 %v1292
  %v1365 = vunpack.c.h.b16 %v1292
  %v1366 = vunpack.c.l.b16 %v1293
  %v1367 = vunpack.c.h.b16 %v1293
  %v1368 = vunpack.c.l.b16 %v1294
  %v1369 = vunpack.c.h.b16 %v1294
  %v1370 = vunpack.c.l.b16 %v1295
  %v1371 = vunpack.c.h.b16 %v1295
  %v1372 = vunpack.c.l.b16 %v1296
  %v1373 = vunpack.c.h.b16 %v1296
  %v1374 = vunpack.c.l.b16 %v1297
  %v1375 = vunpack.c.h.b16 %v1297
  %v1376 = vunpack.c.l.b16 %v1298
  %v1377 = vunpack.c.h.b16 %v1298
  %v1378 = vunpack.c.l.b16 %v1299
  %v1379 = vunpack.c.h.b16 %v1299
  %v1380 = vunpack.c.l.b16 %v1300
  %v1381 = vunpack.c.h.b16 %v1300
  %v1382 = vunpack.c.l.b16 %v1301
  %v1383 = vunpack.c.h.b16 %v1301
  %v1384 = vunpack.c.l.b16 %v1302
  %v1385 = vunpack.c.h.b16 %v1302
  %v1386 = vunpack.c.l.b16 %v1303
  %v1387 = vunpack.c.h.b16 %v1303
  %v1388 = vunpack.c.l.b16 %v1304
  %v1389 = vunpack.c.h.b16 %v1304
  %v1390 = vunpack.c.l.b16 %v1305
  %v1391 = vunpack.c.h.b16 %v1305
  %v1392 = vunpack.c.l.b16 %v1306
  %v1393 = vunpack.c.h.b16 %v1306
  %v1394 = vunpack.c.l.b16 %v1307
  %v1395 = vunpack.c.h.b16 %v1307
  %v1396 = vunpack.c.l.b16 %v1308
  %v1397 = vunpack.c.h.b16 %v1308
  %v1398 = vunpack.c.l.b16 %v1309
  %v1399 = vunpack.c.h.b16 %v1309
  %v1400 = vunpack.c.l.b16 %v1310
  %v1401 = vunpack.c.h.b16 %v1310
  %v1402 = vunpack.c.l.b16 %v1311
  %v1403 = vunpack.c.h.b16 %v1311
  %v1404 = vunpack.c.l.b16 %v1312
  %v1405 = vunpack.c.h.b16 %v1312
  %v1406 = vunpack.c.l.b16 %v1313
  %v1407 = vunpack.c.h.b16 %v1313
  %v1408 = vunpack.c.l.b16 %v1314
  %v1409 = vunpack.c.h.b16 %v1314
  %v1410 = vunpack.c.l.b16 %v1315
  %v1411 = vunpack.c.h.b16 %v1315
  %v1412 = vpack.c.b16 %v1348, %v1348
  %v1413 = vpack.c.b16 %v1349, %v1349
  %v1414 = vpack.c.b16 %v1350, %v1350
  %v1415 = vpack.c.b16 %v1351, %v1351
  %v1416 = vpack.c.b16 %v1352, %v1352
  %v1417 = vpack.c.b16 %v1353, %v1353
  %v1418 = vpack.c.b16 %v1354, %v1354
  %v1419 = vpack.c.b16 %v1355, %v1355
  %v1420 = vpack.c.b16 %v1356, %v1356
  %v1421 = vpack.c.b16 %v1357, %v1357
  %v1422 = vpack.c.b16 %v1358, %v1358
  %v1423 = vpack.c.b16 %v1359, %v1359
  %v1424 = vpack.c.b16 %v1360, %v1360
  %v1425 = vpack.c.b16 %v1361, %v1361
  %v1426 = vpack.c.b16 %v1362, %v1362
  %v1427 = vpack.c.b16 %v1363, %v1363
  %v1428 = vpack.c.b16 %v1364, %v1364
  %v1429 = vpack.c.b16 %v1365, %v1365
  %v1430 = vpack.c.b16 %v1366, %v1366
  %v1431 = vpack.c.b16 %v1367, %v1367
  %v1432 = vpack.c.b16 %v1368, %v1368
  %v1433 = vpack.c.b16 %v1369, %v1369
  %v1434 = vpack.c.b16 %v1370, %v1370
  %v1435 = vpack.c.b16 %v1371, %v1371
  %v1436 = vpack.c.b16 %v1372, %v1372
  %v1437 = vpack.c.b16 %v1373, %v1373
  %v1438 = vpack.c.b16 %v1374, %v1374
  %v1439 = vpack.c.b16 %v1375, %v1375
  %v1440 = vpack.c.b16 %v1376, %v1376
  %v1441 = vpack.c.b16 %v1377, %v1377
  %v1442 = vpack.c.b16 %v1378, %v1378
  %v1443 = vpack.c.b16 %v1379, %v1379
  %v1444 = vpack.c.b16 %v1380, %v1380
  %v1445 = vpack.c.b16 %v1381, %v1381
  %v1446 = vpack.c.b16 %v1382, %v1382
  %v1447 = vpack.c.b16 %v1383, %v1383
  %v1448 = vpack.c.b16 %v1384, %v1384
  %v1449 = vpack.c.b16 %v1385, %v1385
  %v1450 = vpack.c.b16 %v1386, %v1386
  %v1451 = vpack.c.b16 %v1387, %v1387
  %v1452 = vpack.c.b16 %v1388, %v1388
  %v1453 = vpack.c.b16 %v1389, %v1389
  %v1454 = vpack.c.b16 %v1390, %v1390
  %v1455 = vpack.c.b16 %v1391, %v1391
  %v1456 = vpack.c.b16 %v1392, %v1392
  %v1457 = vpack.c.b16 %v1393, %v1393
  %v1458 = vpack.c.b16 %v1394, %v1394
  %v1459 = vpack.c.b16 %v1395, %v1395
  %v1460 = vpack.c.b16 %v1396, %v1396
  %v1461 = vpack.c.b16 %v1397, %v1397
  %v1462 = vpack.c.b16 %v1398, %v1398
  %v1463 = vpack.c.b16 %v1399, %v1399
  %v1464 = vpack.c.b16 %v1400, %v1400
  %v1465 = vpack.c.b16 %v1401, %v1401
  %v1466 = vpack.c.b16 %v1402, %v1402
  %v1467 = vpack.c.b16 %v1403, %v1403
  %v1468 = vpack.c.b16 %v1404, %v1404
  %v1469 = vpack.c.b16 %v1405, %v1405
  %v1470 = vpack.c.b16 %v1406, %v1406
  %v1471 = vpack.c.b16 %v1407, %v1407
  %v1472 = vpack.c.b16 %v1408, %v1408
  %v1473 = vpack.c.b16 %v1409, %v1409
  %v1474 = vpack.c.b16 %v1410, %v1410
  %v1475 = vpack.c.b16 %v1411, %v1411
  %1540 = vst [vmem:[%s4] sm:$0xf] %v1412
  %1541 = vst [vmem:[%s4 + $0x4] sm:$0xf] %v1413
  %1542 = vst [vmem:[%s4 + $0x8] sm:$0xf] %v1414
  %1543 = vst [vmem:[%s4 + $0xc] sm:$0xf] %v1415
  %1544 = vst [vmem:[%s4 + $0x10] sm:$0xf] %v1416
  %1545 = vst [vmem:[%s4 + $0x14] sm:$0xf] %v1417
  %1546 = vst [vmem:[%s4 + $0x18] sm:$0xf] %v1418
  %1547 = vst [vmem:[%s4 + $0x1c] sm:$0xf] %v1419
  %1548 = vst [vmem:[%s4 + $0x20] sm:$0xf] %v1420
  %1549 = vst [vmem:[%s4 + $0x24] sm:$0xf] %v1421
  %1550 = vst [vmem:[%s4 + $0x28] sm:$0xf] %v1422
  %1551 = vst [vmem:[%s4 + $0x2c] sm:$0xf] %v1423
  %1552 = vst [vmem:[%s4 + $0x30] sm:$0xf] %v1424
  %1553 = vst [vmem:[%s4 + $0x34] sm:$0xf] %v1425
  %1554 = vst [vmem:[%s4 + $0x38] sm:$0xf] %v1426
  %1555 = vst [vmem:[%s4 + $0x3c] sm:$0xf] %v1427
  %1556 = vst [vmem:[%s4 + $0x40] sm:$0xf] %v1428
  %1557 = vst [vmem:[%s4 + $0x44] sm:$0xf] %v1429
  %1558 = vst [vmem:[%s4 + $0x48] sm:$0xf] %v1430
  %1559 = vst [vmem:[%s4 + $0x4c] sm:$0xf] %v1431
  %1560 = vst [vmem:[%s4 + $0x50] sm:$0xf] %v1432
  %1561 = vst [vmem:[%s4 + $0x54] sm:$0xf] %v1433
  %1562 = vst [vmem:[%s4 + $0x58] sm:$0xf] %v1434
  %1563 = vst [vmem:[%s4 + $0x5c] sm:$0xf] %v1435
  %1564 = vst [vmem:[%s4 + $0x60] sm:$0xf] %v1436
  %1565 = vst [vmem:[%s4 + $0x64] sm:$0xf] %v1437
  %1566 = vst [vmem:[%s4 + $0x68] sm:$0xf] %v1438
  %1567 = vst [vmem:[%s4 + $0x6c] sm:$0xf] %v1439
  %1568 = vst [vmem:[%s4 + $0x70] sm:$0xf] %v1440
  %1569 = vst [vmem:[%s4 + $0x74] sm:$0xf] %v1441
  %1570 = vst [vmem:[%s4 + $0x78] sm:$0xf] %v1442
  %1571 = vst [vmem:[%s4 + $0x7c] sm:$0xf] %v1443
  %1572 = vst [vmem:[%s4 + $0x80] sm:$0xf] %v1444
  %1573 = vst [vmem:[%s4 + $0x84] sm:$0xf] %v1445
  %1574 = vst [vmem:[%s4 + $0x88] sm:$0xf] %v1446
  %1575 = vst [vmem:[%s4 + $0x8c] sm:$0xf] %v1447
  %1576 = vst [vmem:[%s4 + $0x90] sm:$0xf] %v1448
  %1577 = vst [vmem:[%s4 + $0x94] sm:$0xf] %v1449
  %1578 = vst [vmem:[%s4 + $0x98] sm:$0xf] %v1450
  %1579 = vst [vmem:[%s4 + $0x9c] sm:$0xf] %v1451
  %1580 = vst [vmem:[%s4 + $0xa0] sm:$0xf] %v1452
  %1581 = vst [vmem:[%s4 + $0xa4] sm:$0xf] %v1453
  %1582 = vst [vmem:[%s4 + $0xa8] sm:$0xf] %v1454
  %1583 = vst [vmem:[%s4 + $0xac] sm:$0xf] %v1455
  %1584 = vst [vmem:[%s4 + $0xb0] sm:$0xf] %v1456
  %1585 = vst [vmem:[%s4 + $0xb4] sm:$0xf] %v1457
  %1586 = vst [vmem:[%s4 + $0xb8] sm:$0xf] %v1458
  %1587 = vst [vmem:[%s4 + $0xbc] sm:$0xf] %v1459
  %1588 = vst [vmem:[%s4 + $0xc0] sm:$0xf] %v1460
  %1589 = vst [vmem:[%s4 + $0xc4] sm:$0xf] %v1461
  %1590 = vst [vmem:[%s4 + $0xc8] sm:$0xf] %v1462
  %1591 = vst [vmem:[%s4 + $0xcc] sm:$0xf] %v1463
  %1592 = vst [vmem:[%s4 + $0xd0] sm:$0xf] %v1464
  %1593 = vst [vmem:[%s4 + $0xd4] sm:$0xf] %v1465
  %1594 = vst [vmem:[%s4 + $0xd8] sm:$0xf] %v1466
  %1595 = vst [vmem:[%s4 + $0xdc] sm:$0xf] %v1467
  %1596 = vst [vmem:[%s4 + $0xe0] sm:$0xf] %v1468
  %1597 = vst [vmem:[%s4 + $0xe4] sm:$0xf] %v1469
  %1598 = vst [vmem:[%s4 + $0xe8] sm:$0xf] %v1470
  %1599 = vst [vmem:[%s4 + $0xec] sm:$0xf] %v1471
  %1600 = vst [vmem:[%s4 + $0xf0] sm:$0xf] %v1472
  %1601 = vst [vmem:[%s4 + $0xf4] sm:$0xf] %v1473
  %1602 = vst [vmem:[%s4 + $0xf8] sm:$0xf] %v1474
  %1603 = vst [vmem:[%s4 + $0xfc] sm:$0xf] %v1475
  %v1604 = vadd.f32 %v1030, %v1033
  %v1605 = vadd.f32 %v1604, %v1038
  %v1606 = vadd.f32 %v1605, %v1041
  %v1607 = vadd.f32 %v1606, %v1046
  %v1608 = vadd.f32 %v1607, %v1049
  %v1609 = vadd.f32 %v1608, %v1054
  %v1610 = vadd.f32 %v1609, %v1057
  %v1611 = vadd.f32 %v1610, %v1062
  %v1612 = vadd.f32 %v1611, %v1065
  %v1613 = vadd.f32 %v1612, %v1070
  %v1614 = vadd.f32 %v1613, %v1073
  %v1615 = vadd.f32 %v1614, %v1078
  %v1616 = vadd.f32 %v1615, %v1081
  %v1617 = vadd.f32 %v1616, %v1086
  %v1618 = vadd.f32 %v1617, %v1089
  %v1619 = vadd.f32 %v1618, %v1094
  %v1620 = vadd.f32 %v1619, %v1097
  %v1621 = vadd.f32 %v1620, %v1102
  %v1622 = vadd.f32 %v1621, %v1105
  %v1623 = vadd.f32 %v1622, %v1110
  %v1624 = vadd.f32 %v1623, %v1113
  %v1625 = vadd.f32 %v1624, %v1118
  %v1626 = vadd.f32 %v1625, %v1121
  %v1627 = vadd.f32 %v1626, %v1126
  %v1628 = vadd.f32 %v1627, %v1129
  %v1629 = vadd.f32 %v1628, %v1134
  %v1630 = vadd.f32 %v1629, %v1137
  %v1631 = vadd.f32 %v1630, %v1142
  %v1632 = vadd.f32 %v1631, %v1145
  %v1633 = vadd.f32 %v1632, %v1150
  %v1634 = vadd.f32 %v1633, %v1153
  %v1635 = vadd.f32 %v1634, %v1158
  %v1636 = vadd.f32 %v1635, %v1161
  %v1637 = vadd.f32 %v1636, %v1166
  %v1638 = vadd.f32 %v1637, %v1169
  %v1639 = vadd.f32 %v1638, %v1174
  %v1640 = vadd.f32 %v1639, %v1177
  %v1641 = vadd.f32 %v1640, %v1182
  %v1642 = vadd.f32 %v1641, %v1185
  %v1643 = vadd.f32 %v1642, %v1190
  %v1644 = vadd.f32 %v1643, %v1193
  %v1645 = vadd.f32 %v1644, %v1198
  %v1646 = vadd.f32 %v1645, %v1201
  %v1647 = vadd.f32 %v1646, %v1206
  %v1648 = vadd.f32 %v1647, %v1209
  %v1649 = vadd.f32 %v1648, %v1214
  %v1650 = vadd.f32 %v1649, %v1217
  %v1651 = vadd.f32 %v1650, %v1222
  %v1652 = vadd.f32 %v1651, %v1225
  %v1653 = vadd.f32 %v1652, %v1230
  %v1654 = vadd.f32 %v1653, %v1233
  %v1655 = vadd.f32 %v1654, %v1238
  %v1656 = vadd.f32 %v1655, %v1241
  %v1657 = vadd.f32 %v1656, %v1246
  %v1658 = vadd.f32 %v1657, %v1249
  %v1659 = vadd.f32 %v1658, %v1254
  %v1660 = vadd.f32 %v1659, %v1257
  %v1661 = vadd.f32 %v1660, %v1262
  %v1662 = vadd.f32 %v1661, %v1265
  %v1663 = vadd.f32 %v1662, %v1270
  %v1664 = vadd.f32 %v1663, %v1273
  %v1665 = vadd.f32 %v1664, %v1278
  %v1666 = vadd.f32 %v1665, %v1281
  %v1667 = vrot.slane %v1666, 4
  %v1668 = vadd.f32 %v1666, %v1667
  %v1669 = vrot.slane %v1668, 2
  %v1670 = vadd.f32 %v1668, %v1669
  %v1671 = vrot.slane %v1670, 1
  %v1672 = vadd.f32 %v1670, %v1671
  %1673 = vst [vmem:[%s5] sm:$0x1] %v1672
  %v1674 = vmul.f32 %v1030, %v1030
  %v1675 = vmul.f32 %v1033, %v1033
  %v1676 = vmul.f32 %v1038, %v1038
  %v1677 = vmul.f32 %v1041, %v1041
  %v1678 = vmul.f32 %v1046, %v1046
  %v1679 = vmul.f32 %v1049, %v1049
  %v1680 = vmul.f32 %v1054, %v1054
  %v1681 = vmul.f32 %v1057, %v1057
  %v1682 = vmul.f32 %v1062, %v1062
  %v1683 = vmul.f32 %v1065, %v1065
  %v1684 = vmul.f32 %v1070, %v1070
  %v1685 = vmul.f32 %v1073, %v1073
  %v1686 = vmul.f32 %v1078, %v1078
  %v1687 = vmul.f32 %v1081, %v1081
  %v1688 = vmul.f32 %v1086, %v1086
  %v1689 = vmul.f32 %v1089, %v1089
  %v1690 = vmul.f32 %v1094, %v1094
  %v1691 = vmul.f32 %v1097, %v1097
  %v1692 = vmul.f32 %v1102, %v1102
  %v1693 = vmul.f32 %v1105, %v1105
  %v1694 = vmul.f32 %v1110, %v1110
  %v1695 = vmul.f32 %v1113, %v1113
  %v1696 = vmul.f32 %v1118, %v1118
  %v1697 = vmul.f32 %v1121, %v1121
  %v1698 = vmul.f32 %v1126, %v1126
  %v1699 = vmul.f32 %v1129, %v1129
  %v1700 = vmul.f32 %v1134, %v1134
  %v1701 = vmul.f32 %v1137, %v1137
  %v1702 = vmul.f32 %v1142, %v1142
  %v1703 = vmul.f32 %v1145, %v1145
  %v1704 = vmul.f32 %v1150, %v1150
  %v1705 = vmul.f32 %v1153, %v1153
  %v1706 = vmul.f32 %v1158, %v1158
  %v1707 = vmul.f32 %v1161, %v1161
  %v1708 = vmul.f32 %v1166, %v1166
  %v1709 = vmul.f32 %v1169, %v1169
  %v1710 = vmul.f32 %v1174, %v1174
  %v1711 = vmul.f32 %v1177, %v1177
  %v1712 = vmul.f32 %v1182, %v1182
  %v1713 = vmul.f32 %v1185, %v1185
  %v1714 = vmul.f32 %v1190, %v1190
  %v1715 = vmul.f32 %v1193, %v1193
  %v1716 = vmul.f32 %v1198, %v1198
  %v1717 = vmul.f32 %v1201, %v1201
  %v1718 = vmul.f32 %v1206, %v1206
  %v1719 = vmul.f32 %v1209, %v1209
  %v1720 = vmul.f32 %v1214, %v1214
  %v1721 = vmul.f32 %v1217, %v1217
  %v1722 = vmul.f32 %v1222, %v1222
  %v1723 = vmul.f32 %v1225, %v1225
  %v1724 = vmul.f32 %v1230, %v1230
  %v1725 = vmul.f32 %v1233, %v1233
  %v1726 = vmul.f32 %v1238, %v1238
  %v1727 = vmul.f32 %v1241, %v1241
  %v1728 = vmul.f32 %v1246, %v1246
  %v1729 = vmul.f32 %v1249, %v1249
  %v1730 = vmul.f32 %v1254, %v1254
  %v1731 = vmul.f32 %v1257, %v1257
  %v1732 = vmul.f32 %v1262, %v1262
  %v1733 = vmul.f32 %v1265, %v1265
  %v1734 = vmul.f32 %v1270, %v1270
  %v1735 = vmul.f32 %v1273, %v1273
  %v1736 = vmul.f32 %v1278, %v1278
  %v1737 = vmul.f32 %v1281, %v1281
  %v1738 = vadd.f32 %v1674, %v1675
  %v1739 = vadd.f32 %v1738, %v1676
  %v1740 = vadd.f32 %v1739, %v1677
  %v1741 = vadd.f32 %v1740, %v1678
  %v1742 = vadd.f32 %v1741, %v1679
  %v1743 = vadd.f32 %v1742, %v1680
  %v1744 = vadd.f32 %v1743, %v1681
  %v1745 = vadd.f32 %v1744, %v1682
  %v1746 = vadd.f32 %v1745, %v1683
  %v1747 = vadd.f32 %v1746, %v1684
  %v1748 = vadd.f32 %v1747, %v1685
  %v1749 = vadd.f32 %v1748, %v1686
  %v1750 = vadd.f32 %v1749, %v1687
  %v1751 = vadd.f32 %v1750, %v1688
  %v1752 = vadd.f32 %v1751, %v1689
  %v1753 = vadd.f32 %v1752, %v1690
  %v1754 = vadd.f32 %v1753, %v1691
  %v1755 = vadd.f32 %v1754, %v1692
  %v1756 = vadd.f32 %v1755, %v1693
  %v1757 = vadd.f32 %v1756, %v1694
  %v1758 = vadd.f32 %v1757, %v1695
  %v1759 = vadd.f32 %v1758, %v1696
  %v1760 = vadd.f32 %v1759, %v1697
  %v1761 = vadd.f32 %v1760, %v1698
  %v1762 = vadd.f32 %v1761, %v1699
  %v1763 = vadd.f32 %v1762, %v1700
  %v1764 = vadd.f32 %v1763, %v1701
  %v1765 = vadd.f32 %v1764, %v1702
  %v1766 = vadd.f32 %v1765, %v1703
  %v1767 = vadd.f32 %v1766, %v1704
  %v1768 = vadd.f32 %v1767, %v1705
  %v1769 = vadd.f32 %v1768, %v1706
  %v1770 = vadd.f32 %v1769, %v1707
  %v1771 = vadd.f32 %v1770, %v1708
  %v1772 = vadd.f32 %v1771, %v1709
  %v1773 = vadd.f32 %v1772, %v1710
  %v1774 = vadd.f32 %v1773, %v1711
  %v1775 = vadd.f32 %v1774, %v1712
  %v1776 = vadd.f32 %v1775, %v1713
  %v1777 = vadd.f32 %v1776, %v1714
  %v1778 = vadd.f32 %v1777, %v1715
  %v1779 = vadd.f32 %v1778, %v1716
  %v1780 = vadd.f32 %v1779, %v1717
  %v1781 = vadd.f32 %v1780, %v1718
  %v1782 = vadd.f32 %v1781, %v1719
  %v1783 = vadd.f32 %v1782, %v1720
  %v1784 = vadd.f32 %v1783, %v1721
  %v1785 = vadd.f32 %v1784, %v1722
  %v1786 = vadd.f32 %v1785, %v1723
  %v1787 = vadd.f32 %v1786, %v1724
  %v1788 = vadd.f32 %v1787, %v1725
  %v1789 = vadd.f32 %v1788, %v1726
  %v1790 = vadd.f32 %v1789, %v1727
  %v1791 = vadd.f32 %v1790, %v1728
  %v1792 = vadd.f32 %v1791, %v1729
  %v1793 = vadd.f32 %v1792, %v1730
  %v1794 = vadd.f32 %v1793, %v1731
  %v1795 = vadd.f32 %v1794, %v1732
  %v1796 = vadd.f32 %v1795, %v1733
  %v1797 = vadd.f32 %v1796, %v1734
  %v1798 = vadd.f32 %v1797, %v1735
  %v1799 = vadd.f32 %v1798, %v1736
  %v1800 = vadd.f32 %v1799, %v1737
  %v1801 = vrot.slane %v1800, 4
  %v1802 = vadd.f32 %v1800, %v1801
  %v1803 = vrot.slane %v1802, 2
  %v1804 = vadd.f32 %v1802, %v1803
  %v1805 = vrot.slane %v1804, 1
  %v1806 = vadd.f32 %v1804, %v1805
  %1807 = vst [vmem:[%s5 + $0x1] sm:$0x1] %v1806
  // Predicated region
  $region18: #{nlayer_discriminator_forward.4} parent=0 // pred_check
    _
  $region19: #{nlayer_discriminator_forward.4} parent=0 // pred_check_branch
    %1809 = sbr.rel (0) target = $region21
  $region20: #{nlayer_discriminator_forward.4} parent=0 // pred_region
    _
  $region21: #{nlayer_discriminator_forward.4} parent=0 // pred_fallthru
    _
  // Predicated region
  $region22: #{nlayer_discriminator_forward.4} parent=0 // pred_check
    _
  $region23: #{nlayer_discriminator_forward.4} parent=0 // pred_check_branch
    %1811 = sbr.rel (0) target = $region25
  $region24: #{nlayer_discriminator_forward.4} parent=0 // pred_region
    _
  $region25: #{nlayer_discriminator_forward.4} parent=0 // pred_fallthru
    _
  // Predicated region
  $region26: #{nlayer_discriminator_forward.4} parent=0 // pred_check
    _
  $region27: #{nlayer_discriminator_forward.4} parent=0 // pred_check_branch
    %1813 = sbr.rel (0) target = $region29
  $region28: #{nlayer_discriminator_forward.4} parent=0 // pred_region
    _
  $region29: #{nlayer_discriminator_forward.4} parent=0 // pred_fallthru
    _
  // Predicated region
  $region30: #{nlayer_discriminator_forward.4} parent=0 // pred_check
    _
  $region31: #{nlayer_discriminator_forward.4} parent=0 // pred_check_branch
    %1815 = sbr.rel (0) target = $region33
  $region32: #{nlayer_discriminator_forward.4} parent=0 // pred_region
    _
  $region33: #{nlayer_discriminator_forward.4} parent=0 // pred_fallthru
    _

// kernel: nlayer_discriminator_forward.6
$region0: #{nlayer_discriminator_forward.6}
  #allocation0 [shape = 'u32[]', space=smem, size = 0x4, offset = 0x4, fixed_abs, tag = 'smem constant byte address 0x4 - core index']
  #allocation1 [shape = 'u32[144,128]{1,0:T(1,128)}', space=vmem, size = 0x12000, scoped, tag = 'internal scratch']
  %s0 = inlined_call_operand.vmem [shape: bf16[512,256], index: 0, kind: input, shape index: {}]
  %s1 = inlined_call_operand.vmem [shape: f32[1,256], index: 1, kind: input, shape index: {}]
  %s2 = inlined_call_operand.vmem [shape: f32[1,256], index: 2, kind: input, shape index: {}]
  %s3 = inlined_call_operand.vmem [shape: bf16[256,512], index: 3, kind: input, shape index: {}]
  %s4 = inlined_call_operand.vmem [shape: f32[1,2,512], index: 4, kind: output, shape index: {}]
  %s5 = sld [smem:[#allocation0]]
  $region26: #{nlayer_discriminator_forward.6} parent=0
    _
  %s7 = ssub.s32 1, %s5
  %s8 = scalar_select 0, %s7, %s5
  // Predicated region
  $region2: #{nlayer_discriminator_forward.6} parent=0 // pred_check
    _
  $region3: #{nlayer_discriminator_forward.6} parent=0 // pred_check_branch
    %10 = sbr.rel (0) target = $region5
  $region4: #{nlayer_discriminator_forward.6} parent=0 // pred_region
    _
  $region5: #{nlayer_discriminator_forward.6} parent=0 // pred_fallthru
    _
  // Predicated region
  $region6: #{nlayer_discriminator_forward.6} parent=0 // pred_check
    _
  $region7: #{nlayer_discriminator_forward.6} parent=0 // pred_check_branch
    %12 = sbr.rel (0) target = $region9
  $region8: #{nlayer_discriminator_forward.6} parent=0 // pred_region
    _
  $region9: #{nlayer_discriminator_forward.6} parent=0 // pred_fallthru
    _
  // Predicated region
  $region10: #{nlayer_discriminator_forward.6} parent=0 // pred_check
    _
  $region11: #{nlayer_discriminator_forward.6} parent=0 // pred_check_branch
    %14 = sbr.rel (0) target = $region13
  $region12: #{nlayer_discriminator_forward.6} parent=0 // pred_region
    _
  $region13: #{nlayer_discriminator_forward.6} parent=0 // pred_fallthru
    _
  // Predicated region
  $region14: #{nlayer_discriminator_forward.6} parent=0 // pred_check
    _
  $region15: #{nlayer_discriminator_forward.6} parent=0 // pred_check_branch
    %16 = sbr.rel (0) target = $region17
  $region16: #{nlayer_discriminator_forward.6} parent=0 // pred_region
    _
  $region17: #{nlayer_discriminator_forward.6} parent=0 // pred_fallthru
    _
  %v17 = vld [vmem:[%s0] sm:$0xff]
  %v18 = vld [vmem:[%s0 + $0x8] sm:$0xff]
  %v19 = vld [vmem:[%s0 + $0x10] sm:$0xff]
  %v20 = vld [vmem:[%s0 + $0x18] sm:$0xff]
  %v21 = vld [vmem:[%s0 + $0x20] sm:$0xff]
  %v22 = vld [vmem:[%s0 + $0x28] sm:$0xff]
  %v23 = vld [vmem:[%s0 + $0x30] sm:$0xff]
  %v24 = vld [vmem:[%s0 + $0x38] sm:$0xff]
  %v25 = vld [vmem:[%s0 + $0x40] sm:$0xff]
  %v26 = vld [vmem:[%s0 + $0x48] sm:$0xff]
  %v27 = vld [vmem:[%s0 + $0x50] sm:$0xff]
  %v28 = vld [vmem:[%s0 + $0x58] sm:$0xff]
  %v29 = vld [vmem:[%s0 + $0x60] sm:$0xff]
  %v30 = vld [vmem:[%s0 + $0x68] sm:$0xff]
  %v31 = vld [vmem:[%s0 + $0x70] sm:$0xff]
  %v32 = vld [vmem:[%s0 + $0x78] sm:$0xff]
  %v33 = vld [vmem:[%s0 + $0x80] sm:$0xff]
  %v34 = vld [vmem:[%s0 + $0x88] sm:$0xff]
  %v35 = vld [vmem:[%s0 + $0x90] sm:$0xff]
  %v36 = vld [vmem:[%s0 + $0x98] sm:$0xff]
  %v37 = vld [vmem:[%s0 + $0xa0] sm:$0xff]
  %v38 = vld [vmem:[%s0 + $0xa8] sm:$0xff]
  %v39 = vld [vmem:[%s0 + $0xb0] sm:$0xff]
  %v40 = vld [vmem:[%s0 + $0xb8] sm:$0xff]
  %v41 = vld [vmem:[%s0 + $0xc0] sm:$0xff]
  %v42 = vld [vmem:[%s0 + $0xc8] sm:$0xff]
  %v43 = vld [vmem:[%s0 + $0xd0] sm:$0xff]
  %v44 = vld [vmem:[%s0 + $0xd8] sm:$0xff]
  %v45 = vld [vmem:[%s0 + $0xe0] sm:$0xff]
  %v46 = vld [vmem:[%s0 + $0xe8] sm:$0xff]
  %v47 = vld [vmem:[%s0 + $0xf0] sm:$0xff]
  %v48 = vld [vmem:[%s0 + $0xf8] sm:$0xff]
  %v49 = vld [vmem:[%s0 + $0x100] sm:$0xff]
  %v50 = vld [vmem:[%s0 + $0x108] sm:$0xff]
  %v51 = vld [vmem:[%s0 + $0x110] sm:$0xff]
  %v52 = vld [vmem:[%s0 + $0x118] sm:$0xff]
  %v53 = vld [vmem:[%s0 + $0x120] sm:$0xff]
  %v54 = vld [vmem:[%s0 + $0x128] sm:$0xff]
  %v55 = vld [vmem:[%s0 + $0x130] sm:$0xff]
  %v56 = vld [vmem:[%s0 + $0x138] sm:$0xff]
  %v57 = vld [vmem:[%s0 + $0x140] sm:$0xff]
  %v58 = vld [vmem:[%s0 + $0x148] sm:$0xff]
  %v59 = vld [vmem:[%s0 + $0x150] sm:$0xff]
  %v60 = vld [vmem:[%s0 + $0x158] sm:$0xff]
  %v61 = vld [vmem:[%s0 + $0x160] sm:$0xff]
  %v62 = vld [vmem:[%s0 + $0x168] sm:$0xff]
  %v63 = vld [vmem:[%s0 + $0x170] sm:$0xff]
  %v64 = vld [vmem:[%s0 + $0x178] sm:$0xff]
  %v65 = vld [vmem:[%s0 + $0x180] sm:$0xff]
  %v66 = vld [vmem:[%s0 + $0x188] sm:$0xff]
  %v67 = vld [vmem:[%s0 + $0x190] sm:$0xff]
  %v68 = vld [vmem:[%s0 + $0x198] sm:$0xff]
  %v69 = vld [vmem:[%s0 + $0x1a0] sm:$0xff]
  %v70 = vld [vmem:[%s0 + $0x1a8] sm:$0xff]
  %v71 = vld [vmem:[%s0 + $0x1b0] sm:$0xff]
  %v72 = vld [vmem:[%s0 + $0x1b8] sm:$0xff]
  %v73 = vld [vmem:[%s0 + $0x1c0] sm:$0xff]
  %v74 = vld [vmem:[%s0 + $0x1c8] sm:$0xff]
  %v75 = vld [vmem:[%s0 + $0x1d0] sm:$0xff]
  %v76 = vld [vmem:[%s0 + $0x1d8] sm:$0xff]
  %v77 = vld [vmem:[%s0 + $0x1e0] sm:$0xff]
  %v78 = vld [vmem:[%s0 + $0x1e8] sm:$0xff]
  %v79 = vld [vmem:[%s0 + $0x1f0] sm:$0xff]
  %v80 = vld [vmem:[%s0 + $0x1f8] sm:$0xff]
  %v81 = vunpack.c.l.bf16 %v17
  %v82 = vunpack.c.h.bf16 %v17
  %v83 = vunpack.c.l.bf16 %v18
  %v84 = vunpack.c.h.bf16 %v18
  %v85 = vunpack.c.l.bf16 %v19
  %v86 = vunpack.c.h.bf16 %v19
  %v87 = vunpack.c.l.bf16 %v20
  %v88 = vunpack.c.h.bf16 %v20
  %v89 = vunpack.c.l.bf16 %v21
  %v90 = vunpack.c.h.bf16 %v21
  %v91 = vunpack.c.l.bf16 %v22
  %v92 = vunpack.c.h.bf16 %v22
  %v93 = vunpack.c.l.bf16 %v23
  %v94 = vunpack.c.h.bf16 %v23
  %v95 = vunpack.c.l.bf16 %v24
  %v96 = vunpack.c.h.bf16 %v24
  %v97 = vunpack.c.l.bf16 %v25
  %v98 = vunpack.c.h.bf16 %v25
  %v99 = vunpack.c.l.bf16 %v26
  %v100 = vunpack.c.h.bf16 %v26
  %v101 = vunpack.c.l.bf16 %v27
  %v102 = vunpack.c.h.bf16 %v27
  %v103 = vunpack.c.l.bf16 %v28
  %v104 = vunpack.c.h.bf16 %v28
  %v105 = vunpack.c.l.bf16 %v29
  %v106 = vunpack.c.h.bf16 %v29
  %v107 = vunpack.c.l.bf16 %v30
  %v108 = vunpack.c.h.bf16 %v30
  %v109 = vunpack.c.l.bf16 %v31
  %v110 = vunpack.c.h.bf16 %v31
  %v111 = vunpack.c.l.bf16 %v32
  %v112 = vunpack.c.h.bf16 %v32
  %v113 = vunpack.c.l.bf16 %v33
  %v114 = vunpack.c.h.bf16 %v33
  %v115 = vunpack.c.l.bf16 %v34
  %v116 = vunpack.c.h.bf16 %v34
  %v117 = vunpack.c.l.bf16 %v35
  %v118 = vunpack.c.h.bf16 %v35
  %v119 = vunpack.c.l.bf16 %v36
  %v120 = vunpack.c.h.bf16 %v36
  %v121 = vunpack.c.l.bf16 %v37
  %v122 = vunpack.c.h.bf16 %v37
  %v123 = vunpack.c.l.bf16 %v38
  %v124 = vunpack.c.h.bf16 %v38
  %v125 = vunpack.c.l.bf16 %v39
  %v126 = vunpack.c.h.bf16 %v39
  %v127 = vunpack.c.l.bf16 %v40
  %v128 = vunpack.c.h.bf16 %v40
  %v129 = vunpack.c.l.bf16 %v41
  %v130 = vunpack.c.h.bf16 %v41
  %v131 = vunpack.c.l.bf16 %v42
  %v132 = vunpack.c.h.bf16 %v42
  %v133 = vunpack.c.l.bf16 %v43
  %v134 = vunpack.c.h.bf16 %v43
  %v135 = vunpack.c.l.bf16 %v44
  %v136 = vunpack.c.h.bf16 %v44
  %v137 = vunpack.c.l.bf16 %v45
  %v138 = vunpack.c.h.bf16 %v45
  %v139 = vunpack.c.l.bf16 %v46
  %v140 = vunpack.c.h.bf16 %v46
  %v141 = vunpack.c.l.bf16 %v47
  %v142 = vunpack.c.h.bf16 %v47
  %v143 = vunpack.c.l.bf16 %v48
  %v144 = vunpack.c.h.bf16 %v48
  %v145 = vunpack.c.l.bf16 %v49
  %v146 = vunpack.c.h.bf16 %v49
  %v147 = vunpack.c.l.bf16 %v50
  %v148 = vunpack.c.h.bf16 %v50
  %v149 = vunpack.c.l.bf16 %v51
  %v150 = vunpack.c.h.bf16 %v51
  %v151 = vunpack.c.l.bf16 %v52
  %v152 = vunpack.c.h.bf16 %v52
  %v153 = vunpack.c.l.bf16 %v53
  %v154 = vunpack.c.h.bf16 %v53
  %v155 = vunpack.c.l.bf16 %v54
  %v156 = vunpack.c.h.bf16 %v54
  %v157 = vunpack.c.l.bf16 %v55
  %v158 = vunpack.c.h.bf16 %v55
  %v159 = vunpack.c.l.bf16 %v56
  %v160 = vunpack.c.h.bf16 %v56
  %v161 = vunpack.c.l.bf16 %v57
  %v162 = vunpack.c.h.bf16 %v57
  %v163 = vunpack.c.l.bf16 %v58
  %v164 = vunpack.c.h.bf16 %v58
  %v165 = vunpack.c.l.bf16 %v59
  %v166 = vunpack.c.h.bf16 %v59
  %v167 = vunpack.c.l.bf16 %v60
  %v168 = vunpack.c.h.bf16 %v60
  %v169 = vunpack.c.l.bf16 %v61
  %v170 = vunpack.c.h.bf16 %v61
  %v171 = vunpack.c.l.bf16 %v62
  %v172 = vunpack.c.h.bf16 %v62
  %v173 = vunpack.c.l.bf16 %v63
  %v174 = vunpack.c.h.bf16 %v63
  %v175 = vunpack.c.l.bf16 %v64
  %v176 = vunpack.c.h.bf16 %v64
  %v177 = vunpack.c.l.bf16 %v65
  %v178 = vunpack.c.h.bf16 %v65
  %v179 = vunpack.c.l.bf16 %v66
  %v180 = vunpack.c.h.bf16 %v66
  %v181 = vunpack.c.l.bf16 %v67
  %v182 = vunpack.c.h.bf16 %v67
  %v183 = vunpack.c.l.bf16 %v68
  %v184 = vunpack.c.h.bf16 %v68
  %v185 = vunpack.c.l.bf16 %v69
  %v186 = vunpack.c.h.bf16 %v69
  %v187 = vunpack.c.l.bf16 %v70
  %v188 = vunpack.c.h.bf16 %v70
  %v189 = vunpack.c.l.bf16 %v71
  %v190 = vunpack.c.h.bf16 %v71
  %v191 = vunpack.c.l.bf16 %v72
  %v192 = vunpack.c.h.bf16 %v72
  %v193 = vunpack.c.l.bf16 %v73
  %v194 = vunpack.c.h.bf16 %v73
  %v195 = vunpack.c.l.bf16 %v74
  %v196 = vunpack.c.h.bf16 %v74
  %v197 = vunpack.c.l.bf16 %v75
  %v198 = vunpack.c.h.bf16 %v75
  %v199 = vunpack.c.l.bf16 %v76
  %v200 = vunpack.c.h.bf16 %v76
  %v201 = vunpack.c.l.bf16 %v77
  %v202 = vunpack.c.h.bf16 %v77
  %v203 = vunpack.c.l.bf16 %v78
  %v204 = vunpack.c.h.bf16 %v78
  %v205 = vunpack.c.l.bf16 %v79
  %v206 = vunpack.c.h.bf16 %v79
  %v207 = vunpack.c.l.bf16 %v80
  %v208 = vunpack.c.h.bf16 %v80
  %v209 = vld [vmem:[%s1] sm:$0x3]
  %v211 = vlaneseq
  %v212 = vshrl.u32 %v211, 7
  %v213 = vsub.s32 0, %v212
  %v214 = vrot.slane %v209, %v213
  %v215 = vlaneseq
  %v216 = vshrl.u32 %v215, 7
  %v217 = vsub.s32 1, %v216
  %v218 = vrot.slane %v209, %v217
  %v221 = vmul.f32 %v81, %v214
  %v222 = vmul.f32 %v82, %v218
  %v223 = vmul.f32 %v83, %v214
  %v224 = vmul.f32 %v84, %v218
  %v225 = vmul.f32 %v85, %v214
  %v226 = vmul.f32 %v86, %v218
  %v227 = vmul.f32 %v87, %v214
  %v228 = vmul.f32 %v88, %v218
  %v229 = vmul.f32 %v89, %v214
  %v230 = vmul.f32 %v90, %v218
  %v231 = vmul.f32 %v91, %v214
  %v232 = vmul.f32 %v92, %v218
  %v233 = vmul.f32 %v93, %v214
  %v234 = vmul.f32 %v94, %v218
  %v235 = vmul.f32 %v95, %v214
  %v236 = vmul.f32 %v96, %v218
  %v237 = vmul.f32 %v97, %v214
  %v238 = vmul.f32 %v98, %v218
  %v239 = vmul.f32 %v99, %v214
  %v240 = vmul.f32 %v100, %v218
  %v241 = vmul.f32 %v101, %v214
  %v242 = vmul.f32 %v102, %v218
  %v243 = vmul.f32 %v103, %v214
  %v244 = vmul.f32 %v104, %v218
  %v245 = vmul.f32 %v105, %v214
  %v246 = vmul.f32 %v106, %v218
  %v247 = vmul.f32 %v107, %v214
  %v248 = vmul.f32 %v108, %v218
  %v249 = vmul.f32 %v109, %v214
  %v250 = vmul.f32 %v110, %v218
  %v251 = vmul.f32 %v111, %v214
  %v252 = vmul.f32 %v112, %v218
  %v253 = vmul.f32 %v113, %v214
  %v254 = vmul.f32 %v114, %v218
  %v255 = vmul.f32 %v115, %v214
  %v256 = vmul.f32 %v116, %v218
  %v257 = vmul.f32 %v117, %v214
  %v258 = vmul.f32 %v118, %v218
  %v259 = vmul.f32 %v119, %v214
  %v260 = vmul.f32 %v120, %v218
  %v261 = vmul.f32 %v121, %v214
  %v262 = vmul.f32 %v122, %v218
  %v263 = vmul.f32 %v123, %v214
  %v264 = vmul.f32 %v124, %v218
  %v265 = vmul.f32 %v125, %v214
  %v266 = vmul.f32 %v126, %v218
  %v267 = vmul.f32 %v127, %v214
  %v268 = vmul.f32 %v128, %v218
  %v269 = vmul.f32 %v129, %v214
  %v270 = vmul.f32 %v130, %v218
  %v271 = vmul.f32 %v131, %v214
  %v272 = vmul.f32 %v132, %v218
  %v273 = vmul.f32 %v133, %v214
  %v274 = vmul.f32 %v134, %v218
  %v275 = vmul.f32 %v135, %v214
  %v276 = vmul.f32 %v136, %v218
  %v277 = vmul.f32 %v137, %v214
  %v278 = vmul.f32 %v138, %v218
  %v279 = vmul.f32 %v139, %v214
  %v280 = vmul.f32 %v140, %v218
  %v281 = vmul.f32 %v141, %v214
  %v282 = vmul.f32 %v142, %v218
  %v283 = vmul.f32 %v143, %v214
  %v284 = vmul.f32 %v144, %v218
  %v285 = vmul.f32 %v145, %v214
  %v286 = vmul.f32 %v146, %v218
  %v287 = vmul.f32 %v147, %v214
  %v288 = vmul.f32 %v148, %v218
  %v289 = vmul.f32 %v149, %v214
  %v290 = vmul.f32 %v150, %v218
  %v291 = vmul.f32 %v151, %v214
  %v292 = vmul.f32 %v152, %v218
  %v293 = vmul.f32 %v153, %v214
  %v294 = vmul.f32 %v154, %v218
  %v295 = vmul.f32 %v155, %v214
  %v296 = vmul.f32 %v156, %v218
  %v297 = vmul.f32 %v157, %v214
  %v298 = vmul.f32 %v158, %v218
  %v299 = vmul.f32 %v159, %v214
  %v300 = vmul.f32 %v160, %v218
  %v301 = vmul.f32 %v161, %v214
  %v302 = vmul.f32 %v162, %v218
  %v303 = vmul.f32 %v163, %v214
  %v304 = vmul.f32 %v164, %v218
  %v305 = vmul.f32 %v165, %v214
  %v306 = vmul.f32 %v166, %v218
  %v307 = vmul.f32 %v167, %v214
  %v308 = vmul.f32 %v168, %v218
  %v309 = vmul.f32 %v169, %v214
  %v310 = vmul.f32 %v170, %v218
  %v311 = vmul.f32 %v171, %v214
  %v312 = vmul.f32 %v172, %v218
  %v313 = vmul.f32 %v173, %v214
  %v314 = vmul.f32 %v174, %v218
  %v315 = vmul.f32 %v175, %v214
  %v316 = vmul.f32 %v176, %v218
  %v317 = vmul.f32 %v177, %v214
  %v318 = vmul.f32 %v178, %v218
  %v319 = vmul.f32 %v179, %v214
  %v320 = vmul.f32 %v180, %v218
  %v321 = vmul.f32 %v181, %v214
  %v322 = vmul.f32 %v182, %v218
  %v323 = vmul.f32 %v183, %v214
  %v324 = vmul.f32 %v184, %v218
  %v325 = vmul.f32 %v185, %v214
  %v326 = vmul.f32 %v186, %v218
  %v327 = vmul.f32 %v187, %v214
  %v328 = vmul.f32 %v188, %v218
  %v329 = vmul.f32 %v189, %v214
  %v330 = vmul.f32 %v190, %v218
  %v331 = vmul.f32 %v191, %v214
  %v332 = vmul.f32 %v192, %v218
  %v333 = vmul.f32 %v193, %v214
  %v334 = vmul.f32 %v194, %v218
  %v335 = vmul.f32 %v195, %v214
  %v336 = vmul.f32 %v196, %v218
  %v337 = vmul.f32 %v197, %v214
  %v338 = vmul.f32 %v198, %v218
  %v339 = vmul.f32 %v199, %v214
  %v340 = vmul.f32 %v200, %v218
  %v341 = vmul.f32 %v201, %v214
  %v342 = vmul.f32 %v202, %v218
  %v343 = vmul.f32 %v203, %v214
  %v344 = vmul.f32 %v204, %v218
  %v345 = vmul.f32 %v205, %v214
  %v346 = vmul.f32 %v206, %v218
  %v347 = vmul.f32 %v207, %v214
  %v348 = vmul.f32 %v208, %v218
  %v349 = vld [vmem:[%s2] sm:$0x3]
  %v351 = vlaneseq
  %v352 = vshrl.u32 %v351, 7
  %v353 = vsub.s32 0, %v352
  %v354 = vrot.slane %v349, %v353
  %v355 = vlaneseq
  %v356 = vshrl.u32 %v355, 7
  %v357 = vsub.s32 1, %v356
  %v358 = vrot.slane %v349, %v357
  %v361 = vadd.f32 %v221, %v354
  %v362 = vadd.f32 %v222, %v358
  %v363 = vadd.f32 %v223, %v354
  %v364 = vadd.f32 %v224, %v358
  %v365 = vadd.f32 %v225, %v354
  %v366 = vadd.f32 %v226, %v358
  %v367 = vadd.f32 %v227, %v354
  %v368 = vadd.f32 %v228, %v358
  %v369 = vadd.f32 %v229, %v354
  %v370 = vadd.f32 %v230, %v358
  %v371 = vadd.f32 %v231, %v354
  %v372 = vadd.f32 %v232, %v358
  %v373 = vadd.f32 %v233, %v354
  %v374 = vadd.f32 %v234, %v358
  %v375 = vadd.f32 %v235, %v354
  %v376 = vadd.f32 %v236, %v358
  %v377 = vadd.f32 %v237, %v354
  %v378 = vadd.f32 %v238, %v358
  %v379 = vadd.f32 %v239, %v354
  %v380 = vadd.f32 %v240, %v358
  %v381 = vadd.f32 %v241, %v354
  %v382 = vadd.f32 %v242, %v358
  %v383 = vadd.f32 %v243, %v354
  %v384 = vadd.f32 %v244, %v358
  %v385 = vadd.f32 %v245, %v354
  %v386 = vadd.f32 %v246, %v358
  %v387 = vadd.f32 %v247, %v354
  %v388 = vadd.f32 %v248, %v358
  %v389 = vadd.f32 %v249, %v354
  %v390 = vadd.f32 %v250, %v358
  %v391 = vadd.f32 %v251, %v354
  %v392 = vadd.f32 %v252, %v358
  %v393 = vadd.f32 %v253, %v354
  %v394 = vadd.f32 %v254, %v358
  %v395 = vadd.f32 %v255, %v354
  %v396 = vadd.f32 %v256, %v358
  %v397 = vadd.f32 %v257, %v354
  %v398 = vadd.f32 %v258, %v358
  %v399 = vadd.f32 %v259, %v354
  %v400 = vadd.f32 %v260, %v358
  %v401 = vadd.f32 %v261, %v354
  %v402 = vadd.f32 %v262, %v358
  %v403 = vadd.f32 %v263, %v354
  %v404 = vadd.f32 %v264, %v358
  %v405 = vadd.f32 %v265, %v354
  %v406 = vadd.f32 %v266, %v358
  %v407 = vadd.f32 %v267, %v354
  %v408 = vadd.f32 %v268, %v358
  %v409 = vadd.f32 %v269, %v354
  %v410 = vadd.f32 %v270, %v358
  %v411 = vadd.f32 %v271, %v354
  %v412 = vadd.f32 %v272, %v358
  %v413 = vadd.f32 %v273, %v354
  %v414 = vadd.f32 %v274, %v358
  %v415 = vadd.f32 %v275, %v354
  %v416 = vadd.f32 %v276, %v358
  %v417 = vadd.f32 %v277, %v354
  %v418 = vadd.f32 %v278, %v358
  %v419 = vadd.f32 %v279, %v354
  %v420 = vadd.f32 %v280, %v358
  %v421 = vadd.f32 %v281, %v354
  %v422 = vadd.f32 %v282, %v358
  %v423 = vadd.f32 %v283, %v354
  %v424 = vadd.f32 %v284, %v358
  %v425 = vadd.f32 %v285, %v354
  %v426 = vadd.f32 %v286, %v358
  %v427 = vadd.f32 %v287, %v354
  %v428 = vadd.f32 %v288, %v358
  %v429 = vadd.f32 %v289, %v354
  %v430 = vadd.f32 %v290, %v358
  %v431 = vadd.f32 %v291, %v354
  %v432 = vadd.f32 %v292, %v358
  %v433 = vadd.f32 %v293, %v354
  %v434 = vadd.f32 %v294, %v358
  %v435 = vadd.f32 %v295, %v354
  %v436 = vadd.f32 %v296, %v358
  %v437 = vadd.f32 %v297, %v354
  %v438 = vadd.f32 %v298, %v358
  %v439 = vadd.f32 %v299, %v354
  %v440 = vadd.f32 %v300, %v358
  %v441 = vadd.f32 %v301, %v354
  %v442 = vadd.f32 %v302, %v358
  %v443 = vadd.f32 %v303, %v354
  %v444 = vadd.f32 %v304, %v358
  %v445 = vadd.f32 %v305, %v354
  %v446 = vadd.f32 %v306, %v358
  %v447 = vadd.f32 %v307, %v354
  %v448 = vadd.f32 %v308, %v358
  %v449 = vadd.f32 %v309, %v354
  %v450 = vadd.f32 %v310, %v358
  %v451 = vadd.f32 %v311, %v354
  %v452 = vadd.f32 %v312, %v358
  %v453 = vadd.f32 %v313, %v354
  %v454 = vadd.f32 %v314, %v358
  %v455 = vadd.f32 %v315, %v354
  %v456 = vadd.f32 %v316, %v358
  %v457 = vadd.f32 %v317, %v354
  %v458 = vadd.f32 %v318, %v358
  %v459 = vadd.f32 %v319, %v354
  %v460 = vadd.f32 %v320, %v358
  %v461 = vadd.f32 %v321, %v354
  %v462 = vadd.f32 %v322, %v358
  %v463 = vadd.f32 %v323, %v354
  %v464 = vadd.f32 %v324, %v358
  %v465 = vadd.f32 %v325, %v354
  %v466 = vadd.f32 %v326, %v358
  %v467 = vadd.f32 %v327, %v354
  %v468 = vadd.f32 %v328, %v358
  %v469 = vadd.f32 %v329, %v354
  %v470 = vadd.f32 %v330, %v358
  %v471 = vadd.f32 %v331, %v354
  %v472 = vadd.f32 %v332, %v358
  %v473 = vadd.f32 %v333, %v354
  %v474 = vadd.f32 %v334, %v358
  %v475 = vadd.f32 %v335, %v354
  %v476 = vadd.f32 %v336, %v358
  %v477 = vadd.f32 %v337, %v354
  %v478 = vadd.f32 %v338, %v358
  %v479 = vadd.f32 %v339, %v354
  %v480 = vadd.f32 %v340, %v358
  %v481 = vadd.f32 %v341, %v354
  %v482 = vadd.f32 %v342, %v358
  %v483 = vadd.f32 %v343, %v354
  %v484 = vadd.f32 %v344, %v358
  %v485 = vadd.f32 %v345, %v354
  %v486 = vadd.f32 %v346, %v358
  %v487 = vadd.f32 %v347, %v354
  %v488 = vadd.f32 %v348, %v358
  %vm489 = vcmp.ge.f32.partialorder %v361, 0.0
  %vm490 = vcmp.ge.f32.partialorder %v362, 0.0
  %vm491 = vcmp.ge.f32.partialorder %v363, 0.0
  %vm492 = vcmp.ge.f32.partialorder %v364, 0.0
  %vm493 = vcmp.ge.f32.partialorder %v365, 0.0
  %vm494 = vcmp.ge.f32.partialorder %v366, 0.0
  %vm495 = vcmp.ge.f32.partialorder %v367, 0.0
  %vm496 = vcmp.ge.f32.partialorder %v368, 0.0
  %vm497 = vcmp.ge.f32.partialorder %v369, 0.0
  %vm498 = vcmp.ge.f32.partialorder %v370, 0.0
  %vm499 = vcmp.ge.f32.partialorder %v371, 0.0
  %vm500 = vcmp.ge.f32.partialorder %v372, 0.0
  %vm501 = vcmp.ge.f32.partialorder %v373, 0.0
  %vm502 = vcmp.ge.f32.partialorder %v374, 0.0
  %vm503 = vcmp.ge.f32.partialorder %v375, 0.0
  %vm504 = vcmp.ge.f32.partialorder %v376, 0.0
  %vm505 = vcmp.ge.f32.partialorder %v377, 0.0
  %vm506 = vcmp.ge.f32.partialorder %v378, 0.0
  %vm507 = vcmp.ge.f32.partialorder %v379, 0.0
  %vm508 = vcmp.ge.f32.partialorder %v380, 0.0
  %vm509 = vcmp.ge.f32.partialorder %v381, 0.0
  %vm510 = vcmp.ge.f32.partialorder %v382, 0.0
  %vm511 = vcmp.ge.f32.partialorder %v383, 0.0
  %vm512 = vcmp.ge.f32.partialorder %v384, 0.0
  %vm513 = vcmp.ge.f32.partialorder %v385, 0.0
  %vm514 = vcmp.ge.f32.partialorder %v386, 0.0
  %vm515 = vcmp.ge.f32.partialorder %v387, 0.0
  %vm516 = vcmp.ge.f32.partialorder %v388, 0.0
  %vm517 = vcmp.ge.f32.partialorder %v389, 0.0
  %vm518 = vcmp.ge.f32.partialorder %v390, 0.0
  %vm519 = vcmp.ge.f32.partialorder %v391, 0.0
  %vm520 = vcmp.ge.f32.partialorder %v392, 0.0
  %vm521 = vcmp.ge.f32.partialorder %v393, 0.0
  %vm522 = vcmp.ge.f32.partialorder %v394, 0.0
  %vm523 = vcmp.ge.f32.partialorder %v395, 0.0
  %vm524 = vcmp.ge.f32.partialorder %v396, 0.0
  %vm525 = vcmp.ge.f32.partialorder %v397, 0.0
  %vm526 = vcmp.ge.f32.partialorder %v398, 0.0
  %vm527 = vcmp.ge.f32.partialorder %v399, 0.0
  %vm528 = vcmp.ge.f32.partialorder %v400, 0.0
  %vm529 = vcmp.ge.f32.partialorder %v401, 0.0
  %vm530 = vcmp.ge.f32.partialorder %v402, 0.0
  %vm531 = vcmp.ge.f32.partialorder %v403, 0.0
  %vm532 = vcmp.ge.f32.partialorder %v404, 0.0
  %vm533 = vcmp.ge.f32.partialorder %v405, 0.0
  %vm534 = vcmp.ge.f32.partialorder %v406, 0.0
  %vm535 = vcmp.ge.f32.partialorder %v407, 0.0
  %vm536 = vcmp.ge.f32.partialorder %v408, 0.0
  %vm537 = vcmp.ge.f32.partialorder %v409, 0.0
  %vm538 = vcmp.ge.f32.partialorder %v410, 0.0
  %vm539 = vcmp.ge.f32.partialorder %v411, 0.0
  %vm540 = vcmp.ge.f32.partialorder %v412, 0.0
  %vm541 = vcmp.ge.f32.partialorder %v413, 0.0
  %vm542 = vcmp.ge.f32.partialorder %v414, 0.0
  %vm543 = vcmp.ge.f32.partialorder %v415, 0.0
  %vm544 = vcmp.ge.f32.partialorder %v416, 0.0
  %vm545 = vcmp.ge.f32.partialorder %v417, 0.0
  %vm546 = vcmp.ge.f32.partialorder %v418, 0.0
  %vm547 = vcmp.ge.f32.partialorder %v419, 0.0
  %vm548 = vcmp.ge.f32.partialorder %v420, 0.0
  %vm549 = vcmp.ge.f32.partialorder %v421, 0.0
  %vm550 = vcmp.ge.f32.partialorder %v422, 0.0
  %vm551 = vcmp.ge.f32.partialorder %v423, 0.0
  %vm552 = vcmp.ge.f32.partialorder %v424, 0.0
  %vm553 = vcmp.ge.f32.partialorder %v425, 0.0
  %vm554 = vcmp.ge.f32.partialorder %v426, 0.0
  %vm555 = vcmp.ge.f32.partialorder %v427, 0.0
  %vm556 = vcmp.ge.f32.partialorder %v428, 0.0
  %vm557 = vcmp.ge.f32.partialorder %v429, 0.0
  %vm558 = vcmp.ge.f32.partialorder %v430, 0.0
  %vm559 = vcmp.ge.f32.partialorder %v431, 0.0
  %vm560 = vcmp.ge.f32.partialorder %v432, 0.0
  %vm561 = vcmp.ge.f32.partialorder %v433, 0.0
  %vm562 = vcmp.ge.f32.partialorder %v434, 0.0
  %vm563 = vcmp.ge.f32.partialorder %v435, 0.0
  %vm564 = vcmp.ge.f32.partialorder %v436, 0.0
  %vm565 = vcmp.ge.f32.partialorder %v437, 0.0
  %vm566 = vcmp.ge.f32.partialorder %v438, 0.0
  %vm567 = vcmp.ge.f32.partialorder %v439, 0.0
  %vm568 = vcmp.ge.f32.partialorder %v440, 0.0
  %vm569 = vcmp.ge.f32.partialorder %v441, 0.0
  %vm570 = vcmp.ge.f32.partialorder %v442, 0.0
  %vm571 = vcmp.ge.f32.partialorder %v443, 0.0
  %vm572 = vcmp.ge.f32.partialorder %v444, 0.0
  %vm573 = vcmp.ge.f32.partialorder %v445, 0.0
  %vm574 = vcmp.ge.f32.partialorder %v446, 0.0
  %vm575 = vcmp.ge.f32.partialorder %v447, 0.0
  %vm576 = vcmp.ge.f32.partialorder %v448, 0.0
  %vm577 = vcmp.ge.f32.partialorder %v449, 0.0
  %vm578 = vcmp.ge.f32.partialorder %v450, 0.0
  %vm579 = vcmp.ge.f32.partialorder %v451, 0.0
  %vm580 = vcmp.ge.f32.partialorder %v452, 0.0
  %vm581 = vcmp.ge.f32.partialorder %v453, 0.0
  %vm582 = vcmp.ge.f32.partialorder %v454, 0.0
  %vm583 = vcmp.ge.f32.partialorder %v455, 0.0
  %vm584 = vcmp.ge.f32.partialorder %v456, 0.0
  %vm585 = vcmp.ge.f32.partialorder %v457, 0.0
  %vm586 = vcmp.ge.f32.partialorder %v458, 0.0
  %vm587 = vcmp.ge.f32.partialorder %v459, 0.0
  %vm588 = vcmp.ge.f32.partialorder %v460, 0.0
  %vm589 = vcmp.ge.f32.partialorder %v461, 0.0
  %vm590 = vcmp.ge.f32.partialorder %v462, 0.0
  %vm591 = vcmp.ge.f32.partialorder %v463, 0.0
  %vm592 = vcmp.ge.f32.partialorder %v464, 0.0
  %vm593 = vcmp.ge.f32.partialorder %v465, 0.0
  %vm594 = vcmp.ge.f32.partialorder %v466, 0.0
  %vm595 = vcmp.ge.f32.partialorder %v467, 0.0
  %vm596 = vcmp.ge.f32.partialorder %v468, 0.0
  %vm597 = vcmp.ge.f32.partialorder %v469, 0.0
  %vm598 = vcmp.ge.f32.partialorder %v470, 0.0
  %vm599 = vcmp.ge.f32.partialorder %v471, 0.0
  %vm600 = vcmp.ge.f32.partialorder %v472, 0.0
  %vm601 = vcmp.ge.f32.partialorder %v473, 0.0
  %vm602 = vcmp.ge.f32.partialorder %v474, 0.0
  %vm603 = vcmp.ge.f32.partialorder %v475, 0.0
  %vm604 = vcmp.ge.f32.partialorder %v476, 0.0
  %vm605 = vcmp.ge.f32.partialorder %v477, 0.0
  %vm606 = vcmp.ge.f32.partialorder %v478, 0.0
  %vm607 = vcmp.ge.f32.partialorder %v479, 0.0
  %vm608 = vcmp.ge.f32.partialorder %v480, 0.0
  %vm609 = vcmp.ge.f32.partialorder %v481, 0.0
  %vm610 = vcmp.ge.f32.partialorder %v482, 0.0
  %vm611 = vcmp.ge.f32.partialorder %v483, 0.0
  %vm612 = vcmp.ge.f32.partialorder %v484, 0.0
  %vm613 = vcmp.ge.f32.partialorder %v485, 0.0
  %vm614 = vcmp.ge.f32.partialorder %v486, 0.0
  %vm615 = vcmp.ge.f32.partialorder %v487, 0.0
  %vm616 = vcmp.ge.f32.partialorder %v488, 0.0
  %v617 = vmul.f32 %v361, 0.2
  %v618 = vmul.f32 %v362, 0.2
  %v619 = vmul.f32 %v363, 0.2
  %v620 = vmul.f32 %v364, 0.2
  %v621 = vmul.f32 %v365, 0.2
  %v622 = vmul.f32 %v366, 0.2
  %v623 = vmul.f32 %v367, 0.2
  %v624 = vmul.f32 %v368, 0.2
  %v625 = vmul.f32 %v369, 0.2
  %v626 = vmul.f32 %v370, 0.2
  %v627 = vmul.f32 %v371, 0.2
  %v628 = vmul.f32 %v372, 0.2
  %v629 = vmul.f32 %v373, 0.2
  %v630 = vmul.f32 %v374, 0.2
  %v631 = vmul.f32 %v375, 0.2
  %v632 = vmul.f32 %v376, 0.2
  %v633 = vmul.f32 %v377, 0.2
  %v634 = vmul.f32 %v378, 0.2
  %v635 = vmul.f32 %v379, 0.2
  %v636 = vmul.f32 %v380, 0.2
  %v637 = vmul.f32 %v381, 0.2
  %v638 = vmul.f32 %v382, 0.2
  %v639 = vmul.f32 %v383, 0.2
  %v640 = vmul.f32 %v384, 0.2
  %v641 = vmul.f32 %v385, 0.2
  %v642 = vmul.f32 %v386, 0.2
  %v643 = vmul.f32 %v387, 0.2
  %v644 = vmul.f32 %v388, 0.2
  %v645 = vmul.f32 %v389, 0.2
  %v646 = vmul.f32 %v390, 0.2
  %v647 = vmul.f32 %v391, 0.2
  %v648 = vmul.f32 %v392, 0.2
  %v649 = vmul.f32 %v393, 0.2
  %v650 = vmul.f32 %v394, 0.2
  %v651 = vmul.f32 %v395, 0.2
  %v652 = vmul.f32 %v396, 0.2
  %v653 = vmul.f32 %v397, 0.2
  %v654 = vmul.f32 %v398, 0.2
  %v655 = vmul.f32 %v399, 0.2
  %v656 = vmul.f32 %v400, 0.2
  %v657 = vmul.f32 %v401, 0.2
  %v658 = vmul.f32 %v402, 0.2
  %v659 = vmul.f32 %v403, 0.2
  %v660 = vmul.f32 %v404, 0.2
  %v661 = vmul.f32 %v405, 0.2
  %v662 = vmul.f32 %v406, 0.2
  %v663 = vmul.f32 %v407, 0.2
  %v664 = vmul.f32 %v408, 0.2
  %v665 = vmul.f32 %v409, 0.2
  %v666 = vmul.f32 %v410, 0.2
  %v667 = vmul.f32 %v411, 0.2
  %v668 = vmul.f32 %v412, 0.2
  %v669 = vmul.f32 %v413, 0.2
  %v670 = vmul.f32 %v414, 0.2
  %v671 = vmul.f32 %v415, 0.2
  %v672 = vmul.f32 %v416, 0.2
  %v673 = vmul.f32 %v417, 0.2
  %v674 = vmul.f32 %v418, 0.2
  %v675 = vmul.f32 %v419, 0.2
  %v676 = vmul.f32 %v420, 0.2
  %v677 = vmul.f32 %v421, 0.2
  %v678 = vmul.f32 %v422, 0.2
  %v679 = vmul.f32 %v423, 0.2
  %v680 = vmul.f32 %v424, 0.2
  %v681 = vmul.f32 %v425, 0.2
  %v682 = vmul.f32 %v426, 0.2
  %v683 = vmul.f32 %v427, 0.2
  %v684 = vmul.f32 %v428, 0.2
  %v685 = vmul.f32 %v429, 0.2
  %v686 = vmul.f32 %v430, 0.2
  %v687 = vmul.f32 %v431, 0.2
  %v688 = vmul.f32 %v432, 0.2
  %v689 = vmul.f32 %v433, 0.2
  %v690 = vmul.f32 %v434, 0.2
  %v691 = vmul.f32 %v435, 0.2
  %v692 = vmul.f32 %v436, 0.2
  %v693 = vmul.f32 %v437, 0.2
  %v694 = vmul.f32 %v438, 0.2
  %v695 = vmul.f32 %v439, 0.2
  %v696 = vmul.f32 %v440, 0.2
  %v697 = vmul.f32 %v441, 0.2
  %v698 = vmul.f32 %v442, 0.2
  %v699 = vmul.f32 %v443, 0.2
  %v700 = vmul.f32 %v444, 0.2
  %v701 = vmul.f32 %v445, 0.2
  %v702 = vmul.f32 %v446, 0.2
  %v703 = vmul.f32 %v447, 0.2
  %v704 = vmul.f32 %v448, 0.2
  %v705 = vmul.f32 %v449, 0.2
  %v706 = vmul.f32 %v450, 0.2
  %v707 = vmul.f32 %v451, 0.2
  %v708 = vmul.f32 %v452, 0.2
  %v709 = vmul.f32 %v453, 0.2
  %v710 = vmul.f32 %v454, 0.2
  %v711 = vmul.f32 %v455, 0.2
  %v712 = vmul.f32 %v456, 0.2
  %v713 = vmul.f32 %v457, 0.2
  %v714 = vmul.f32 %v458, 0.2
  %v715 = vmul.f32 %v459, 0.2
  %v716 = vmul.f32 %v460, 0.2
  %v717 = vmul.f32 %v461, 0.2
  %v718 = vmul.f32 %v462, 0.2
  %v719 = vmul.f32 %v463, 0.2
  %v720 = vmul.f32 %v464, 0.2
  %v721 = vmul.f32 %v465, 0.2
  %v722 = vmul.f32 %v466, 0.2
  %v723 = vmul.f32 %v467, 0.2
  %v724 = vmul.f32 %v468, 0.2
  %v725 = vmul.f32 %v469, 0.2
  %v726 = vmul.f32 %v470, 0.2
  %v727 = vmul.f32 %v471, 0.2
  %v728 = vmul.f32 %v472, 0.2
  %v729 = vmul.f32 %v473, 0.2
  %v730 = vmul.f32 %v474, 0.2
  %v731 = vmul.f32 %v475, 0.2
  %v732 = vmul.f32 %v476, 0.2
  %v733 = vmul.f32 %v477, 0.2
  %v734 = vmul.f32 %v478, 0.2
  %v735 = vmul.f32 %v479, 0.2
  %v736 = vmul.f32 %v480, 0.2
  %v737 = vmul.f32 %v481, 0.2
  %v738 = vmul.f32 %v482, 0.2
  %v739 = vmul.f32 %v483, 0.2
  %v740 = vmul.f32 %v484, 0.2
  %v741 = vmul.f32 %v485, 0.2
  %v742 = vmul.f32 %v486, 0.2
  %v743 = vmul.f32 %v487, 0.2
  %v744 = vmul.f32 %v488, 0.2
  %v745 = vsel %vm489, %v361, %v617
  %v746 = vsel %vm490, %v362, %v618
  %v747 = vsel %vm491, %v363, %v619
  %v748 = vsel %vm492, %v364, %v620
  %v749 = vsel %vm493, %v365, %v621
  %v750 = vsel %vm494, %v366, %v622
  %v751 = vsel %vm495, %v367, %v623
  %v752 = vsel %vm496, %v368, %v624
  %v753 = vsel %vm497, %v369, %v625
  %v754 = vsel %vm498, %v370, %v626
  %v755 = vsel %vm499, %v371, %v627
  %v756 = vsel %vm500, %v372, %v628
  %v757 = vsel %vm501, %v373, %v629
  %v758 = vsel %vm502, %v374, %v630
  %v759 = vsel %vm503, %v375, %v631
  %v760 = vsel %vm504, %v376, %v632
  %v761 = vsel %vm505, %v377, %v633
  %v762 = vsel %vm506, %v378, %v634
  %v763 = vsel %vm507, %v379, %v635
  %v764 = vsel %vm508, %v380, %v636
  %v765 = vsel %vm509, %v381, %v637
  %v766 = vsel %vm510, %v382, %v638
  %v767 = vsel %vm511, %v383, %v639
  %v768 = vsel %vm512, %v384, %v640
  %v769 = vsel %vm513, %v385, %v641
  %v770 = vsel %vm514, %v386, %v642
  %v771 = vsel %vm515, %v387, %v643
  %v772 = vsel %vm516, %v388, %v644
  %v773 = vsel %vm517, %v389, %v645
  %v774 = vsel %vm518, %v390, %v646
  %v775 = vsel %vm519, %v391, %v647
  %v776 = vsel %vm520, %v392, %v648
  %v777 = vsel %vm521, %v393, %v649
  %v778 = vsel %vm522, %v394, %v650
  %v779 = vsel %vm523, %v395, %v651
  %v780 = vsel %vm524, %v396, %v652
  %v781 = vsel %vm525, %v397, %v653
  %v782 = vsel %vm526, %v398, %v654
  %v783 = vsel %vm527, %v399, %v655
  %v784 = vsel %vm528, %v400, %v656
  %v785 = vsel %vm529, %v401, %v657
  %v786 = vsel %vm530, %v402, %v658
  %v787 = vsel %vm531, %v403, %v659
  %v788 = vsel %vm532, %v404, %v660
  %v789 = vsel %vm533, %v405, %v661
  %v790 = vsel %vm534, %v406, %v662
  %v791 = vsel %vm535, %v407, %v663
  %v792 = vsel %vm536, %v408, %v664
  %v793 = vsel %vm537, %v409, %v665
  %v794 = vsel %vm538, %v410, %v666
  %v795 = vsel %vm539, %v411, %v667
  %v796 = vsel %vm540, %v412, %v668
  %v797 = vsel %vm541, %v413, %v669
  %v798 = vsel %vm542, %v414, %v670
  %v799 = vsel %vm543, %v415, %v671
  %v800 = vsel %vm544, %v416, %v672
  %v801 = vsel %vm545, %v417, %v673
  %v802 = vsel %vm546, %v418, %v674
  %v803 = vsel %vm547, %v419, %v675
  %v804 = vsel %vm548, %v420, %v676
  %v805 = vsel %vm549, %v421, %v677
  %v806 = vsel %vm550, %v422, %v678
  %v807 = vsel %vm551, %v423, %v679
  %v808 = vsel %vm552, %v424, %v680
  %v809 = vsel %vm553, %v425, %v681
  %v810 = vsel %vm554, %v426, %v682
  %v811 = vsel %vm555, %v427, %v683
  %v812 = vsel %vm556, %v428, %v684
  %v813 = vsel %vm557, %v429, %v685
  %v814 = vsel %vm558, %v430, %v686
  %v815 = vsel %vm559, %v431, %v687
  %v816 = vsel %vm560, %v432, %v688
  %v817 = vsel %vm561, %v433, %v689
  %v818 = vsel %vm562, %v434, %v690
  %v819 = vsel %vm563, %v435, %v691
  %v820 = vsel %vm564, %v436, %v692
  %v821 = vsel %vm565, %v437, %v693
  %v822 = vsel %vm566, %v438, %v694
  %v823 = vsel %vm567, %v439, %v695
  %v824 = vsel %vm568, %v440, %v696
  %v825 = vsel %vm569, %v441, %v697
  %v826 = vsel %vm570, %v442, %v698
  %v827 = vsel %vm571, %v443, %v699
  %v828 = vsel %vm572, %v444, %v700
  %v829 = vsel %vm573, %v445, %v701
  %v830 = vsel %vm574, %v446, %v702
  %v831 = vsel %vm575, %v447, %v703
  %v832 = vsel %vm576, %v448, %v704
  %v833 = vsel %vm577, %v449, %v705
  %v834 = vsel %vm578, %v450, %v706
  %v835 = vsel %vm579, %v451, %v707
  %v836 = vsel %vm580, %v452, %v708
  %v837 = vsel %vm581, %v453, %v709
  %v838 = vsel %vm582, %v454, %v710
  %v839 = vsel %vm583, %v455, %v711
  %v840 = vsel %vm584, %v456, %v712
  %v841 = vsel %vm585, %v457, %v713
  %v842 = vsel %vm586, %v458, %v714
  %v843 = vsel %vm587, %v459, %v715
  %v844 = vsel %vm588, %v460, %v716
  %v845 = vsel %vm589, %v461, %v717
  %v846 = vsel %vm590, %v462, %v718
  %v847 = vsel %vm591, %v463, %v719
  %v848 = vsel %vm592, %v464, %v720
  %v849 = vsel %vm593, %v465, %v721
  %v850 = vsel %vm594, %v466, %v722
  %v851 = vsel %vm595, %v467, %v723
  %v852 = vsel %vm596, %v468, %v724
  %v853 = vsel %vm597, %v469, %v725
  %v854 = vsel %vm598, %v470, %v726
  %v855 = vsel %vm599, %v471, %v727
  %v856 = vsel %vm600, %v472, %v728
  %v857 = vsel %vm601, %v473, %v729
  %v858 = vsel %vm602, %v474, %v730
  %v859 = vsel %vm603, %v475, %v731
  %v860 = vsel %vm604, %v476, %v732
  %v861 = vsel %vm605, %v477, %v733
  %v862 = vsel %vm606, %v478, %v734
  %v863 = vsel %vm607, %v479, %v735
  %v864 = vsel %vm608, %v480, %v736
  %v865 = vsel %vm609, %v481, %v737
  %v866 = vsel %vm610, %v482, %v738
  %v867 = vsel %vm611, %v483, %v739
  %v868 = vsel %vm612, %v484, %v740
  %v869 = vsel %vm613, %v485, %v741
  %v870 = vsel %vm614, %v486, %v742
  %v871 = vsel %vm615, %v487, %v743
  %v872 = vsel %vm616, %v488, %v744
  %v873 = vpack.c.bf16 %v747, %v745
  %v874 = vpack.c.bf16 %v748, %v746
  %v875 = vpack.c.bf16 %v751, %v749
  %v876 = vpack.c.bf16 %v752, %v750
  %v877 = vpack.c.bf16 %v755, %v753
  %v878 = vpack.c.bf16 %v756, %v754
  %v879 = vpack.c.bf16 %v759, %v757
  %v880 = vpack.c.bf16 %v760, %v758
  %v881 = vpack.c.bf16 %v763, %v761
  %v882 = vpack.c.bf16 %v764, %v762
  %v883 = vpack.c.bf16 %v767, %v765
  %v884 = vpack.c.bf16 %v768, %v766
  %v885 = vpack.c.bf16 %v771, %v769
  %v886 = vpack.c.bf16 %v772, %v770
  %v887 = vpack.c.bf16 %v775, %v773
  %v888 = vpack.c.bf16 %v776, %v774
  %v889 = vpack.c.bf16 %v779, %v777
  %v890 = vpack.c.bf16 %v780, %v778
  %v891 = vpack.c.bf16 %v783, %v781
  %v892 = vpack.c.bf16 %v784, %v782
  %v893 = vpack.c.bf16 %v787, %v785
  %v894 = vpack.c.bf16 %v788, %v786
  %v895 = vpack.c.bf16 %v791, %v789
  %v896 = vpack.c.bf16 %v792, %v790
  %v897 = vpack.c.bf16 %v795, %v793
  %v898 = vpack.c.bf16 %v796, %v794
  %v899 = vpack.c.bf16 %v799, %v797
  %v900 = vpack.c.bf16 %v800, %v798
  %v901 = vpack.c.bf16 %v803, %v801
  %v902 = vpack.c.bf16 %v804, %v802
  %v903 = vpack.c.bf16 %v807, %v805
  %v904 = vpack.c.bf16 %v808, %v806
  %v905 = vpack.c.bf16 %v811, %v809
  %v906 = vpack.c.bf16 %v812, %v810
  %v907 = vpack.c.bf16 %v815, %v813
  %v908 = vpack.c.bf16 %v816, %v814
  %v909 = vpack.c.bf16 %v819, %v817
  %v910 = vpack.c.bf16 %v820, %v818
  %v911 = vpack.c.bf16 %v823, %v821
  %v912 = vpack.c.bf16 %v824, %v822
  %v913 = vpack.c.bf16 %v827, %v825
  %v914 = vpack.c.bf16 %v828, %v826
  %v915 = vpack.c.bf16 %v831, %v829
  %v916 = vpack.c.bf16 %v832, %v830
  %v917 = vpack.c.bf16 %v835, %v833
  %v918 = vpack.c.bf16 %v836, %v834
  %v919 = vpack.c.bf16 %v839, %v837
  %v920 = vpack.c.bf16 %v840, %v838
  %v921 = vpack.c.bf16 %v843, %v841
  %v922 = vpack.c.bf16 %v844, %v842
  %v923 = vpack.c.bf16 %v847, %v845
  %v924 = vpack.c.bf16 %v848, %v846
  %v925 = vpack.c.bf16 %v851, %v849
  %v926 = vpack.c.bf16 %v852, %v850
  %v927 = vpack.c.bf16 %v855, %v853
  %v928 = vpack.c.bf16 %v856, %v854
  %v929 = vpack.c.bf16 %v859, %v857
  %v930 = vpack.c.bf16 %v860, %v858
  %v931 = vpack.c.bf16 %v863, %v861
  %v932 = vpack.c.bf16 %v864, %v862
  %v933 = vpack.c.bf16 %v867, %v865
  %v934 = vpack.c.bf16 %v868, %v866
  %v935 = vpack.c.bf16 %v871, %v869
  %v936 = vpack.c.bf16 %v872, %v870
  %v937 = vld [vmem:[%s3] sm:$0xff]
  %v938 = vld [vmem:[%s3 + $0x8] sm:$0xff]
  %v939 = vld [vmem:[%s3 + $0x10] sm:$0xff]
  %v940 = vld [vmem:[%s3 + $0x18] sm:$0xff]
  %v941 = vld [vmem:[%s3 + $0x20] sm:$0xff]
  %v942 = vld [vmem:[%s3 + $0x28] sm:$0xff]
  %v943 = vld [vmem:[%s3 + $0x30] sm:$0xff]
  %v944 = vld [vmem:[%s3 + $0x38] sm:$0xff]
  %v945 = vld [vmem:[%s3 + $0x40] sm:$0xff]
  %v946 = vld [vmem:[%s3 + $0x48] sm:$0xff]
  %v947 = vld [vmem:[%s3 + $0x50] sm:$0xff]
  %v948 = vld [vmem:[%s3 + $0x58] sm:$0xff]
  %v949 = vld [vmem:[%s3 + $0x60] sm:$0xff]
  %v950 = vld [vmem:[%s3 + $0x68] sm:$0xff]
  %v951 = vld [vmem:[%s3 + $0x70] sm:$0xff]
  %v952 = vld [vmem:[%s3 + $0x78] sm:$0xff]
  %v953 = vld [vmem:[%s3 + $0x80] sm:$0xff]
  %v954 = vld [vmem:[%s3 + $0x88] sm:$0xff]
  %v955 = vld [vmem:[%s3 + $0x90] sm:$0xff]
  %v956 = vld [vmem:[%s3 + $0x98] sm:$0xff]
  %v957 = vld [vmem:[%s3 + $0xa0] sm:$0xff]
  %v958 = vld [vmem:[%s3 + $0xa8] sm:$0xff]
  %v959 = vld [vmem:[%s3 + $0xb0] sm:$0xff]
  %v960 = vld [vmem:[%s3 + $0xb8] sm:$0xff]
  %v961 = vld [vmem:[%s3 + $0xc0] sm:$0xff]
  %v962 = vld [vmem:[%s3 + $0xc8] sm:$0xff]
  %v963 = vld [vmem:[%s3 + $0xd0] sm:$0xff]
  %v964 = vld [vmem:[%s3 + $0xd8] sm:$0xff]
  %v965 = vld [vmem:[%s3 + $0xe0] sm:$0xff]
  %v966 = vld [vmem:[%s3 + $0xe8] sm:$0xff]
  %v967 = vld [vmem:[%s3 + $0xf0] sm:$0xff]
  %v968 = vld [vmem:[%s3 + $0xf8] sm:$0xff]
  %v969 = vld [vmem:[%s3 + $0x100] sm:$0xff]
  %v970 = vld [vmem:[%s3 + $0x108] sm:$0xff]
  %v971 = vld [vmem:[%s3 + $0x110] sm:$0xff]
  %v972 = vld [vmem:[%s3 + $0x118] sm:$0xff]
  %v973 = vld [vmem:[%s3 + $0x120] sm:$0xff]
  %v974 = vld [vmem:[%s3 + $0x128] sm:$0xff]
  %v975 = vld [vmem:[%s3 + $0x130] sm:$0xff]
  %v976 = vld [vmem:[%s3 + $0x138] sm:$0xff]
  %v977 = vld [vmem:[%s3 + $0x140] sm:$0xff]
  %v978 = vld [vmem:[%s3 + $0x148] sm:$0xff]
  %v979 = vld [vmem:[%s3 + $0x150] sm:$0xff]
  %v980 = vld [vmem:[%s3 + $0x158] sm:$0xff]
  %v981 = vld [vmem:[%s3 + $0x160] sm:$0xff]
  %v982 = vld [vmem:[%s3 + $0x168] sm:$0xff]
  %v983 = vld [vmem:[%s3 + $0x170] sm:$0xff]
  %v984 = vld [vmem:[%s3 + $0x178] sm:$0xff]
  %v985 = vld [vmem:[%s3 + $0x180] sm:$0xff]
  %v986 = vld [vmem:[%s3 + $0x188] sm:$0xff]
  %v987 = vld [vmem:[%s3 + $0x190] sm:$0xff]
  %v988 = vld [vmem:[%s3 + $0x198] sm:$0xff]
  %v989 = vld [vmem:[%s3 + $0x1a0] sm:$0xff]
  %v990 = vld [vmem:[%s3 + $0x1a8] sm:$0xff]
  %v991 = vld [vmem:[%s3 + $0x1b0] sm:$0xff]
  %v992 = vld [vmem:[%s3 + $0x1b8] sm:$0xff]
  %v993 = vld [vmem:[%s3 + $0x1c0] sm:$0xff]
  %v994 = vld [vmem:[%s3 + $0x1c8] sm:$0xff]
  %v995 = vld [vmem:[%s3 + $0x1d0] sm:$0xff]
  %v996 = vld [vmem:[%s3 + $0x1d8] sm:$0xff]
  %v997 = vld [vmem:[%s3 + $0x1e0] sm:$0xff]
  %v998 = vld [vmem:[%s3 + $0x1e8] sm:$0xff]
  %v999 = vld [vmem:[%s3 + $0x1f0] sm:$0xff]
  %v1000 = vld [vmem:[%s3 + $0x1f8] sm:$0xff]
  %v1065 = vunpack.c.l.b16 %v937
  %v1066 = vunpack.c.h.b16 %v937
  %v1067 = vunpack.c.l.b16 %v938
  %v1068 = vunpack.c.h.b16 %v938
  %v1069 = vunpack.c.l.b16 %v939
  %v1070 = vunpack.c.h.b16 %v939
  %v1071 = vunpack.c.l.b16 %v940
  %v1072 = vunpack.c.h.b16 %v940
  %v1073 = vunpack.c.l.b16 %v941
  %v1074 = vunpack.c.h.b16 %v941
  %v1075 = vunpack.c.l.b16 %v942
  %v1076 = vunpack.c.h.b16 %v942
  %v1077 = vunpack.c.l.b16 %v943
  %v1078 = vunpack.c.h.b16 %v943
  %v1079 = vunpack.c.l.b16 %v944
  %v1080 = vunpack.c.h.b16 %v944
  %v1081 = vunpack.c.l.b16 %v945
  %v1082 = vunpack.c.h.b16 %v945
  %v1083 = vunpack.c.l.b16 %v946
  %v1084 = vunpack.c.h.b16 %v946
  %v1085 = vunpack.c.l.b16 %v947
  %v1086 = vunpack.c.h.b16 %v947
  %v1087 = vunpack.c.l.b16 %v948
  %v1088 = vunpack.c.h.b16 %v948
  %v1089 = vunpack.c.l.b16 %v949
  %v1090 = vunpack.c.h.b16 %v949
  %v1091 = vunpack.c.l.b16 %v950
  %v1092 = vunpack.c.h.b16 %v950
  %v1093 = vunpack.c.l.b16 %v951
  %v1094 = vunpack.c.h.b16 %v951
  %v1095 = vunpack.c.l.b16 %v952
  %v1096 = vunpack.c.h.b16 %v952
  %v1097 = vunpack.c.l.b16 %v953
  %v1098 = vunpack.c.h.b16 %v953
  %v1099 = vunpack.c.l.b16 %v954
  %v1100 = vunpack.c.h.b16 %v954
  %v1101 = vunpack.c.l.b16 %v955
  %v1102 = vunpack.c.h.b16 %v955
  %v1103 = vunpack.c.l.b16 %v956
  %v1104 = vunpack.c.h.b16 %v956
  %v1105 = vunpack.c.l.b16 %v957
  %v1106 = vunpack.c.h.b16 %v957
  %v1107 = vunpack.c.l.b16 %v958
  %v1108 = vunpack.c.h.b16 %v958
  %v1109 = vunpack.c.l.b16 %v959
  %v1110 = vunpack.c.h.b16 %v959
  %v1111 = vunpack.c.l.b16 %v960
  %v1112 = vunpack.c.h.b16 %v960
  %v1113 = vunpack.c.l.b16 %v961
  %v1114 = vunpack.c.h.b16 %v961
  %v1115 = vunpack.c.l.b16 %v962
  %v1116 = vunpack.c.h.b16 %v962
  %v1117 = vunpack.c.l.b16 %v963
  %v1118 = vunpack.c.h.b16 %v963
  %v1119 = vunpack.c.l.b16 %v964
  %v1120 = vunpack.c.h.b16 %v964
  %v1121 = vunpack.c.l.b16 %v965
  %v1122 = vunpack.c.h.b16 %v965
  %v1123 = vunpack.c.l.b16 %v966
  %v1124 = vunpack.c.h.b16 %v966
  %v1125 = vunpack.c.l.b16 %v967
  %v1126 = vunpack.c.h.b16 %v967
  %v1127 = vunpack.c.l.b16 %v968
  %v1128 = vunpack.c.h.b16 %v968
  %v1129 = vunpack.c.l.b16 %v969
  %v1130 = vunpack.c.h.b16 %v969
  %v1131 = vunpack.c.l.b16 %v970
  %v1132 = vunpack.c.h.b16 %v970
  %v1133 = vunpack.c.l.b16 %v971
  %v1134 = vunpack.c.h.b16 %v971
  %v1135 = vunpack.c.l.b16 %v972
  %v1136 = vunpack.c.h.b16 %v972
  %v1137 = vunpack.c.l.b16 %v973
  %v1138 = vunpack.c.h.b16 %v973
  %v1139 = vunpack.c.l.b16 %v974
  %v1140 = vunpack.c.h.b16 %v974
  %v1141 = vunpack.c.l.b16 %v975
  %v1142 = vunpack.c.h.b16 %v975
  %v1143 = vunpack.c.l.b16 %v976
  %v1144 = vunpack.c.h.b16 %v976
  %v1145 = vunpack.c.l.b16 %v977
  %v1146 = vunpack.c.h.b16 %v977
  %v1147 = vunpack.c.l.b16 %v978
  %v1148 = vunpack.c.h.b16 %v978
  %v1149 = vunpack.c.l.b16 %v979
  %v1150 = vunpack.c.h.b16 %v979
  %v1151 = vunpack.c.l.b16 %v980
  %v1152 = vunpack.c.h.b16 %v980
  %v1153 = vunpack.c.l.b16 %v981
  %v1154 = vunpack.c.h.b16 %v981
  %v1155 = vunpack.c.l.b16 %v982
  %v1156 = vunpack.c.h.b16 %v982
  %v1157 = vunpack.c.l.b16 %v983
  %v1158 = vunpack.c.h.b16 %v983
  %v1159 = vunpack.c.l.b16 %v984
  %v1160 = vunpack.c.h.b16 %v984
  %v1161 = vunpack.c.l.b16 %v985
  %v1162 = vunpack.c.h.b16 %v985
  %v1163 = vunpack.c.l.b16 %v986
  %v1164 = vunpack.c.h.b16 %v986
  %v1165 = vunpack.c.l.b16 %v987
  %v1166 = vunpack.c.h.b16 %v987
  %v1167 = vunpack.c.l.b16 %v988
  %v1168 = vunpack.c.h.b16 %v988
  %v1169 = vunpack.c.l.b16 %v989
  %v1170 = vunpack.c.h.b16 %v989
  %v1171 = vunpack.c.l.b16 %v990
  %v1172 = vunpack.c.h.b16 %v990
  %v1173 = vunpack.c.l.b16 %v991
  %v1174 = vunpack.c.h.b16 %v991
  %v1175 = vunpack.c.l.b16 %v992
  %v1176 = vunpack.c.h.b16 %v992
  %v1177 = vunpack.c.l.b16 %v993
  %v1178 = vunpack.c.h.b16 %v993
  %v1179 = vunpack.c.l.b16 %v994
  %v1180 = vunpack.c.h.b16 %v994
  %v1181 = vunpack.c.l.b16 %v995
  %v1182 = vunpack.c.h.b16 %v995
  %v1183 = vunpack.c.l.b16 %v996
  %v1184 = vunpack.c.h.b16 %v996
  %v1185 = vunpack.c.l.b16 %v997
  %v1186 = vunpack.c.h.b16 %v997
  %v1187 = vunpack.c.l.b16 %v998
  %v1188 = vunpack.c.h.b16 %v998
  %v1189 = vunpack.c.l.b16 %v999
  %v1190 = vunpack.c.h.b16 %v999
  %v1191 = vunpack.c.l.b16 %v1000
  %v1192 = vunpack.c.h.b16 %v1000
  %v1193 = vpack.c.b16 %v1069, %v1065
  %v1194 = vpack.c.b16 %v1070, %v1066
  %v1195 = vpack.c.b16 %v1071, %v1067
  %v1196 = vpack.c.b16 %v1072, %v1068
  %v1197 = vpack.c.b16 %v1077, %v1073
  %v1198 = vpack.c.b16 %v1078, %v1074
  %v1199 = vpack.c.b16 %v1079, %v1075
  %v1200 = vpack.c.b16 %v1080, %v1076
  %v1201 = vpack.c.b16 %v1085, %v1081
  %v1202 = vpack.c.b16 %v1086, %v1082
  %v1203 = vpack.c.b16 %v1087, %v1083
  %v1204 = vpack.c.b16 %v1088, %v1084
  %v1205 = vpack.c.b16 %v1093, %v1089
  %v1206 = vpack.c.b16 %v1094, %v1090
  %v1207 = vpack.c.b16 %v1095, %v1091
  %v1208 = vpack.c.b16 %v1096, %v1092
  %v1209 = vpack.c.b16 %v1101, %v1097
  %v1210 = vpack.c.b16 %v1102, %v1098
  %v1211 = vpack.c.b16 %v1103, %v1099
  %v1212 = vpack.c.b16 %v1104, %v1100
  %v1213 = vpack.c.b16 %v1109, %v1105
  %v1214 = vpack.c.b16 %v1110, %v1106
  %v1215 = vpack.c.b16 %v1111, %v1107
  %v1216 = vpack.c.b16 %v1112, %v1108
  %v1217 = vpack.c.b16 %v1117, %v1113
  %v1218 = vpack.c.b16 %v1118, %v1114
  %v1219 = vpack.c.b16 %v1119, %v1115
  %v1220 = vpack.c.b16 %v1120, %v1116
  %v1221 = vpack.c.b16 %v1125, %v1121
  %v1222 = vpack.c.b16 %v1126, %v1122
  %v1223 = vpack.c.b16 %v1127, %v1123
  %v1224 = vpack.c.b16 %v1128, %v1124
  %v1225 = vpack.c.b16 %v1133, %v1129
  %v1226 = vpack.c.b16 %v1134, %v1130
  %v1227 = vpack.c.b16 %v1135, %v1131
  %v1228 = vpack.c.b16 %v1136, %v1132
  %v1229 = vpack.c.b16 %v1141, %v1137
  %v1230 = vpack.c.b16 %v1142, %v1138
  %v1231 = vpack.c.b16 %v1143, %v1139
  %v1232 = vpack.c.b16 %v1144, %v1140
  %v1233 = vpack.c.b16 %v1149, %v1145
  %v1234 = vpack.c.b16 %v1150, %v1146
  %v1235 = vpack.c.b16 %v1151, %v1147
  %v1236 = vpack.c.b16 %v1152, %v1148
  %v1237 = vpack.c.b16 %v1157, %v1153
  %v1238 = vpack.c.b16 %v1158, %v1154
  %v1239 = vpack.c.b16 %v1159, %v1155
  %v1240 = vpack.c.b16 %v1160, %v1156
  %v1241 = vpack.c.b16 %v1165, %v1161
  %v1242 = vpack.c.b16 %v1166, %v1162
  %v1243 = vpack.c.b16 %v1167, %v1163
  %v1244 = vpack.c.b16 %v1168, %v1164
  %v1245 = vpack.c.b16 %v1173, %v1169
  %v1246 = vpack.c.b16 %v1174, %v1170
  %v1247 = vpack.c.b16 %v1175, %v1171
  %v1248 = vpack.c.b16 %v1176, %v1172
  %v1249 = vpack.c.b16 %v1181, %v1177
  %v1250 = vpack.c.b16 %v1182, %v1178
  %v1251 = vpack.c.b16 %v1183, %v1179
  %v1252 = vpack.c.b16 %v1184, %v1180
  %v1253 = vpack.c.b16 %v1189, %v1185
  %v1254 = vpack.c.b16 %v1190, %v1186
  %v1255 = vpack.c.b16 %v1191, %v1187
  %v1256 = vpack.c.b16 %v1192, %v1188
  %1321 = vmatprep.subr.bf16.mxu0 %v1194
  %1322 = vmatpush1.bf16.msra.mxu0 %v1193
  %1323 = vmatprep.subr.bf16.mxu0 %v1198
  %1324 = vmatpush1.bf16.msra.mxu0 %v1197
  %1325 = vmatprep.subr.bf16.mxu0 %v1202
  %1326 = vmatpush1.bf16.msra.mxu0 %v1201
  %1327 = vmatprep.subr.bf16.mxu0 %v1206
  %1328 = vmatpush1.bf16.msra.mxu0 %v1205
  %1329 = vmatprep.subr.bf16.mxu0 %v1210
  %1330 = vmatpush1.bf16.msra.mxu0 %v1209
  %1331 = vmatprep.subr.bf16.mxu0 %v1214
  %1332 = vmatpush1.bf16.msra.mxu0 %v1213
  %1333 = vmatprep.subr.bf16.mxu0 %v1218
  %1334 = vmatpush1.bf16.msra.mxu0 %v1217
  %1335 = vmatprep.subr.bf16.mxu0 %v1222
  %1336 = vmatpush1.bf16.msra.mxu0 %v1221
  %1337 = vmatprep.subr.bf16.mxu0 %v1226
  %1338 = vmatpush1.bf16.msra.mxu0 %v1225
  %1339 = vmatprep.subr.bf16.mxu0 %v1230
  %1340 = vmatpush1.bf16.msra.mxu0 %v1229
  %1341 = vmatprep.subr.bf16.mxu0 %v1234
  %1342 = vmatpush1.bf16.msra.mxu0 %v1233
  %1343 = vmatprep.subr.bf16.mxu0 %v1238
  %1344 = vmatpush1.bf16.msra.mxu0 %v1237
  %1345 = vmatprep.subr.bf16.mxu0 %v1242
  %1346 = vmatpush1.bf16.msra.mxu0 %v1241
  %1347 = vmatprep.subr.bf16.mxu0 %v1246
  %1348 = vmatpush1.bf16.msra.mxu0 %v1245
  %1349 = vmatprep.subr.bf16.mxu0 %v1250
  %1350 = vmatpush1.bf16.msra.mxu0 %v1249
  %1351 = vmatprep.subr.bf16.mxu0 %v1254
  %1352 = vmatpush1.bf16.msra.mxu0 %v1253
  %1353 = vmatprep.mubr.bf16.mxu0 %v874
  %1354 = vmatmul.mubr.bf16.gmra.mrb[0].mxu0 %v873
  %v1355 = vpop.f32.mrb[0].mxu0
  %v1356 = vadd.f32 0.0, %v1355
  %v1357 = vpop.f32.mrb[0].mxu0
  %v1358 = vadd.f32 0.0, %v1357
  %v1359 = vpop.f32.mrb[0].mxu0
  %v1360 = vadd.f32 0.0, %v1359
  %v1361 = vpop.f32.mrb[0].mxu0
  %v1362 = vadd.f32 0.0, %v1361
  %1363 = vmatprep.mubr.bf16.mxu0 %v876
  %1364 = vmatmul.mubr.bf16.gmra.mrb[0].mxu0 %v875
  %v1365 = vpop.f32.mrb[0].mxu0
  %v1366 = vadd.f32 0.0, %v1365
  %v1367 = vpop.f32.mrb[0].mxu0
  %v1368 = vadd.f32 0.0, %v1367
  %v1369 = vpop.f32.mrb[0].mxu0
  %v1370 = vadd.f32 0.0, %v1369
  %v1371 = vpop.f32.mrb[0].mxu0
  %v1372 = vadd.f32 0.0, %v1371
  %1373 = vmatprep.mubr.bf16.mxu0 %v878
  %1374 = vmatmul.mubr.bf16.gmra.mrb[0].mxu0 %v877
  %v1375 = vpop.f32.mrb[0].mxu0
  %v1376 = vadd.f32 0.0, %v1375
  %v1377 = vpop.f32.mrb[0].mxu0
  %v1378 = vadd.f32 0.0, %v1377
  %v1379 = vpop.f32.mrb[0].mxu0
  %v1380 = vadd.f32 0.0, %v1379
  %v1381 = vpop.f32.mrb[0].mxu0
  %v1382 = vadd.f32 0.0, %v1381
  %1383 = vmatprep.mubr.bf16.mxu0 %v880
  %1384 = vmatmul.mubr.bf16.gmra.mrb[0].mxu0 %v879
  %v1385 = vpop.f32.mrb[0].mxu0
  %v1386 = vadd.f32 0.0, %v1385
  %v1387 = vpop.f32.mrb[0].mxu0
  %v1388 = vadd.f32 0.0, %v1387
  %v1389 = vpop.f32.mrb[0].mxu0
  %v1390 = vadd.f32 0.0, %v1389
  %v1391 = vpop.f32.mrb[0].mxu0
  %v1392 = vadd.f32 0.0, %v1391
  %1393 = vmatprep.mubr.bf16.mxu0 %v882
  %1394 = vmatmul.mubr.bf16.gmra.mrb[0].mxu0 %v881
  %v1395 = vpop.f32.mrb[0].mxu0
  %v1396 = vadd.f32 0.0, %v1395
  %v1397 = vpop.f32.mrb[0].mxu0
  %v1398 = vadd.f32 0.0, %v1397
  %v1399 = vpop.f32.mrb[0].mxu0
  %v1400 = vadd.f32 0.0, %v1399
  %v1401 = vpop.f32.mrb[0].mxu0
  %v1402 = vadd.f32 0.0, %v1401
  %1403 = vmatprep.mubr.bf16.mxu0 %v884
  %1404 = vmatmul.mubr.bf16.gmra.mrb[0].mxu0 %v883
  %v1405 = vpop.f32.mrb[0].mxu0
  %v1406 = vadd.f32 0.0, %v1405
  %v1407 = vpop.f32.mrb[0].mxu0
  %v1408 = vadd.f32 0.0, %v1407
  %v1409 = vpop.f32.mrb[0].mxu0
  %v1410 = vadd.f32 0.0, %v1409
  %v1411 = vpop.f32.mrb[0].mxu0
  %v1412 = vadd.f32 0.0, %v1411
  %1413 = vmatprep.mubr.bf16.mxu0 %v886
  %1414 = vmatmul.mubr.bf16.gmra.mrb[0].mxu0 %v885
  %v1415 = vpop.f32.mrb[0].mxu0
  %v1416 = vadd.f32 0.0, %v1415
  %v1417 = vpop.f32.mrb[0].mxu0
  %v1418 = vadd.f32 0.0, %v1417
  %v1419 = vpop.f32.mrb[0].mxu0
  %v1420 = vadd.f32 0.0, %v1419
  %v1421 = vpop.f32.mrb[0].mxu0
  %v1422 = vadd.f32 0.0, %v1421
  %1423 = vmatprep.mubr.bf16.mxu0 %v888
  %1424 = vmatmul.mubr.bf16.gmra.mrb[0].mxu0 %v887
  %v1425 = vpop.f32.mrb[0].mxu0
  %v1426 = vadd.f32 0.0, %v1425
  %v1427 = vpop.f32.mrb[0].mxu0
  %v1428 = vadd.f32 0.0, %v1427
  %v1429 = vpop.f32.mrb[0].mxu0
  %v1430 = vadd.f32 0.0, %v1429
  %v1431 = vpop.f32.mrb[0].mxu0
  %v1432 = vadd.f32 0.0, %v1431
  %1433 = vmatprep.mubr.bf16.mxu0 %v890
  %1434 = vmatmul.mubr.bf16.gmra.mrb[0].mxu0 %v889
  %v1435 = vpop.f32.mrb[0].mxu0
  %v1436 = vadd.f32 0.0, %v1435
  %v1437 = vpop.f32.mrb[0].mxu0
  %v1438 = vadd.f32 0.0, %v1437
  %v1439 = vpop.f32.mrb[0].mxu0
  %v1440 = vadd.f32 0.0, %v1439
  %v1441 = vpop.f32.mrb[0].mxu0
  %v1442 = vadd.f32 0.0, %v1441
  %1443 = vmatprep.mubr.bf16.mxu0 %v892
  %1444 = vmatmul.mubr.bf16.gmra.mrb[0].mxu0 %v891
  %v1445 = vpop.f32.mrb[0].mxu0
  %v1446 = vadd.f32 0.0, %v1445
  %v1447 = vpop.f32.mrb[0].mxu0
  %v1448 = vadd.f32 0.0, %v1447
  %v1449 = vpop.f32.mrb[0].mxu0
  %v1450 = vadd.f32 0.0, %v1449
  %v1451 = vpop.f32.mrb[0].mxu0
  %v1452 = vadd.f32 0.0, %v1451
  %1453 = vmatprep.mubr.bf16.mxu0 %v894
  %1454 = vmatmul.mubr.bf16.gmra.mrb[0].mxu0 %v893
  %v1455 = vpop.f32.mrb[0].mxu0
  %v1456 = vadd.f32 0.0, %v1455
  %v1457 = vpop.f32.mrb[0].mxu0
  %v1458 = vadd.f32 0.0, %v1457
  %v1459 = vpop.f32.mrb[0].mxu0
  %v1460 = vadd.f32 0.0, %v1459
  %v1461 = vpop.f32.mrb[0].mxu0
  %v1462 = vadd.f32 0.0, %v1461
  %1463 = vmatprep.mubr.bf16.mxu0 %v896
  %1464 = vmatmul.mubr.bf16.gmra.mrb[0].mxu0 %v895
  %v1465 = vpop.f32.mrb[0].mxu0
  %v1466 = vadd.f32 0.0, %v1465
  %v1467 = vpop.f32.mrb[0].mxu0
  %v1468 = vadd.f32 0.0, %v1467
  %v1469 = vpop.f32.mrb[0].mxu0
  %v1470 = vadd.f32 0.0, %v1469
  %v1471 = vpop.f32.mrb[0].mxu0
  %v1472 = vadd.f32 0.0, %v1471
  %1473 = vmatprep.mubr.bf16.mxu0 %v898
  %1474 = vmatmul.mubr.bf16.gmra.mrb[0].mxu0 %v897
  %v1475 = vpop.f32.mrb[0].mxu0
  %v1476 = vadd.f32 0.0, %v1475
  %v1477 = vpop.f32.mrb[0].mxu0
  %v1478 = vadd.f32 0.0, %v1477
  %v1479 = vpop.f32.mrb[0].mxu0
  %v1480 = vadd.f32 0.0, %v1479
  %v1481 = vpop.f32.mrb[0].mxu0
  %v1482 = vadd.f32 0.0, %v1481
  %1483 = vmatprep.mubr.bf16.mxu0 %v900
  %1484 = vmatmul.mubr.bf16.gmra.mrb[0].mxu0 %v899
  %v1485 = vpop.f32.mrb[0].mxu0
  %v1486 = vadd.f32 0.0, %v1485
  %v1487 = vpop.f32.mrb[0].mxu0
  %v1488 = vadd.f32 0.0, %v1487
  %v1489 = vpop.f32.mrb[0].mxu0
  %v1490 = vadd.f32 0.0, %v1489
  %v1491 = vpop.f32.mrb[0].mxu0
  %v1492 = vadd.f32 0.0, %v1491
  %1493 = vmatprep.mubr.bf16.mxu0 %v902
  %1494 = vmatmul.mubr.bf16.gmra.mrb[0].mxu0 %v901
  %v1495 = vpop.f32.mrb[0].mxu0
  %v1496 = vadd.f32 0.0, %v1495
  %v1497 = vpop.f32.mrb[0].mxu0
  %v1498 = vadd.f32 0.0, %v1497
  %v1499 = vpop.f32.mrb[0].mxu0
  %v1500 = vadd.f32 0.0, %v1499
  %v1501 = vpop.f32.mrb[0].mxu0
  %v1502 = vadd.f32 0.0, %v1501
  %1503 = vmatprep.mubr.bf16.mxu0 %v904
  %1504 = vmatmul.mubr.bf16.gmra.mrb[0].mxu0 %v903
  %v1505 = vpop.f32.mrb[0].mxu0
  %v1506 = vadd.f32 0.0, %v1505
  %v1507 = vpop.f32.mrb[0].mxu0
  %v1508 = vadd.f32 0.0, %v1507
  %v1509 = vpop.f32.mrb[0].mxu0
  %v1510 = vadd.f32 0.0, %v1509
  %v1511 = vpop.f32.mrb[0].mxu0
  %v1512 = vadd.f32 0.0, %v1511
  %1513 = vmatprep.mubr.bf16.mxu0 %v906
  %1514 = vmatmul.mubr.bf16.gmra.mrb[0].mxu0 %v905
  %v1515 = vpop.f32.mrb[0].mxu0
  %v1516 = vadd.f32 0.0, %v1515
  %v1517 = vpop.f32.mrb[0].mxu0
  %v1518 = vadd.f32 0.0, %v1517
  %v1519 = vpop.f32.mrb[0].mxu0
  %v1520 = vadd.f32 0.0, %v1519
  %v1521 = vpop.f32.mrb[0].mxu0
  %v1522 = vadd.f32 0.0, %v1521
  %1523 = vmatprep.mubr.bf16.mxu0 %v908
  %1524 = vmatmul.mubr.bf16.gmra.mrb[0].mxu0 %v907
  %v1525 = vpop.f32.mrb[0].mxu0
  %v1526 = vadd.f32 0.0, %v1525
  %v1527 = vpop.f32.mrb[0].mxu0
  %v1528 = vadd.f32 0.0, %v1527
  %v1529 = vpop.f32.mrb[0].mxu0
  %v1530 = vadd.f32 0.0, %v1529
  %v1531 = vpop.f32.mrb[0].mxu0
  %v1532 = vadd.f32 0.0, %v1531
  %1533 = vmatprep.mubr.bf16.mxu0 %v910
  %1534 = vmatmul.mubr.bf16.gmra.mrb[0].mxu0 %v909
  %v1535 = vpop.f32.mrb[0].mxu0
  %v1536 = vadd.f32 0.0, %v1535
  %v1537 = vpop.f32.mrb[0].mxu0
  %v1538 = vadd.f32 0.0, %v1537
  %v1539 = vpop.f32.mrb[0].mxu0
  %v1540 = vadd.f32 0.0, %v1539
  %v1541 = vpop.f32.mrb[0].mxu0
  %v1542 = vadd.f32 0.0, %v1541
  %1543 = vmatprep.mubr.bf16.mxu0 %v912
  %1544 = vmatmul.mubr.bf16.gmra.mrb[0].mxu0 %v911
  %v1545 = vpop.f32.mrb[0].mxu0
  %v1546 = vadd.f32 0.0, %v1545
  %v1547 = vpop.f32.mrb[0].mxu0
  %v1548 = vadd.f32 0.0, %v1547
  %v1549 = vpop.f32.mrb[0].mxu0
  %v1550 = vadd.f32 0.0, %v1549
  %v1551 = vpop.f32.mrb[0].mxu0
  %v1552 = vadd.f32 0.0, %v1551
  %1553 = vmatprep.mubr.bf16.mxu0 %v914
  %1554 = vmatmul.mubr.bf16.gmra.mrb[0].mxu0 %v913
  %v1555 = vpop.f32.mrb[0].mxu0
  %v1556 = vadd.f32 0.0, %v1555
  %v1557 = vpop.f32.mrb[0].mxu0
  %v1558 = vadd.f32 0.0, %v1557
  %v1559 = vpop.f32.mrb[0].mxu0
  %v1560 = vadd.f32 0.0, %v1559
  %v1561 = vpop.f32.mrb[0].mxu0
  %v1562 = vadd.f32 0.0, %v1561
  %1563 = vmatprep.mubr.bf16.mxu0 %v916
  %1564 = vmatmul.mubr.bf16.gmra.mrb[0].mxu0 %v915
  %v1565 = vpop.f32.mrb[0].mxu0
  %v1566 = vadd.f32 0.0, %v1565
  %v1567 = vpop.f32.mrb[0].mxu0
  %v1568 = vadd.f32 0.0, %v1567
  %v1569 = vpop.f32.mrb[0].mxu0
  %v1570 = vadd.f32 0.0, %v1569
  %v1571 = vpop.f32.mrb[0].mxu0
  %v1572 = vadd.f32 0.0, %v1571
  %1573 = vmatprep.mubr.bf16.mxu0 %v918
  %1574 = vmatmul.mubr.bf16.gmra.mrb[0].mxu0 %v917
  %v1575 = vpop.f32.mrb[0].mxu0
  %v1576 = vadd.f32 0.0, %v1575
  %v1577 = vpop.f32.mrb[0].mxu0
  %v1578 = vadd.f32 0.0, %v1577
  %v1579 = vpop.f32.mrb[0].mxu0
  %v1580 = vadd.f32 0.0, %v1579
  %v1581 = vpop.f32.mrb[0].mxu0
  %v1582 = vadd.f32 0.0, %v1581
  %1583 = vmatprep.mubr.bf16.mxu0 %v920
  %1584 = vmatmul.mubr.bf16.gmra.mrb[0].mxu0 %v919
  %v1585 = vpop.f32.mrb[0].mxu0
  %v1586 = vadd.f32 0.0, %v1585
  %v1587 = vpop.f32.mrb[0].mxu0
  %v1588 = vadd.f32 0.0, %v1587
  %v1589 = vpop.f32.mrb[0].mxu0
  %v1590 = vadd.f32 0.0, %v1589
  %v1591 = vpop.f32.mrb[0].mxu0
  %v1592 = vadd.f32 0.0, %v1591
  %1593 = vmatprep.mubr.bf16.mxu0 %v922
  %1594 = vmatmul.mubr.bf16.gmra.mrb[0].mxu0 %v921
  %v1595 = vpop.f32.mrb[0].mxu0
  %v1596 = vadd.f32 0.0, %v1595
  %v1597 = vpop.f32.mrb[0].mxu0
  %v1598 = vadd.f32 0.0, %v1597
  %v1599 = vpop.f32.mrb[0].mxu0
  %v1600 = vadd.f32 0.0, %v1599
  %v1601 = vpop.f32.mrb[0].mxu0
  %v1602 = vadd.f32 0.0, %v1601
  %1603 = vmatprep.mubr.bf16.mxu0 %v924
  %1604 = vmatmul.mubr.bf16.gmra.mrb[0].mxu0 %v923
  %v1605 = vpop.f32.mrb[0].mxu0
  %v1606 = vadd.f32 0.0, %v1605
  %v1607 = vpop.f32.mrb[0].mxu0
  %v1608 = vadd.f32 0.0, %v1607
  %v1609 = vpop.f32.mrb[0].mxu0
  %v1610 = vadd.f32 0.0, %v1609
  %v1611 = vpop.f32.mrb[0].mxu0
  %v1612 = vadd.f32 0.0, %v1611
  %1613 = vmatprep.mubr.bf16.mxu0 %v926
  %1614 = vmatmul.mubr.bf16.gmra.mrb[0].mxu0 %v925
  %v1615 = vpop.f32.mrb[0].mxu0
  %v1616 = vadd.f32 0.0, %v1615
  %v1617 = vpop.f32.mrb[0].mxu0
  %v1618 = vadd.f32 0.0, %v1617
  %v1619 = vpop.f32.mrb[0].mxu0
  %v1620 = vadd.f32 0.0, %v1619
  %v1621 = vpop.f32.mrb[0].mxu0
  %v1622 = vadd.f32 0.0, %v1621
  %1623 = vmatprep.mubr.bf16.mxu0 %v928
  %1624 = vmatmul.mubr.bf16.gmra.mrb[0].mxu0 %v927
  %v1625 = vpop.f32.mrb[0].mxu0
  %v1626 = vadd.f32 0.0, %v1625
  %v1627 = vpop.f32.mrb[0].mxu0
  %v1628 = vadd.f32 0.0, %v1627
  %v1629 = vpop.f32.mrb[0].mxu0
  %v1630 = vadd.f32 0.0, %v1629
  %v1631 = vpop.f32.mrb[0].mxu0
  %v1632 = vadd.f32 0.0, %v1631
  %1633 = vmatprep.mubr.bf16.mxu0 %v930
  %1634 = vmatmul.mubr.bf16.gmra.mrb[0].mxu0 %v929
  %v1635 = vpop.f32.mrb[0].mxu0
  %v1636 = vadd.f32 0.0, %v1635
  %v1637 = vpop.f32.mrb[0].mxu0
  %v1638 = vadd.f32 0.0, %v1637
  %v1639 = vpop.f32.mrb[0].mxu0
  %v1640 = vadd.f32 0.0, %v1639
  %v1641 = vpop.f32.mrb[0].mxu0
  %v1642 = vadd.f32 0.0, %v1641
  %1643 = vmatprep.mubr.bf16.mxu0 %v932
  %1644 = vmatmul.mubr.bf16.gmra.mrb[0].mxu0 %v931
  %v1645 = vpop.f32.mrb[0].mxu0
  %v1646 = vadd.f32 0.0, %v1645
  %v1647 = vpop.f32.mrb[0].mxu0
  %v1648 = vadd.f32 0.0, %v1647
  %v1649 = vpop.f32.mrb[0].mxu0
  %v1650 = vadd.f32 0.0, %v1649
  %v1651 = vpop.f32.mrb[0].mxu0
  %v1652 = vadd.f32 0.0, %v1651
  %1653 = vmatprep.mubr.bf16.mxu0 %v934
  %1654 = vmatmul.mubr.bf16.gmra.mrb[0].mxu0 %v933
  %v1655 = vpop.f32.mrb[0].mxu0
  %v1656 = vadd.f32 0.0, %v1655
  %v1657 = vpop.f32.mrb[0].mxu0
  %v1658 = vadd.f32 0.0, %v1657
  %v1659 = vpop.f32.mrb[0].mxu0
  %v1660 = vadd.f32 0.0, %v1659
  %v1661 = vpop.f32.mrb[0].mxu0
  %v1662 = vadd.f32 0.0, %v1661
  %1663 = vmatprep.mubr.bf16.mxu0 %v936
  %1664 = vmatmul.mubr.bf16.gmra.mrb[0].mxu0 %v935
  %v1665 = vpop.f32.mrb[0].mxu0
  %v1666 = vadd.f32 0.0, %v1665
  %v1667 = vpop.f32.mrb[0].mxu0
  %v1668 = vadd.f32 0.0, %v1667
  %v1669 = vpop.f32.mrb[0].mxu0
  %v1670 = vadd.f32 0.0, %v1669
  %v1671 = vpop.f32.mrb[0].mxu0
  %v1672 = vadd.f32 0.0, %v1671
  %1673 = vdwg.mxu0
  %1674 = vmatprep.subr.bf16.mxu0 %v1196
  %1675 = vmatpush1.bf16.msra.mxu0 %v1195
  %1676 = vmatprep.subr.bf16.mxu0 %v1200
  %1677 = vmatpush1.bf16.msra.mxu0 %v1199
  %1678 = vmatprep.subr.bf16.mxu0 %v1204
  %1679 = vmatpush1.bf16.msra.mxu0 %v1203
  %1680 = vmatprep.subr.bf16.mxu0 %v1208
  %1681 = vmatpush1.bf16.msra.mxu0 %v1207
  %1682 = vmatprep.subr.bf16.mxu0 %v1212
  %1683 = vmatpush1.bf16.msra.mxu0 %v1211
  %1684 = vmatprep.subr.bf16.mxu0 %v1216
  %1685 = vmatpush1.bf16.msra.mxu0 %v1215
  %1686 = vmatprep.subr.bf16.mxu0 %v1220
  %1687 = vmatpush1.bf16.msra.mxu0 %v1219
  %1688 = vmatprep.subr.bf16.mxu0 %v1224
  %1689 = vmatpush1.bf16.msra.mxu0 %v1223
  %1690 = vmatprep.subr.bf16.mxu0 %v1228
  %1691 = vmatpush1.bf16.msra.mxu0 %v1227
  %1692 = vmatprep.subr.bf16.mxu0 %v1232
  %1693 = vmatpush1.bf16.msra.mxu0 %v1231
  %1694 = vmatprep.subr.bf16.mxu0 %v1236
  %1695 = vmatpush1.bf16.msra.mxu0 %v1235
  %1696 = vmatprep.subr.bf16.mxu0 %v1240
  %1697 = vmatpush1.bf16.msra.mxu0 %v1239
  %1698 = vmatprep.subr.bf16.mxu0 %v1244
  %1699 = vmatpush1.bf16.msra.mxu0 %v1243
  %1700 = vmatprep.subr.bf16.mxu0 %v1248
  %1701 = vmatpush1.bf16.msra.mxu0 %v1247
  %1702 = vmatprep.subr.bf16.mxu0 %v1252
  %1703 = vmatpush1.bf16.msra.mxu0 %v1251
  %1704 = vmatprep.subr.bf16.mxu0 %v1256
  %1705 = vmatpush1.bf16.msra.mxu0 %v1255
  %1706 = vmatprep.mubr.bf16.mxu0 %v874
  %1707 = vmatmul.mubr.bf16.gmra.mrb[0].mxu0 %v873
  %v1708 = vpop.f32.mrb[0].mxu0
  %v1709 = vadd.f32 0.0, %v1708
  %v1710 = vpop.f32.mrb[0].mxu0
  %v1711 = vadd.f32 0.0, %v1710
  %v1712 = vpop.f32.mrb[0].mxu0
  %v1713 = vadd.f32 0.0, %v1712
  %v1714 = vpop.f32.mrb[0].mxu0
  %v1715 = vadd.f32 0.0, %v1714
  %1716 = vmatprep.mubr.bf16.mxu0 %v876
  %1717 = vmatmul.mubr.bf16.gmra.mrb[0].mxu0 %v875
  %v1718 = vpop.f32.mrb[0].mxu0
  %v1719 = vadd.f32 0.0, %v1718
  %v1720 = vpop.f32.mrb[0].mxu0
  %v1721 = vadd.f32 0.0, %v1720
  %v1722 = vpop.f32.mrb[0].mxu0
  %v1723 = vadd.f32 0.0, %v1722
  %v1724 = vpop.f32.mrb[0].mxu0
  %v1725 = vadd.f32 0.0, %v1724
  %1726 = vmatprep.mubr.bf16.mxu0 %v878
  %1727 = vmatmul.mubr.bf16.gmra.mrb[0].mxu0 %v877
  %v1728 = vpop.f32.mrb[0].mxu0
  %v1729 = vadd.f32 0.0, %v1728
  %v1730 = vpop.f32.mrb[0].mxu0
  %v1731 = vadd.f32 0.0, %v1730
  %v1732 = vpop.f32.mrb[0].mxu0
  %v1733 = vadd.f32 0.0, %v1732
  %v1734 = vpop.f32.mrb[0].mxu0
  %v1735 = vadd.f32 0.0, %v1734
  %1736 = vmatprep.mubr.bf16.mxu0 %v880
  %1737 = vmatmul.mubr.bf16.gmra.mrb[0].mxu0 %v879
  %v1738 = vpop.f32.mrb[0].mxu0
  %v1739 = vadd.f32 0.0, %v1738
  %v1740 = vpop.f32.mrb[0].mxu0
  %v1741 = vadd.f32 0.0, %v1740
  %v1742 = vpop.f32.mrb[0].mxu0
  %v1743 = vadd.f32 0.0, %v1742
  %v1744 = vpop.f32.mrb[0].mxu0
  %v1745 = vadd.f32 0.0, %v1744
  %1746 = vmatprep.mubr.bf16.mxu0 %v882
  %1747 = vmatmul.mubr.bf16.gmra.mrb[0].mxu0 %v881
  %v1748 = vpop.f32.mrb[0].mxu0
  %v1749 = vadd.f32 0.0, %v1748
  %v1750 = vpop.f32.mrb[0].mxu0
  %v1751 = vadd.f32 0.0, %v1750
  %v1752 = vpop.f32.mrb[0].mxu0
  %v1753 = vadd.f32 0.0, %v1752
  %v1754 = vpop.f32.mrb[0].mxu0
  %v1755 = vadd.f32 0.0, %v1754
  %1756 = vmatprep.mubr.bf16.mxu0 %v884
  %1757 = vmatmul.mubr.bf16.gmra.mrb[0].mxu0 %v883
  %v1758 = vpop.f32.mrb[0].mxu0
  %v1759 = vadd.f32 0.0, %v1758
  %v1760 = vpop.f32.mrb[0].mxu0
  %v1761 = vadd.f32 0.0, %v1760
  %v1762 = vpop.f32.mrb[0].mxu0
  %v1763 = vadd.f32 0.0, %v1762
  %v1764 = vpop.f32.mrb[0].mxu0
  %v1765 = vadd.f32 0.0, %v1764
  %1766 = vmatprep.mubr.bf16.mxu0 %v886
  %1767 = vmatmul.mubr.bf16.gmra.mrb[0].mxu0 %v885
  %v1768 = vpop.f32.mrb[0].mxu0
  %v1769 = vadd.f32 0.0, %v1768
  %v1770 = vpop.f32.mrb[0].mxu0
  %v1771 = vadd.f32 0.0, %v1770
  %v1772 = vpop.f32.mrb[0].mxu0
  %v1773 = vadd.f32 0.0, %v1772
  %v1774 = vpop.f32.mrb[0].mxu0
  %v1775 = vadd.f32 0.0, %v1774
  %1776 = vmatprep.mubr.bf16.mxu0 %v888
  %1777 = vmatmul.mubr.bf16.gmra.mrb[0].mxu0 %v887
  %v1778 = vpop.f32.mrb[0].mxu0
  %v1779 = vadd.f32 0.0, %v1778
  %v1780 = vpop.f32.mrb[0].mxu0
  %v1781 = vadd.f32 0.0, %v1780
  %v1782 = vpop.f32.mrb[0].mxu0
  %v1783 = vadd.f32 0.0, %v1782
  %v1784 = vpop.f32.mrb[0].mxu0
  %v1785 = vadd.f32 0.0, %v1784
  %1786 = vmatprep.mubr.bf16.mxu0 %v890
  %1787 = vmatmul.mubr.bf16.gmra.mrb[0].mxu0 %v889
  %v1788 = vpop.f32.mrb[0].mxu0
  %v1789 = vadd.f32 0.0, %v1788
  %v1790 = vpop.f32.mrb[0].mxu0
  %v1791 = vadd.f32 0.0, %v1790
  %v1792 = vpop.f32.mrb[0].mxu0
  %v1793 = vadd.f32 0.0, %v1792
  %v1794 = vpop.f32.mrb[0].mxu0
  %v1795 = vadd.f32 0.0, %v1794
  %1796 = vmatprep.mubr.bf16.mxu0 %v892
  %1797 = vmatmul.mubr.bf16.gmra.mrb[0].mxu0 %v891
  %v1798 = vpop.f32.mrb[0].mxu0
  %v1799 = vadd.f32 0.0, %v1798
  %v1800 = vpop.f32.mrb[0].mxu0
  %v1801 = vadd.f32 0.0, %v1800
  %v1802 = vpop.f32.mrb[0].mxu0
  %v1803 = vadd.f32 0.0, %v1802
  %v1804 = vpop.f32.mrb[0].mxu0
  %v1805 = vadd.f32 0.0, %v1804
  %1806 = vmatprep.mubr.bf16.mxu0 %v894
  %1807 = vmatmul.mubr.bf16.gmra.mrb[0].mxu0 %v893
  %v1808 = vpop.f32.mrb[0].mxu0
  %v1809 = vadd.f32 0.0, %v1808
  %v1810 = vpop.f32.mrb[0].mxu0
  %v1811 = vadd.f32 0.0, %v1810
  %v1812 = vpop.f32.mrb[0].mxu0
  %v1813 = vadd.f32 0.0, %v1812
  %v1814 = vpop.f32.mrb[0].mxu0
  %v1815 = vadd.f32 0.0, %v1814
  %1816 = vmatprep.mubr.bf16.mxu0 %v896
  %1817 = vmatmul.mubr.bf16.gmra.mrb[0].mxu0 %v895
  %v1818 = vpop.f32.mrb[0].mxu0
  %v1819 = vadd.f32 0.0, %v1818
  %v1820 = vpop.f32.mrb[0].mxu0
  %v1821 = vadd.f32 0.0, %v1820
  %v1822 = vpop.f32.mrb[0].mxu0
  %v1823 = vadd.f32 0.0, %v1822
  %v1824 = vpop.f32.mrb[0].mxu0
  %v1825 = vadd.f32 0.0, %v1824
  %1826 = vmatprep.mubr.bf16.mxu0 %v898
  %1827 = vmatmul.mubr.bf16.gmra.mrb[0].mxu0 %v897
  %v1828 = vpop.f32.mrb[0].mxu0
  %v1829 = vadd.f32 0.0, %v1828
  %v1830 = vpop.f32.mrb[0].mxu0
  %v1831 = vadd.f32 0.0, %v1830
  %v1832 = vpop.f32.mrb[0].mxu0
  %v1833 = vadd.f32 0.0, %v1832
  %v1834 = vpop.f32.mrb[0].mxu0
  %v1835 = vadd.f32 0.0, %v1834
  %1836 = vmatprep.mubr.bf16.mxu0 %v900
  %1837 = vmatmul.mubr.bf16.gmra.mrb[0].mxu0 %v899
  %v1838 = vpop.f32.mrb[0].mxu0
  %v1839 = vadd.f32 0.0, %v1838
  %v1840 = vpop.f32.mrb[0].mxu0
  %v1841 = vadd.f32 0.0, %v1840
  %v1842 = vpop.f32.mrb[0].mxu0
  %v1843 = vadd.f32 0.0, %v1842
  %v1844 = vpop.f32.mrb[0].mxu0
  %v1845 = vadd.f32 0.0, %v1844
  %1846 = vmatprep.mubr.bf16.mxu0 %v902
  %1847 = vmatmul.mubr.bf16.gmra.mrb[0].mxu0 %v901
  %v1848 = vpop.f32.mrb[0].mxu0
  %v1849 = vadd.f32 0.0, %v1848
  %v1850 = vpop.f32.mrb[0].mxu0
  %v1851 = vadd.f32 0.0, %v1850
  %v1852 = vpop.f32.mrb[0].mxu0
  %v1853 = vadd.f32 0.0, %v1852
  %v1854 = vpop.f32.mrb[0].mxu0
  %v1855 = vadd.f32 0.0, %v1854
  %1856 = vmatprep.mubr.bf16.mxu0 %v904
  %1857 = vmatmul.mubr.bf16.gmra.mrb[0].mxu0 %v903
  %v1858 = vpop.f32.mrb[0].mxu0
  %v1859 = vadd.f32 0.0, %v1858
  %v1860 = vpop.f32.mrb[0].mxu0
  %v1861 = vadd.f32 0.0, %v1860
  %v1862 = vpop.f32.mrb[0].mxu0
  %v1863 = vadd.f32 0.0, %v1862
  %v1864 = vpop.f32.mrb[0].mxu0
  %v1865 = vadd.f32 0.0, %v1864
  %1866 = vmatprep.mubr.bf16.mxu0 %v906
  %1867 = vmatmul.mubr.bf16.gmra.mrb[0].mxu0 %v905
  %v1868 = vpop.f32.mrb[0].mxu0
  %v1869 = vadd.f32 0.0, %v1868
  %v1870 = vpop.f32.mrb[0].mxu0
  %v1871 = vadd.f32 0.0, %v1870
  %v1872 = vpop.f32.mrb[0].mxu0
  %v1873 = vadd.f32 0.0, %v1872
  %v1874 = vpop.f32.mrb[0].mxu0
  %v1875 = vadd.f32 0.0, %v1874
  %1876 = vmatprep.mubr.bf16.mxu0 %v908
  %1877 = vmatmul.mubr.bf16.gmra.mrb[0].mxu0 %v907
  %v1878 = vpop.f32.mrb[0].mxu0
  %v1879 = vadd.f32 0.0, %v1878
  %v1880 = vpop.f32.mrb[0].mxu0
  %v1881 = vadd.f32 0.0, %v1880
  %v1882 = vpop.f32.mrb[0].mxu0
  %v1883 = vadd.f32 0.0, %v1882
  %v1884 = vpop.f32.mrb[0].mxu0
  %v1885 = vadd.f32 0.0, %v1884
  %1886 = vmatprep.mubr.bf16.mxu0 %v910
  %1887 = vmatmul.mubr.bf16.gmra.mrb[0].mxu0 %v909
  %v1888 = vpop.f32.mrb[0].mxu0
  %v1889 = vadd.f32 0.0, %v1888
  %v1890 = vpop.f32.mrb[0].mxu0
  %v1891 = vadd.f32 0.0, %v1890
  %v1892 = vpop.f32.mrb[0].mxu0
  %v1893 = vadd.f32 0.0, %v1892
  %v1894 = vpop.f32.mrb[0].mxu0
  %v1895 = vadd.f32 0.0, %v1894
  %1896 = vmatprep.mubr.bf16.mxu0 %v912
  %1897 = vmatmul.mubr.bf16.gmra.mrb[0].mxu0 %v911
  %v1898 = vpop.f32.mrb[0].mxu0
  %v1899 = vadd.f32 0.0, %v1898
  %v1900 = vpop.f32.mrb[0].mxu0
  %v1901 = vadd.f32 0.0, %v1900
  %v1902 = vpop.f32.mrb[0].mxu0
  %v1903 = vadd.f32 0.0, %v1902
  %v1904 = vpop.f32.mrb[0].mxu0
  %v1905 = vadd.f32 0.0, %v1904
  %1906 = vmatprep.mubr.bf16.mxu0 %v914
  %1907 = vmatmul.mubr.bf16.gmra.mrb[0].mxu0 %v913
  %v1908 = vpop.f32.mrb[0].mxu0
  %v1909 = vadd.f32 0.0, %v1908
  %v1910 = vpop.f32.mrb[0].mxu0
  %v1911 = vadd.f32 0.0, %v1910
  %v1912 = vpop.f32.mrb[0].mxu0
  %v1913 = vadd.f32 0.0, %v1912
  %v1914 = vpop.f32.mrb[0].mxu0
  %v1915 = vadd.f32 0.0, %v1914
  %1916 = vmatprep.mubr.bf16.mxu0 %v916
  %1917 = vmatmul.mubr.bf16.gmra.mrb[0].mxu0 %v915
  %v1918 = vpop.f32.mrb[0].mxu0
  %v1919 = vadd.f32 0.0, %v1918
  %v1920 = vpop.f32.mrb[0].mxu0
  %v1921 = vadd.f32 0.0, %v1920
  %v1922 = vpop.f32.mrb[0].mxu0
  %v1923 = vadd.f32 0.0, %v1922
  %v1924 = vpop.f32.mrb[0].mxu0
  %v1925 = vadd.f32 0.0, %v1924
  %1926 = vmatprep.mubr.bf16.mxu0 %v918
  %1927 = vmatmul.mubr.bf16.gmra.mrb[0].mxu0 %v917
  %v1928 = vpop.f32.mrb[0].mxu0
  %v1929 = vadd.f32 0.0, %v1928
  %v1930 = vpop.f32.mrb[0].mxu0
  %v1931 = vadd.f32 0.0, %v1930
  %v1932 = vpop.f32.mrb[0].mxu0
  %v1933 = vadd.f32 0.0, %v1932
  %v1934 = vpop.f32.mrb[0].mxu0
  %v1935 = vadd.f32 0.0, %v1934
  %1936 = vmatprep.mubr.bf16.mxu0 %v920
  %1937 = vmatmul.mubr.bf16.gmra.mrb[0].mxu0 %v919
  %v1938 = vpop.f32.mrb[0].mxu0
  %v1939 = vadd.f32 0.0, %v1938
  %v1940 = vpop.f32.mrb[0].mxu0
  %v1941 = vadd.f32 0.0, %v1940
  %v1942 = vpop.f32.mrb[0].mxu0
  %v1943 = vadd.f32 0.0, %v1942
  %v1944 = vpop.f32.mrb[0].mxu0
  %v1945 = vadd.f32 0.0, %v1944
  %1946 = vmatprep.mubr.bf16.mxu0 %v922
  %1947 = vmatmul.mubr.bf16.gmra.mrb[0].mxu0 %v921
  %v1948 = vpop.f32.mrb[0].mxu0
  %v1949 = vadd.f32 0.0, %v1948
  %v1950 = vpop.f32.mrb[0].mxu0
  %v1951 = vadd.f32 0.0, %v1950
  %v1952 = vpop.f32.mrb[0].mxu0
  %v1953 = vadd.f32 0.0, %v1952
  %v1954 = vpop.f32.mrb[0].mxu0
  %v1955 = vadd.f32 0.0, %v1954
  %1956 = vmatprep.mubr.bf16.mxu0 %v924
  %1957 = vmatmul.mubr.bf16.gmra.mrb[0].mxu0 %v923
  %v1958 = vpop.f32.mrb[0].mxu0
  %v1959 = vadd.f32 0.0, %v1958
  %v1960 = vpop.f32.mrb[0].mxu0
  %v1961 = vadd.f32 0.0, %v1960
  %v1962 = vpop.f32.mrb[0].mxu0
  %v1963 = vadd.f32 0.0, %v1962
  %v1964 = vpop.f32.mrb[0].mxu0
  %v1965 = vadd.f32 0.0, %v1964
  %1966 = vmatprep.mubr.bf16.mxu0 %v926
  %1967 = vmatmul.mubr.bf16.gmra.mrb[0].mxu0 %v925
  %v1968 = vpop.f32.mrb[0].mxu0
  %v1969 = vadd.f32 0.0, %v1968
  %v1970 = vpop.f32.mrb[0].mxu0
  %v1971 = vadd.f32 0.0, %v1970
  %v1972 = vpop.f32.mrb[0].mxu0
  %v1973 = vadd.f32 0.0, %v1972
  %v1974 = vpop.f32.mrb[0].mxu0
  %v1975 = vadd.f32 0.0, %v1974
  %1976 = vmatprep.mubr.bf16.mxu0 %v928
  %1977 = vmatmul.mubr.bf16.gmra.mrb[0].mxu0 %v927
  %v1978 = vpop.f32.mrb[0].mxu0
  %v1979 = vadd.f32 0.0, %v1978
  %v1980 = vpop.f32.mrb[0].mxu0
  %v1981 = vadd.f32 0.0, %v1980
  %v1982 = vpop.f32.mrb[0].mxu0
  %v1983 = vadd.f32 0.0, %v1982
  %v1984 = vpop.f32.mrb[0].mxu0
  %v1985 = vadd.f32 0.0, %v1984
  %1986 = vmatprep.mubr.bf16.mxu0 %v930
  %1987 = vmatmul.mubr.bf16.gmra.mrb[0].mxu0 %v929
  %v1988 = vpop.f32.mrb[0].mxu0
  %v1989 = vadd.f32 0.0, %v1988
  %v1990 = vpop.f32.mrb[0].mxu0
  %v1991 = vadd.f32 0.0, %v1990
  %v1992 = vpop.f32.mrb[0].mxu0
  %v1993 = vadd.f32 0.0, %v1992
  %v1994 = vpop.f32.mrb[0].mxu0
  %v1995 = vadd.f32 0.0, %v1994
  %1996 = vmatprep.mubr.bf16.mxu0 %v932
  %1997 = vmatmul.mubr.bf16.gmra.mrb[0].mxu0 %v931
  %v1998 = vpop.f32.mrb[0].mxu0
  %v1999 = vadd.f32 0.0, %v1998
  %v2000 = vpop.f32.mrb[0].mxu0
  %v2001 = vadd.f32 0.0, %v2000
  %v2002 = vpop.f32.mrb[0].mxu0
  %v2003 = vadd.f32 0.0, %v2002
  %v2004 = vpop.f32.mrb[0].mxu0
  %v2005 = vadd.f32 0.0, %v2004
  %2006 = vmatprep.mubr.bf16.mxu0 %v934
  %2007 = vmatmul.mubr.bf16.gmra.mrb[0].mxu0 %v933
  %v2008 = vpop.f32.mrb[0].mxu0
  %v2009 = vadd.f32 0.0, %v2008
  %v2010 = vpop.f32.mrb[0].mxu0
  %v2011 = vadd.f32 0.0, %v2010
  %v2012 = vpop.f32.mrb[0].mxu0
  %v2013 = vadd.f32 0.0, %v2012
  %v2014 = vpop.f32.mrb[0].mxu0
  %v2015 = vadd.f32 0.0, %v2014
  %2016 = vmatprep.mubr.bf16.mxu0 %v936
  %2017 = vmatmul.mubr.bf16.gmra.mrb[0].mxu0 %v935
  %v2018 = vpop.f32.mrb[0].mxu0
  %v2019 = vadd.f32 0.0, %v2018
  %v2020 = vpop.f32.mrb[0].mxu0
  %v2021 = vadd.f32 0.0, %v2020
  %v2022 = vpop.f32.mrb[0].mxu0
  %v2023 = vadd.f32 0.0, %v2022
  %v2024 = vpop.f32.mrb[0].mxu0
  %v2025 = vadd.f32 0.0, %v2024
  %2026 = vdwg.mxu0
  %v2027 = vadd.f32 %v1356, %v1360
  %v2028 = vadd.f32 %v2027, %v1366
  %v2029 = vadd.f32 %v2028, %v1370
  %v2030 = vadd.f32 %v2029, %v1376
  %v2031 = vadd.f32 %v2030, %v1380
  %v2032 = vadd.f32 %v2031, %v1386
  %v2033 = vadd.f32 %v2032, %v1390
  %v2034 = vadd.f32 %v2033, %v1396
  %v2035 = vadd.f32 %v2034, %v1400
  %v2036 = vadd.f32 %v2035, %v1406
  %v2037 = vadd.f32 %v2036, %v1410
  %v2038 = vadd.f32 %v2037, %v1416
  %v2039 = vadd.f32 %v2038, %v1420
  %v2040 = vadd.f32 %v2039, %v1426
  %v2041 = vadd.f32 %v2040, %v1430
  %v2042 = vadd.f32 %v2041, %v1436
  %v2043 = vadd.f32 %v2042, %v1440
  %v2044 = vadd.f32 %v2043, %v1446
  %v2045 = vadd.f32 %v2044, %v1450
  %v2046 = vadd.f32 %v2045, %v1456
  %v2047 = vadd.f32 %v2046, %v1460
  %v2048 = vadd.f32 %v2047, %v1466
  %v2049 = vadd.f32 %v2048, %v1470
  %v2050 = vadd.f32 %v2049, %v1476
  %v2051 = vadd.f32 %v2050, %v1480
  %v2052 = vadd.f32 %v2051, %v1486
  %v2053 = vadd.f32 %v2052, %v1490
  %v2054 = vadd.f32 %v2053, %v1496
  %v2055 = vadd.f32 %v2054, %v1500
  %v2056 = vadd.f32 %v2055, %v1506
  %v2057 = vadd.f32 %v2056, %v1510
  %v2058 = vadd.f32 %v2057, %v1516
  %v2059 = vadd.f32 %v2058, %v1520
  %v2060 = vadd.f32 %v2059, %v1526
  %v2061 = vadd.f32 %v2060, %v1530
  %v2062 = vadd.f32 %v2061, %v1536
  %v2063 = vadd.f32 %v2062, %v1540
  %v2064 = vadd.f32 %v2063, %v1546
  %v2065 = vadd.f32 %v2064, %v1550
  %v2066 = vadd.f32 %v2065, %v1556
  %v2067 = vadd.f32 %v2066, %v1560
  %v2068 = vadd.f32 %v2067, %v1566
  %v2069 = vadd.f32 %v2068, %v1570
  %v2070 = vadd.f32 %v2069, %v1576
  %v2071 = vadd.f32 %v2070, %v1580
  %v2072 = vadd.f32 %v2071, %v1586
  %v2073 = vadd.f32 %v2072, %v1590
  %v2074 = vadd.f32 %v2073, %v1596
  %v2075 = vadd.f32 %v2074, %v1600
  %v2076 = vadd.f32 %v2075, %v1606
  %v2077 = vadd.f32 %v2076, %v1610
  %v2078 = vadd.f32 %v2077, %v1616
  %v2079 = vadd.f32 %v2078, %v1620
  %v2080 = vadd.f32 %v2079, %v1626
  %v2081 = vadd.f32 %v2080, %v1630
  %v2082 = vadd.f32 %v2081, %v1636
  %v2083 = vadd.f32 %v2082, %v1640
  %v2084 = vadd.f32 %v2083, %v1646
  %v2085 = vadd.f32 %v2084, %v1650
  %v2086 = vadd.f32 %v2085, %v1656
  %v2087 = vadd.f32 %v2086, %v1660
  %v2088 = vadd.f32 %v2087, %v1666
  %v2089 = vadd.f32 %v2088, %v1670
  %v2090 = vrot.slane %v2089, 4
  %v2091 = vadd.f32 %v2089, %v2090
  %v2092 = vrot.slane %v2091, 2
  %v2093 = vadd.f32 %v2091, %v2092
  %v2094 = vrot.slane %v2093, 1
  %v2095 = vadd.f32 %v2093, %v2094
  %v2096 = vadd.f32 %v1358, %v1362
  %v2097 = vadd.f32 %v2096, %v1368
  %v2098 = vadd.f32 %v2097, %v1372
  %v2099 = vadd.f32 %v2098, %v1378
  %v2100 = vadd.f32 %v2099, %v1382
  %v2101 = vadd.f32 %v2100, %v1388
  %v2102 = vadd.f32 %v2101, %v1392
  %v2103 = vadd.f32 %v2102, %v1398
  %v2104 = vadd.f32 %v2103, %v1402
  %v2105 = vadd.f32 %v2104, %v1408
  %v2106 = vadd.f32 %v2105, %v1412
  %v2107 = vadd.f32 %v2106, %v1418
  %v2108 = vadd.f32 %v2107, %v1422
  %v2109 = vadd.f32 %v2108, %v1428
  %v2110 = vadd.f32 %v2109, %v1432
  %v2111 = vadd.f32 %v2110, %v1438
  %v2112 = vadd.f32 %v2111, %v1442
  %v2113 = vadd.f32 %v2112, %v1448
  %v2114 = vadd.f32 %v2113, %v1452
  %v2115 = vadd.f32 %v2114, %v1458
  %v2116 = vadd.f32 %v2115, %v1462
  %v2117 = vadd.f32 %v2116, %v1468
  %v2118 = vadd.f32 %v2117, %v1472
  %v2119 = vadd.f32 %v2118, %v1478
  %v2120 = vadd.f32 %v2119, %v1482
  %v2121 = vadd.f32 %v2120, %v1488
  %v2122 = vadd.f32 %v2121, %v1492
  %v2123 = vadd.f32 %v2122, %v1498
  %v2124 = vadd.f32 %v2123, %v1502
  %v2125 = vadd.f32 %v2124, %v1508
  %v2126 = vadd.f32 %v2125, %v1512
  %v2127 = vadd.f32 %v2126, %v1518
  %v2128 = vadd.f32 %v2127, %v1522
  %v2129 = vadd.f32 %v2128, %v1528
  %v2130 = vadd.f32 %v2129, %v1532
  %v2131 = vadd.f32 %v2130, %v1538
  %v2132 = vadd.f32 %v2131, %v1542
  %v2133 = vadd.f32 %v2132, %v1548
  %v2134 = vadd.f32 %v2133, %v1552
  %v2135 = vadd.f32 %v2134, %v1558
  %v2136 = vadd.f32 %v2135, %v1562
  %v2137 = vadd.f32 %v2136, %v1568
  %v2138 = vadd.f32 %v2137, %v1572
  %v2139 = vadd.f32 %v2138, %v1578
  %v2140 = vadd.f32 %v2139, %v1582
  %v2141 = vadd.f32 %v2140, %v1588
  %v2142 = vadd.f32 %v2141, %v1592
  %v2143 = vadd.f32 %v2142, %v1598
  %v2144 = vadd.f32 %v2143, %v1602
  %v2145 = vadd.f32 %v2144, %v1608
  %v2146 = vadd.f32 %v2145, %v1612
  %v2147 = vadd.f32 %v2146, %v1618
  %v2148 = vadd.f32 %v2147, %v1622
  %v2149 = vadd.f32 %v2148, %v1628
  %v2150 = vadd.f32 %v2149, %v1632
  %v2151 = vadd.f32 %v2150, %v1638
  %v2152 = vadd.f32 %v2151, %v1642
  %v2153 = vadd.f32 %v2152, %v1648
  %v2154 = vadd.f32 %v2153, %v1652
  %v2155 = vadd.f32 %v2154, %v1658
  %v2156 = vadd.f32 %v2155, %v1662
  %v2157 = vadd.f32 %v2156, %v1668
  %v2158 = vadd.f32 %v2157, %v1672
  %v2159 = vrot.slane %v2158, 4
  %v2160 = vadd.f32 %v2158, %v2159
  %v2161 = vrot.slane %v2160, 2
  %v2162 = vadd.f32 %v2160, %v2161
  %v2163 = vrot.slane %v2162, 1
  %v2164 = vadd.f32 %v2162, %v2163
  %v2165 = vadd.f32 %v1709, %v1713
  %v2166 = vadd.f32 %v2165, %v1719
  %v2167 = vadd.f32 %v2166, %v1723
  %v2168 = vadd.f32 %v2167, %v1729
  %v2169 = vadd.f32 %v2168, %v1733
  %v2170 = vadd.f32 %v2169, %v1739
  %v2171 = vadd.f32 %v2170, %v1743
  %v2172 = vadd.f32 %v2171, %v1749
  %v2173 = vadd.f32 %v2172, %v1753
  %v2174 = vadd.f32 %v2173, %v1759
  %v2175 = vadd.f32 %v2174, %v1763
  %v2176 = vadd.f32 %v2175, %v1769
  %v2177 = vadd.f32 %v2176, %v1773
  %v2178 = vadd.f32 %v2177, %v1779
  %v2179 = vadd.f32 %v2178, %v1783
  %v2180 = vadd.f32 %v2179, %v1789
  %v2181 = vadd.f32 %v2180, %v1793
  %v2182 = vadd.f32 %v2181, %v1799
  %v2183 = vadd.f32 %v2182, %v1803
  %v2184 = vadd.f32 %v2183, %v1809
  %v2185 = vadd.f32 %v2184, %v1813
  %v2186 = vadd.f32 %v2185, %v1819
  %v2187 = vadd.f32 %v2186, %v1823
  %v2188 = vadd.f32 %v2187, %v1829
  %v2189 = vadd.f32 %v2188, %v1833
  %v2190 = vadd.f32 %v2189, %v1839
  %v2191 = vadd.f32 %v2190, %v1843
  %v2192 = vadd.f32 %v2191, %v1849
  %v2193 = vadd.f32 %v2192, %v1853
  %v2194 = vadd.f32 %v2193, %v1859
  %v2195 = vadd.f32 %v2194, %v1863
  %v2196 = vadd.f32 %v2195, %v1869
  %v2197 = vadd.f32 %v2196, %v1873
  %v2198 = vadd.f32 %v2197, %v1879
  %v2199 = vadd.f32 %v2198, %v1883
  %v2200 = vadd.f32 %v2199, %v1889
  %v2201 = vadd.f32 %v2200, %v1893
  %v2202 = vadd.f32 %v2201, %v1899
  %v2203 = vadd.f32 %v2202, %v1903
  %v2204 = vadd.f32 %v2203, %v1909
  %v2205 = vadd.f32 %v2204, %v1913
  %v2206 = vadd.f32 %v2205, %v1919
  %v2207 = vadd.f32 %v2206, %v1923
  %v2208 = vadd.f32 %v2207, %v1929
  %v2209 = vadd.f32 %v2208, %v1933
  %v2210 = vadd.f32 %v2209, %v1939
  %v2211 = vadd.f32 %v2210, %v1943
  %v2212 = vadd.f32 %v2211, %v1949
  %v2213 = vadd.f32 %v2212, %v1953
  %v2214 = vadd.f32 %v2213, %v1959
  %v2215 = vadd.f32 %v2214, %v1963
  %v2216 = vadd.f32 %v2215, %v1969
  %v2217 = vadd.f32 %v2216, %v1973
  %v2218 = vadd.f32 %v2217, %v1979
  %v2219 = vadd.f32 %v2218, %v1983
  %v2220 = vadd.f32 %v2219, %v1989
  %v2221 = vadd.f32 %v2220, %v1993
  %v2222 = vadd.f32 %v2221, %v1999
  %v2223 = vadd.f32 %v2222, %v2003
  %v2224 = vadd.f32 %v2223, %v2009
  %v2225 = vadd.f32 %v2224, %v2013
  %v2226 = vadd.f32 %v2225, %v2019
  %v2227 = vadd.f32 %v2226, %v2023
  %v2228 = vrot.slane %v2227, 4
  %v2229 = vadd.f32 %v2227, %v2228
  %v2230 = vrot.slane %v2229, 2
  %v2231 = vadd.f32 %v2229, %v2230
  %v2232 = vrot.slane %v2231, 1
  %v2233 = vadd.f32 %v2231, %v2232
  %v2234 = vadd.f32 %v1711, %v1715
  %v2235 = vadd.f32 %v2234, %v1721
  %v2236 = vadd.f32 %v2235, %v1725
  %v2237 = vadd.f32 %v2236, %v1731
  %v2238 = vadd.f32 %v2237, %v1735
  %v2239 = vadd.f32 %v2238, %v1741
  %v2240 = vadd.f32 %v2239, %v1745
  %v2241 = vadd.f32 %v2240, %v1751
  %v2242 = vadd.f32 %v2241, %v1755
  %v2243 = vadd.f32 %v2242, %v1761
  %v2244 = vadd.f32 %v2243, %v1765
  %v2245 = vadd.f32 %v2244, %v1771
  %v2246 = vadd.f32 %v2245, %v1775
  %v2247 = vadd.f32 %v2246, %v1781
  %v2248 = vadd.f32 %v2247, %v1785
  %v2249 = vadd.f32 %v2248, %v1791
  %v2250 = vadd.f32 %v2249, %v1795
  %v2251 = vadd.f32 %v2250, %v1801
  %v2252 = vadd.f32 %v2251, %v1805
  %v2253 = vadd.f32 %v2252, %v1811
  %v2254 = vadd.f32 %v2253, %v1815
  %v2255 = vadd.f32 %v2254, %v1821
  %v2256 = vadd.f32 %v2255, %v1825
  %v2257 = vadd.f32 %v2256, %v1831
  %v2258 = vadd.f32 %v2257, %v1835
  %v2259 = vadd.f32 %v2258, %v1841
  %v2260 = vadd.f32 %v2259, %v1845
  %v2261 = vadd.f32 %v2260, %v1851
  %v2262 = vadd.f32 %v2261, %v1855
  %v2263 = vadd.f32 %v2262, %v1861
  %v2264 = vadd.f32 %v2263, %v1865
  %v2265 = vadd.f32 %v2264, %v1871
  %v2266 = vadd.f32 %v2265, %v1875
  %v2267 = vadd.f32 %v2266, %v1881
  %v2268 = vadd.f32 %v2267, %v1885
  %v2269 = vadd.f32 %v2268, %v1891
  %v2270 = vadd.f32 %v2269, %v1895
  %v2271 = vadd.f32 %v2270, %v1901
  %v2272 = vadd.f32 %v2271, %v1905
  %v2273 = vadd.f32 %v2272, %v1911
  %v2274 = vadd.f32 %v2273, %v1915
  %v2275 = vadd.f32 %v2274, %v1921
  %v2276 = vadd.f32 %v2275, %v1925
  %v2277 = vadd.f32 %v2276, %v1931
  %v2278 = vadd.f32 %v2277, %v1935
  %v2279 = vadd.f32 %v2278, %v1941
  %v2280 = vadd.f32 %v2279, %v1945
  %v2281 = vadd.f32 %v2280, %v1951
  %v2282 = vadd.f32 %v2281, %v1955
  %v2283 = vadd.f32 %v2282, %v1961
  %v2284 = vadd.f32 %v2283, %v1965
  %v2285 = vadd.f32 %v2284, %v1971
  %v2286 = vadd.f32 %v2285, %v1975
  %v2287 = vadd.f32 %v2286, %v1981
  %v2288 = vadd.f32 %v2287, %v1985
  %v2289 = vadd.f32 %v2288, %v1991
  %v2290 = vadd.f32 %v2289, %v1995
  %v2291 = vadd.f32 %v2290, %v2001
  %v2292 = vadd.f32 %v2291, %v2005
  %v2293 = vadd.f32 %v2292, %v2011
  %v2294 = vadd.f32 %v2293, %v2015
  %v2295 = vadd.f32 %v2294, %v2021
  %v2296 = vadd.f32 %v2295, %v2025
  %v2297 = vrot.slane %v2296, 4
  %v2298 = vadd.f32 %v2296, %v2297
  %v2299 = vrot.slane %v2298, 2
  %v2300 = vadd.f32 %v2298, %v2299
  %v2301 = vrot.slane %v2300, 1
  %v2302 = vadd.f32 %v2300, %v2301
  %v2307 = vcombine.low %v2095, %v2164
  %v2308 = vcombine.low %v2233, %v2302
  %v2310 = vunpack.c.l.s4 1966171168
  %v2311 = vunpack.c.0.s8 %v2310
  %v2312 = vlaneseq
  %v2313 = vshrl.u32 %v2312, 7
  %v2314 = vsub.s32 %v2311, %v2313
  %v2315 = vrot.slane %v2307, %v2314
  %v2317 = vunpack.c.l.s4 1966171168
  %v2318 = vunpack.c.0.s8 %v2317
  %v2319 = vlaneseq
  %v2320 = vshrl.u32 %v2319, 7
  %v2321 = vsub.s32 %v2318, %v2320
  %v2322 = vrot.slane %v2308, %v2321
  %v2323 = vcombine.low %v2315, %v2322
  %v2325 = vunpack.c.l.s4 1966171168
  %v2326 = vunpack.c.0.s8 %v2325
  %v2327 = vlaneseq
  %v2328 = vshrl.u32 %v2327, 7
  %v2329 = vsub.s32 %v2326, %v2328
  %v2330 = vrot.slane %v2323, %v2329
  %v2332 = vlaneseq
  %vm2333 = vcmp.ge.s32.totalorder %v2332, 0
  %vm2334 = vcmp.lt.s32.totalorder %v2332, 512
  %vm2335 = vmand %vm2333, %vm2334
  %2336 = vst.msk [vmem:[%s4] ss:$2 sm:$0xf] %vm2335, %v2330
  %v2337 = vmul.f32 %v1356, %v1356
  %v2338 = vmul.f32 %v1358, %v1358
  %v2339 = vmul.f32 %v1709, %v1709
  %v2340 = vmul.f32 %v1711, %v1711
  %v2341 = vmul.f32 %v1360, %v1360
  %v2342 = vmul.f32 %v1362, %v1362
  %v2343 = vmul.f32 %v1713, %v1713
  %v2344 = vmul.f32 %v1715, %v1715
  %v2345 = vmul.f32 %v1366, %v1366
  %v2346 = vmul.f32 %v1368, %v1368
  %v2347 = vmul.f32 %v1719, %v1719
  %v2348 = vmul.f32 %v1721, %v1721
  %v2349 = vmul.f32 %v1370, %v1370
  %v2350 = vmul.f32 %v1372, %v1372
  %v2351 = vmul.f32 %v1723, %v1723
  %v2352 = vmul.f32 %v1725, %v1725
  %v2353 = vmul.f32 %v1376, %v1376
  %v2354 = vmul.f32 %v1378, %v1378
  %v2355 = vmul.f32 %v1729, %v1729
  %v2356 = vmul.f32 %v1731, %v1731
  %v2357 = vmul.f32 %v1380, %v1380
  %v2358 = vmul.f32 %v1382, %v1382
  %v2359 = vmul.f32 %v1733, %v1733
  %v2360 = vmul.f32 %v1735, %v1735
  %v2361 = vmul.f32 %v1386, %v1386
  %v2362 = vmul.f32 %v1388, %v1388
  %v2363 = vmul.f32 %v1739, %v1739
  %v2364 = vmul.f32 %v1741, %v1741
  %v2365 = vmul.f32 %v1390, %v1390
  %v2366 = vmul.f32 %v1392, %v1392
  %v2367 = vmul.f32 %v1743, %v1743
  %v2368 = vmul.f32 %v1745, %v1745
  %v2369 = vmul.f32 %v1396, %v1396
  %v2370 = vmul.f32 %v1398, %v1398
  %v2371 = vmul.f32 %v1749, %v1749
  %v2372 = vmul.f32 %v1751, %v1751
  %v2373 = vmul.f32 %v1400, %v1400
  %v2374 = vmul.f32 %v1402, %v1402
  %v2375 = vmul.f32 %v1753, %v1753
  %v2376 = vmul.f32 %v1755, %v1755
  %v2377 = vmul.f32 %v1406, %v1406
  %v2378 = vmul.f32 %v1408, %v1408
  %v2379 = vmul.f32 %v1759, %v1759
  %v2380 = vmul.f32 %v1761, %v1761
  %v2381 = vmul.f32 %v1410, %v1410
  %v2382 = vmul.f32 %v1412, %v1412
  %v2383 = vmul.f32 %v1763, %v1763
  %v2384 = vmul.f32 %v1765, %v1765
  %v2385 = vmul.f32 %v1416, %v1416
  %v2386 = vmul.f32 %v1418, %v1418
  %v2387 = vmul.f32 %v1769, %v1769
  %v2388 = vmul.f32 %v1771, %v1771
  %v2389 = vmul.f32 %v1420, %v1420
  %v2390 = vmul.f32 %v1422, %v1422
  %v2391 = vmul.f32 %v1773, %v1773
  %v2392 = vmul.f32 %v1775, %v1775
  %v2393 = vmul.f32 %v1426, %v1426
  %v2394 = vmul.f32 %v1428, %v1428
  %v2395 = vmul.f32 %v1779, %v1779
  %v2396 = vmul.f32 %v1781, %v1781
  %v2397 = vmul.f32 %v1430, %v1430
  %v2398 = vmul.f32 %v1432, %v1432
  %v2399 = vmul.f32 %v1783, %v1783
  %v2400 = vmul.f32 %v1785, %v1785
  %v2401 = vmul.f32 %v1436, %v1436
  %v2402 = vmul.f32 %v1438, %v1438
  %v2403 = vmul.f32 %v1789, %v1789
  %v2404 = vmul.f32 %v1791, %v1791
  %v2405 = vmul.f32 %v1440, %v1440
  %v2406 = vmul.f32 %v1442, %v1442
  %v2407 = vmul.f32 %v1793, %v1793
  %v2408 = vmul.f32 %v1795, %v1795
  %v2409 = vmul.f32 %v1446, %v1446
  %v2410 = vmul.f32 %v1448, %v1448
  %v2411 = vmul.f32 %v1799, %v1799
  %v2412 = vmul.f32 %v1801, %v1801
  %v2413 = vmul.f32 %v1450, %v1450
  %v2414 = vmul.f32 %v1452, %v1452
  %v2415 = vmul.f32 %v1803, %v1803
  %v2416 = vmul.f32 %v1805, %v1805
  %v2417 = vmul.f32 %v1456, %v1456
  %v2418 = vmul.f32 %v1458, %v1458
  %v2419 = vmul.f32 %v1809, %v1809
  %v2420 = vmul.f32 %v1811, %v1811
  %v2421 = vmul.f32 %v1460, %v1460
  %v2422 = vmul.f32 %v1462, %v1462
  %v2423 = vmul.f32 %v1813, %v1813
  %v2424 = vmul.f32 %v1815, %v1815
  %v2425 = vmul.f32 %v1466, %v1466
  %v2426 = vmul.f32 %v1468, %v1468
  %v2427 = vmul.f32 %v1819, %v1819
  %v2428 = vmul.f32 %v1821, %v1821
  %v2429 = vmul.f32 %v1470, %v1470
  %v2430 = vmul.f32 %v1472, %v1472
  %v2431 = vmul.f32 %v1823, %v1823
  %v2432 = vmul.f32 %v1825, %v1825
  %v2433 = vmul.f32 %v1476, %v1476
  %v2434 = vmul.f32 %v1478, %v1478
  %v2435 = vmul.f32 %v1829, %v1829
  %v2436 = vmul.f32 %v1831, %v1831
  %v2437 = vmul.f32 %v1480, %v1480
  %v2438 = vmul.f32 %v1482, %v1482
  %v2439 = vmul.f32 %v1833, %v1833
  %v2440 = vmul.f32 %v1835, %v1835
  %v2441 = vmul.f32 %v1486, %v1486
  %v2442 = vmul.f32 %v1488, %v1488
  %v2443 = vmul.f32 %v1839, %v1839
  %v2444 = vmul.f32 %v1841, %v1841
  %v2445 = vmul.f32 %v1490, %v1490
  %v2446 = vmul.f32 %v1492, %v1492
  %v2447 = vmul.f32 %v1843, %v1843
  %v2448 = vmul.f32 %v1845, %v1845
  %v2449 = vmul.f32 %v1496, %v1496
  %v2450 = vmul.f32 %v1498, %v1498
  %v2451 = vmul.f32 %v1849, %v1849
  %v2452 = vmul.f32 %v1851, %v1851
  %v2453 = vmul.f32 %v1500, %v1500
  %v2454 = vmul.f32 %v1502, %v1502
  %v2455 = vmul.f32 %v1853, %v1853
  %v2456 = vmul.f32 %v1855, %v1855
  %v2457 = vmul.f32 %v1506, %v1506
  %v2458 = vmul.f32 %v1508, %v1508
  %v2459 = vmul.f32 %v1859, %v1859
  %v2460 = vmul.f32 %v1861, %v1861
  %v2461 = vmul.f32 %v1510, %v1510
  %v2462 = vmul.f32 %v1512, %v1512
  %v2463 = vmul.f32 %v1863, %v1863
  %v2464 = vmul.f32 %v1865, %v1865
  %v2465 = vmul.f32 %v1516, %v1516
  %v2466 = vmul.f32 %v1518, %v1518
  %v2467 = vmul.f32 %v1869, %v1869
  %v2468 = vmul.f32 %v1871, %v1871
  %v2469 = vmul.f32 %v1520, %v1520
  %v2470 = vmul.f32 %v1522, %v1522
  %v2471 = vmul.f32 %v1873, %v1873
  %v2472 = vmul.f32 %v1875, %v1875
  %v2473 = vmul.f32 %v1526, %v1526
  %v2474 = vmul.f32 %v1528, %v1528
  %v2475 = vmul.f32 %v1879, %v1879
  %v2476 = vmul.f32 %v1881, %v1881
  %v2477 = vmul.f32 %v1530, %v1530
  %v2478 = vmul.f32 %v1532, %v1532
  %v2479 = vmul.f32 %v1883, %v1883
  %v2480 = vmul.f32 %v1885, %v1885
  %v2481 = vmul.f32 %v1536, %v1536
  %v2482 = vmul.f32 %v1538, %v1538
  %v2483 = vmul.f32 %v1889, %v1889
  %v2484 = vmul.f32 %v1891, %v1891
  %v2485 = vmul.f32 %v1540, %v1540
  %v2486 = vmul.f32 %v1542, %v1542
  %v2487 = vmul.f32 %v1893, %v1893
  %v2488 = vmul.f32 %v1895, %v1895
  %v2489 = vmul.f32 %v1546, %v1546
  %v2490 = vmul.f32 %v1548, %v1548
  %v2491 = vmul.f32 %v1899, %v1899
  %v2492 = vmul.f32 %v1901, %v1901
  %v2493 = vmul.f32 %v1550, %v1550
  %v2494 = vmul.f32 %v1552, %v1552
  %v2495 = vmul.f32 %v1903, %v1903
  %v2496 = vmul.f32 %v1905, %v1905
  %v2497 = vmul.f32 %v1556, %v1556
  %v2498 = vmul.f32 %v1558, %v1558
  %v2499 = vmul.f32 %v1909, %v1909
  %v2500 = vmul.f32 %v1911, %v1911
  %v2501 = vmul.f32 %v1560, %v1560
  %v2502 = vmul.f32 %v1562, %v1562
  %v2503 = vmul.f32 %v1913, %v1913
  %v2504 = vmul.f32 %v1915, %v1915
  %v2505 = vmul.f32 %v1566, %v1566
  %v2506 = vmul.f32 %v1568, %v1568
  %v2507 = vmul.f32 %v1919, %v1919
  %v2508 = vmul.f32 %v1921, %v1921
  %v2509 = vmul.f32 %v1570, %v1570
  %v2510 = vmul.f32 %v1572, %v1572
  %v2511 = vmul.f32 %v1923, %v1923
  %v2512 = vmul.f32 %v1925, %v1925
  %v2513 = vmul.f32 %v1576, %v1576
  %v2514 = vmul.f32 %v1578, %v1578
  %v2515 = vmul.f32 %v1929, %v1929
  %v2516 = vmul.f32 %v1931, %v1931
  %v2517 = vmul.f32 %v1580, %v1580
  %v2518 = vmul.f32 %v1582, %v1582
  %v2519 = vmul.f32 %v1933, %v1933
  %v2520 = vmul.f32 %v1935, %v1935
  %v2521 = vmul.f32 %v1586, %v1586
  %v2522 = vmul.f32 %v1588, %v1588
  %v2523 = vmul.f32 %v1939, %v1939
  %v2524 = vmul.f32 %v1941, %v1941
  %v2525 = vmul.f32 %v1590, %v1590
  %v2526 = vmul.f32 %v1592, %v1592
  %v2527 = vmul.f32 %v1943, %v1943
  %v2528 = vmul.f32 %v1945, %v1945
  %v2529 = vmul.f32 %v1596, %v1596
  %v2530 = vmul.f32 %v1598, %v1598
  %v2531 = vmul.f32 %v1949, %v1949
  %v2532 = vmul.f32 %v1951, %v1951
  %v2533 = vmul.f32 %v1600, %v1600
  %v2534 = vmul.f32 %v1602, %v1602
  %v2535 = vmul.f32 %v1953, %v1953
  %v2536 = vmul.f32 %v1955, %v1955
  %v2537 = vmul.f32 %v1606, %v1606
  %v2538 = vmul.f32 %v1608, %v1608
  %v2539 = vmul.f32 %v1959, %v1959
  %v2540 = vmul.f32 %v1961, %v1961
  %v2541 = vmul.f32 %v1610, %v1610
  %v2542 = vmul.f32 %v1612, %v1612
  %v2543 = vmul.f32 %v1963, %v1963
  %v2544 = vmul.f32 %v1965, %v1965
  %v2545 = vmul.f32 %v1616, %v1616
  %v2546 = vmul.f32 %v1618, %v1618
  %v2547 = vmul.f32 %v1969, %v1969
  %v2548 = vmul.f32 %v1971, %v1971
  %v2549 = vmul.f32 %v1620, %v1620
  %v2550 = vmul.f32 %v1622, %v1622
  %v2551 = vmul.f32 %v1973, %v1973
  %v2552 = vmul.f32 %v1975, %v1975
  %v2553 = vmul.f32 %v1626, %v1626
  %v2554 = vmul.f32 %v1628, %v1628
  %v2555 = vmul.f32 %v1979, %v1979
  %v2556 = vmul.f32 %v1981, %v1981
  %v2557 = vmul.f32 %v1630, %v1630
  %v2558 = vmul.f32 %v1632, %v1632
  %v2559 = vmul.f32 %v1983, %v1983
  %v2560 = vmul.f32 %v1985, %v1985
  %v2561 = vmul.f32 %v1636, %v1636
  %v2562 = vmul.f32 %v1638, %v1638
  %v2563 = vmul.f32 %v1989, %v1989
  %v2564 = vmul.f32 %v1991, %v1991
  %v2565 = vmul.f32 %v1640, %v1640
  %v2566 = vmul.f32 %v1642, %v1642
  %v2567 = vmul.f32 %v1993, %v1993
  %v2568 = vmul.f32 %v1995, %v1995
  %v2569 = vmul.f32 %v1646, %v1646
  %v2570 = vmul.f32 %v1648, %v1648
  %v2571 = vmul.f32 %v1999, %v1999
  %v2572 = vmul.f32 %v2001, %v2001
  %v2573 = vmul.f32 %v1650, %v1650
  %v2574 = vmul.f32 %v1652, %v1652
  %v2575 = vmul.f32 %v2003, %v2003
  %v2576 = vmul.f32 %v2005, %v2005
  %v2577 = vmul.f32 %v1656, %v1656
  %v2578 = vmul.f32 %v1658, %v1658
  %v2579 = vmul.f32 %v2009, %v2009
  %v2580 = vmul.f32 %v2011, %v2011
  %v2581 = vmul.f32 %v1660, %v1660
  %v2582 = vmul.f32 %v1662, %v1662
  %v2583 = vmul.f32 %v2013, %v2013
  %v2584 = vmul.f32 %v2015, %v2015
  %v2585 = vmul.f32 %v1666, %v1666
  %v2586 = vmul.f32 %v1668, %v1668
  %v2587 = vmul.f32 %v2019, %v2019
  %v2588 = vmul.f32 %v2021, %v2021
  %v2589 = vmul.f32 %v1670, %v1670
  %v2590 = vmul.f32 %v1672, %v1672
  %v2591 = vmul.f32 %v2023, %v2023
  %v2592 = vmul.f32 %v2025, %v2025
  %v2593 = vadd.f32 %v2337, %v2341
  %v2594 = vadd.f32 %v2593, %v2345
  %v2595 = vadd.f32 %v2594, %v2349
  %v2596 = vadd.f32 %v2595, %v2353
  %v2597 = vadd.f32 %v2596, %v2357
  %v2598 = vadd.f32 %v2597, %v2361
  %v2599 = vadd.f32 %v2598, %v2365
  %v2600 = vadd.f32 %v2599, %v2369
  %v2601 = vadd.f32 %v2600, %v2373
  %v2602 = vadd.f32 %v2601, %v2377
  %v2603 = vadd.f32 %v2602, %v2381
  %v2604 = vadd.f32 %v2603, %v2385
  %v2605 = vadd.f32 %v2604, %v2389
  %v2606 = vadd.f32 %v2605, %v2393
  %v2607 = vadd.f32 %v2606, %v2397
  %v2608 = vadd.f32 %v2607, %v2401
  %v2609 = vadd.f32 %v2608, %v2405
  %v2610 = vadd.f32 %v2609, %v2409
  %v2611 = vadd.f32 %v2610, %v2413
  %v2612 = vadd.f32 %v2611, %v2417
  %v2613 = vadd.f32 %v2612, %v2421
  %v2614 = vadd.f32 %v2613, %v2425
  %v2615 = vadd.f32 %v2614, %v2429
  %v2616 = vadd.f32 %v2615, %v2433
  %v2617 = vadd.f32 %v2616, %v2437
  %v2618 = vadd.f32 %v2617, %v2441
  %v2619 = vadd.f32 %v2618, %v2445
  %v2620 = vadd.f32 %v2619, %v2449
  %v2621 = vadd.f32 %v2620, %v2453
  %v2622 = vadd.f32 %v2621, %v2457
  %v2623 = vadd.f32 %v2622, %v2461
  %v2624 = vadd.f32 %v2623, %v2465
  %v2625 = vadd.f32 %v2624, %v2469
  %v2626 = vadd.f32 %v2625, %v2473
  %v2627 = vadd.f32 %v2626, %v2477
  %v2628 = vadd.f32 %v2627, %v2481
  %v2629 = vadd.f32 %v2628, %v2485
  %v2630 = vadd.f32 %v2629, %v2489
  %v2631 = vadd.f32 %v2630, %v2493
  %v2632 = vadd.f32 %v2631, %v2497
  %v2633 = vadd.f32 %v2632, %v2501
  %v2634 = vadd.f32 %v2633, %v2505
  %v2635 = vadd.f32 %v2634, %v2509
  %v2636 = vadd.f32 %v2635, %v2513
  %v2637 = vadd.f32 %v2636, %v2517
  %v2638 = vadd.f32 %v2637, %v2521
  %v2639 = vadd.f32 %v2638, %v2525
  %v2640 = vadd.f32 %v2639, %v2529
  %v2641 = vadd.f32 %v2640, %v2533
  %v2642 = vadd.f32 %v2641, %v2537
  %v2643 = vadd.f32 %v2642, %v2541
  %v2644 = vadd.f32 %v2643, %v2545
  %v2645 = vadd.f32 %v2644, %v2549
  %v2646 = vadd.f32 %v2645, %v2553
  %v2647 = vadd.f32 %v2646, %v2557
  %v2648 = vadd.f32 %v2647, %v2561
  %v2649 = vadd.f32 %v2648, %v2565
  %v2650 = vadd.f32 %v2649, %v2569
  %v2651 = vadd.f32 %v2650, %v2573
  %v2652 = vadd.f32 %v2651, %v2577
  %v2653 = vadd.f32 %v2652, %v2581
  %v2654 = vadd.f32 %v2653, %v2585
  %v2655 = vadd.f32 %v2654, %v2589
  %v2656 = vrot.slane %v2655, 4
  %v2657 = vadd.f32 %v2655, %v2656
  %v2658 = vrot.slane %v2657, 2
  %v2659 = vadd.f32 %v2657, %v2658
  %v2660 = vrot.slane %v2659, 1
  %v2661 = vadd.f32 %v2659, %v2660
  %v2662 = vadd.f32 %v2338, %v2342
  %v2663 = vadd.f32 %v2662, %v2346
  %v2664 = vadd.f32 %v2663, %v2350
  %v2665 = vadd.f32 %v2664, %v2354
  %v2666 = vadd.f32 %v2665, %v2358
  %v2667 = vadd.f32 %v2666, %v2362
  %v2668 = vadd.f32 %v2667, %v2366
  %v2669 = vadd.f32 %v2668, %v2370
  %v2670 = vadd.f32 %v2669, %v2374
  %v2671 = vadd.f32 %v2670, %v2378
  %v2672 = vadd.f32 %v2671, %v2382
  %v2673 = vadd.f32 %v2672, %v2386
  %v2674 = vadd.f32 %v2673, %v2390
  %v2675 = vadd.f32 %v2674, %v2394
  %v2676 = vadd.f32 %v2675, %v2398
  %v2677 = vadd.f32 %v2676, %v2402
  %v2678 = vadd.f32 %v2677, %v2406
  %v2679 = vadd.f32 %v2678, %v2410
  %v2680 = vadd.f32 %v2679, %v2414
  %v2681 = vadd.f32 %v2680, %v2418
  %v2682 = vadd.f32 %v2681, %v2422
  %v2683 = vadd.f32 %v2682, %v2426
  %v2684 = vadd.f32 %v2683, %v2430
  %v2685 = vadd.f32 %v2684, %v2434
  %v2686 = vadd.f32 %v2685, %v2438
  %v2687 = vadd.f32 %v2686, %v2442
  %v2688 = vadd.f32 %v2687, %v2446
  %v2689 = vadd.f32 %v2688, %v2450
  %v2690 = vadd.f32 %v2689, %v2454
  %v2691 = vadd.f32 %v2690, %v2458
  %v2692 = vadd.f32 %v2691, %v2462
  %v2693 = vadd.f32 %v2692, %v2466
  %v2694 = vadd.f32 %v2693, %v2470
  %v2695 = vadd.f32 %v2694, %v2474
  %v2696 = vadd.f32 %v2695, %v2478
  %v2697 = vadd.f32 %v2696, %v2482
  %v2698 = vadd.f32 %v2697, %v2486
  %v2699 = vadd.f32 %v2698, %v2490
  %v2700 = vadd.f32 %v2699, %v2494
  %v2701 = vadd.f32 %v2700, %v2498
  %v2702 = vadd.f32 %v2701, %v2502
  %v2703 = vadd.f32 %v2702, %v2506
  %v2704 = vadd.f32 %v2703, %v2510
  %v2705 = vadd.f32 %v2704, %v2514
  %v2706 = vadd.f32 %v2705, %v2518
  %v2707 = vadd.f32 %v2706, %v2522
  %v2708 = vadd.f32 %v2707, %v2526
  %v2709 = vadd.f32 %v2708, %v2530
  %v2710 = vadd.f32 %v2709, %v2534
  %v2711 = vadd.f32 %v2710, %v2538
  %v2712 = vadd.f32 %v2711, %v2542
  %v2713 = vadd.f32 %v2712, %v2546
  %v2714 = vadd.f32 %v2713, %v2550
  %v2715 = vadd.f32 %v2714, %v2554
  %v2716 = vadd.f32 %v2715, %v2558
  %v2717 = vadd.f32 %v2716, %v2562
  %v2718 = vadd.f32 %v2717, %v2566
  %v2719 = vadd.f32 %v2718, %v2570
  %v2720 = vadd.f32 %v2719, %v2574
  %v2721 = vadd.f32 %v2720, %v2578
  %v2722 = vadd.f32 %v2721, %v2582
  %v2723 = vadd.f32 %v2722, %v2586
  %v2724 = vadd.f32 %v2723, %v2590
  %v2725 = vrot.slane %v2724, 4
  %v2726 = vadd.f32 %v2724, %v2725
  %v2727 = vrot.slane %v2726, 2
  %v2728 = vadd.f32 %v2726, %v2727
  %v2729 = vrot.slane %v2728, 1
  %v2730 = vadd.f32 %v2728, %v2729
  %v2731 = vadd.f32 %v2339, %v2343
  %v2732 = vadd.f32 %v2731, %v2347
  %v2733 = vadd.f32 %v2732, %v2351
  %v2734 = vadd.f32 %v2733, %v2355
  %v2735 = vadd.f32 %v2734, %v2359
  %v2736 = vadd.f32 %v2735, %v2363
  %v2737 = vadd.f32 %v2736, %v2367
  %v2738 = vadd.f32 %v2737, %v2371
  %v2739 = vadd.f32 %v2738, %v2375
  %v2740 = vadd.f32 %v2739, %v2379
  %v2741 = vadd.f32 %v2740, %v2383
  %v2742 = vadd.f32 %v2741, %v2387
  %v2743 = vadd.f32 %v2742, %v2391
  %v2744 = vadd.f32 %v2743, %v2395
  %v2745 = vadd.f32 %v2744, %v2399
  %v2746 = vadd.f32 %v2745, %v2403
  %v2747 = vadd.f32 %v2746, %v2407
  %v2748 = vadd.f32 %v2747, %v2411
  %v2749 = vadd.f32 %v2748, %v2415
  %v2750 = vadd.f32 %v2749, %v2419
  %v2751 = vadd.f32 %v2750, %v2423
  %v2752 = vadd.f32 %v2751, %v2427
  %v2753 = vadd.f32 %v2752, %v2431
  %v2754 = vadd.f32 %v2753, %v2435
  %v2755 = vadd.f32 %v2754, %v2439
  %v2756 = vadd.f32 %v2755, %v2443
  %v2757 = vadd.f32 %v2756, %v2447
  %v2758 = vadd.f32 %v2757, %v2451
  %v2759 = vadd.f32 %v2758, %v2455
  %v2760 = vadd.f32 %v2759, %v2459
  %v2761 = vadd.f32 %v2760, %v2463
  %v2762 = vadd.f32 %v2761, %v2467
  %v2763 = vadd.f32 %v2762, %v2471
  %v2764 = vadd.f32 %v2763, %v2475
  %v2765 = vadd.f32 %v2764, %v2479
  %v2766 = vadd.f32 %v2765, %v2483
  %v2767 = vadd.f32 %v2766, %v2487
  %v2768 = vadd.f32 %v2767, %v2491
  %v2769 = vadd.f32 %v2768, %v2495
  %v2770 = vadd.f32 %v2769, %v2499
  %v2771 = vadd.f32 %v2770, %v2503
  %v2772 = vadd.f32 %v2771, %v2507
  %v2773 = vadd.f32 %v2772, %v2511
  %v2774 = vadd.f32 %v2773, %v2515
  %v2775 = vadd.f32 %v2774, %v2519
  %v2776 = vadd.f32 %v2775, %v2523
  %v2777 = vadd.f32 %v2776, %v2527
  %v2778 = vadd.f32 %v2777, %v2531
  %v2779 = vadd.f32 %v2778, %v2535
  %v2780 = vadd.f32 %v2779, %v2539
  %v2781 = vadd.f32 %v2780, %v2543
  %v2782 = vadd.f32 %v2781, %v2547
  %v2783 = vadd.f32 %v2782, %v2551
  %v2784 = vadd.f32 %v2783, %v2555
  %v2785 = vadd.f32 %v2784, %v2559
  %v2786 = vadd.f32 %v2785, %v2563
  %v2787 = vadd.f32 %v2786, %v2567
  %v2788 = vadd.f32 %v2787, %v2571
  %v2789 = vadd.f32 %v2788, %v2575
  %v2790 = vadd.f32 %v2789, %v2579
  %v2791 = vadd.f32 %v2790, %v2583
  %v2792 = vadd.f32 %v2791, %v2587
  %v2793 = vadd.f32 %v2792, %v2591
  %v2794 = vrot.slane %v2793, 4
  %v2795 = vadd.f32 %v2793, %v2794
  %v2796 = vrot.slane %v2795, 2
  %v2797 = vadd.f32 %v2795, %v2796
  %v2798 = vrot.slane %v2797, 1
  %v2799 = vadd.f32 %v2797, %v2798
  %v2800 = vadd.f32 %v2340, %v2344
  %v2801 = vadd.f32 %v2800, %v2348
  %v2802 = vadd.f32 %v2801, %v2352
  %v2803 = vadd.f32 %v2802, %v2356
  %v2804 = vadd.f32 %v2803, %v2360
  %v2805 = vadd.f32 %v2804, %v2364
  %v2806 = vadd.f32 %v2805, %v2368
  %v2807 = vadd.f32 %v2806, %v2372
  %v2808 = vadd.f32 %v2807, %v2376
  %v2809 = vadd.f32 %v2808, %v2380
  %v2810 = vadd.f32 %v2809, %v2384
  %v2811 = vadd.f32 %v2810, %v2388
  %v2812 = vadd.f32 %v2811, %v2392
  %v2813 = vadd.f32 %v2812, %v2396
  %v2814 = vadd.f32 %v2813, %v2400
  %v2815 = vadd.f32 %v2814, %v2404
  %v2816 = vadd.f32 %v2815, %v2408
  %v2817 = vadd.f32 %v2816, %v2412
  %v2818 = vadd.f32 %v2817, %v2416
  %v2819 = vadd.f32 %v2818, %v2420
  %v2820 = vadd.f32 %v2819, %v2424
  %v2821 = vadd.f32 %v2820, %v2428
  %v2822 = vadd.f32 %v2821, %v2432
  %v2823 = vadd.f32 %v2822, %v2436
  %v2824 = vadd.f32 %v2823, %v2440
  %v2825 = vadd.f32 %v2824, %v2444
  %v2826 = vadd.f32 %v2825, %v2448
  %v2827 = vadd.f32 %v2826, %v2452
  %v2828 = vadd.f32 %v2827, %v2456
  %v2829 = vadd.f32 %v2828, %v2460
  %v2830 = vadd.f32 %v2829, %v2464
  %v2831 = vadd.f32 %v2830, %v2468
  %v2832 = vadd.f32 %v2831, %v2472
  %v2833 = vadd.f32 %v2832, %v2476
  %v2834 = vadd.f32 %v2833, %v2480
  %v2835 = vadd.f32 %v2834, %v2484
  %v2836 = vadd.f32 %v2835, %v2488
  %v2837 = vadd.f32 %v2836, %v2492
  %v2838 = vadd.f32 %v2837, %v2496
  %v2839 = vadd.f32 %v2838, %v2500
  %v2840 = vadd.f32 %v2839, %v2504
  %v2841 = vadd.f32 %v2840, %v2508
  %v2842 = vadd.f32 %v2841, %v2512
  %v2843 = vadd.f32 %v2842, %v2516
  %v2844 = vadd.f32 %v2843, %v2520
  %v2845 = vadd.f32 %v2844, %v2524
  %v2846 = vadd.f32 %v2845, %v2528
  %v2847 = vadd.f32 %v2846, %v2532
  %v2848 = vadd.f32 %v2847, %v2536
  %v2849 = vadd.f32 %v2848, %v2540
  %v2850 = vadd.f32 %v2849, %v2544
  %v2851 = vadd.f32 %v2850, %v2548
  %v2852 = vadd.f32 %v2851, %v2552
  %v2853 = vadd.f32 %v2852, %v2556
  %v2854 = vadd.f32 %v2853, %v2560
  %v2855 = vadd.f32 %v2854, %v2564
  %v2856 = vadd.f32 %v2855, %v2568
  %v2857 = vadd.f32 %v2856, %v2572
  %v2858 = vadd.f32 %v2857, %v2576
  %v2859 = vadd.f32 %v2858, %v2580
  %v2860 = vadd.f32 %v2859, %v2584
  %v2861 = vadd.f32 %v2860, %v2588
  %v2862 = vadd.f32 %v2861, %v2592
  %v2863 = vrot.slane %v2862, 4
  %v2864 = vadd.f32 %v2862, %v2863
  %v2865 = vrot.slane %v2864, 2
  %v2866 = vadd.f32 %v2864, %v2865
  %v2867 = vrot.slane %v2866, 1
  %v2868 = vadd.f32 %v2866, %v2867
  %v2873 = vcombine.low %v2661, %v2730
  %v2874 = vcombine.low %v2799, %v2868
  %v2876 = vunpack.c.l.s4 1966171168
  %v2877 = vunpack.c.0.s8 %v2876
  %v2878 = vlaneseq
  %v2879 = vshrl.u32 %v2878, 7
  %v2880 = vsub.s32 %v2877, %v2879
  %v2881 = vrot.slane %v2873, %v2880
  %v2883 = vunpack.c.l.s4 1966171168
  %v2884 = vunpack.c.0.s8 %v2883
  %v2885 = vlaneseq
  %v2886 = vshrl.u32 %v2885, 7
  %v2887 = vsub.s32 %v2884, %v2886
  %v2888 = vrot.slane %v2874, %v2887
  %v2889 = vcombine.low %v2881, %v2888
  %v2891 = vunpack.c.l.s4 1966171168
  %v2892 = vunpack.c.0.s8 %v2891
  %v2893 = vlaneseq
  %v2894 = vshrl.u32 %v2893, 7
  %v2895 = vsub.s32 %v2892, %v2894
  %v2896 = vrot.slane %v2889, %v2895
  %s2898 = scalar_lea.vmem %s4, 1
  %2899 = vst.msk [vmem:[%s2898] ss:$2 sm:$0xf] %vm2335, %v2896
  // Predicated region
  $region18: #{nlayer_discriminator_forward.6} parent=0 // pred_check
    _
  $region19: #{nlayer_discriminator_forward.6} parent=0 // pred_check_branch
    %2901 = sbr.rel (0) target = $region21
  $region20: #{nlayer_discriminator_forward.6} parent=0 // pred_region
    _
  $region21: #{nlayer_discriminator_forward.6} parent=0 // pred_fallthru
    _
  // Predicated region
  $region22: #{nlayer_discriminator_forward.6} parent=0 // pred_check
    _
  $region23: #{nlayer_discriminator_forward.6} parent=0 // pred_check_branch
    %2903 = sbr.rel (0) target = $region25
  $region24: #{nlayer_discriminator_forward.6} parent=0 // pred_region
    _
  $region25: #{nlayer_discriminator_forward.6} parent=0 // pred_fallthru
    _

// kernel: squeeze.15
$region0: #{squeeze.15}
  %s0 = inlined_call_operand.vmem [shape: f32[512], index: 0, kind: input, shape index: {}]
  %s1 = inlined_call_operand.hbm [shape: f32[2,1,4,8,8], index: 1, kind: output, shape index: {}]
  $region1: #{squeeze.15} parent=0
    #allocation0 [shape = 'u8[32768]{0}', space=vmem, size = 0x8000, scoped, tag = 'operand span for operand 1']
    #allocation1 [shape = 's32[1]{0}', space=sflag, size = 0x4, scoped, tag = 'scoped memory for squeeze.15']
    #allocation2 [shape = 'u8[4096]{0}', space=vmem, size = 0x1000, scoped, tag = 'scoped mem for input reshape']
    %2 = vsyncpa [#allocation1], 0
    %s4 = sshllo.u32 0, 4
    %v5 = vld [vmem:[%s0] sm:%s4]
    %6 = vst [vmem:[#allocation2] sm:%s4] %v5
    %v7 = vld [vmem:[#allocation2] sm:$0xf]
    %vm8 = vcmask 64512
    %9 = vst.msk [vmem:[#allocation0] ss:$16 sm:$0x3] %vm8, %v7
    %10 = vst.msk [vmem:[#allocation0] ss:$16 sm:$0xc] %vm8, %v7
    %v11 = vld [vmem:[#allocation2] sm:$0xf]
    %12 = vrot.lane.b32.xlu0 %v11, 120
    %v13 = vpop.permute.xlu0 %12
    %vm14 = vcmask 64512
    %s15 = scalar_lea.vmem [#allocation0], 1
    %16 = vst.msk [vmem:[%s15] ss:$16 sm:$0x3] %vm14, %v13
    %s17 = scalar_lea.vmem [#allocation0], 1
    %18 = vst.msk [vmem:[%s17] ss:$16 sm:$0xc] %vm14, %v13
    %v19 = vld [vmem:[#allocation2] sm:$0xf]
    %20 = vrot.lane.b32.xlu0 %v19, 112
    %v21 = vpop.permute.xlu0 %20
    %vm22 = vcmask 64512
    %s23 = scalar_lea.vmem [#allocation0], 2
    %24 = vst.msk [vmem:[%s23] ss:$16 sm:$0x3] %vm22, %v21
    %s25 = scalar_lea.vmem [#allocation0], 2
    %26 = vst.msk [vmem:[%s25] ss:$16 sm:$0xc] %vm22, %v21
    %v27 = vld [vmem:[#allocation2] sm:$0xf]
    %28 = vrot.lane.b32.xlu0 %v27, 104
    %v29 = vpop.permute.xlu0 %28
    %vm30 = vcmask 64512
    %s31 = scalar_lea.vmem [#allocation0], 3
    %32 = vst.msk [vmem:[%s31] ss:$16 sm:$0x3] %vm30, %v29
    %s33 = scalar_lea.vmem [#allocation0], 3
    %34 = vst.msk [vmem:[%s33] ss:$16 sm:$0xc] %vm30, %v29
    %v35 = vld [vmem:[#allocation2] sm:$0xf]
    %36 = vrot.lane.b32.xlu0 %v35, 96
    %v37 = vpop.permute.xlu0 %36
    %vm38 = vcmask 64512
    %s39 = scalar_lea.vmem [#allocation0], 4
    %40 = vst.msk [vmem:[%s39] ss:$16 sm:$0x3] %vm38, %v37
    %s41 = scalar_lea.vmem [#allocation0], 4
    %42 = vst.msk [vmem:[%s41] ss:$16 sm:$0xc] %vm38, %v37
    %v43 = vld [vmem:[#allocation2] sm:$0xf]
    %44 = vrot.lane.b32.xlu0 %v43, 88
    %v45 = vpop.permute.xlu0 %44
    %vm46 = vcmask 64512
    %s47 = scalar_lea.vmem [#allocation0], 5
    %48 = vst.msk [vmem:[%s47] ss:$16 sm:$0x3] %vm46, %v45
    %s49 = scalar_lea.vmem [#allocation0], 5
    %50 = vst.msk [vmem:[%s49] ss:$16 sm:$0xc] %vm46, %v45
    %v51 = vld [vmem:[#allocation2] sm:$0xf]
    %52 = vrot.lane.b32.xlu0 %v51, 80
    %v53 = vpop.permute.xlu0 %52
    %vm54 = vcmask 64512
    %s55 = scalar_lea.vmem [#allocation0], 6
    %56 = vst.msk [vmem:[%s55] ss:$16 sm:$0x3] %vm54, %v53
    %s57 = scalar_lea.vmem [#allocation0], 6
    %58 = vst.msk [vmem:[%s57] ss:$16 sm:$0xc] %vm54, %v53
    %v59 = vld [vmem:[#allocation2] sm:$0xf]
    %60 = vrot.lane.b32.xlu0 %v59, 72
    %v61 = vpop.permute.xlu0 %60
    %vm62 = vcmask 64512
    %s63 = scalar_lea.vmem [#allocation0], 7
    %64 = vst.msk [vmem:[%s63] ss:$16 sm:$0x3] %vm62, %v61
    %s65 = scalar_lea.vmem [#allocation0], 7
    %66 = vst.msk [vmem:[%s65] ss:$16 sm:$0xc] %vm62, %v61
    %v67 = vld [vmem:[#allocation2] sm:$0xf]
    %68 = vrot.lane.b32.xlu0 %v67, 64
    %v69 = vpop.permute.xlu0 %68
    %vm70 = vcmask 64512
    %s71 = scalar_lea.vmem [#allocation0], 8
    %72 = vst.msk [vmem:[%s71] ss:$16 sm:$0x3] %vm70, %v69
    %s73 = scalar_lea.vmem [#allocation0], 8
    %74 = vst.msk [vmem:[%s73] ss:$16 sm:$0xc] %vm70, %v69
    %v75 = vld [vmem:[#allocation2] sm:$0xf]
    %76 = vrot.lane.b32.xlu0 %v75, 56
    %v77 = vpop.permute.xlu0 %76
    %vm78 = vcmask 64512
    %s79 = scalar_lea.vmem [#allocation0], 9
    %80 = vst.msk [vmem:[%s79] ss:$16 sm:$0x3] %vm78, %v77
    %s81 = scalar_lea.vmem [#allocation0], 9
    %82 = vst.msk [vmem:[%s81] ss:$16 sm:$0xc] %vm78, %v77
    %v83 = vld [vmem:[#allocation2] sm:$0xf]
    %84 = vrot.lane.b32.xlu0 %v83, 48
    %v85 = vpop.permute.xlu0 %84
    %vm86 = vcmask 64512
    %s87 = scalar_lea.vmem [#allocation0], 10
    %88 = vst.msk [vmem:[%s87] ss:$16 sm:$0x3] %vm86, %v85
    %s89 = scalar_lea.vmem [#allocation0], 10
    %90 = vst.msk [vmem:[%s89] ss:$16 sm:$0xc] %vm86, %v85
    %v91 = vld [vmem:[#allocation2] sm:$0xf]
    %92 = vrot.lane.b32.xlu0 %v91, 40
    %v93 = vpop.permute.xlu0 %92
    %vm94 = vcmask 64512
    %s95 = scalar_lea.vmem [#allocation0], 11
    %96 = vst.msk [vmem:[%s95] ss:$16 sm:$0x3] %vm94, %v93
    %s97 = scalar_lea.vmem [#allocation0], 11
    %98 = vst.msk [vmem:[%s97] ss:$16 sm:$0xc] %vm94, %v93
    %v99 = vld [vmem:[#allocation2] sm:$0xf]
    %100 = vrot.lane.b32.xlu0 %v99, 32
    %v101 = vpop.permute.xlu0 %100
    %vm102 = vcmask 64512
    %s103 = scalar_lea.vmem [#allocation0], 12
    %104 = vst.msk [vmem:[%s103] ss:$16 sm:$0x3] %vm102, %v101
    %s105 = scalar_lea.vmem [#allocation0], 12
    %106 = vst.msk [vmem:[%s105] ss:$16 sm:$0xc] %vm102, %v101
    %v107 = vld [vmem:[#allocation2] sm:$0xf]
    %108 = vrot.lane.b32.xlu0 %v107, 24
    %v109 = vpop.permute.xlu0 %108
    %vm110 = vcmask 64512
    %s111 = scalar_lea.vmem [#allocation0], 13
    %112 = vst.msk [vmem:[%s111] ss:$16 sm:$0x3] %vm110, %v109
    %s113 = scalar_lea.vmem [#allocation0], 13
    %114 = vst.msk [vmem:[%s113] ss:$16 sm:$0xc] %vm110, %v109
    %v115 = vld [vmem:[#allocation2] sm:$0xf]
    %116 = vrot.lane.b32.xlu0 %v115, 16
    %v117 = vpop.permute.xlu0 %116
    %vm118 = vcmask 64512
    %s119 = scalar_lea.vmem [#allocation0], 14
    %120 = vst.msk [vmem:[%s119] ss:$16 sm:$0x3] %vm118, %v117
    %s121 = scalar_lea.vmem [#allocation0], 14
    %122 = vst.msk [vmem:[%s121] ss:$16 sm:$0xc] %vm118, %v117
    %v123 = vld [vmem:[#allocation2] sm:$0xf]
    %124 = vrot.lane.b32.xlu0 %v123, 8
    %v125 = vpop.permute.xlu0 %124
    %vm126 = vcmask 64512
    %s127 = scalar_lea.vmem [#allocation0], 15
    %128 = vst.msk [vmem:[%s127] ss:$16 sm:$0x3] %vm126, %v125
    %s129 = scalar_lea.vmem [#allocation0], 15
    %130 = vst.msk [vmem:[%s129] ss:$16 sm:$0xc] %vm126, %v125
    %s132 = ssub.s32 1024, 1024
    %133 = vsyncadd [#allocation1], %s132
    %s135 = sshll.u32 [#allocation0], 4
    %s136 = int_to_ptr.vmem [resolvable:$true] %s135
    %138 = dma.vmem_to_hbm [thread:$0]  %s136, 1024, %s1, [#allocation1]
    %139 = dma.done [#allocation1], 1024
    %140 = vsyncpa [#allocation1], 1

// kernel: nlayer_discriminator_forward.7
$region0: #{nlayer_discriminator_forward.7}
  #allocation0 [shape = 'u32[]', space=smem, size = 0x4, offset = 0x4, fixed_abs, tag = 'smem constant byte address 0x4 - core index']
  #allocation1 [shape = 'u32[144,128]{1,0:T(1,128)}', space=vmem, size = 0x12000, scoped, tag = 'internal scratch']
  #allocation2 [shape = 'f32[1,1]{1,0:T(1,128)S(1)}', space=vmem, size = 0x200, scoped, tag = 'scoped memory for nlayer_discriminator_forward.7']
  %s0 = inlined_call_operand.vmem [shape: bf16[512,256], index: 0, kind: input, shape index: {}]
  %s1 = inlined_call_operand.vmem [shape: f32[1,256], index: 1, kind: input, shape index: {}]
  %s2 = inlined_call_operand.vmem [shape: f32[1,256], index: 2, kind: input, shape index: {}]
  %s3 = inlined_call_operand.vmem [shape: bf16[256,512], index: 3, kind: input, shape index: {}]
  %s4 = inlined_call_operand.vmem [shape: f32[1,512], index: 4, kind: input, shape index: {}]
  %s5 = inlined_call_operand.vmem [shape: f32[1,512], index: 5, kind: input, shape index: {}]
  %s6 = inlined_call_operand.vmem [shape: f32[1,512], index: 6, kind: input, shape index: {}]
  %s7 = inlined_call_operand.<no memory space> [shape: f32[1,1], index: 7, kind: input, shape index: {}]
  %s8 = inlined_call_operand.vmem [shape: f32[512,1], index: 8, kind: output, shape index: {}]
  %s9 = sld [smem:[#allocation0]]
  $region42: #{nlayer_discriminator_forward.7} parent=0
    _
  %s11 = ssub.s32 1, %s9
  %s12 = scalar_select 0, %s11, %s9
  %v13 = vstv %s7
  %14 = vst [vmem:[#allocation2] sm:$0x1] %v13
  // Predicated region
  $region2: #{nlayer_discriminator_forward.7} parent=0 // pred_check
    _
  $region3: #{nlayer_discriminator_forward.7} parent=0 // pred_check_branch
    %16 = sbr.rel (0) target = $region5
  $region4: #{nlayer_discriminator_forward.7} parent=0 // pred_region
    _
  $region5: #{nlayer_discriminator_forward.7} parent=0 // pred_fallthru
    _
  // Predicated region
  $region6: #{nlayer_discriminator_forward.7} parent=0 // pred_check
    _
  $region7: #{nlayer_discriminator_forward.7} parent=0 // pred_check_branch
    %18 = sbr.rel (0) target = $region9
  $region8: #{nlayer_discriminator_forward.7} parent=0 // pred_region
    _
  $region9: #{nlayer_discriminator_forward.7} parent=0 // pred_fallthru
    _
  // Predicated region
  $region10: #{nlayer_discriminator_forward.7} parent=0 // pred_check
    _
  $region11: #{nlayer_discriminator_forward.7} parent=0 // pred_check_branch
    %20 = sbr.rel (0) target = $region13
  $region12: #{nlayer_discriminator_forward.7} parent=0 // pred_region
    _
  $region13: #{nlayer_discriminator_forward.7} parent=0 // pred_fallthru
    _
  // Predicated region
  $region14: #{nlayer_discriminator_forward.7} parent=0 // pred_check
    _
  $region15: #{nlayer_discriminator_forward.7} parent=0 // pred_check_branch
    %22 = sbr.rel (0) target = $region17
  $region16: #{nlayer_discriminator_forward.7} parent=0 // pred_region
    _
  $region17: #{nlayer_discriminator_forward.7} parent=0 // pred_fallthru
    _
  // Predicated region
  $region18: #{nlayer_discriminator_forward.7} parent=0 // pred_check
    _
  $region19: #{nlayer_discriminator_forward.7} parent=0 // pred_check_branch
    %24 = sbr.rel (0) target = $region21
  $region20: #{nlayer_discriminator_forward.7} parent=0 // pred_region
    _
  $region21: #{nlayer_discriminator_forward.7} parent=0 // pred_fallthru
    _
  // Predicated region
  $region22: #{nlayer_discriminator_forward.7} parent=0 // pred_check
    _
  $region23: #{nlayer_discriminator_forward.7} parent=0 // pred_check_branch
    %26 = sbr.rel (0) target = $region25
  $region24: #{nlayer_discriminator_forward.7} parent=0 // pred_region
    _
  $region25: #{nlayer_discriminator_forward.7} parent=0 // pred_fallthru
    _
  // Predicated region
  $region26: #{nlayer_discriminator_forward.7} parent=0 // pred_check
    _
  $region27: #{nlayer_discriminator_forward.7} parent=0 // pred_check_branch
    %28 = sbr.rel (0) target = $region29
  $region28: #{nlayer_discriminator_forward.7} parent=0 // pred_region
    _
  $region29: #{nlayer_discriminator_forward.7} parent=0 // pred_fallthru
    _
  // Predicated region
  $region30: #{nlayer_discriminator_forward.7} parent=0 // pred_check
    _
  $region31: #{nlayer_discriminator_forward.7} parent=0 // pred_check_branch
    %30 = sbr.rel (0) target = $region33
  $region32: #{nlayer_discriminator_forward.7} parent=0 // pred_region
    _
  $region33: #{nlayer_discriminator_forward.7} parent=0 // pred_fallthru
    _
  %v31 = vld [vmem:[%s0] sm:$0xff]
  %v32 = vld [vmem:[%s0 + $0x8] sm:$0xff]
  %v33 = vld [vmem:[%s0 + $0x10] sm:$0xff]
  %v34 = vld [vmem:[%s0 + $0x18] sm:$0xff]
  %v35 = vld [vmem:[%s0 + $0x20] sm:$0xff]
  %v36 = vld [vmem:[%s0 + $0x28] sm:$0xff]
  %v37 = vld [vmem:[%s0 + $0x30] sm:$0xff]
  %v38 = vld [vmem:[%s0 + $0x38] sm:$0xff]
  %v39 = vld [vmem:[%s0 + $0x40] sm:$0xff]
  %v40 = vld [vmem:[%s0 + $0x48] sm:$0xff]
  %v41 = vld [vmem:[%s0 + $0x50] sm:$0xff]
  %v42 = vld [vmem:[%s0 + $0x58] sm:$0xff]
  %v43 = vld [vmem:[%s0 + $0x60] sm:$0xff]
  %v44 = vld [vmem:[%s0 + $0x68] sm:$0xff]
  %v45 = vld [vmem:[%s0 + $0x70] sm:$0xff]
  %v46 = vld [vmem:[%s0 + $0x78] sm:$0xff]
  %v47 = vld [vmem:[%s0 + $0x80] sm:$0xff]
  %v48 = vld [vmem:[%s0 + $0x88] sm:$0xff]
  %v49 = vld [vmem:[%s0 + $0x90] sm:$0xff]
  %v50 = vld [vmem:[%s0 + $0x98] sm:$0xff]
  %v51 = vld [vmem:[%s0 + $0xa0] sm:$0xff]
  %v52 = vld [vmem:[%s0 + $0xa8] sm:$0xff]
  %v53 = vld [vmem:[%s0 + $0xb0] sm:$0xff]
  %v54 = vld [vmem:[%s0 + $0xb8] sm:$0xff]
  %v55 = vld [vmem:[%s0 + $0xc0] sm:$0xff]
  %v56 = vld [vmem:[%s0 + $0xc8] sm:$0xff]
  %v57 = vld [vmem:[%s0 + $0xd0] sm:$0xff]
  %v58 = vld [vmem:[%s0 + $0xd8] sm:$0xff]
  %v59 = vld [vmem:[%s0 + $0xe0] sm:$0xff]
  %v60 = vld [vmem:[%s0 + $0xe8] sm:$0xff]
  %v61 = vld [vmem:[%s0 + $0xf0] sm:$0xff]
  %v62 = vld [vmem:[%s0 + $0xf8] sm:$0xff]
  %v63 = vld [vmem:[%s0 + $0x100] sm:$0xff]
  %v64 = vld [vmem:[%s0 + $0x108] sm:$0xff]
  %v65 = vld [vmem:[%s0 + $0x110] sm:$0xff]
  %v66 = vld [vmem:[%s0 + $0x118] sm:$0xff]
  %v67 = vld [vmem:[%s0 + $0x120] sm:$0xff]
  %v68 = vld [vmem:[%s0 + $0x128] sm:$0xff]
  %v69 = vld [vmem:[%s0 + $0x130] sm:$0xff]
  %v70 = vld [vmem:[%s0 + $0x138] sm:$0xff]
  %v71 = vld [vmem:[%s0 + $0x140] sm:$0xff]
  %v72 = vld [vmem:[%s0 + $0x148] sm:$0xff]
  %v73 = vld [vmem:[%s0 + $0x150] sm:$0xff]
  %v74 = vld [vmem:[%s0 + $0x158] sm:$0xff]
  %v75 = vld [vmem:[%s0 + $0x160] sm:$0xff]
  %v76 = vld [vmem:[%s0 + $0x168] sm:$0xff]
  %v77 = vld [vmem:[%s0 + $0x170] sm:$0xff]
  %v78 = vld [vmem:[%s0 + $0x178] sm:$0xff]
  %v79 = vld [vmem:[%s0 + $0x180] sm:$0xff]
  %v80 = vld [vmem:[%s0 + $0x188] sm:$0xff]
  %v81 = vld [vmem:[%s0 + $0x190] sm:$0xff]
  %v82 = vld [vmem:[%s0 + $0x198] sm:$0xff]
  %v83 = vld [vmem:[%s0 + $0x1a0] sm:$0xff]
  %v84 = vld [vmem:[%s0 + $0x1a8] sm:$0xff]
  %v85 = vld [vmem:[%s0 + $0x1b0] sm:$0xff]
  %v86 = vld [vmem:[%s0 + $0x1b8] sm:$0xff]
  %v87 = vld [vmem:[%s0 + $0x1c0] sm:$0xff]
  %v88 = vld [vmem:[%s0 + $0x1c8] sm:$0xff]
  %v89 = vld [vmem:[%s0 + $0x1d0] sm:$0xff]
  %v90 = vld [vmem:[%s0 + $0x1d8] sm:$0xff]
  %v91 = vld [vmem:[%s0 + $0x1e0] sm:$0xff]
  %v92 = vld [vmem:[%s0 + $0x1e8] sm:$0xff]
  %v93 = vld [vmem:[%s0 + $0x1f0] sm:$0xff]
  %v94 = vld [vmem:[%s0 + $0x1f8] sm:$0xff]
  %v95 = vunpack.c.l.bf16 %v31
  %v96 = vunpack.c.h.bf16 %v31
  %v97 = vunpack.c.l.bf16 %v32
  %v98 = vunpack.c.h.bf16 %v32
  %v99 = vunpack.c.l.bf16 %v33
  %v100 = vunpack.c.h.bf16 %v33
  %v101 = vunpack.c.l.bf16 %v34
  %v102 = vunpack.c.h.bf16 %v34
  %v103 = vunpack.c.l.bf16 %v35
  %v104 = vunpack.c.h.bf16 %v35
  %v105 = vunpack.c.l.bf16 %v36
  %v106 = vunpack.c.h.bf16 %v36
  %v107 = vunpack.c.l.bf16 %v37
  %v108 = vunpack.c.h.bf16 %v37
  %v109 = vunpack.c.l.bf16 %v38
  %v110 = vunpack.c.h.bf16 %v38
  %v111 = vunpack.c.l.bf16 %v39
  %v112 = vunpack.c.h.bf16 %v39
  %v113 = vunpack.c.l.bf16 %v40
  %v114 = vunpack.c.h.bf16 %v40
  %v115 = vunpack.c.l.bf16 %v41
  %v116 = vunpack.c.h.bf16 %v41
  %v117 = vunpack.c.l.bf16 %v42
  %v118 = vunpack.c.h.bf16 %v42
  %v119 = vunpack.c.l.bf16 %v43
  %v120 = vunpack.c.h.bf16 %v43
  %v121 = vunpack.c.l.bf16 %v44
  %v122 = vunpack.c.h.bf16 %v44
  %v123 = vunpack.c.l.bf16 %v45
  %v124 = vunpack.c.h.bf16 %v45
  %v125 = vunpack.c.l.bf16 %v46
  %v126 = vunpack.c.h.bf16 %v46
  %v127 = vunpack.c.l.bf16 %v47
  %v128 = vunpack.c.h.bf16 %v47
  %v129 = vunpack.c.l.bf16 %v48
  %v130 = vunpack.c.h.bf16 %v48
  %v131 = vunpack.c.l.bf16 %v49
  %v132 = vunpack.c.h.bf16 %v49
  %v133 = vunpack.c.l.bf16 %v50
  %v134 = vunpack.c.h.bf16 %v50
  %v135 = vunpack.c.l.bf16 %v51
  %v136 = vunpack.c.h.bf16 %v51
  %v137 = vunpack.c.l.bf16 %v52
  %v138 = vunpack.c.h.bf16 %v52
  %v139 = vunpack.c.l.bf16 %v53
  %v140 = vunpack.c.h.bf16 %v53
  %v141 = vunpack.c.l.bf16 %v54
  %v142 = vunpack.c.h.bf16 %v54
  %v143 = vunpack.c.l.bf16 %v55
  %v144 = vunpack.c.h.bf16 %v55
  %v145 = vunpack.c.l.bf16 %v56
  %v146 = vunpack.c.h.bf16 %v56
  %v147 = vunpack.c.l.bf16 %v57
  %v148 = vunpack.c.h.bf16 %v57
  %v149 = vunpack.c.l.bf16 %v58
  %v150 = vunpack.c.h.bf16 %v58
  %v151 = vunpack.c.l.bf16 %v59
  %v152 = vunpack.c.h.bf16 %v59
  %v153 = vunpack.c.l.bf16 %v60
  %v154 = vunpack.c.h.bf16 %v60
  %v155 = vunpack.c.l.bf16 %v61
  %v156 = vunpack.c.h.bf16 %v61
  %v157 = vunpack.c.l.bf16 %v62
  %v158 = vunpack.c.h.bf16 %v62
  %v159 = vunpack.c.l.bf16 %v63
  %v160 = vunpack.c.h.bf16 %v63
  %v161 = vunpack.c.l.bf16 %v64
  %v162 = vunpack.c.h.bf16 %v64
  %v163 = vunpack.c.l.bf16 %v65
  %v164 = vunpack.c.h.bf16 %v65
  %v165 = vunpack.c.l.bf16 %v66
  %v166 = vunpack.c.h.bf16 %v66
  %v167 = vunpack.c.l.bf16 %v67
  %v168 = vunpack.c.h.bf16 %v67
  %v169 = vunpack.c.l.bf16 %v68
  %v170 = vunpack.c.h.bf16 %v68
  %v171 = vunpack.c.l.bf16 %v69
  %v172 = vunpack.c.h.bf16 %v69
  %v173 = vunpack.c.l.bf16 %v70
  %v174 = vunpack.c.h.bf16 %v70
  %v175 = vunpack.c.l.bf16 %v71
  %v176 = vunpack.c.h.bf16 %v71
  %v177 = vunpack.c.l.bf16 %v72
  %v178 = vunpack.c.h.bf16 %v72
  %v179 = vunpack.c.l.bf16 %v73
  %v180 = vunpack.c.h.bf16 %v73
  %v181 = vunpack.c.l.bf16 %v74
  %v182 = vunpack.c.h.bf16 %v74
  %v183 = vunpack.c.l.bf16 %v75
  %v184 = vunpack.c.h.bf16 %v75
  %v185 = vunpack.c.l.bf16 %v76
  %v186 = vunpack.c.h.bf16 %v76
  %v187 = vunpack.c.l.bf16 %v77
  %v188 = vunpack.c.h.bf16 %v77
  %v189 = vunpack.c.l.bf16 %v78
  %v190 = vunpack.c.h.bf16 %v78
  %v191 = vunpack.c.l.bf16 %v79
  %v192 = vunpack.c.h.bf16 %v79
  %v193 = vunpack.c.l.bf16 %v80
  %v194 = vunpack.c.h.bf16 %v80
  %v195 = vunpack.c.l.bf16 %v81
  %v196 = vunpack.c.h.bf16 %v81
  %v197 = vunpack.c.l.bf16 %v82
  %v198 = vunpack.c.h.bf16 %v82
  %v199 = vunpack.c.l.bf16 %v83
  %v200 = vunpack.c.h.bf16 %v83
  %v201 = vunpack.c.l.bf16 %v84
  %v202 = vunpack.c.h.bf16 %v84
  %v203 = vunpack.c.l.bf16 %v85
  %v204 = vunpack.c.h.bf16 %v85
  %v205 = vunpack.c.l.bf16 %v86
  %v206 = vunpack.c.h.bf16 %v86
  %v207 = vunpack.c.l.bf16 %v87
  %v208 = vunpack.c.h.bf16 %v87
  %v209 = vunpack.c.l.bf16 %v88
  %v210 = vunpack.c.h.bf16 %v88
  %v211 = vunpack.c.l.bf16 %v89
  %v212 = vunpack.c.h.bf16 %v89
  %v213 = vunpack.c.l.bf16 %v90
  %v214 = vunpack.c.h.bf16 %v90
  %v215 = vunpack.c.l.bf16 %v91
  %v216 = vunpack.c.h.bf16 %v91
  %v217 = vunpack.c.l.bf16 %v92
  %v218 = vunpack.c.h.bf16 %v92
  %v219 = vunpack.c.l.bf16 %v93
  %v220 = vunpack.c.h.bf16 %v93
  %v221 = vunpack.c.l.bf16 %v94
  %v222 = vunpack.c.h.bf16 %v94
  %v223 = vld [vmem:[%s1] sm:$0x3]
  %v225 = vlaneseq
  %v226 = vshrl.u32 %v225, 7
  %v227 = vsub.s32 0, %v226
  %v228 = vrot.slane %v223, %v227
  %v229 = vlaneseq
  %v230 = vshrl.u32 %v229, 7
  %v231 = vsub.s32 1, %v230
  %v232 = vrot.slane %v223, %v231
  %v235 = vmul.f32 %v95, %v228
  %v236 = vmul.f32 %v96, %v232
  %v237 = vmul.f32 %v97, %v228
  %v238 = vmul.f32 %v98, %v232
  %v239 = vmul.f32 %v99, %v228
  %v240 = vmul.f32 %v100, %v232
  %v241 = vmul.f32 %v101, %v228
  %v242 = vmul.f32 %v102, %v232
  %v243 = vmul.f32 %v103, %v228
  %v244 = vmul.f32 %v104, %v232
  %v245 = vmul.f32 %v105, %v228
  %v246 = vmul.f32 %v106, %v232
  %v247 = vmul.f32 %v107, %v228
  %v248 = vmul.f32 %v108, %v232
  %v249 = vmul.f32 %v109, %v228
  %v250 = vmul.f32 %v110, %v232
  %v251 = vmul.f32 %v111, %v228
  %v252 = vmul.f32 %v112, %v232
  %v253 = vmul.f32 %v113, %v228
  %v254 = vmul.f32 %v114, %v232
  %v255 = vmul.f32 %v115, %v228
  %v256 = vmul.f32 %v116, %v232
  %v257 = vmul.f32 %v117, %v228
  %v258 = vmul.f32 %v118, %v232
  %v259 = vmul.f32 %v119, %v228
  %v260 = vmul.f32 %v120, %v232
  %v261 = vmul.f32 %v121, %v228
  %v262 = vmul.f32 %v122, %v232
  %v263 = vmul.f32 %v123, %v228
  %v264 = vmul.f32 %v124, %v232
  %v265 = vmul.f32 %v125, %v228
  %v266 = vmul.f32 %v126, %v232
  %v267 = vmul.f32 %v127, %v228
  %v268 = vmul.f32 %v128, %v232
  %v269 = vmul.f32 %v129, %v228
  %v270 = vmul.f32 %v130, %v232
  %v271 = vmul.f32 %v131, %v228
  %v272 = vmul.f32 %v132, %v232
  %v273 = vmul.f32 %v133, %v228
  %v274 = vmul.f32 %v134, %v232
  %v275 = vmul.f32 %v135, %v228
  %v276 = vmul.f32 %v136, %v232
  %v277 = vmul.f32 %v137, %v228
  %v278 = vmul.f32 %v138, %v232
  %v279 = vmul.f32 %v139, %v228
  %v280 = vmul.f32 %v140, %v232
  %v281 = vmul.f32 %v141, %v228
  %v282 = vmul.f32 %v142, %v232
  %v283 = vmul.f32 %v143, %v228
  %v284 = vmul.f32 %v144, %v232
  %v285 = vmul.f32 %v145, %v228
  %v286 = vmul.f32 %v146, %v232
  %v287 = vmul.f32 %v147, %v228
  %v288 = vmul.f32 %v148, %v232
  %v289 = vmul.f32 %v149, %v228
  %v290 = vmul.f32 %v150, %v232
  %v291 = vmul.f32 %v151, %v228
  %v292 = vmul.f32 %v152, %v232
  %v293 = vmul.f32 %v153, %v228
  %v294 = vmul.f32 %v154, %v232
  %v295 = vmul.f32 %v155, %v228
  %v296 = vmul.f32 %v156, %v232
  %v297 = vmul.f32 %v157, %v228
  %v298 = vmul.f32 %v158, %v232
  %v299 = vmul.f32 %v159, %v228
  %v300 = vmul.f32 %v160, %v232
  %v301 = vmul.f32 %v161, %v228
  %v302 = vmul.f32 %v162, %v232
  %v303 = vmul.f32 %v163, %v228
  %v304 = vmul.f32 %v164, %v232
  %v305 = vmul.f32 %v165, %v228
  %v306 = vmul.f32 %v166, %v232
  %v307 = vmul.f32 %v167, %v228
  %v308 = vmul.f32 %v168, %v232
  %v309 = vmul.f32 %v169, %v228
  %v310 = vmul.f32 %v170, %v232
  %v311 = vmul.f32 %v171, %v228
  %v312 = vmul.f32 %v172, %v232
  %v313 = vmul.f32 %v173, %v228
  %v314 = vmul.f32 %v174, %v232
  %v315 = vmul.f32 %v175, %v228
  %v316 = vmul.f32 %v176, %v232
  %v317 = vmul.f32 %v177, %v228
  %v318 = vmul.f32 %v178, %v232
  %v319 = vmul.f32 %v179, %v228
  %v320 = vmul.f32 %v180, %v232
  %v321 = vmul.f32 %v181, %v228
  %v322 = vmul.f32 %v182, %v232
  %v323 = vmul.f32 %v183, %v228
  %v324 = vmul.f32 %v184, %v232
  %v325 = vmul.f32 %v185, %v228
  %v326 = vmul.f32 %v186, %v232
  %v327 = vmul.f32 %v187, %v228
  %v328 = vmul.f32 %v188, %v232
  %v329 = vmul.f32 %v189, %v228
  %v330 = vmul.f32 %v190, %v232
  %v331 = vmul.f32 %v191, %v228
  %v332 = vmul.f32 %v192, %v232
  %v333 = vmul.f32 %v193, %v228
  %v334 = vmul.f32 %v194, %v232
  %v335 = vmul.f32 %v195, %v228
  %v336 = vmul.f32 %v196, %v232
  %v337 = vmul.f32 %v197, %v228
  %v338 = vmul.f32 %v198, %v232
  %v339 = vmul.f32 %v199, %v228
  %v340 = vmul.f32 %v200, %v232
  %v341 = vmul.f32 %v201, %v228
  %v342 = vmul.f32 %v202, %v232
  %v343 = vmul.f32 %v203, %v228
  %v344 = vmul.f32 %v204, %v232
  %v345 = vmul.f32 %v205, %v228
  %v346 = vmul.f32 %v206, %v232
  %v347 = vmul.f32 %v207, %v228
  %v348 = vmul.f32 %v208, %v232
  %v349 = vmul.f32 %v209, %v228
  %v350 = vmul.f32 %v210, %v232
  %v351 = vmul.f32 %v211, %v228
  %v352 = vmul.f32 %v212, %v232
  %v353 = vmul.f32 %v213, %v228
  %v354 = vmul.f32 %v214, %v232
  %v355 = vmul.f32 %v215, %v228
  %v356 = vmul.f32 %v216, %v232
  %v357 = vmul.f32 %v217, %v228
  %v358 = vmul.f32 %v218, %v232
  %v359 = vmul.f32 %v219, %v228
  %v360 = vmul.f32 %v220, %v232
  %v361 = vmul.f32 %v221, %v228
  %v362 = vmul.f32 %v222, %v232
  %v363 = vld [vmem:[%s2] sm:$0x3]
  %v365 = vlaneseq
  %v366 = vshrl.u32 %v365, 7
  %v367 = vsub.s32 0, %v366
  %v368 = vrot.slane %v363, %v367
  %v369 = vlaneseq
  %v370 = vshrl.u32 %v369, 7
  %v371 = vsub.s32 1, %v370
  %v372 = vrot.slane %v363, %v371
  %v375 = vadd.f32 %v235, %v368
  %v376 = vadd.f32 %v236, %v372
  %v377 = vadd.f32 %v237, %v368
  %v378 = vadd.f32 %v238, %v372
  %v379 = vadd.f32 %v239, %v368
  %v380 = vadd.f32 %v240, %v372
  %v381 = vadd.f32 %v241, %v368
  %v382 = vadd.f32 %v242, %v372
  %v383 = vadd.f32 %v243, %v368
  %v384 = vadd.f32 %v244, %v372
  %v385 = vadd.f32 %v245, %v368
  %v386 = vadd.f32 %v246, %v372
  %v387 = vadd.f32 %v247, %v368
  %v388 = vadd.f32 %v248, %v372
  %v389 = vadd.f32 %v249, %v368
  %v390 = vadd.f32 %v250, %v372
  %v391 = vadd.f32 %v251, %v368
  %v392 = vadd.f32 %v252, %v372
  %v393 = vadd.f32 %v253, %v368
  %v394 = vadd.f32 %v254, %v372
  %v395 = vadd.f32 %v255, %v368
  %v396 = vadd.f32 %v256, %v372
  %v397 = vadd.f32 %v257, %v368
  %v398 = vadd.f32 %v258, %v372
  %v399 = vadd.f32 %v259, %v368
  %v400 = vadd.f32 %v260, %v372
  %v401 = vadd.f32 %v261, %v368
  %v402 = vadd.f32 %v262, %v372
  %v403 = vadd.f32 %v263, %v368
  %v404 = vadd.f32 %v264, %v372
  %v405 = vadd.f32 %v265, %v368
  %v406 = vadd.f32 %v266, %v372
  %v407 = vadd.f32 %v267, %v368
  %v408 = vadd.f32 %v268, %v372
  %v409 = vadd.f32 %v269, %v368
  %v410 = vadd.f32 %v270, %v372
  %v411 = vadd.f32 %v271, %v368
  %v412 = vadd.f32 %v272, %v372
  %v413 = vadd.f32 %v273, %v368
  %v414 = vadd.f32 %v274, %v372
  %v415 = vadd.f32 %v275, %v368
  %v416 = vadd.f32 %v276, %v372
  %v417 = vadd.f32 %v277, %v368
  %v418 = vadd.f32 %v278, %v372
  %v419 = vadd.f32 %v279, %v368
  %v420 = vadd.f32 %v280, %v372
  %v421 = vadd.f32 %v281, %v368
  %v422 = vadd.f32 %v282, %v372
  %v423 = vadd.f32 %v283, %v368
  %v424 = vadd.f32 %v284, %v372
  %v425 = vadd.f32 %v285, %v368
  %v426 = vadd.f32 %v286, %v372
  %v427 = vadd.f32 %v287, %v368
  %v428 = vadd.f32 %v288, %v372
  %v429 = vadd.f32 %v289, %v368
  %v430 = vadd.f32 %v290, %v372
  %v431 = vadd.f32 %v291, %v368
  %v432 = vadd.f32 %v292, %v372
  %v433 = vadd.f32 %v293, %v368
  %v434 = vadd.f32 %v294, %v372
  %v435 = vadd.f32 %v295, %v368
  %v436 = vadd.f32 %v296, %v372
  %v437 = vadd.f32 %v297, %v368
  %v438 = vadd.f32 %v298, %v372
  %v439 = vadd.f32 %v299, %v368
  %v440 = vadd.f32 %v300, %v372
  %v441 = vadd.f32 %v301, %v368
  %v442 = vadd.f32 %v302, %v372
  %v443 = vadd.f32 %v303, %v368
  %v444 = vadd.f32 %v304, %v372
  %v445 = vadd.f32 %v305, %v368
  %v446 = vadd.f32 %v306, %v372
  %v447 = vadd.f32 %v307, %v368
  %v448 = vadd.f32 %v308, %v372
  %v449 = vadd.f32 %v309, %v368
  %v450 = vadd.f32 %v310, %v372
  %v451 = vadd.f32 %v311, %v368
  %v452 = vadd.f32 %v312, %v372
  %v453 = vadd.f32 %v313, %v368
  %v454 = vadd.f32 %v314, %v372
  %v455 = vadd.f32 %v315, %v368
  %v456 = vadd.f32 %v316, %v372
  %v457 = vadd.f32 %v317, %v368
  %v458 = vadd.f32 %v318, %v372
  %v459 = vadd.f32 %v319, %v368
  %v460 = vadd.f32 %v320, %v372
  %v461 = vadd.f32 %v321, %v368
  %v462 = vadd.f32 %v322, %v372
  %v463 = vadd.f32 %v323, %v368
  %v464 = vadd.f32 %v324, %v372
  %v465 = vadd.f32 %v325, %v368
  %v466 = vadd.f32 %v326, %v372
  %v467 = vadd.f32 %v327, %v368
  %v468 = vadd.f32 %v328, %v372
  %v469 = vadd.f32 %v329, %v368
  %v470 = vadd.f32 %v330, %v372
  %v471 = vadd.f32 %v331, %v368
  %v472 = vadd.f32 %v332, %v372
  %v473 = vadd.f32 %v333, %v368
  %v474 = vadd.f32 %v334, %v372
  %v475 = vadd.f32 %v335, %v368
  %v476 = vadd.f32 %v336, %v372
  %v477 = vadd.f32 %v337, %v368
  %v478 = vadd.f32 %v338, %v372
  %v479 = vadd.f32 %v339, %v368
  %v480 = vadd.f32 %v340, %v372
  %v481 = vadd.f32 %v341, %v368
  %v482 = vadd.f32 %v342, %v372
  %v483 = vadd.f32 %v343, %v368
  %v484 = vadd.f32 %v344, %v372
  %v485 = vadd.f32 %v345, %v368
  %v486 = vadd.f32 %v346, %v372
  %v487 = vadd.f32 %v347, %v368
  %v488 = vadd.f32 %v348, %v372
  %v489 = vadd.f32 %v349, %v368
  %v490 = vadd.f32 %v350, %v372
  %v491 = vadd.f32 %v351, %v368
  %v492 = vadd.f32 %v352, %v372
  %v493 = vadd.f32 %v353, %v368
  %v494 = vadd.f32 %v354, %v372
  %v495 = vadd.f32 %v355, %v368
  %v496 = vadd.f32 %v356, %v372
  %v497 = vadd.f32 %v357, %v368
  %v498 = vadd.f32 %v358, %v372
  %v499 = vadd.f32 %v359, %v368
  %v500 = vadd.f32 %v360, %v372
  %v501 = vadd.f32 %v361, %v368
  %v502 = vadd.f32 %v362, %v372
  %vm503 = vcmp.ge.f32.partialorder %v375, 0.0
  %vm504 = vcmp.ge.f32.partialorder %v376, 0.0
  %vm505 = vcmp.ge.f32.partialorder %v377, 0.0
  %vm506 = vcmp.ge.f32.partialorder %v378, 0.0
  %vm507 = vcmp.ge.f32.partialorder %v379, 0.0
  %vm508 = vcmp.ge.f32.partialorder %v380, 0.0
  %vm509 = vcmp.ge.f32.partialorder %v381, 0.0
  %vm510 = vcmp.ge.f32.partialorder %v382, 0.0
  %vm511 = vcmp.ge.f32.partialorder %v383, 0.0
  %vm512 = vcmp.ge.f32.partialorder %v384, 0.0
  %vm513 = vcmp.ge.f32.partialorder %v385, 0.0
  %vm514 = vcmp.ge.f32.partialorder %v386, 0.0
  %vm515 = vcmp.ge.f32.partialorder %v387, 0.0
  %vm516 = vcmp.ge.f32.partialorder %v388, 0.0
  %vm517 = vcmp.ge.f32.partialorder %v389, 0.0
  %vm518 = vcmp.ge.f32.partialorder %v390, 0.0
  %vm519 = vcmp.ge.f32.partialorder %v391, 0.0
  %vm520 = vcmp.ge.f32.partialorder %v392, 0.0
  %vm521 = vcmp.ge.f32.partialorder %v393, 0.0
  %vm522 = vcmp.ge.f32.partialorder %v394, 0.0
  %vm523 = vcmp.ge.f32.partialorder %v395, 0.0
  %vm524 = vcmp.ge.f32.partialorder %v396, 0.0
  %vm525 = vcmp.ge.f32.partialorder %v397, 0.0
  %vm526 = vcmp.ge.f32.partialorder %v398, 0.0
  %vm527 = vcmp.ge.f32.partialorder %v399, 0.0
  %vm528 = vcmp.ge.f32.partialorder %v400, 0.0
  %vm529 = vcmp.ge.f32.partialorder %v401, 0.0
  %vm530 = vcmp.ge.f32.partialorder %v402, 0.0
  %vm531 = vcmp.ge.f32.partialorder %v403, 0.0
  %vm532 = vcmp.ge.f32.partialorder %v404, 0.0
  %vm533 = vcmp.ge.f32.partialorder %v405, 0.0
  %vm534 = vcmp.ge.f32.partialorder %v406, 0.0
  %vm535 = vcmp.ge.f32.partialorder %v407, 0.0
  %vm536 = vcmp.ge.f32.partialorder %v408, 0.0
  %vm537 = vcmp.ge.f32.partialorder %v409, 0.0
  %vm538 = vcmp.ge.f32.partialorder %v410, 0.0
  %vm539 = vcmp.ge.f32.partialorder %v411, 0.0
  %vm540 = vcmp.ge.f32.partialorder %v412, 0.0
  %vm541 = vcmp.ge.f32.partialorder %v413, 0.0
  %vm542 = vcmp.ge.f32.partialorder %v414, 0.0
  %vm543 = vcmp.ge.f32.partialorder %v415, 0.0
  %vm544 = vcmp.ge.f32.partialorder %v416, 0.0
  %vm545 = vcmp.ge.f32.partialorder %v417, 0.0
  %vm546 = vcmp.ge.f32.partialorder %v418, 0.0
  %vm547 = vcmp.ge.f32.partialorder %v419, 0.0
  %vm548 = vcmp.ge.f32.partialorder %v420, 0.0
  %vm549 = vcmp.ge.f32.partialorder %v421, 0.0
  %vm550 = vcmp.ge.f32.partialorder %v422, 0.0
  %vm551 = vcmp.ge.f32.partialorder %v423, 0.0
  %vm552 = vcmp.ge.f32.partialorder %v424, 0.0
  %vm553 = vcmp.ge.f32.partialorder %v425, 0.0
  %vm554 = vcmp.ge.f32.partialorder %v426, 0.0
  %vm555 = vcmp.ge.f32.partialorder %v427, 0.0
  %vm556 = vcmp.ge.f32.partialorder %v428, 0.0
  %vm557 = vcmp.ge.f32.partialorder %v429, 0.0
  %vm558 = vcmp.ge.f32.partialorder %v430, 0.0
  %vm559 = vcmp.ge.f32.partialorder %v431, 0.0
  %vm560 = vcmp.ge.f32.partialorder %v432, 0.0
  %vm561 = vcmp.ge.f32.partialorder %v433, 0.0
  %vm562 = vcmp.ge.f32.partialorder %v434, 0.0
  %vm563 = vcmp.ge.f32.partialorder %v435, 0.0
  %vm564 = vcmp.ge.f32.partialorder %v436, 0.0
  %vm565 = vcmp.ge.f32.partialorder %v437, 0.0
  %vm566 = vcmp.ge.f32.partialorder %v438, 0.0
  %vm567 = vcmp.ge.f32.partialorder %v439, 0.0
  %vm568 = vcmp.ge.f32.partialorder %v440, 0.0
  %vm569 = vcmp.ge.f32.partialorder %v441, 0.0
  %vm570 = vcmp.ge.f32.partialorder %v442, 0.0
  %vm571 = vcmp.ge.f32.partialorder %v443, 0.0
  %vm572 = vcmp.ge.f32.partialorder %v444, 0.0
  %vm573 = vcmp.ge.f32.partialorder %v445, 0.0
  %vm574 = vcmp.ge.f32.partialorder %v446, 0.0
  %vm575 = vcmp.ge.f32.partialorder %v447, 0.0
  %vm576 = vcmp.ge.f32.partialorder %v448, 0.0
  %vm577 = vcmp.ge.f32.partialorder %v449, 0.0
  %vm578 = vcmp.ge.f32.partialorder %v450, 0.0
  %vm579 = vcmp.ge.f32.partialorder %v451, 0.0
  %vm580 = vcmp.ge.f32.partialorder %v452, 0.0
  %vm581 = vcmp.ge.f32.partialorder %v453, 0.0
  %vm582 = vcmp.ge.f32.partialorder %v454, 0.0
  %vm583 = vcmp.ge.f32.partialorder %v455, 0.0
  %vm584 = vcmp.ge.f32.partialorder %v456, 0.0
  %vm585 = vcmp.ge.f32.partialorder %v457, 0.0
  %vm586 = vcmp.ge.f32.partialorder %v458, 0.0
  %vm587 = vcmp.ge.f32.partialorder %v459, 0.0
  %vm588 = vcmp.ge.f32.partialorder %v460, 0.0
  %vm589 = vcmp.ge.f32.partialorder %v461, 0.0
  %vm590 = vcmp.ge.f32.partialorder %v462, 0.0
  %vm591 = vcmp.ge.f32.partialorder %v463, 0.0
  %vm592 = vcmp.ge.f32.partialorder %v464, 0.0
  %vm593 = vcmp.ge.f32.partialorder %v465, 0.0
  %vm594 = vcmp.ge.f32.partialorder %v466, 0.0
  %vm595 = vcmp.ge.f32.partialorder %v467, 0.0
  %vm596 = vcmp.ge.f32.partialorder %v468, 0.0
  %vm597 = vcmp.ge.f32.partialorder %v469, 0.0
  %vm598 = vcmp.ge.f32.partialorder %v470, 0.0
  %vm599 = vcmp.ge.f32.partialorder %v471, 0.0
  %vm600 = vcmp.ge.f32.partialorder %v472, 0.0
  %vm601 = vcmp.ge.f32.partialorder %v473, 0.0
  %vm602 = vcmp.ge.f32.partialorder %v474, 0.0
  %vm603 = vcmp.ge.f32.partialorder %v475, 0.0
  %vm604 = vcmp.ge.f32.partialorder %v476, 0.0
  %vm605 = vcmp.ge.f32.partialorder %v477, 0.0
  %vm606 = vcmp.ge.f32.partialorder %v478, 0.0
  %vm607 = vcmp.ge.f32.partialorder %v479, 0.0
  %vm608 = vcmp.ge.f32.partialorder %v480, 0.0
  %vm609 = vcmp.ge.f32.partialorder %v481, 0.0
  %vm610 = vcmp.ge.f32.partialorder %v482, 0.0
  %vm611 = vcmp.ge.f32.partialorder %v483, 0.0
  %vm612 = vcmp.ge.f32.partialorder %v484, 0.0
  %vm613 = vcmp.ge.f32.partialorder %v485, 0.0
  %vm614 = vcmp.ge.f32.partialorder %v486, 0.0
  %vm615 = vcmp.ge.f32.partialorder %v487, 0.0
  %vm616 = vcmp.ge.f32.partialorder %v488, 0.0
  %vm617 = vcmp.ge.f32.partialorder %v489, 0.0
  %vm618 = vcmp.ge.f32.partialorder %v490, 0.0
  %vm619 = vcmp.ge.f32.partialorder %v491, 0.0
  %vm620 = vcmp.ge.f32.partialorder %v492, 0.0
  %vm621 = vcmp.ge.f32.partialorder %v493, 0.0
  %vm622 = vcmp.ge.f32.partialorder %v494, 0.0
  %vm623 = vcmp.ge.f32.partialorder %v495, 0.0
  %vm624 = vcmp.ge.f32.partialorder %v496, 0.0
  %vm625 = vcmp.ge.f32.partialorder %v497, 0.0
  %vm626 = vcmp.ge.f32.partialorder %v498, 0.0
  %vm627 = vcmp.ge.f32.partialorder %v499, 0.0
  %vm628 = vcmp.ge.f32.partialorder %v500, 0.0
  %vm629 = vcmp.ge.f32.partialorder %v501, 0.0
  %vm630 = vcmp.ge.f32.partialorder %v502, 0.0
  %v631 = vmul.f32 %v375, 0.2
  %v632 = vmul.f32 %v376, 0.2
  %v633 = vmul.f32 %v377, 0.2
  %v634 = vmul.f32 %v378, 0.2
  %v635 = vmul.f32 %v379, 0.2
  %v636 = vmul.f32 %v380, 0.2
  %v637 = vmul.f32 %v381, 0.2
  %v638 = vmul.f32 %v382, 0.2
  %v639 = vmul.f32 %v383, 0.2
  %v640 = vmul.f32 %v384, 0.2
  %v641 = vmul.f32 %v385, 0.2
  %v642 = vmul.f32 %v386, 0.2
  %v643 = vmul.f32 %v387, 0.2
  %v644 = vmul.f32 %v388, 0.2
  %v645 = vmul.f32 %v389, 0.2
  %v646 = vmul.f32 %v390, 0.2
  %v647 = vmul.f32 %v391, 0.2
  %v648 = vmul.f32 %v392, 0.2
  %v649 = vmul.f32 %v393, 0.2
  %v650 = vmul.f32 %v394, 0.2
  %v651 = vmul.f32 %v395, 0.2
  %v652 = vmul.f32 %v396, 0.2
  %v653 = vmul.f32 %v397, 0.2
  %v654 = vmul.f32 %v398, 0.2
  %v655 = vmul.f32 %v399, 0.2
  %v656 = vmul.f32 %v400, 0.2
  %v657 = vmul.f32 %v401, 0.2
  %v658 = vmul.f32 %v402, 0.2
  %v659 = vmul.f32 %v403, 0.2
  %v660 = vmul.f32 %v404, 0.2
  %v661 = vmul.f32 %v405, 0.2
  %v662 = vmul.f32 %v406, 0.2
  %v663 = vmul.f32 %v407, 0.2
  %v664 = vmul.f32 %v408, 0.2
  %v665 = vmul.f32 %v409, 0.2
  %v666 = vmul.f32 %v410, 0.2
  %v667 = vmul.f32 %v411, 0.2
  %v668 = vmul.f32 %v412, 0.2
  %v669 = vmul.f32 %v413, 0.2
  %v670 = vmul.f32 %v414, 0.2
  %v671 = vmul.f32 %v415, 0.2
  %v672 = vmul.f32 %v416, 0.2
  %v673 = vmul.f32 %v417, 0.2
  %v674 = vmul.f32 %v418, 0.2
  %v675 = vmul.f32 %v419, 0.2
  %v676 = vmul.f32 %v420, 0.2
  %v677 = vmul.f32 %v421, 0.2
  %v678 = vmul.f32 %v422, 0.2
  %v679 = vmul.f32 %v423, 0.2
  %v680 = vmul.f32 %v424, 0.2
  %v681 = vmul.f32 %v425, 0.2
  %v682 = vmul.f32 %v426, 0.2
  %v683 = vmul.f32 %v427, 0.2
  %v684 = vmul.f32 %v428, 0.2
  %v685 = vmul.f32 %v429, 0.2
  %v686 = vmul.f32 %v430, 0.2
  %v687 = vmul.f32 %v431, 0.2
  %v688 = vmul.f32 %v432, 0.2
  %v689 = vmul.f32 %v433, 0.2
  %v690 = vmul.f32 %v434, 0.2
  %v691 = vmul.f32 %v435, 0.2
  %v692 = vmul.f32 %v436, 0.2
  %v693 = vmul.f32 %v437, 0.2
  %v694 = vmul.f32 %v438, 0.2
  %v695 = vmul.f32 %v439, 0.2
  %v696 = vmul.f32 %v440, 0.2
  %v697 = vmul.f32 %v441, 0.2
  %v698 = vmul.f32 %v442, 0.2
  %v699 = vmul.f32 %v443, 0.2
  %v700 = vmul.f32 %v444, 0.2
  %v701 = vmul.f32 %v445, 0.2
  %v702 = vmul.f32 %v446, 0.2
  %v703 = vmul.f32 %v447, 0.2
  %v704 = vmul.f32 %v448, 0.2
  %v705 = vmul.f32 %v449, 0.2
  %v706 = vmul.f32 %v450, 0.2
  %v707 = vmul.f32 %v451, 0.2
  %v708 = vmul.f32 %v452, 0.2
  %v709 = vmul.f32 %v453, 0.2
  %v710 = vmul.f32 %v454, 0.2
  %v711 = vmul.f32 %v455, 0.2
  %v712 = vmul.f32 %v456, 0.2
  %v713 = vmul.f32 %v457, 0.2
  %v714 = vmul.f32 %v458, 0.2
  %v715 = vmul.f32 %v459, 0.2
  %v716 = vmul.f32 %v460, 0.2
  %v717 = vmul.f32 %v461, 0.2
  %v718 = vmul.f32 %v462, 0.2
  %v719 = vmul.f32 %v463, 0.2
  %v720 = vmul.f32 %v464, 0.2
  %v721 = vmul.f32 %v465, 0.2
  %v722 = vmul.f32 %v466, 0.2
  %v723 = vmul.f32 %v467, 0.2
  %v724 = vmul.f32 %v468, 0.2
  %v725 = vmul.f32 %v469, 0.2
  %v726 = vmul.f32 %v470, 0.2
  %v727 = vmul.f32 %v471, 0.2
  %v728 = vmul.f32 %v472, 0.2
  %v729 = vmul.f32 %v473, 0.2
  %v730 = vmul.f32 %v474, 0.2
  %v731 = vmul.f32 %v475, 0.2
  %v732 = vmul.f32 %v476, 0.2
  %v733 = vmul.f32 %v477, 0.2
  %v734 = vmul.f32 %v478, 0.2
  %v735 = vmul.f32 %v479, 0.2
  %v736 = vmul.f32 %v480, 0.2
  %v737 = vmul.f32 %v481, 0.2
  %v738 = vmul.f32 %v482, 0.2
  %v739 = vmul.f32 %v483, 0.2
  %v740 = vmul.f32 %v484, 0.2
  %v741 = vmul.f32 %v485, 0.2
  %v742 = vmul.f32 %v486, 0.2
  %v743 = vmul.f32 %v487, 0.2
  %v744 = vmul.f32 %v488, 0.2
  %v745 = vmul.f32 %v489, 0.2
  %v746 = vmul.f32 %v490, 0.2
  %v747 = vmul.f32 %v491, 0.2
  %v748 = vmul.f32 %v492, 0.2
  %v749 = vmul.f32 %v493, 0.2
  %v750 = vmul.f32 %v494, 0.2
  %v751 = vmul.f32 %v495, 0.2
  %v752 = vmul.f32 %v496, 0.2
  %v753 = vmul.f32 %v497, 0.2
  %v754 = vmul.f32 %v498, 0.2
  %v755 = vmul.f32 %v499, 0.2
  %v756 = vmul.f32 %v500, 0.2
  %v757 = vmul.f32 %v501, 0.2
  %v758 = vmul.f32 %v502, 0.2
  %v759 = vsel %vm503, %v375, %v631
  %v760 = vsel %vm504, %v376, %v632
  %v761 = vsel %vm505, %v377, %v633
  %v762 = vsel %vm506, %v378, %v634
  %v763 = vsel %vm507, %v379, %v635
  %v764 = vsel %vm508, %v380, %v636
  %v765 = vsel %vm509, %v381, %v637
  %v766 = vsel %vm510, %v382, %v638
  %v767 = vsel %vm511, %v383, %v639
  %v768 = vsel %vm512, %v384, %v640
  %v769 = vsel %vm513, %v385, %v641
  %v770 = vsel %vm514, %v386, %v642
  %v771 = vsel %vm515, %v387, %v643
  %v772 = vsel %vm516, %v388, %v644
  %v773 = vsel %vm517, %v389, %v645
  %v774 = vsel %vm518, %v390, %v646
  %v775 = vsel %vm519, %v391, %v647
  %v776 = vsel %vm520, %v392, %v648
  %v777 = vsel %vm521, %v393, %v649
  %v778 = vsel %vm522, %v394, %v650
  %v779 = vsel %vm523, %v395, %v651
  %v780 = vsel %vm524, %v396, %v652
  %v781 = vsel %vm525, %v397, %v653
  %v782 = vsel %vm526, %v398, %v654
  %v783 = vsel %vm527, %v399, %v655
  %v784 = vsel %vm528, %v400, %v656
  %v785 = vsel %vm529, %v401, %v657
  %v786 = vsel %vm530, %v402, %v658
  %v787 = vsel %vm531, %v403, %v659
  %v788 = vsel %vm532, %v404, %v660
  %v789 = vsel %vm533, %v405, %v661
  %v790 = vsel %vm534, %v406, %v662
  %v791 = vsel %vm535, %v407, %v663
  %v792 = vsel %vm536, %v408, %v664
  %v793 = vsel %vm537, %v409, %v665
  %v794 = vsel %vm538, %v410, %v666
  %v795 = vsel %vm539, %v411, %v667
  %v796 = vsel %vm540, %v412, %v668
  %v797 = vsel %vm541, %v413, %v669
  %v798 = vsel %vm542, %v414, %v670
  %v799 = vsel %vm543, %v415, %v671
  %v800 = vsel %vm544, %v416, %v672
  %v801 = vsel %vm545, %v417, %v673
  %v802 = vsel %vm546, %v418, %v674
  %v803 = vsel %vm547, %v419, %v675
  %v804 = vsel %vm548, %v420, %v676
  %v805 = vsel %vm549, %v421, %v677
  %v806 = vsel %vm550, %v422, %v678
  %v807 = vsel %vm551, %v423, %v679
  %v808 = vsel %vm552, %v424, %v680
  %v809 = vsel %vm553, %v425, %v681
  %v810 = vsel %vm554, %v426, %v682
  %v811 = vsel %vm555, %v427, %v683
  %v812 = vsel %vm556, %v428, %v684
  %v813 = vsel %vm557, %v429, %v685
  %v814 = vsel %vm558, %v430, %v686
  %v815 = vsel %vm559, %v431, %v687
  %v816 = vsel %vm560, %v432, %v688
  %v817 = vsel %vm561, %v433, %v689
  %v818 = vsel %vm562, %v434, %v690
  %v819 = vsel %vm563, %v435, %v691
  %v820 = vsel %vm564, %v436, %v692
  %v821 = vsel %vm565, %v437, %v693
  %v822 = vsel %vm566, %v438, %v694
  %v823 = vsel %vm567, %v439, %v695
  %v824 = vsel %vm568, %v440, %v696
  %v825 = vsel %vm569, %v441, %v697
  %v826 = vsel %vm570, %v442, %v698
  %v827 = vsel %vm571, %v443, %v699
  %v828 = vsel %vm572, %v444, %v700
  %v829 = vsel %vm573, %v445, %v701
  %v830 = vsel %vm574, %v446, %v702
  %v831 = vsel %vm575, %v447, %v703
  %v832 = vsel %vm576, %v448, %v704
  %v833 = vsel %vm577, %v449, %v705
  %v834 = vsel %vm578, %v450, %v706
  %v835 = vsel %vm579, %v451, %v707
  %v836 = vsel %vm580, %v452, %v708
  %v837 = vsel %vm581, %v453, %v709
  %v838 = vsel %vm582, %v454, %v710
  %v839 = vsel %vm583, %v455, %v711
  %v840 = vsel %vm584, %v456, %v712
  %v841 = vsel %vm585, %v457, %v713
  %v842 = vsel %vm586, %v458, %v714
  %v843 = vsel %vm587, %v459, %v715
  %v844 = vsel %vm588, %v460, %v716
  %v845 = vsel %vm589, %v461, %v717
  %v846 = vsel %vm590, %v462, %v718
  %v847 = vsel %vm591, %v463, %v719
  %v848 = vsel %vm592, %v464, %v720
  %v849 = vsel %vm593, %v465, %v721
  %v850 = vsel %vm594, %v466, %v722
  %v851 = vsel %vm595, %v467, %v723
  %v852 = vsel %vm596, %v468, %v724
  %v853 = vsel %vm597, %v469, %v725
  %v854 = vsel %vm598, %v470, %v726
  %v855 = vsel %vm599, %v471, %v727
  %v856 = vsel %vm600, %v472, %v728
  %v857 = vsel %vm601, %v473, %v729
  %v858 = vsel %vm602, %v474, %v730
  %v859 = vsel %vm603, %v475, %v731
  %v860 = vsel %vm604, %v476, %v732
  %v861 = vsel %vm605, %v477, %v733
  %v862 = vsel %vm606, %v478, %v734
  %v863 = vsel %vm607, %v479, %v735
  %v864 = vsel %vm608, %v480, %v736
  %v865 = vsel %vm609, %v481, %v737
  %v866 = vsel %vm610, %v482, %v738
  %v867 = vsel %vm611, %v483, %v739
  %v868 = vsel %vm612, %v484, %v740
  %v869 = vsel %vm613, %v485, %v741
  %v870 = vsel %vm614, %v486, %v742
  %v871 = vsel %vm615, %v487, %v743
  %v872 = vsel %vm616, %v488, %v744
  %v873 = vsel %vm617, %v489, %v745
  %v874 = vsel %vm618, %v490, %v746
  %v875 = vsel %vm619, %v491, %v747
  %v876 = vsel %vm620, %v492, %v748
  %v877 = vsel %vm621, %v493, %v749
  %v878 = vsel %vm622, %v494, %v750
  %v879 = vsel %vm623, %v495, %v751
  %v880 = vsel %vm624, %v496, %v752
  %v881 = vsel %vm625, %v497, %v753
  %v882 = vsel %vm626, %v498, %v754
  %v883 = vsel %vm627, %v499, %v755
  %v884 = vsel %vm628, %v500, %v756
  %v885 = vsel %vm629, %v501, %v757
  %v886 = vsel %vm630, %v502, %v758
  %v887 = vpack.c.bf16 %v761, %v759
  %v888 = vpack.c.bf16 %v762, %v760
  %v889 = vpack.c.bf16 %v765, %v763
  %v890 = vpack.c.bf16 %v766, %v764
  %v891 = vpack.c.bf16 %v769, %v767
  %v892 = vpack.c.bf16 %v770, %v768
  %v893 = vpack.c.bf16 %v773, %v771
  %v894 = vpack.c.bf16 %v774, %v772
  %v895 = vpack.c.bf16 %v777, %v775
  %v896 = vpack.c.bf16 %v778, %v776
  %v897 = vpack.c.bf16 %v781, %v779
  %v898 = vpack.c.bf16 %v782, %v780
  %v899 = vpack.c.bf16 %v785, %v783
  %v900 = vpack.c.bf16 %v786, %v784
  %v901 = vpack.c.bf16 %v789, %v787
  %v902 = vpack.c.bf16 %v790, %v788
  %v903 = vpack.c.bf16 %v793, %v791
  %v904 = vpack.c.bf16 %v794, %v792
  %v905 = vpack.c.bf16 %v797, %v795
  %v906 = vpack.c.bf16 %v798, %v796
  %v907 = vpack.c.bf16 %v801, %v799
  %v908 = vpack.c.bf16 %v802, %v800
  %v909 = vpack.c.bf16 %v805, %v803
  %v910 = vpack.c.bf16 %v806, %v804
  %v911 = vpack.c.bf16 %v809, %v807
  %v912 = vpack.c.bf16 %v810, %v808
  %v913 = vpack.c.bf16 %v813, %v811
  %v914 = vpack.c.bf16 %v814, %v812
  %v915 = vpack.c.bf16 %v817, %v815
  %v916 = vpack.c.bf16 %v818, %v816
  %v917 = vpack.c.bf16 %v821, %v819
  %v918 = vpack.c.bf16 %v822, %v820
  %v919 = vpack.c.bf16 %v825, %v823
  %v920 = vpack.c.bf16 %v826, %v824
  %v921 = vpack.c.bf16 %v829, %v827
  %v922 = vpack.c.bf16 %v830, %v828
  %v923 = vpack.c.bf16 %v833, %v831
  %v924 = vpack.c.bf16 %v834, %v832
  %v925 = vpack.c.bf16 %v837, %v835
  %v926 = vpack.c.bf16 %v838, %v836
  %v927 = vpack.c.bf16 %v841, %v839
  %v928 = vpack.c.bf16 %v842, %v840
  %v929 = vpack.c.bf16 %v845, %v843
  %v930 = vpack.c.bf16 %v846, %v844
  %v931 = vpack.c.bf16 %v849, %v847
  %v932 = vpack.c.bf16 %v850, %v848
  %v933 = vpack.c.bf16 %v853, %v851
  %v934 = vpack.c.bf16 %v854, %v852
  %v935 = vpack.c.bf16 %v857, %v855
  %v936 = vpack.c.bf16 %v858, %v856
  %v937 = vpack.c.bf16 %v861, %v859
  %v938 = vpack.c.bf16 %v862, %v860
  %v939 = vpack.c.bf16 %v865, %v863
  %v940 = vpack.c.bf16 %v866, %v864
  %v941 = vpack.c.bf16 %v869, %v867
  %v942 = vpack.c.bf16 %v870, %v868
  %v943 = vpack.c.bf16 %v873, %v871
  %v944 = vpack.c.bf16 %v874, %v872
  %v945 = vpack.c.bf16 %v877, %v875
  %v946 = vpack.c.bf16 %v878, %v876
  %v947 = vpack.c.bf16 %v881, %v879
  %v948 = vpack.c.bf16 %v882, %v880
  %v949 = vpack.c.bf16 %v885, %v883
  %v950 = vpack.c.bf16 %v886, %v884
  %v951 = vld [vmem:[%s3] sm:$0xff]
  %v952 = vld [vmem:[%s3 + $0x8] sm:$0xff]
  %v953 = vld [vmem:[%s3 + $0x10] sm:$0xff]
  %v954 = vld [vmem:[%s3 + $0x18] sm:$0xff]
  %v955 = vld [vmem:[%s3 + $0x20] sm:$0xff]
  %v956 = vld [vmem:[%s3 + $0x28] sm:$0xff]
  %v957 = vld [vmem:[%s3 + $0x30] sm:$0xff]
  %v958 = vld [vmem:[%s3 + $0x38] sm:$0xff]
  %v959 = vld [vmem:[%s3 + $0x40] sm:$0xff]
  %v960 = vld [vmem:[%s3 + $0x48] sm:$0xff]
  %v961 = vld [vmem:[%s3 + $0x50] sm:$0xff]
  %v962 = vld [vmem:[%s3 + $0x58] sm:$0xff]
  %v963 = vld [vmem:[%s3 + $0x60] sm:$0xff]
  %v964 = vld [vmem:[%s3 + $0x68] sm:$0xff]
  %v965 = vld [vmem:[%s3 + $0x70] sm:$0xff]
  %v966 = vld [vmem:[%s3 + $0x78] sm:$0xff]
  %v967 = vld [vmem:[%s3 + $0x80] sm:$0xff]
  %v968 = vld [vmem:[%s3 + $0x88] sm:$0xff]
  %v969 = vld [vmem:[%s3 + $0x90] sm:$0xff]
  %v970 = vld [vmem:[%s3 + $0x98] sm:$0xff]
  %v971 = vld [vmem:[%s3 + $0xa0] sm:$0xff]
  %v972 = vld [vmem:[%s3 + $0xa8] sm:$0xff]
  %v973 = vld [vmem:[%s3 + $0xb0] sm:$0xff]
  %v974 = vld [vmem:[%s3 + $0xb8] sm:$0xff]
  %v975 = vld [vmem:[%s3 + $0xc0] sm:$0xff]
  %v976 = vld [vmem:[%s3 + $0xc8] sm:$0xff]
  %v977 = vld [vmem:[%s3 + $0xd0] sm:$0xff]
  %v978 = vld [vmem:[%s3 + $0xd8] sm:$0xff]
  %v979 = vld [vmem:[%s3 + $0xe0] sm:$0xff]
  %v980 = vld [vmem:[%s3 + $0xe8] sm:$0xff]
  %v981 = vld [vmem:[%s3 + $0xf0] sm:$0xff]
  %v982 = vld [vmem:[%s3 + $0xf8] sm:$0xff]
  %v983 = vld [vmem:[%s3 + $0x100] sm:$0xff]
  %v984 = vld [vmem:[%s3 + $0x108] sm:$0xff]
  %v985 = vld [vmem:[%s3 + $0x110] sm:$0xff]
  %v986 = vld [vmem:[%s3 + $0x118] sm:$0xff]
  %v987 = vld [vmem:[%s3 + $0x120] sm:$0xff]
  %v988 = vld [vmem:[%s3 + $0x128] sm:$0xff]
  %v989 = vld [vmem:[%s3 + $0x130] sm:$0xff]
  %v990 = vld [vmem:[%s3 + $0x138] sm:$0xff]
  %v991 = vld [vmem:[%s3 + $0x140] sm:$0xff]
  %v992 = vld [vmem:[%s3 + $0x148] sm:$0xff]
  %v993 = vld [vmem:[%s3 + $0x150] sm:$0xff]
  %v994 = vld [vmem:[%s3 + $0x158] sm:$0xff]
  %v995 = vld [vmem:[%s3 + $0x160] sm:$0xff]
  %v996 = vld [vmem:[%s3 + $0x168] sm:$0xff]
  %v997 = vld [vmem:[%s3 + $0x170] sm:$0xff]
  %v998 = vld [vmem:[%s3 + $0x178] sm:$0xff]
  %v999 = vld [vmem:[%s3 + $0x180] sm:$0xff]
  %v1000 = vld [vmem:[%s3 + $0x188] sm:$0xff]
  %v1001 = vld [vmem:[%s3 + $0x190] sm:$0xff]
  %v1002 = vld [vmem:[%s3 + $0x198] sm:$0xff]
  %v1003 = vld [vmem:[%s3 + $0x1a0] sm:$0xff]
  %v1004 = vld [vmem:[%s3 + $0x1a8] sm:$0xff]
  %v1005 = vld [vmem:[%s3 + $0x1b0] sm:$0xff]
  %v1006 = vld [vmem:[%s3 + $0x1b8] sm:$0xff]
  %v1007 = vld [vmem:[%s3 + $0x1c0] sm:$0xff]
  %v1008 = vld [vmem:[%s3 + $0x1c8] sm:$0xff]
  %v1009 = vld [vmem:[%s3 + $0x1d0] sm:$0xff]
  %v1010 = vld [vmem:[%s3 + $0x1d8] sm:$0xff]
  %v1011 = vld [vmem:[%s3 + $0x1e0] sm:$0xff]
  %v1012 = vld [vmem:[%s3 + $0x1e8] sm:$0xff]
  %v1013 = vld [vmem:[%s3 + $0x1f0] sm:$0xff]
  %v1014 = vld [vmem:[%s3 + $0x1f8] sm:$0xff]
  %v1079 = vunpack.c.l.b16 %v951
  %v1080 = vunpack.c.h.b16 %v951
  %v1081 = vunpack.c.l.b16 %v952
  %v1082 = vunpack.c.h.b16 %v952
  %v1083 = vunpack.c.l.b16 %v953
  %v1084 = vunpack.c.h.b16 %v953
  %v1085 = vunpack.c.l.b16 %v954
  %v1086 = vunpack.c.h.b16 %v954
  %v1087 = vunpack.c.l.b16 %v955
  %v1088 = vunpack.c.h.b16 %v955
  %v1089 = vunpack.c.l.b16 %v956
  %v1090 = vunpack.c.h.b16 %v956
  %v1091 = vunpack.c.l.b16 %v957
  %v1092 = vunpack.c.h.b16 %v957
  %v1093 = vunpack.c.l.b16 %v958
  %v1094 = vunpack.c.h.b16 %v958
  %v1095 = vunpack.c.l.b16 %v959
  %v1096 = vunpack.c.h.b16 %v959
  %v1097 = vunpack.c.l.b16 %v960
  %v1098 = vunpack.c.h.b16 %v960
  %v1099 = vunpack.c.l.b16 %v961
  %v1100 = vunpack.c.h.b16 %v961
  %v1101 = vunpack.c.l.b16 %v962
  %v1102 = vunpack.c.h.b16 %v962
  %v1103 = vunpack.c.l.b16 %v963
  %v1104 = vunpack.c.h.b16 %v963
  %v1105 = vunpack.c.l.b16 %v964
  %v1106 = vunpack.c.h.b16 %v964
  %v1107 = vunpack.c.l.b16 %v965
  %v1108 = vunpack.c.h.b16 %v965
  %v1109 = vunpack.c.l.b16 %v966
  %v1110 = vunpack.c.h.b16 %v966
  %v1111 = vunpack.c.l.b16 %v967
  %v1112 = vunpack.c.h.b16 %v967
  %v1113 = vunpack.c.l.b16 %v968
  %v1114 = vunpack.c.h.b16 %v968
  %v1115 = vunpack.c.l.b16 %v969
  %v1116 = vunpack.c.h.b16 %v969
  %v1117 = vunpack.c.l.b16 %v970
  %v1118 = vunpack.c.h.b16 %v970
  %v1119 = vunpack.c.l.b16 %v971
  %v1120 = vunpack.c.h.b16 %v971
  %v1121 = vunpack.c.l.b16 %v972
  %v1122 = vunpack.c.h.b16 %v972
  %v1123 = vunpack.c.l.b16 %v973
  %v1124 = vunpack.c.h.b16 %v973
  %v1125 = vunpack.c.l.b16 %v974
  %v1126 = vunpack.c.h.b16 %v974
  %v1127 = vunpack.c.l.b16 %v975
  %v1128 = vunpack.c.h.b16 %v975
  %v1129 = vunpack.c.l.b16 %v976
  %v1130 = vunpack.c.h.b16 %v976
  %v1131 = vunpack.c.l.b16 %v977
  %v1132 = vunpack.c.h.b16 %v977
  %v1133 = vunpack.c.l.b16 %v978
  %v1134 = vunpack.c.h.b16 %v978
  %v1135 = vunpack.c.l.b16 %v979
  %v1136 = vunpack.c.h.b16 %v979
  %v1137 = vunpack.c.l.b16 %v980
  %v1138 = vunpack.c.h.b16 %v980
  %v1139 = vunpack.c.l.b16 %v981
  %v1140 = vunpack.c.h.b16 %v981
  %v1141 = vunpack.c.l.b16 %v982
  %v1142 = vunpack.c.h.b16 %v982
  %v1143 = vunpack.c.l.b16 %v983
  %v1144 = vunpack.c.h.b16 %v983
  %v1145 = vunpack.c.l.b16 %v984
  %v1146 = vunpack.c.h.b16 %v984
  %v1147 = vunpack.c.l.b16 %v985
  %v1148 = vunpack.c.h.b16 %v985
  %v1149 = vunpack.c.l.b16 %v986
  %v1150 = vunpack.c.h.b16 %v986
  %v1151 = vunpack.c.l.b16 %v987
  %v1152 = vunpack.c.h.b16 %v987
  %v1153 = vunpack.c.l.b16 %v988
  %v1154 = vunpack.c.h.b16 %v988
  %v1155 = vunpack.c.l.b16 %v989
  %v1156 = vunpack.c.h.b16 %v989
  %v1157 = vunpack.c.l.b16 %v990
  %v1158 = vunpack.c.h.b16 %v990
  %v1159 = vunpack.c.l.b16 %v991
  %v1160 = vunpack.c.h.b16 %v991
  %v1161 = vunpack.c.l.b16 %v992
  %v1162 = vunpack.c.h.b16 %v992
  %v1163 = vunpack.c.l.b16 %v993
  %v1164 = vunpack.c.h.b16 %v993
  %v1165 = vunpack.c.l.b16 %v994
  %v1166 = vunpack.c.h.b16 %v994
  %v1167 = vunpack.c.l.b16 %v995
  %v1168 = vunpack.c.h.b16 %v995
  %v1169 = vunpack.c.l.b16 %v996
  %v1170 = vunpack.c.h.b16 %v996
  %v1171 = vunpack.c.l.b16 %v997
  %v1172 = vunpack.c.h.b16 %v997
  %v1173 = vunpack.c.l.b16 %v998
  %v1174 = vunpack.c.h.b16 %v998
  %v1175 = vunpack.c.l.b16 %v999
  %v1176 = vunpack.c.h.b16 %v999
  %v1177 = vunpack.c.l.b16 %v1000
  %v1178 = vunpack.c.h.b16 %v1000
  %v1179 = vunpack.c.l.b16 %v1001
  %v1180 = vunpack.c.h.b16 %v1001
  %v1181 = vunpack.c.l.b16 %v1002
  %v1182 = vunpack.c.h.b16 %v1002
  %v1183 = vunpack.c.l.b16 %v1003
  %v1184 = vunpack.c.h.b16 %v1003
  %v1185 = vunpack.c.l.b16 %v1004
  %v1186 = vunpack.c.h.b16 %v1004
  %v1187 = vunpack.c.l.b16 %v1005
  %v1188 = vunpack.c.h.b16 %v1005
  %v1189 = vunpack.c.l.b16 %v1006
  %v1190 = vunpack.c.h.b16 %v1006
  %v1191 = vunpack.c.l.b16 %v1007
  %v1192 = vunpack.c.h.b16 %v1007
  %v1193 = vunpack.c.l.b16 %v1008
  %v1194 = vunpack.c.h.b16 %v1008
  %v1195 = vunpack.c.l.b16 %v1009
  %v1196 = vunpack.c.h.b16 %v1009
  %v1197 = vunpack.c.l.b16 %v1010
  %v1198 = vunpack.c.h.b16 %v1010
  %v1199 = vunpack.c.l.b16 %v1011
  %v1200 = vunpack.c.h.b16 %v1011
  %v1201 = vunpack.c.l.b16 %v1012
  %v1202 = vunpack.c.h.b16 %v1012
  %v1203 = vunpack.c.l.b16 %v1013
  %v1204 = vunpack.c.h.b16 %v1013
  %v1205 = vunpack.c.l.b16 %v1014
  %v1206 = vunpack.c.h.b16 %v1014
  %v1207 = vpack.c.b16 %v1083, %v1079
  %v1208 = vpack.c.b16 %v1084, %v1080
  %v1209 = vpack.c.b16 %v1085, %v1081
  %v1210 = vpack.c.b16 %v1086, %v1082
  %v1211 = vpack.c.b16 %v1091, %v1087
  %v1212 = vpack.c.b16 %v1092, %v1088
  %v1213 = vpack.c.b16 %v1093, %v1089
  %v1214 = vpack.c.b16 %v1094, %v1090
  %v1215 = vpack.c.b16 %v1099, %v1095
  %v1216 = vpack.c.b16 %v1100, %v1096
  %v1217 = vpack.c.b16 %v1101, %v1097
  %v1218 = vpack.c.b16 %v1102, %v1098
  %v1219 = vpack.c.b16 %v1107, %v1103
  %v1220 = vpack.c.b16 %v1108, %v1104
  %v1221 = vpack.c.b16 %v1109, %v1105
  %v1222 = vpack.c.b16 %v1110, %v1106
  %v1223 = vpack.c.b16 %v1115, %v1111
  %v1224 = vpack.c.b16 %v1116, %v1112
  %v1225 = vpack.c.b16 %v1117, %v1113
  %v1226 = vpack.c.b16 %v1118, %v1114
  %v1227 = vpack.c.b16 %v1123, %v1119
  %v1228 = vpack.c.b16 %v1124, %v1120
  %v1229 = vpack.c.b16 %v1125, %v1121
  %v1230 = vpack.c.b16 %v1126, %v1122
  %v1231 = vpack.c.b16 %v1131, %v1127
  %v1232 = vpack.c.b16 %v1132, %v1128
  %v1233 = vpack.c.b16 %v1133, %v1129
  %v1234 = vpack.c.b16 %v1134, %v1130
  %v1235 = vpack.c.b16 %v1139, %v1135
  %v1236 = vpack.c.b16 %v1140, %v1136
  %v1237 = vpack.c.b16 %v1141, %v1137
  %v1238 = vpack.c.b16 %v1142, %v1138
  %v1239 = vpack.c.b16 %v1147, %v1143
  %v1240 = vpack.c.b16 %v1148, %v1144
  %v1241 = vpack.c.b16 %v1149, %v1145
  %v1242 = vpack.c.b16 %v1150, %v1146
  %v1243 = vpack.c.b16 %v1155, %v1151
  %v1244 = vpack.c.b16 %v1156, %v1152
  %v1245 = vpack.c.b16 %v1157, %v1153
  %v1246 = vpack.c.b16 %v1158, %v1154
  %v1247 = vpack.c.b16 %v1163, %v1159
  %v1248 = vpack.c.b16 %v1164, %v1160
  %v1249 = vpack.c.b16 %v1165, %v1161
  %v1250 = vpack.c.b16 %v1166, %v1162
  %v1251 = vpack.c.b16 %v1171, %v1167
  %v1252 = vpack.c.b16 %v1172, %v1168
  %v1253 = vpack.c.b16 %v1173, %v1169
  %v1254 = vpack.c.b16 %v1174, %v1170
  %v1255 = vpack.c.b16 %v1179, %v1175
  %v1256 = vpack.c.b16 %v1180, %v1176
  %v1257 = vpack.c.b16 %v1181, %v1177
  %v1258 = vpack.c.b16 %v1182, %v1178
  %v1259 = vpack.c.b16 %v1187, %v1183
  %v1260 = vpack.c.b16 %v1188, %v1184
  %v1261 = vpack.c.b16 %v1189, %v1185
  %v1262 = vpack.c.b16 %v1190, %v1186
  %v1263 = vpack.c.b16 %v1195, %v1191
  %v1264 = vpack.c.b16 %v1196, %v1192
  %v1265 = vpack.c.b16 %v1197, %v1193
  %v1266 = vpack.c.b16 %v1198, %v1194
  %v1267 = vpack.c.b16 %v1203, %v1199
  %v1268 = vpack.c.b16 %v1204, %v1200
  %v1269 = vpack.c.b16 %v1205, %v1201
  %v1270 = vpack.c.b16 %v1206, %v1202
  %1335 = vmatprep.subr.bf16.mxu0 %v1208
  %1336 = vmatpush1.bf16.msra.mxu0 %v1207
  %1337 = vmatprep.subr.bf16.mxu0 %v1212
  %1338 = vmatpush1.bf16.msra.mxu0 %v1211
  %1339 = vmatprep.subr.bf16.mxu0 %v1216
  %1340 = vmatpush1.bf16.msra.mxu0 %v1215
  %1341 = vmatprep.subr.bf16.mxu0 %v1220
  %1342 = vmatpush1.bf16.msra.mxu0 %v1219
  %1343 = vmatprep.subr.bf16.mxu0 %v1224
  %1344 = vmatpush1.bf16.msra.mxu0 %v1223
  %1345 = vmatprep.subr.bf16.mxu0 %v1228
  %1346 = vmatpush1.bf16.msra.mxu0 %v1227
  %1347 = vmatprep.subr.bf16.mxu0 %v1232
  %1348 = vmatpush1.bf16.msra.mxu0 %v1231
  %1349 = vmatprep.subr.bf16.mxu0 %v1236
  %1350 = vmatpush1.bf16.msra.mxu0 %v1235
  %1351 = vmatprep.subr.bf16.mxu0 %v1240
  %1352 = vmatpush1.bf16.msra.mxu0 %v1239
  %1353 = vmatprep.subr.bf16.mxu0 %v1244
  %1354 = vmatpush1.bf16.msra.mxu0 %v1243
  %1355 = vmatprep.subr.bf16.mxu0 %v1248
  %1356 = vmatpush1.bf16.msra.mxu0 %v1247
  %1357 = vmatprep.subr.bf16.mxu0 %v1252
  %1358 = vmatpush1.bf16.msra.mxu0 %v1251
  %1359 = vmatprep.subr.bf16.mxu0 %v1256
  %1360 = vmatpush1.bf16.msra.mxu0 %v1255
  %1361 = vmatprep.subr.bf16.mxu0 %v1260
  %1362 = vmatpush1.bf16.msra.mxu0 %v1259
  %1363 = vmatprep.subr.bf16.mxu0 %v1264
  %1364 = vmatpush1.bf16.msra.mxu0 %v1263
  %1365 = vmatprep.subr.bf16.mxu0 %v1268
  %1366 = vmatpush1.bf16.msra.mxu0 %v1267
  %1367 = vmatprep.mubr.bf16.mxu0 %v888
  %1368 = vmatmul.mubr.bf16.gmra.mrb[0].mxu0 %v887
  %v1369 = vpop.f32.mrb[0].mxu0
  %v1370 = vadd.f32 0.0, %v1369
  %v1371 = vpop.f32.mrb[0].mxu0
  %v1372 = vadd.f32 0.0, %v1371
  %v1373 = vpop.f32.mrb[0].mxu0
  %v1374 = vadd.f32 0.0, %v1373
  %v1375 = vpop.f32.mrb[0].mxu0
  %v1376 = vadd.f32 0.0, %v1375
  %1377 = vmatprep.mubr.bf16.mxu0 %v890
  %1378 = vmatmul.mubr.bf16.gmra.mrb[0].mxu0 %v889
  %v1379 = vpop.f32.mrb[0].mxu0
  %v1380 = vadd.f32 0.0, %v1379
  %v1381 = vpop.f32.mrb[0].mxu0
  %v1382 = vadd.f32 0.0, %v1381
  %v1383 = vpop.f32.mrb[0].mxu0
  %v1384 = vadd.f32 0.0, %v1383
  %v1385 = vpop.f32.mrb[0].mxu0
  %v1386 = vadd.f32 0.0, %v1385
  %1387 = vmatprep.mubr.bf16.mxu0 %v892
  %1388 = vmatmul.mubr.bf16.gmra.mrb[0].mxu0 %v891
  %v1389 = vpop.f32.mrb[0].mxu0
  %v1390 = vadd.f32 0.0, %v1389
  %v1391 = vpop.f32.mrb[0].mxu0
  %v1392 = vadd.f32 0.0, %v1391
  %v1393 = vpop.f32.mrb[0].mxu0
  %v1394 = vadd.f32 0.0, %v1393
  %v1395 = vpop.f32.mrb[0].mxu0
  %v1396 = vadd.f32 0.0, %v1395
  %1397 = vmatprep.mubr.bf16.mxu0 %v894
  %1398 = vmatmul.mubr.bf16.gmra.mrb[0].mxu0 %v893
  %v1399 = vpop.f32.mrb[0].mxu0
  %v1400 = vadd.f32 0.0, %v1399
  %v1401 = vpop.f32.mrb[0].mxu0
  %v1402 = vadd.f32 0.0, %v1401
  %v1403 = vpop.f32.mrb[0].mxu0
  %v1404 = vadd.f32 0.0, %v1403
  %v1405 = vpop.f32.mrb[0].mxu0
  %v1406 = vadd.f32 0.0, %v1405
  %1407 = vmatprep.mubr.bf16.mxu0 %v896
  %1408 = vmatmul.mubr.bf16.gmra.mrb[0].mxu0 %v895
  %v1409 = vpop.f32.mrb[0].mxu0
  %v1410 = vadd.f32 0.0, %v1409
  %v1411 = vpop.f32.mrb[0].mxu0
  %v1412 = vadd.f32 0.0, %v1411
  %v1413 = vpop.f32.mrb[0].mxu0
  %v1414 = vadd.f32 0.0, %v1413
  %v1415 = vpop.f32.mrb[0].mxu0
  %v1416 = vadd.f32 0.0, %v1415
  %1417 = vmatprep.mubr.bf16.mxu0 %v898
  %1418 = vmatmul.mubr.bf16.gmra.mrb[0].mxu0 %v897
  %v1419 = vpop.f32.mrb[0].mxu0
  %v1420 = vadd.f32 0.0, %v1419
  %v1421 = vpop.f32.mrb[0].mxu0
  %v1422 = vadd.f32 0.0, %v1421
  %v1423 = vpop.f32.mrb[0].mxu0
  %v1424 = vadd.f32 0.0, %v1423
  %v1425 = vpop.f32.mrb[0].mxu0
  %v1426 = vadd.f32 0.0, %v1425
  %1427 = vmatprep.mubr.bf16.mxu0 %v900
  %1428 = vmatmul.mubr.bf16.gmra.mrb[0].mxu0 %v899
  %v1429 = vpop.f32.mrb[0].mxu0
  %v1430 = vadd.f32 0.0, %v1429
  %v1431 = vpop.f32.mrb[0].mxu0
  %v1432 = vadd.f32 0.0, %v1431
  %v1433 = vpop.f32.mrb[0].mxu0
  %v1434 = vadd.f32 0.0, %v1433
  %v1435 = vpop.f32.mrb[0].mxu0
  %v1436 = vadd.f32 0.0, %v1435
  %1437 = vmatprep.mubr.bf16.mxu0 %v902
  %1438 = vmatmul.mubr.bf16.gmra.mrb[0].mxu0 %v901
  %v1439 = vpop.f32.mrb[0].mxu0
  %v1440 = vadd.f32 0.0, %v1439
  %v1441 = vpop.f32.mrb[0].mxu0
  %v1442 = vadd.f32 0.0, %v1441
  %v1443 = vpop.f32.mrb[0].mxu0
  %v1444 = vadd.f32 0.0, %v1443
  %v1445 = vpop.f32.mrb[0].mxu0
  %v1446 = vadd.f32 0.0, %v1445
  %1447 = vmatprep.mubr.bf16.mxu0 %v904
  %1448 = vmatmul.mubr.bf16.gmra.mrb[0].mxu0 %v903
  %v1449 = vpop.f32.mrb[0].mxu0
  %v1450 = vadd.f32 0.0, %v1449
  %v1451 = vpop.f32.mrb[0].mxu0
  %v1452 = vadd.f32 0.0, %v1451
  %v1453 = vpop.f32.mrb[0].mxu0
  %v1454 = vadd.f32 0.0, %v1453
  %v1455 = vpop.f32.mrb[0].mxu0
  %v1456 = vadd.f32 0.0, %v1455
  %1457 = vmatprep.mubr.bf16.mxu0 %v906
  %1458 = vmatmul.mubr.bf16.gmra.mrb[0].mxu0 %v905
  %v1459 = vpop.f32.mrb[0].mxu0
  %v1460 = vadd.f32 0.0, %v1459
  %v1461 = vpop.f32.mrb[0].mxu0
  %v1462 = vadd.f32 0.0, %v1461
  %v1463 = vpop.f32.mrb[0].mxu0
  %v1464 = vadd.f32 0.0, %v1463
  %v1465 = vpop.f32.mrb[0].mxu0
  %v1466 = vadd.f32 0.0, %v1465
  %1467 = vmatprep.mubr.bf16.mxu0 %v908
  %1468 = vmatmul.mubr.bf16.gmra.mrb[0].mxu0 %v907
  %v1469 = vpop.f32.mrb[0].mxu0
  %v1470 = vadd.f32 0.0, %v1469
  %v1471 = vpop.f32.mrb[0].mxu0
  %v1472 = vadd.f32 0.0, %v1471
  %v1473 = vpop.f32.mrb[0].mxu0
  %v1474 = vadd.f32 0.0, %v1473
  %v1475 = vpop.f32.mrb[0].mxu0
  %v1476 = vadd.f32 0.0, %v1475
  %1477 = vmatprep.mubr.bf16.mxu0 %v910
  %1478 = vmatmul.mubr.bf16.gmra.mrb[0].mxu0 %v909
  %v1479 = vpop.f32.mrb[0].mxu0
  %v1480 = vadd.f32 0.0, %v1479
  %v1481 = vpop.f32.mrb[0].mxu0
  %v1482 = vadd.f32 0.0, %v1481
  %v1483 = vpop.f32.mrb[0].mxu0
  %v1484 = vadd.f32 0.0, %v1483
  %v1485 = vpop.f32.mrb[0].mxu0
  %v1486 = vadd.f32 0.0, %v1485
  %1487 = vmatprep.mubr.bf16.mxu0 %v912
  %1488 = vmatmul.mubr.bf16.gmra.mrb[0].mxu0 %v911
  %v1489 = vpop.f32.mrb[0].mxu0
  %v1490 = vadd.f32 0.0, %v1489
  %v1491 = vpop.f32.mrb[0].mxu0
  %v1492 = vadd.f32 0.0, %v1491
  %v1493 = vpop.f32.mrb[0].mxu0
  %v1494 = vadd.f32 0.0, %v1493
  %v1495 = vpop.f32.mrb[0].mxu0
  %v1496 = vadd.f32 0.0, %v1495
  %1497 = vmatprep.mubr.bf16.mxu0 %v914
  %1498 = vmatmul.mubr.bf16.gmra.mrb[0].mxu0 %v913
  %v1499 = vpop.f32.mrb[0].mxu0
  %v1500 = vadd.f32 0.0, %v1499
  %v1501 = vpop.f32.mrb[0].mxu0
  %v1502 = vadd.f32 0.0, %v1501
  %v1503 = vpop.f32.mrb[0].mxu0
  %v1504 = vadd.f32 0.0, %v1503
  %v1505 = vpop.f32.mrb[0].mxu0
  %v1506 = vadd.f32 0.0, %v1505
  %1507 = vmatprep.mubr.bf16.mxu0 %v916
  %1508 = vmatmul.mubr.bf16.gmra.mrb[0].mxu0 %v915
  %v1509 = vpop.f32.mrb[0].mxu0
  %v1510 = vadd.f32 0.0, %v1509
  %v1511 = vpop.f32.mrb[0].mxu0
  %v1512 = vadd.f32 0.0, %v1511
  %v1513 = vpop.f32.mrb[0].mxu0
  %v1514 = vadd.f32 0.0, %v1513
  %v1515 = vpop.f32.mrb[0].mxu0
  %v1516 = vadd.f32 0.0, %v1515
  %1517 = vmatprep.mubr.bf16.mxu0 %v918
  %1518 = vmatmul.mubr.bf16.gmra.mrb[0].mxu0 %v917
  %v1519 = vpop.f32.mrb[0].mxu0
  %v1520 = vadd.f32 0.0, %v1519
  %v1521 = vpop.f32.mrb[0].mxu0
  %v1522 = vadd.f32 0.0, %v1521
  %v1523 = vpop.f32.mrb[0].mxu0
  %v1524 = vadd.f32 0.0, %v1523
  %v1525 = vpop.f32.mrb[0].mxu0
  %v1526 = vadd.f32 0.0, %v1525
  %1527 = vmatprep.mubr.bf16.mxu0 %v920
  %1528 = vmatmul.mubr.bf16.gmra.mrb[0].mxu0 %v919
  %v1529 = vpop.f32.mrb[0].mxu0
  %v1530 = vadd.f32 0.0, %v1529
  %v1531 = vpop.f32.mrb[0].mxu0
  %v1532 = vadd.f32 0.0, %v1531
  %v1533 = vpop.f32.mrb[0].mxu0
  %v1534 = vadd.f32 0.0, %v1533
  %v1535 = vpop.f32.mrb[0].mxu0
  %v1536 = vadd.f32 0.0, %v1535
  %1537 = vmatprep.mubr.bf16.mxu0 %v922
  %1538 = vmatmul.mubr.bf16.gmra.mrb[0].mxu0 %v921
  %v1539 = vpop.f32.mrb[0].mxu0
  %v1540 = vadd.f32 0.0, %v1539
  %v1541 = vpop.f32.mrb[0].mxu0
  %v1542 = vadd.f32 0.0, %v1541
  %v1543 = vpop.f32.mrb[0].mxu0
  %v1544 = vadd.f32 0.0, %v1543
  %v1545 = vpop.f32.mrb[0].mxu0
  %v1546 = vadd.f32 0.0, %v1545
  %1547 = vmatprep.mubr.bf16.mxu0 %v924
  %1548 = vmatmul.mubr.bf16.gmra.mrb[0].mxu0 %v923
  %v1549 = vpop.f32.mrb[0].mxu0
  %v1550 = vadd.f32 0.0, %v1549
  %v1551 = vpop.f32.mrb[0].mxu0
  %v1552 = vadd.f32 0.0, %v1551
  %v1553 = vpop.f32.mrb[0].mxu0
  %v1554 = vadd.f32 0.0, %v1553
  %v1555 = vpop.f32.mrb[0].mxu0
  %v1556 = vadd.f32 0.0, %v1555
  %1557 = vmatprep.mubr.bf16.mxu0 %v926
  %1558 = vmatmul.mubr.bf16.gmra.mrb[0].mxu0 %v925
  %v1559 = vpop.f32.mrb[0].mxu0
  %v1560 = vadd.f32 0.0, %v1559
  %v1561 = vpop.f32.mrb[0].mxu0
  %v1562 = vadd.f32 0.0, %v1561
  %v1563 = vpop.f32.mrb[0].mxu0
  %v1564 = vadd.f32 0.0, %v1563
  %v1565 = vpop.f32.mrb[0].mxu0
  %v1566 = vadd.f32 0.0, %v1565
  %1567 = vmatprep.mubr.bf16.mxu0 %v928
  %1568 = vmatmul.mubr.bf16.gmra.mrb[0].mxu0 %v927
  %v1569 = vpop.f32.mrb[0].mxu0
  %v1570 = vadd.f32 0.0, %v1569
  %v1571 = vpop.f32.mrb[0].mxu0
  %v1572 = vadd.f32 0.0, %v1571
  %v1573 = vpop.f32.mrb[0].mxu0
  %v1574 = vadd.f32 0.0, %v1573
  %v1575 = vpop.f32.mrb[0].mxu0
  %v1576 = vadd.f32 0.0, %v1575
  %1577 = vmatprep.mubr.bf16.mxu0 %v930
  %1578 = vmatmul.mubr.bf16.gmra.mrb[0].mxu0 %v929
  %v1579 = vpop.f32.mrb[0].mxu0
  %v1580 = vadd.f32 0.0, %v1579
  %v1581 = vpop.f32.mrb[0].mxu0
  %v1582 = vadd.f32 0.0, %v1581
  %v1583 = vpop.f32.mrb[0].mxu0
  %v1584 = vadd.f32 0.0, %v1583
  %v1585 = vpop.f32.mrb[0].mxu0
  %v1586 = vadd.f32 0.0, %v1585
  %1587 = vmatprep.mubr.bf16.mxu0 %v932
  %1588 = vmatmul.mubr.bf16.gmra.mrb[0].mxu0 %v931
  %v1589 = vpop.f32.mrb[0].mxu0
  %v1590 = vadd.f32 0.0, %v1589
  %v1591 = vpop.f32.mrb[0].mxu0
  %v1592 = vadd.f32 0.0, %v1591
  %v1593 = vpop.f32.mrb[0].mxu0
  %v1594 = vadd.f32 0.0, %v1593
  %v1595 = vpop.f32.mrb[0].mxu0
  %v1596 = vadd.f32 0.0, %v1595
  %1597 = vmatprep.mubr.bf16.mxu0 %v934
  %1598 = vmatmul.mubr.bf16.gmra.mrb[0].mxu0 %v933
  %v1599 = vpop.f32.mrb[0].mxu0
  %v1600 = vadd.f32 0.0, %v1599
  %v1601 = vpop.f32.mrb[0].mxu0
  %v1602 = vadd.f32 0.0, %v1601
  %v1603 = vpop.f32.mrb[0].mxu0
  %v1604 = vadd.f32 0.0, %v1603
  %v1605 = vpop.f32.mrb[0].mxu0
  %v1606 = vadd.f32 0.0, %v1605
  %1607 = vmatprep.mubr.bf16.mxu0 %v936
  %1608 = vmatmul.mubr.bf16.gmra.mrb[0].mxu0 %v935
  %v1609 = vpop.f32.mrb[0].mxu0
  %v1610 = vadd.f32 0.0, %v1609
  %v1611 = vpop.f32.mrb[0].mxu0
  %v1612 = vadd.f32 0.0, %v1611
  %v1613 = vpop.f32.mrb[0].mxu0
  %v1614 = vadd.f32 0.0, %v1613
  %v1615 = vpop.f32.mrb[0].mxu0
  %v1616 = vadd.f32 0.0, %v1615
  %1617 = vmatprep.mubr.bf16.mxu0 %v938
  %1618 = vmatmul.mubr.bf16.gmra.mrb[0].mxu0 %v937
  %v1619 = vpop.f32.mrb[0].mxu0
  %v1620 = vadd.f32 0.0, %v1619
  %v1621 = vpop.f32.mrb[0].mxu0
  %v1622 = vadd.f32 0.0, %v1621
  %v1623 = vpop.f32.mrb[0].mxu0
  %v1624 = vadd.f32 0.0, %v1623
  %v1625 = vpop.f32.mrb[0].mxu0
  %v1626 = vadd.f32 0.0, %v1625
  %1627 = vmatprep.mubr.bf16.mxu0 %v940
  %1628 = vmatmul.mubr.bf16.gmra.mrb[0].mxu0 %v939
  %v1629 = vpop.f32.mrb[0].mxu0
  %v1630 = vadd.f32 0.0, %v1629
  %v1631 = vpop.f32.mrb[0].mxu0
  %v1632 = vadd.f32 0.0, %v1631
  %v1633 = vpop.f32.mrb[0].mxu0
  %v1634 = vadd.f32 0.0, %v1633
  %v1635 = vpop.f32.mrb[0].mxu0
  %v1636 = vadd.f32 0.0, %v1635
  %1637 = vmatprep.mubr.bf16.mxu0 %v942
  %1638 = vmatmul.mubr.bf16.gmra.mrb[0].mxu0 %v941
  %v1639 = vpop.f32.mrb[0].mxu0
  %v1640 = vadd.f32 0.0, %v1639
  %v1641 = vpop.f32.mrb[0].mxu0
  %v1642 = vadd.f32 0.0, %v1641
  %v1643 = vpop.f32.mrb[0].mxu0
  %v1644 = vadd.f32 0.0, %v1643
  %v1645 = vpop.f32.mrb[0].mxu0
  %v1646 = vadd.f32 0.0, %v1645
  %1647 = vmatprep.mubr.bf16.mxu0 %v944
  %1648 = vmatmul.mubr.bf16.gmra.mrb[0].mxu0 %v943
  %v1649 = vpop.f32.mrb[0].mxu0
  %v1650 = vadd.f32 0.0, %v1649
  %v1651 = vpop.f32.mrb[0].mxu0
  %v1652 = vadd.f32 0.0, %v1651
  %v1653 = vpop.f32.mrb[0].mxu0
  %v1654 = vadd.f32 0.0, %v1653
  %v1655 = vpop.f32.mrb[0].mxu0
  %v1656 = vadd.f32 0.0, %v1655
  %1657 = vmatprep.mubr.bf16.mxu0 %v946
  %1658 = vmatmul.mubr.bf16.gmra.mrb[0].mxu0 %v945
  %v1659 = vpop.f32.mrb[0].mxu0
  %v1660 = vadd.f32 0.0, %v1659
  %v1661 = vpop.f32.mrb[0].mxu0
  %v1662 = vadd.f32 0.0, %v1661
  %v1663 = vpop.f32.mrb[0].mxu0
  %v1664 = vadd.f32 0.0, %v1663
  %v1665 = vpop.f32.mrb[0].mxu0
  %v1666 = vadd.f32 0.0, %v1665
  %1667 = vmatprep.mubr.bf16.mxu0 %v948
  %1668 = vmatmul.mubr.bf16.gmra.mrb[0].mxu0 %v947
  %v1669 = vpop.f32.mrb[0].mxu0
  %v1670 = vadd.f32 0.0, %v1669
  %v1671 = vpop.f32.mrb[0].mxu0
  %v1672 = vadd.f32 0.0, %v1671
  %v1673 = vpop.f32.mrb[0].mxu0
  %v1674 = vadd.f32 0.0, %v1673
  %v1675 = vpop.f32.mrb[0].mxu0
  %v1676 = vadd.f32 0.0, %v1675
  %1677 = vmatprep.mubr.bf16.mxu0 %v950
  %1678 = vmatmul.mubr.bf16.gmra.mrb[0].mxu0 %v949
  %v1679 = vpop.f32.mrb[0].mxu0
  %v1680 = vadd.f32 0.0, %v1679
  %v1681 = vpop.f32.mrb[0].mxu0
  %v1682 = vadd.f32 0.0, %v1681
  %v1683 = vpop.f32.mrb[0].mxu0
  %v1684 = vadd.f32 0.0, %v1683
  %v1685 = vpop.f32.mrb[0].mxu0
  %v1686 = vadd.f32 0.0, %v1685
  %1687 = vdwg.mxu0
  %1688 = vmatprep.subr.bf16.mxu0 %v1210
  %1689 = vmatpush1.bf16.msra.mxu0 %v1209
  %1690 = vmatprep.subr.bf16.mxu0 %v1214
  %1691 = vmatpush1.bf16.msra.mxu0 %v1213
  %1692 = vmatprep.subr.bf16.mxu0 %v1218
  %1693 = vmatpush1.bf16.msra.mxu0 %v1217
  %1694 = vmatprep.subr.bf16.mxu0 %v1222
  %1695 = vmatpush1.bf16.msra.mxu0 %v1221
  %1696 = vmatprep.subr.bf16.mxu0 %v1226
  %1697 = vmatpush1.bf16.msra.mxu0 %v1225
  %1698 = vmatprep.subr.bf16.mxu0 %v1230
  %1699 = vmatpush1.bf16.msra.mxu0 %v1229
  %1700 = vmatprep.subr.bf16.mxu0 %v1234
  %1701 = vmatpush1.bf16.msra.mxu0 %v1233
  %1702 = vmatprep.subr.bf16.mxu0 %v1238
  %1703 = vmatpush1.bf16.msra.mxu0 %v1237
  %1704 = vmatprep.subr.bf16.mxu0 %v1242
  %1705 = vmatpush1.bf16.msra.mxu0 %v1241
  %1706 = vmatprep.subr.bf16.mxu0 %v1246
  %1707 = vmatpush1.bf16.msra.mxu0 %v1245
  %1708 = vmatprep.subr.bf16.mxu0 %v1250
  %1709 = vmatpush1.bf16.msra.mxu0 %v1249
  %1710 = vmatprep.subr.bf16.mxu0 %v1254
  %1711 = vmatpush1.bf16.msra.mxu0 %v1253
  %1712 = vmatprep.subr.bf16.mxu0 %v1258
  %1713 = vmatpush1.bf16.msra.mxu0 %v1257
  %1714 = vmatprep.subr.bf16.mxu0 %v1262
  %1715 = vmatpush1.bf16.msra.mxu0 %v1261
  %1716 = vmatprep.subr.bf16.mxu0 %v1266
  %1717 = vmatpush1.bf16.msra.mxu0 %v1265
  %1718 = vmatprep.subr.bf16.mxu0 %v1270
  %1719 = vmatpush1.bf16.msra.mxu0 %v1269
  %1720 = vmatprep.mubr.bf16.mxu0 %v888
  %1721 = vmatmul.mubr.bf16.gmra.mrb[0].mxu0 %v887
  %v1722 = vpop.f32.mrb[0].mxu0
  %v1723 = vadd.f32 0.0, %v1722
  %v1724 = vpop.f32.mrb[0].mxu0
  %v1725 = vadd.f32 0.0, %v1724
  %v1726 = vpop.f32.mrb[0].mxu0
  %v1727 = vadd.f32 0.0, %v1726
  %v1728 = vpop.f32.mrb[0].mxu0
  %v1729 = vadd.f32 0.0, %v1728
  %1730 = vmatprep.mubr.bf16.mxu0 %v890
  %1731 = vmatmul.mubr.bf16.gmra.mrb[0].mxu0 %v889
  %v1732 = vpop.f32.mrb[0].mxu0
  %v1733 = vadd.f32 0.0, %v1732
  %v1734 = vpop.f32.mrb[0].mxu0
  %v1735 = vadd.f32 0.0, %v1734
  %v1736 = vpop.f32.mrb[0].mxu0
  %v1737 = vadd.f32 0.0, %v1736
  %v1738 = vpop.f32.mrb[0].mxu0
  %v1739 = vadd.f32 0.0, %v1738
  %1740 = vmatprep.mubr.bf16.mxu0 %v892
  %1741 = vmatmul.mubr.bf16.gmra.mrb[0].mxu0 %v891
  %v1742 = vpop.f32.mrb[0].mxu0
  %v1743 = vadd.f32 0.0, %v1742
  %v1744 = vpop.f32.mrb[0].mxu0
  %v1745 = vadd.f32 0.0, %v1744
  %v1746 = vpop.f32.mrb[0].mxu0
  %v1747 = vadd.f32 0.0, %v1746
  %v1748 = vpop.f32.mrb[0].mxu0
  %v1749 = vadd.f32 0.0, %v1748
  %1750 = vmatprep.mubr.bf16.mxu0 %v894
  %1751 = vmatmul.mubr.bf16.gmra.mrb[0].mxu0 %v893
  %v1752 = vpop.f32.mrb[0].mxu0
  %v1753 = vadd.f32 0.0, %v1752
  %v1754 = vpop.f32.mrb[0].mxu0
  %v1755 = vadd.f32 0.0, %v1754
  %v1756 = vpop.f32.mrb[0].mxu0
  %v1757 = vadd.f32 0.0, %v1756
  %v1758 = vpop.f32.mrb[0].mxu0
  %v1759 = vadd.f32 0.0, %v1758
  %1760 = vmatprep.mubr.bf16.mxu0 %v896
  %1761 = vmatmul.mubr.bf16.gmra.mrb[0].mxu0 %v895
  %v1762 = vpop.f32.mrb[0].mxu0
  %v1763 = vadd.f32 0.0, %v1762
  %v1764 = vpop.f32.mrb[0].mxu0
  %v1765 = vadd.f32 0.0, %v1764
  %v1766 = vpop.f32.mrb[0].mxu0
  %v1767 = vadd.f32 0.0, %v1766
  %v1768 = vpop.f32.mrb[0].mxu0
  %v1769 = vadd.f32 0.0, %v1768
  %1770 = vmatprep.mubr.bf16.mxu0 %v898
  %1771 = vmatmul.mubr.bf16.gmra.mrb[0].mxu0 %v897
  %v1772 = vpop.f32.mrb[0].mxu0
  %v1773 = vadd.f32 0.0, %v1772
  %v1774 = vpop.f32.mrb[0].mxu0
  %v1775 = vadd.f32 0.0, %v1774
  %v1776 = vpop.f32.mrb[0].mxu0
  %v1777 = vadd.f32 0.0, %v1776
  %v1778 = vpop.f32.mrb[0].mxu0
  %v1779 = vadd.f32 0.0, %v1778
  %1780 = vmatprep.mubr.bf16.mxu0 %v900
  %1781 = vmatmul.mubr.bf16.gmra.mrb[0].mxu0 %v899
  %v1782 = vpop.f32.mrb[0].mxu0
  %v1783 = vadd.f32 0.0, %v1782
  %v1784 = vpop.f32.mrb[0].mxu0
  %v1785 = vadd.f32 0.0, %v1784
  %v1786 = vpop.f32.mrb[0].mxu0
  %v1787 = vadd.f32 0.0, %v1786
  %v1788 = vpop.f32.mrb[0].mxu0
  %v1789 = vadd.f32 0.0, %v1788
  %1790 = vmatprep.mubr.bf16.mxu0 %v902
  %1791 = vmatmul.mubr.bf16.gmra.mrb[0].mxu0 %v901
  %v1792 = vpop.f32.mrb[0].mxu0
  %v1793 = vadd.f32 0.0, %v1792
  %v1794 = vpop.f32.mrb[0].mxu0
  %v1795 = vadd.f32 0.0, %v1794
  %v1796 = vpop.f32.mrb[0].mxu0
  %v1797 = vadd.f32 0.0, %v1796
  %v1798 = vpop.f32.mrb[0].mxu0
  %v1799 = vadd.f32 0.0, %v1798
  %1800 = vmatprep.mubr.bf16.mxu0 %v904
  %1801 = vmatmul.mubr.bf16.gmra.mrb[0].mxu0 %v903
  %v1802 = vpop.f32.mrb[0].mxu0
  %v1803 = vadd.f32 0.0, %v1802
  %v1804 = vpop.f32.mrb[0].mxu0
  %v1805 = vadd.f32 0.0, %v1804
  %v1806 = vpop.f32.mrb[0].mxu0
  %v1807 = vadd.f32 0.0, %v1806
  %v1808 = vpop.f32.mrb[0].mxu0
  %v1809 = vadd.f32 0.0, %v1808
  %1810 = vmatprep.mubr.bf16.mxu0 %v906
  %1811 = vmatmul.mubr.bf16.gmra.mrb[0].mxu0 %v905
  %v1812 = vpop.f32.mrb[0].mxu0
  %v1813 = vadd.f32 0.0, %v1812
  %v1814 = vpop.f32.mrb[0].mxu0
  %v1815 = vadd.f32 0.0, %v1814
  %v1816 = vpop.f32.mrb[0].mxu0
  %v1817 = vadd.f32 0.0, %v1816
  %v1818 = vpop.f32.mrb[0].mxu0
  %v1819 = vadd.f32 0.0, %v1818
  %1820 = vmatprep.mubr.bf16.mxu0 %v908
  %1821 = vmatmul.mubr.bf16.gmra.mrb[0].mxu0 %v907
  %v1822 = vpop.f32.mrb[0].mxu0
  %v1823 = vadd.f32 0.0, %v1822
  %v1824 = vpop.f32.mrb[0].mxu0
  %v1825 = vadd.f32 0.0, %v1824
  %v1826 = vpop.f32.mrb[0].mxu0
  %v1827 = vadd.f32 0.0, %v1826
  %v1828 = vpop.f32.mrb[0].mxu0
  %v1829 = vadd.f32 0.0, %v1828
  %1830 = vmatprep.mubr.bf16.mxu0 %v910
  %1831 = vmatmul.mubr.bf16.gmra.mrb[0].mxu0 %v909
  %v1832 = vpop.f32.mrb[0].mxu0
  %v1833 = vadd.f32 0.0, %v1832
  %v1834 = vpop.f32.mrb[0].mxu0
  %v1835 = vadd.f32 0.0, %v1834
  %v1836 = vpop.f32.mrb[0].mxu0
  %v1837 = vadd.f32 0.0, %v1836
  %v1838 = vpop.f32.mrb[0].mxu0
  %v1839 = vadd.f32 0.0, %v1838
  %1840 = vmatprep.mubr.bf16.mxu0 %v912
  %1841 = vmatmul.mubr.bf16.gmra.mrb[0].mxu0 %v911
  %v1842 = vpop.f32.mrb[0].mxu0
  %v1843 = vadd.f32 0.0, %v1842
  %v1844 = vpop.f32.mrb[0].mxu0
  %v1845 = vadd.f32 0.0, %v1844
  %v1846 = vpop.f32.mrb[0].mxu0
  %v1847 = vadd.f32 0.0, %v1846
  %v1848 = vpop.f32.mrb[0].mxu0
  %v1849 = vadd.f32 0.0, %v1848
  %1850 = vmatprep.mubr.bf16.mxu0 %v914
  %1851 = vmatmul.mubr.bf16.gmra.mrb[0].mxu0 %v913
  %v1852 = vpop.f32.mrb[0].mxu0
  %v1853 = vadd.f32 0.0, %v1852
  %v1854 = vpop.f32.mrb[0].mxu0
  %v1855 = vadd.f32 0.0, %v1854
  %v1856 = vpop.f32.mrb[0].mxu0
  %v1857 = vadd.f32 0.0, %v1856
  %v1858 = vpop.f32.mrb[0].mxu0
  %v1859 = vadd.f32 0.0, %v1858
  %1860 = vmatprep.mubr.bf16.mxu0 %v916
  %1861 = vmatmul.mubr.bf16.gmra.mrb[0].mxu0 %v915
  %v1862 = vpop.f32.mrb[0].mxu0
  %v1863 = vadd.f32 0.0, %v1862
  %v1864 = vpop.f32.mrb[0].mxu0
  %v1865 = vadd.f32 0.0, %v1864
  %v1866 = vpop.f32.mrb[0].mxu0
  %v1867 = vadd.f32 0.0, %v1866
  %v1868 = vpop.f32.mrb[0].mxu0
  %v1869 = vadd.f32 0.0, %v1868
  %1870 = vmatprep.mubr.bf16.mxu0 %v918
  %1871 = vmatmul.mubr.bf16.gmra.mrb[0].mxu0 %v917
  %v1872 = vpop.f32.mrb[0].mxu0
  %v1873 = vadd.f32 0.0, %v1872
  %v1874 = vpop.f32.mrb[0].mxu0
  %v1875 = vadd.f32 0.0, %v1874
  %v1876 = vpop.f32.mrb[0].mxu0
  %v1877 = vadd.f32 0.0, %v1876
  %v1878 = vpop.f32.mrb[0].mxu0
  %v1879 = vadd.f32 0.0, %v1878
  %1880 = vmatprep.mubr.bf16.mxu0 %v920
  %1881 = vmatmul.mubr.bf16.gmra.mrb[0].mxu0 %v919
  %v1882 = vpop.f32.mrb[0].mxu0
  %v1883 = vadd.f32 0.0, %v1882
  %v1884 = vpop.f32.mrb[0].mxu0
  %v1885 = vadd.f32 0.0, %v1884
  %v1886 = vpop.f32.mrb[0].mxu0
  %v1887 = vadd.f32 0.0, %v1886
  %v1888 = vpop.f32.mrb[0].mxu0
  %v1889 = vadd.f32 0.0, %v1888
  %1890 = vmatprep.mubr.bf16.mxu0 %v922
  %1891 = vmatmul.mubr.bf16.gmra.mrb[0].mxu0 %v921
  %v1892 = vpop.f32.mrb[0].mxu0
  %v1893 = vadd.f32 0.0, %v1892
  %v1894 = vpop.f32.mrb[0].mxu0
  %v1895 = vadd.f32 0.0, %v1894
  %v1896 = vpop.f32.mrb[0].mxu0
  %v1897 = vadd.f32 0.0, %v1896
  %v1898 = vpop.f32.mrb[0].mxu0
  %v1899 = vadd.f32 0.0, %v1898
  %1900 = vmatprep.mubr.bf16.mxu0 %v924
  %1901 = vmatmul.mubr.bf16.gmra.mrb[0].mxu0 %v923
  %v1902 = vpop.f32.mrb[0].mxu0
  %v1903 = vadd.f32 0.0, %v1902
  %v1904 = vpop.f32.mrb[0].mxu0
  %v1905 = vadd.f32 0.0, %v1904
  %v1906 = vpop.f32.mrb[0].mxu0
  %v1907 = vadd.f32 0.0, %v1906
  %v1908 = vpop.f32.mrb[0].mxu0
  %v1909 = vadd.f32 0.0, %v1908
  %1910 = vmatprep.mubr.bf16.mxu0 %v926
  %1911 = vmatmul.mubr.bf16.gmra.mrb[0].mxu0 %v925
  %v1912 = vpop.f32.mrb[0].mxu0
  %v1913 = vadd.f32 0.0, %v1912
  %v1914 = vpop.f32.mrb[0].mxu0
  %v1915 = vadd.f32 0.0, %v1914
  %v1916 = vpop.f32.mrb[0].mxu0
  %v1917 = vadd.f32 0.0, %v1916
  %v1918 = vpop.f32.mrb[0].mxu0
  %v1919 = vadd.f32 0.0, %v1918
  %1920 = vmatprep.mubr.bf16.mxu0 %v928
  %1921 = vmatmul.mubr.bf16.gmra.mrb[0].mxu0 %v927
  %v1922 = vpop.f32.mrb[0].mxu0
  %v1923 = vadd.f32 0.0, %v1922
  %v1924 = vpop.f32.mrb[0].mxu0
  %v1925 = vadd.f32 0.0, %v1924
  %v1926 = vpop.f32.mrb[0].mxu0
  %v1927 = vadd.f32 0.0, %v1926
  %v1928 = vpop.f32.mrb[0].mxu0
  %v1929 = vadd.f32 0.0, %v1928
  %1930 = vmatprep.mubr.bf16.mxu0 %v930
  %1931 = vmatmul.mubr.bf16.gmra.mrb[0].mxu0 %v929
  %v1932 = vpop.f32.mrb[0].mxu0
  %v1933 = vadd.f32 0.0, %v1932
  %v1934 = vpop.f32.mrb[0].mxu0
  %v1935 = vadd.f32 0.0, %v1934
  %v1936 = vpop.f32.mrb[0].mxu0
  %v1937 = vadd.f32 0.0, %v1936
  %v1938 = vpop.f32.mrb[0].mxu0
  %v1939 = vadd.f32 0.0, %v1938
  %1940 = vmatprep.mubr.bf16.mxu0 %v932
  %1941 = vmatmul.mubr.bf16.gmra.mrb[0].mxu0 %v931
  %v1942 = vpop.f32.mrb[0].mxu0
  %v1943 = vadd.f32 0.0, %v1942
  %v1944 = vpop.f32.mrb[0].mxu0
  %v1945 = vadd.f32 0.0, %v1944
  %v1946 = vpop.f32.mrb[0].mxu0
  %v1947 = vadd.f32 0.0, %v1946
  %v1948 = vpop.f32.mrb[0].mxu0
  %v1949 = vadd.f32 0.0, %v1948
  %1950 = vmatprep.mubr.bf16.mxu0 %v934
  %1951 = vmatmul.mubr.bf16.gmra.mrb[0].mxu0 %v933
  %v1952 = vpop.f32.mrb[0].mxu0
  %v1953 = vadd.f32 0.0, %v1952
  %v1954 = vpop.f32.mrb[0].mxu0
  %v1955 = vadd.f32 0.0, %v1954
  %v1956 = vpop.f32.mrb[0].mxu0
  %v1957 = vadd.f32 0.0, %v1956
  %v1958 = vpop.f32.mrb[0].mxu0
  %v1959 = vadd.f32 0.0, %v1958
  %1960 = vmatprep.mubr.bf16.mxu0 %v936
  %1961 = vmatmul.mubr.bf16.gmra.mrb[0].mxu0 %v935
  %v1962 = vpop.f32.mrb[0].mxu0
  %v1963 = vadd.f32 0.0, %v1962
  %v1964 = vpop.f32.mrb[0].mxu0
  %v1965 = vadd.f32 0.0, %v1964
  %v1966 = vpop.f32.mrb[0].mxu0
  %v1967 = vadd.f32 0.0, %v1966
  %v1968 = vpop.f32.mrb[0].mxu0
  %v1969 = vadd.f32 0.0, %v1968
  %1970 = vmatprep.mubr.bf16.mxu0 %v938
  %1971 = vmatmul.mubr.bf16.gmra.mrb[0].mxu0 %v937
  %v1972 = vpop.f32.mrb[0].mxu0
  %v1973 = vadd.f32 0.0, %v1972
  %v1974 = vpop.f32.mrb[0].mxu0
  %v1975 = vadd.f32 0.0, %v1974
  %v1976 = vpop.f32.mrb[0].mxu0
  %v1977 = vadd.f32 0.0, %v1976
  %v1978 = vpop.f32.mrb[0].mxu0
  %v1979 = vadd.f32 0.0, %v1978
  %1980 = vmatprep.mubr.bf16.mxu0 %v940
  %1981 = vmatmul.mubr.bf16.gmra.mrb[0].mxu0 %v939
  %v1982 = vpop.f32.mrb[0].mxu0
  %v1983 = vadd.f32 0.0, %v1982
  %v1984 = vpop.f32.mrb[0].mxu0
  %v1985 = vadd.f32 0.0, %v1984
  %v1986 = vpop.f32.mrb[0].mxu0
  %v1987 = vadd.f32 0.0, %v1986
  %v1988 = vpop.f32.mrb[0].mxu0
  %v1989 = vadd.f32 0.0, %v1988
  %1990 = vmatprep.mubr.bf16.mxu0 %v942
  %1991 = vmatmul.mubr.bf16.gmra.mrb[0].mxu0 %v941
  %v1992 = vpop.f32.mrb[0].mxu0
  %v1993 = vadd.f32 0.0, %v1992
  %v1994 = vpop.f32.mrb[0].mxu0
  %v1995 = vadd.f32 0.0, %v1994
  %v1996 = vpop.f32.mrb[0].mxu0
  %v1997 = vadd.f32 0.0, %v1996
  %v1998 = vpop.f32.mrb[0].mxu0
  %v1999 = vadd.f32 0.0, %v1998
  %2000 = vmatprep.mubr.bf16.mxu0 %v944
  %2001 = vmatmul.mubr.bf16.gmra.mrb[0].mxu0 %v943
  %v2002 = vpop.f32.mrb[0].mxu0
  %v2003 = vadd.f32 0.0, %v2002
  %v2004 = vpop.f32.mrb[0].mxu0
  %v2005 = vadd.f32 0.0, %v2004
  %v2006 = vpop.f32.mrb[0].mxu0
  %v2007 = vadd.f32 0.0, %v2006
  %v2008 = vpop.f32.mrb[0].mxu0
  %v2009 = vadd.f32 0.0, %v2008
  %2010 = vmatprep.mubr.bf16.mxu0 %v946
  %2011 = vmatmul.mubr.bf16.gmra.mrb[0].mxu0 %v945
  %v2012 = vpop.f32.mrb[0].mxu0
  %v2013 = vadd.f32 0.0, %v2012
  %v2014 = vpop.f32.mrb[0].mxu0
  %v2015 = vadd.f32 0.0, %v2014
  %v2016 = vpop.f32.mrb[0].mxu0
  %v2017 = vadd.f32 0.0, %v2016
  %v2018 = vpop.f32.mrb[0].mxu0
  %v2019 = vadd.f32 0.0, %v2018
  %2020 = vmatprep.mubr.bf16.mxu0 %v948
  %2021 = vmatmul.mubr.bf16.gmra.mrb[0].mxu0 %v947
  %v2022 = vpop.f32.mrb[0].mxu0
  %v2023 = vadd.f32 0.0, %v2022
  %v2024 = vpop.f32.mrb[0].mxu0
  %v2025 = vadd.f32 0.0, %v2024
  %v2026 = vpop.f32.mrb[0].mxu0
  %v2027 = vadd.f32 0.0, %v2026
  %v2028 = vpop.f32.mrb[0].mxu0
  %v2029 = vadd.f32 0.0, %v2028
  %2030 = vmatprep.mubr.bf16.mxu0 %v950
  %2031 = vmatmul.mubr.bf16.gmra.mrb[0].mxu0 %v949
  %v2032 = vpop.f32.mrb[0].mxu0
  %v2033 = vadd.f32 0.0, %v2032
  %v2034 = vpop.f32.mrb[0].mxu0
  %v2035 = vadd.f32 0.0, %v2034
  %v2036 = vpop.f32.mrb[0].mxu0
  %v2037 = vadd.f32 0.0, %v2036
  %v2038 = vpop.f32.mrb[0].mxu0
  %v2039 = vadd.f32 0.0, %v2038
  %2040 = vdwg.mxu0
  %v2041 = vld [vmem:[%s4] sm:$0xf]
  %v2043 = vlaneseq
  %v2044 = vshrl.u32 %v2043, 7
  %v2045 = vsub.s32 0, %v2044
  %v2046 = vrot.slane %v2041, %v2045
  %v2047 = vlaneseq
  %v2048 = vshrl.u32 %v2047, 7
  %v2049 = vsub.s32 1, %v2048
  %v2050 = vrot.slane %v2041, %v2049
  %v2051 = vlaneseq
  %v2052 = vshrl.u32 %v2051, 7
  %v2053 = vsub.s32 2, %v2052
  %v2054 = vrot.slane %v2041, %v2053
  %v2055 = vlaneseq
  %v2056 = vshrl.u32 %v2055, 7
  %v2057 = vsub.s32 3, %v2056
  %v2058 = vrot.slane %v2041, %v2057
  %v2063 = vmul.f32 %v1370, %v2046
  %v2064 = vmul.f32 %v1372, %v2050
  %v2065 = vmul.f32 %v1723, %v2054
  %v2066 = vmul.f32 %v1725, %v2058
  %v2067 = vmul.f32 %v1374, %v2046
  %v2068 = vmul.f32 %v1376, %v2050
  %v2069 = vmul.f32 %v1727, %v2054
  %v2070 = vmul.f32 %v1729, %v2058
  %v2071 = vmul.f32 %v1380, %v2046
  %v2072 = vmul.f32 %v1382, %v2050
  %v2073 = vmul.f32 %v1733, %v2054
  %v2074 = vmul.f32 %v1735, %v2058
  %v2075 = vmul.f32 %v1384, %v2046
  %v2076 = vmul.f32 %v1386, %v2050
  %v2077 = vmul.f32 %v1737, %v2054
  %v2078 = vmul.f32 %v1739, %v2058
  %v2079 = vmul.f32 %v1390, %v2046
  %v2080 = vmul.f32 %v1392, %v2050
  %v2081 = vmul.f32 %v1743, %v2054
  %v2082 = vmul.f32 %v1745, %v2058
  %v2083 = vmul.f32 %v1394, %v2046
  %v2084 = vmul.f32 %v1396, %v2050
  %v2085 = vmul.f32 %v1747, %v2054
  %v2086 = vmul.f32 %v1749, %v2058
  %v2087 = vmul.f32 %v1400, %v2046
  %v2088 = vmul.f32 %v1402, %v2050
  %v2089 = vmul.f32 %v1753, %v2054
  %v2090 = vmul.f32 %v1755, %v2058
  %v2091 = vmul.f32 %v1404, %v2046
  %v2092 = vmul.f32 %v1406, %v2050
  %v2093 = vmul.f32 %v1757, %v2054
  %v2094 = vmul.f32 %v1759, %v2058
  %v2095 = vmul.f32 %v1410, %v2046
  %v2096 = vmul.f32 %v1412, %v2050
  %v2097 = vmul.f32 %v1763, %v2054
  %v2098 = vmul.f32 %v1765, %v2058
  %v2099 = vmul.f32 %v1414, %v2046
  %v2100 = vmul.f32 %v1416, %v2050
  %v2101 = vmul.f32 %v1767, %v2054
  %v2102 = vmul.f32 %v1769, %v2058
  %v2103 = vmul.f32 %v1420, %v2046
  %v2104 = vmul.f32 %v1422, %v2050
  %v2105 = vmul.f32 %v1773, %v2054
  %v2106 = vmul.f32 %v1775, %v2058
  %v2107 = vmul.f32 %v1424, %v2046
  %v2108 = vmul.f32 %v1426, %v2050
  %v2109 = vmul.f32 %v1777, %v2054
  %v2110 = vmul.f32 %v1779, %v2058
  %v2111 = vmul.f32 %v1430, %v2046
  %v2112 = vmul.f32 %v1432, %v2050
  %v2113 = vmul.f32 %v1783, %v2054
  %v2114 = vmul.f32 %v1785, %v2058
  %v2115 = vmul.f32 %v1434, %v2046
  %v2116 = vmul.f32 %v1436, %v2050
  %v2117 = vmul.f32 %v1787, %v2054
  %v2118 = vmul.f32 %v1789, %v2058
  %v2119 = vmul.f32 %v1440, %v2046
  %v2120 = vmul.f32 %v1442, %v2050
  %v2121 = vmul.f32 %v1793, %v2054
  %v2122 = vmul.f32 %v1795, %v2058
  %v2123 = vmul.f32 %v1444, %v2046
  %v2124 = vmul.f32 %v1446, %v2050
  %v2125 = vmul.f32 %v1797, %v2054
  %v2126 = vmul.f32 %v1799, %v2058
  %v2127 = vmul.f32 %v1450, %v2046
  %v2128 = vmul.f32 %v1452, %v2050
  %v2129 = vmul.f32 %v1803, %v2054
  %v2130 = vmul.f32 %v1805, %v2058
  %v2131 = vmul.f32 %v1454, %v2046
  %v2132 = vmul.f32 %v1456, %v2050
  %v2133 = vmul.f32 %v1807, %v2054
  %v2134 = vmul.f32 %v1809, %v2058
  %v2135 = vmul.f32 %v1460, %v2046
  %v2136 = vmul.f32 %v1462, %v2050
  %v2137 = vmul.f32 %v1813, %v2054
  %v2138 = vmul.f32 %v1815, %v2058
  %v2139 = vmul.f32 %v1464, %v2046
  %v2140 = vmul.f32 %v1466, %v2050
  %v2141 = vmul.f32 %v1817, %v2054
  %v2142 = vmul.f32 %v1819, %v2058
  %v2143 = vmul.f32 %v1470, %v2046
  %v2144 = vmul.f32 %v1472, %v2050
  %v2145 = vmul.f32 %v1823, %v2054
  %v2146 = vmul.f32 %v1825, %v2058
  %v2147 = vmul.f32 %v1474, %v2046
  %v2148 = vmul.f32 %v1476, %v2050
  %v2149 = vmul.f32 %v1827, %v2054
  %v2150 = vmul.f32 %v1829, %v2058
  %v2151 = vmul.f32 %v1480, %v2046
  %v2152 = vmul.f32 %v1482, %v2050
  %v2153 = vmul.f32 %v1833, %v2054
  %v2154 = vmul.f32 %v1835, %v2058
  %v2155 = vmul.f32 %v1484, %v2046
  %v2156 = vmul.f32 %v1486, %v2050
  %v2157 = vmul.f32 %v1837, %v2054
  %v2158 = vmul.f32 %v1839, %v2058
  %v2159 = vmul.f32 %v1490, %v2046
  %v2160 = vmul.f32 %v1492, %v2050
  %v2161 = vmul.f32 %v1843, %v2054
  %v2162 = vmul.f32 %v1845, %v2058
  %v2163 = vmul.f32 %v1494, %v2046
  %v2164 = vmul.f32 %v1496, %v2050
  %v2165 = vmul.f32 %v1847, %v2054
  %v2166 = vmul.f32 %v1849, %v2058
  %v2167 = vmul.f32 %v1500, %v2046
  %v2168 = vmul.f32 %v1502, %v2050
  %v2169 = vmul.f32 %v1853, %v2054
  %v2170 = vmul.f32 %v1855, %v2058
  %v2171 = vmul.f32 %v1504, %v2046
  %v2172 = vmul.f32 %v1506, %v2050
  %v2173 = vmul.f32 %v1857, %v2054
  %v2174 = vmul.f32 %v1859, %v2058
  %v2175 = vmul.f32 %v1510, %v2046
  %v2176 = vmul.f32 %v1512, %v2050
  %v2177 = vmul.f32 %v1863, %v2054
  %v2178 = vmul.f32 %v1865, %v2058
  %v2179 = vmul.f32 %v1514, %v2046
  %v2180 = vmul.f32 %v1516, %v2050
  %v2181 = vmul.f32 %v1867, %v2054
  %v2182 = vmul.f32 %v1869, %v2058
  %v2183 = vmul.f32 %v1520, %v2046
  %v2184 = vmul.f32 %v1522, %v2050
  %v2185 = vmul.f32 %v1873, %v2054
  %v2186 = vmul.f32 %v1875, %v2058
  %v2187 = vmul.f32 %v1524, %v2046
  %v2188 = vmul.f32 %v1526, %v2050
  %v2189 = vmul.f32 %v1877, %v2054
  %v2190 = vmul.f32 %v1879, %v2058
  %v2191 = vmul.f32 %v1530, %v2046
  %v2192 = vmul.f32 %v1532, %v2050
  %v2193 = vmul.f32 %v1883, %v2054
  %v2194 = vmul.f32 %v1885, %v2058
  %v2195 = vmul.f32 %v1534, %v2046
  %v2196 = vmul.f32 %v1536, %v2050
  %v2197 = vmul.f32 %v1887, %v2054
  %v2198 = vmul.f32 %v1889, %v2058
  %v2199 = vmul.f32 %v1540, %v2046
  %v2200 = vmul.f32 %v1542, %v2050
  %v2201 = vmul.f32 %v1893, %v2054
  %v2202 = vmul.f32 %v1895, %v2058
  %v2203 = vmul.f32 %v1544, %v2046
  %v2204 = vmul.f32 %v1546, %v2050
  %v2205 = vmul.f32 %v1897, %v2054
  %v2206 = vmul.f32 %v1899, %v2058
  %v2207 = vmul.f32 %v1550, %v2046
  %v2208 = vmul.f32 %v1552, %v2050
  %v2209 = vmul.f32 %v1903, %v2054
  %v2210 = vmul.f32 %v1905, %v2058
  %v2211 = vmul.f32 %v1554, %v2046
  %v2212 = vmul.f32 %v1556, %v2050
  %v2213 = vmul.f32 %v1907, %v2054
  %v2214 = vmul.f32 %v1909, %v2058
  %v2215 = vmul.f32 %v1560, %v2046
  %v2216 = vmul.f32 %v1562, %v2050
  %v2217 = vmul.f32 %v1913, %v2054
  %v2218 = vmul.f32 %v1915, %v2058
  %v2219 = vmul.f32 %v1564, %v2046
  %v2220 = vmul.f32 %v1566, %v2050
  %v2221 = vmul.f32 %v1917, %v2054
  %v2222 = vmul.f32 %v1919, %v2058
  %v2223 = vmul.f32 %v1570, %v2046
  %v2224 = vmul.f32 %v1572, %v2050
  %v2225 = vmul.f32 %v1923, %v2054
  %v2226 = vmul.f32 %v1925, %v2058
  %v2227 = vmul.f32 %v1574, %v2046
  %v2228 = vmul.f32 %v1576, %v2050
  %v2229 = vmul.f32 %v1927, %v2054
  %v2230 = vmul.f32 %v1929, %v2058
  %v2231 = vmul.f32 %v1580, %v2046
  %v2232 = vmul.f32 %v1582, %v2050
  %v2233 = vmul.f32 %v1933, %v2054
  %v2234 = vmul.f32 %v1935, %v2058
  %v2235 = vmul.f32 %v1584, %v2046
  %v2236 = vmul.f32 %v1586, %v2050
  %v2237 = vmul.f32 %v1937, %v2054
  %v2238 = vmul.f32 %v1939, %v2058
  %v2239 = vmul.f32 %v1590, %v2046
  %v2240 = vmul.f32 %v1592, %v2050
  %v2241 = vmul.f32 %v1943, %v2054
  %v2242 = vmul.f32 %v1945, %v2058
  %v2243 = vmul.f32 %v1594, %v2046
  %v2244 = vmul.f32 %v1596, %v2050
  %v2245 = vmul.f32 %v1947, %v2054
  %v2246 = vmul.f32 %v1949, %v2058
  %v2247 = vmul.f32 %v1600, %v2046
  %v2248 = vmul.f32 %v1602, %v2050
  %v2249 = vmul.f32 %v1953, %v2054
  %v2250 = vmul.f32 %v1955, %v2058
  %v2251 = vmul.f32 %v1604, %v2046
  %v2252 = vmul.f32 %v1606, %v2050
  %v2253 = vmul.f32 %v1957, %v2054
  %v2254 = vmul.f32 %v1959, %v2058
  %v2255 = vmul.f32 %v1610, %v2046
  %v2256 = vmul.f32 %v1612, %v2050
  %v2257 = vmul.f32 %v1963, %v2054
  %v2258 = vmul.f32 %v1965, %v2058
  %v2259 = vmul.f32 %v1614, %v2046
  %v2260 = vmul.f32 %v1616, %v2050
  %v2261 = vmul.f32 %v1967, %v2054
  %v2262 = vmul.f32 %v1969, %v2058
  %v2263 = vmul.f32 %v1620, %v2046
  %v2264 = vmul.f32 %v1622, %v2050
  %v2265 = vmul.f32 %v1973, %v2054
  %v2266 = vmul.f32 %v1975, %v2058
  %v2267 = vmul.f32 %v1624, %v2046
  %v2268 = vmul.f32 %v1626, %v2050
  %v2269 = vmul.f32 %v1977, %v2054
  %v2270 = vmul.f32 %v1979, %v2058
  %v2271 = vmul.f32 %v1630, %v2046
  %v2272 = vmul.f32 %v1632, %v2050
  %v2273 = vmul.f32 %v1983, %v2054
  %v2274 = vmul.f32 %v1985, %v2058
  %v2275 = vmul.f32 %v1634, %v2046
  %v2276 = vmul.f32 %v1636, %v2050
  %v2277 = vmul.f32 %v1987, %v2054
  %v2278 = vmul.f32 %v1989, %v2058
  %v2279 = vmul.f32 %v1640, %v2046
  %v2280 = vmul.f32 %v1642, %v2050
  %v2281 = vmul.f32 %v1993, %v2054
  %v2282 = vmul.f32 %v1995, %v2058
  %v2283 = vmul.f32 %v1644, %v2046
  %v2284 = vmul.f32 %v1646, %v2050
  %v2285 = vmul.f32 %v1997, %v2054
  %v2286 = vmul.f32 %v1999, %v2058
  %v2287 = vmul.f32 %v1650, %v2046
  %v2288 = vmul.f32 %v1652, %v2050
  %v2289 = vmul.f32 %v2003, %v2054
  %v2290 = vmul.f32 %v2005, %v2058
  %v2291 = vmul.f32 %v1654, %v2046
  %v2292 = vmul.f32 %v1656, %v2050
  %v2293 = vmul.f32 %v2007, %v2054
  %v2294 = vmul.f32 %v2009, %v2058
  %v2295 = vmul.f32 %v1660, %v2046
  %v2296 = vmul.f32 %v1662, %v2050
  %v2297 = vmul.f32 %v2013, %v2054
  %v2298 = vmul.f32 %v2015, %v2058
  %v2299 = vmul.f32 %v1664, %v2046
  %v2300 = vmul.f32 %v1666, %v2050
  %v2301 = vmul.f32 %v2017, %v2054
  %v2302 = vmul.f32 %v2019, %v2058
  %v2303 = vmul.f32 %v1670, %v2046
  %v2304 = vmul.f32 %v1672, %v2050
  %v2305 = vmul.f32 %v2023, %v2054
  %v2306 = vmul.f32 %v2025, %v2058
  %v2307 = vmul.f32 %v1674, %v2046
  %v2308 = vmul.f32 %v1676, %v2050
  %v2309 = vmul.f32 %v2027, %v2054
  %v2310 = vmul.f32 %v2029, %v2058
  %v2311 = vmul.f32 %v1680, %v2046
  %v2312 = vmul.f32 %v1682, %v2050
  %v2313 = vmul.f32 %v2033, %v2054
  %v2314 = vmul.f32 %v2035, %v2058
  %v2315 = vmul.f32 %v1684, %v2046
  %v2316 = vmul.f32 %v1686, %v2050
  %v2317 = vmul.f32 %v2037, %v2054
  %v2318 = vmul.f32 %v2039, %v2058
  %v2319 = vld [vmem:[%s5] sm:$0xf]
  %v2321 = vlaneseq
  %v2322 = vshrl.u32 %v2321, 7
  %v2323 = vsub.s32 0, %v2322
  %v2324 = vrot.slane %v2319, %v2323
  %v2325 = vlaneseq
  %v2326 = vshrl.u32 %v2325, 7
  %v2327 = vsub.s32 1, %v2326
  %v2328 = vrot.slane %v2319, %v2327
  %v2329 = vlaneseq
  %v2330 = vshrl.u32 %v2329, 7
  %v2331 = vsub.s32 2, %v2330
  %v2332 = vrot.slane %v2319, %v2331
  %v2333 = vlaneseq
  %v2334 = vshrl.u32 %v2333, 7
  %v2335 = vsub.s32 3, %v2334
  %v2336 = vrot.slane %v2319, %v2335
  %v2341 = vadd.f32 %v2063, %v2324
  %v2342 = vadd.f32 %v2064, %v2328
  %v2343 = vadd.f32 %v2065, %v2332
  %v2344 = vadd.f32 %v2066, %v2336
  %v2345 = vadd.f32 %v2067, %v2324
  %v2346 = vadd.f32 %v2068, %v2328
  %v2347 = vadd.f32 %v2069, %v2332
  %v2348 = vadd.f32 %v2070, %v2336
  %v2349 = vadd.f32 %v2071, %v2324
  %v2350 = vadd.f32 %v2072, %v2328
  %v2351 = vadd.f32 %v2073, %v2332
  %v2352 = vadd.f32 %v2074, %v2336
  %v2353 = vadd.f32 %v2075, %v2324
  %v2354 = vadd.f32 %v2076, %v2328
  %v2355 = vadd.f32 %v2077, %v2332
  %v2356 = vadd.f32 %v2078, %v2336
  %v2357 = vadd.f32 %v2079, %v2324
  %v2358 = vadd.f32 %v2080, %v2328
  %v2359 = vadd.f32 %v2081, %v2332
  %v2360 = vadd.f32 %v2082, %v2336
  %v2361 = vadd.f32 %v2083, %v2324
  %v2362 = vadd.f32 %v2084, %v2328
  %v2363 = vadd.f32 %v2085, %v2332
  %v2364 = vadd.f32 %v2086, %v2336
  %v2365 = vadd.f32 %v2087, %v2324
  %v2366 = vadd.f32 %v2088, %v2328
  %v2367 = vadd.f32 %v2089, %v2332
  %v2368 = vadd.f32 %v2090, %v2336
  %v2369 = vadd.f32 %v2091, %v2324
  %v2370 = vadd.f32 %v2092, %v2328
  %v2371 = vadd.f32 %v2093, %v2332
  %v2372 = vadd.f32 %v2094, %v2336
  %v2373 = vadd.f32 %v2095, %v2324
  %v2374 = vadd.f32 %v2096, %v2328
  %v2375 = vadd.f32 %v2097, %v2332
  %v2376 = vadd.f32 %v2098, %v2336
  %v2377 = vadd.f32 %v2099, %v2324
  %v2378 = vadd.f32 %v2100, %v2328
  %v2379 = vadd.f32 %v2101, %v2332
  %v2380 = vadd.f32 %v2102, %v2336
  %v2381 = vadd.f32 %v2103, %v2324
  %v2382 = vadd.f32 %v2104, %v2328
  %v2383 = vadd.f32 %v2105, %v2332
  %v2384 = vadd.f32 %v2106, %v2336
  %v2385 = vadd.f32 %v2107, %v2324
  %v2386 = vadd.f32 %v2108, %v2328
  %v2387 = vadd.f32 %v2109, %v2332
  %v2388 = vadd.f32 %v2110, %v2336
  %v2389 = vadd.f32 %v2111, %v2324
  %v2390 = vadd.f32 %v2112, %v2328
  %v2391 = vadd.f32 %v2113, %v2332
  %v2392 = vadd.f32 %v2114, %v2336
  %v2393 = vadd.f32 %v2115, %v2324
  %v2394 = vadd.f32 %v2116, %v2328
  %v2395 = vadd.f32 %v2117, %v2332
  %v2396 = vadd.f32 %v2118, %v2336
  %v2397 = vadd.f32 %v2119, %v2324
  %v2398 = vadd.f32 %v2120, %v2328
  %v2399 = vadd.f32 %v2121, %v2332
  %v2400 = vadd.f32 %v2122, %v2336
  %v2401 = vadd.f32 %v2123, %v2324
  %v2402 = vadd.f32 %v2124, %v2328
  %v2403 = vadd.f32 %v2125, %v2332
  %v2404 = vadd.f32 %v2126, %v2336
  %v2405 = vadd.f32 %v2127, %v2324
  %v2406 = vadd.f32 %v2128, %v2328
  %v2407 = vadd.f32 %v2129, %v2332
  %v2408 = vadd.f32 %v2130, %v2336
  %v2409 = vadd.f32 %v2131, %v2324
  %v2410 = vadd.f32 %v2132, %v2328
  %v2411 = vadd.f32 %v2133, %v2332
  %v2412 = vadd.f32 %v2134, %v2336
  %v2413 = vadd.f32 %v2135, %v2324
  %v2414 = vadd.f32 %v2136, %v2328
  %v2415 = vadd.f32 %v2137, %v2332
  %v2416 = vadd.f32 %v2138, %v2336
  %v2417 = vadd.f32 %v2139, %v2324
  %v2418 = vadd.f32 %v2140, %v2328
  %v2419 = vadd.f32 %v2141, %v2332
  %v2420 = vadd.f32 %v2142, %v2336
  %v2421 = vadd.f32 %v2143, %v2324
  %v2422 = vadd.f32 %v2144, %v2328
  %v2423 = vadd.f32 %v2145, %v2332
  %v2424 = vadd.f32 %v2146, %v2336
  %v2425 = vadd.f32 %v2147, %v2324
  %v2426 = vadd.f32 %v2148, %v2328
  %v2427 = vadd.f32 %v2149, %v2332
  %v2428 = vadd.f32 %v2150, %v2336
  %v2429 = vadd.f32 %v2151, %v2324
  %v2430 = vadd.f32 %v2152, %v2328
  %v2431 = vadd.f32 %v2153, %v2332
  %v2432 = vadd.f32 %v2154, %v2336
  %v2433 = vadd.f32 %v2155, %v2324
  %v2434 = vadd.f32 %v2156, %v2328
  %v2435 = vadd.f32 %v2157, %v2332
  %v2436 = vadd.f32 %v2158, %v2336
  %v2437 = vadd.f32 %v2159, %v2324
  %v2438 = vadd.f32 %v2160, %v2328
  %v2439 = vadd.f32 %v2161, %v2332
  %v2440 = vadd.f32 %v2162, %v2336
  %v2441 = vadd.f32 %v2163, %v2324
  %v2442 = vadd.f32 %v2164, %v2328
  %v2443 = vadd.f32 %v2165, %v2332
  %v2444 = vadd.f32 %v2166, %v2336
  %v2445 = vadd.f32 %v2167, %v2324
  %v2446 = vadd.f32 %v2168, %v2328
  %v2447 = vadd.f32 %v2169, %v2332
  %v2448 = vadd.f32 %v2170, %v2336
  %v2449 = vadd.f32 %v2171, %v2324
  %v2450 = vadd.f32 %v2172, %v2328
  %v2451 = vadd.f32 %v2173, %v2332
  %v2452 = vadd.f32 %v2174, %v2336
  %v2453 = vadd.f32 %v2175, %v2324
  %v2454 = vadd.f32 %v2176, %v2328
  %v2455 = vadd.f32 %v2177, %v2332
  %v2456 = vadd.f32 %v2178, %v2336
  %v2457 = vadd.f32 %v2179, %v2324
  %v2458 = vadd.f32 %v2180, %v2328
  %v2459 = vadd.f32 %v2181, %v2332
  %v2460 = vadd.f32 %v2182, %v2336
  %v2461 = vadd.f32 %v2183, %v2324
  %v2462 = vadd.f32 %v2184, %v2328
  %v2463 = vadd.f32 %v2185, %v2332
  %v2464 = vadd.f32 %v2186, %v2336
  %v2465 = vadd.f32 %v2187, %v2324
  %v2466 = vadd.f32 %v2188, %v2328
  %v2467 = vadd.f32 %v2189, %v2332
  %v2468 = vadd.f32 %v2190, %v2336
  %v2469 = vadd.f32 %v2191, %v2324
  %v2470 = vadd.f32 %v2192, %v2328
  %v2471 = vadd.f32 %v2193, %v2332
  %v2472 = vadd.f32 %v2194, %v2336
  %v2473 = vadd.f32 %v2195, %v2324
  %v2474 = vadd.f32 %v2196, %v2328
  %v2475 = vadd.f32 %v2197, %v2332
  %v2476 = vadd.f32 %v2198, %v2336
  %v2477 = vadd.f32 %v2199, %v2324
  %v2478 = vadd.f32 %v2200, %v2328
  %v2479 = vadd.f32 %v2201, %v2332
  %v2480 = vadd.f32 %v2202, %v2336
  %v2481 = vadd.f32 %v2203, %v2324
  %v2482 = vadd.f32 %v2204, %v2328
  %v2483 = vadd.f32 %v2205, %v2332
  %v2484 = vadd.f32 %v2206, %v2336
  %v2485 = vadd.f32 %v2207, %v2324
  %v2486 = vadd.f32 %v2208, %v2328
  %v2487 = vadd.f32 %v2209, %v2332
  %v2488 = vadd.f32 %v2210, %v2336
  %v2489 = vadd.f32 %v2211, %v2324
  %v2490 = vadd.f32 %v2212, %v2328
  %v2491 = vadd.f32 %v2213, %v2332
  %v2492 = vadd.f32 %v2214, %v2336
  %v2493 = vadd.f32 %v2215, %v2324
  %v2494 = vadd.f32 %v2216, %v2328
  %v2495 = vadd.f32 %v2217, %v2332
  %v2496 = vadd.f32 %v2218, %v2336
  %v2497 = vadd.f32 %v2219, %v2324
  %v2498 = vadd.f32 %v2220, %v2328
  %v2499 = vadd.f32 %v2221, %v2332
  %v2500 = vadd.f32 %v2222, %v2336
  %v2501 = vadd.f32 %v2223, %v2324
  %v2502 = vadd.f32 %v2224, %v2328
  %v2503 = vadd.f32 %v2225, %v2332
  %v2504 = vadd.f32 %v2226, %v2336
  %v2505 = vadd.f32 %v2227, %v2324
  %v2506 = vadd.f32 %v2228, %v2328
  %v2507 = vadd.f32 %v2229, %v2332
  %v2508 = vadd.f32 %v2230, %v2336
  %v2509 = vadd.f32 %v2231, %v2324
  %v2510 = vadd.f32 %v2232, %v2328
  %v2511 = vadd.f32 %v2233, %v2332
  %v2512 = vadd.f32 %v2234, %v2336
  %v2513 = vadd.f32 %v2235, %v2324
  %v2514 = vadd.f32 %v2236, %v2328
  %v2515 = vadd.f32 %v2237, %v2332
  %v2516 = vadd.f32 %v2238, %v2336
  %v2517 = vadd.f32 %v2239, %v2324
  %v2518 = vadd.f32 %v2240, %v2328
  %v2519 = vadd.f32 %v2241, %v2332
  %v2520 = vadd.f32 %v2242, %v2336
  %v2521 = vadd.f32 %v2243, %v2324
  %v2522 = vadd.f32 %v2244, %v2328
  %v2523 = vadd.f32 %v2245, %v2332
  %v2524 = vadd.f32 %v2246, %v2336
  %v2525 = vadd.f32 %v2247, %v2324
  %v2526 = vadd.f32 %v2248, %v2328
  %v2527 = vadd.f32 %v2249, %v2332
  %v2528 = vadd.f32 %v2250, %v2336
  %v2529 = vadd.f32 %v2251, %v2324
  %v2530 = vadd.f32 %v2252, %v2328
  %v2531 = vadd.f32 %v2253, %v2332
  %v2532 = vadd.f32 %v2254, %v2336
  %v2533 = vadd.f32 %v2255, %v2324
  %v2534 = vadd.f32 %v2256, %v2328
  %v2535 = vadd.f32 %v2257, %v2332
  %v2536 = vadd.f32 %v2258, %v2336
  %v2537 = vadd.f32 %v2259, %v2324
  %v2538 = vadd.f32 %v2260, %v2328
  %v2539 = vadd.f32 %v2261, %v2332
  %v2540 = vadd.f32 %v2262, %v2336
  %v2541 = vadd.f32 %v2263, %v2324
  %v2542 = vadd.f32 %v2264, %v2328
  %v2543 = vadd.f32 %v2265, %v2332
  %v2544 = vadd.f32 %v2266, %v2336
  %v2545 = vadd.f32 %v2267, %v2324
  %v2546 = vadd.f32 %v2268, %v2328
  %v2547 = vadd.f32 %v2269, %v2332
  %v2548 = vadd.f32 %v2270, %v2336
  %v2549 = vadd.f32 %v2271, %v2324
  %v2550 = vadd.f32 %v2272, %v2328
  %v2551 = vadd.f32 %v2273, %v2332
  %v2552 = vadd.f32 %v2274, %v2336
  %v2553 = vadd.f32 %v2275, %v2324
  %v2554 = vadd.f32 %v2276, %v2328
  %v2555 = vadd.f32 %v2277, %v2332
  %v2556 = vadd.f32 %v2278, %v2336
  %v2557 = vadd.f32 %v2279, %v2324
  %v2558 = vadd.f32 %v2280, %v2328
  %v2559 = vadd.f32 %v2281, %v2332
  %v2560 = vadd.f32 %v2282, %v2336
  %v2561 = vadd.f32 %v2283, %v2324
  %v2562 = vadd.f32 %v2284, %v2328
  %v2563 = vadd.f32 %v2285, %v2332
  %v2564 = vadd.f32 %v2286, %v2336
  %v2565 = vadd.f32 %v2287, %v2324
  %v2566 = vadd.f32 %v2288, %v2328
  %v2567 = vadd.f32 %v2289, %v2332
  %v2568 = vadd.f32 %v2290, %v2336
  %v2569 = vadd.f32 %v2291, %v2324
  %v2570 = vadd.f32 %v2292, %v2328
  %v2571 = vadd.f32 %v2293, %v2332
  %v2572 = vadd.f32 %v2294, %v2336
  %v2573 = vadd.f32 %v2295, %v2324
  %v2574 = vadd.f32 %v2296, %v2328
  %v2575 = vadd.f32 %v2297, %v2332
  %v2576 = vadd.f32 %v2298, %v2336
  %v2577 = vadd.f32 %v2299, %v2324
  %v2578 = vadd.f32 %v2300, %v2328
  %v2579 = vadd.f32 %v2301, %v2332
  %v2580 = vadd.f32 %v2302, %v2336
  %v2581 = vadd.f32 %v2303, %v2324
  %v2582 = vadd.f32 %v2304, %v2328
  %v2583 = vadd.f32 %v2305, %v2332
  %v2584 = vadd.f32 %v2306, %v2336
  %v2585 = vadd.f32 %v2307, %v2324
  %v2586 = vadd.f32 %v2308, %v2328
  %v2587 = vadd.f32 %v2309, %v2332
  %v2588 = vadd.f32 %v2310, %v2336
  %v2589 = vadd.f32 %v2311, %v2324
  %v2590 = vadd.f32 %v2312, %v2328
  %v2591 = vadd.f32 %v2313, %v2332
  %v2592 = vadd.f32 %v2314, %v2336
  %v2593 = vadd.f32 %v2315, %v2324
  %v2594 = vadd.f32 %v2316, %v2328
  %v2595 = vadd.f32 %v2317, %v2332
  %v2596 = vadd.f32 %v2318, %v2336
  %vm2597 = vcmp.ge.f32.partialorder %v2341, 0.0
  %vm2598 = vcmp.ge.f32.partialorder %v2342, 0.0
  %vm2599 = vcmp.ge.f32.partialorder %v2343, 0.0
  %vm2600 = vcmp.ge.f32.partialorder %v2344, 0.0
  %vm2601 = vcmp.ge.f32.partialorder %v2345, 0.0
  %vm2602 = vcmp.ge.f32.partialorder %v2346, 0.0
  %vm2603 = vcmp.ge.f32.partialorder %v2347, 0.0
  %vm2604 = vcmp.ge.f32.partialorder %v2348, 0.0
  %vm2605 = vcmp.ge.f32.partialorder %v2349, 0.0
  %vm2606 = vcmp.ge.f32.partialorder %v2350, 0.0
  %vm2607 = vcmp.ge.f32.partialorder %v2351, 0.0
  %vm2608 = vcmp.ge.f32.partialorder %v2352, 0.0
  %vm2609 = vcmp.ge.f32.partialorder %v2353, 0.0
  %vm2610 = vcmp.ge.f32.partialorder %v2354, 0.0
  %vm2611 = vcmp.ge.f32.partialorder %v2355, 0.0
  %vm2612 = vcmp.ge.f32.partialorder %v2356, 0.0
  %vm2613 = vcmp.ge.f32.partialorder %v2357, 0.0
  %vm2614 = vcmp.ge.f32.partialorder %v2358, 0.0
  %vm2615 = vcmp.ge.f32.partialorder %v2359, 0.0
  %vm2616 = vcmp.ge.f32.partialorder %v2360, 0.0
  %vm2617 = vcmp.ge.f32.partialorder %v2361, 0.0
  %vm2618 = vcmp.ge.f32.partialorder %v2362, 0.0
  %vm2619 = vcmp.ge.f32.partialorder %v2363, 0.0
  %vm2620 = vcmp.ge.f32.partialorder %v2364, 0.0
  %vm2621 = vcmp.ge.f32.partialorder %v2365, 0.0
  %vm2622 = vcmp.ge.f32.partialorder %v2366, 0.0
  %vm2623 = vcmp.ge.f32.partialorder %v2367, 0.0
  %vm2624 = vcmp.ge.f32.partialorder %v2368, 0.0
  %vm2625 = vcmp.ge.f32.partialorder %v2369, 0.0
  %vm2626 = vcmp.ge.f32.partialorder %v2370, 0.0
  %vm2627 = vcmp.ge.f32.partialorder %v2371, 0.0
  %vm2628 = vcmp.ge.f32.partialorder %v2372, 0.0
  %vm2629 = vcmp.ge.f32.partialorder %v2373, 0.0
  %vm2630 = vcmp.ge.f32.partialorder %v2374, 0.0
  %vm2631 = vcmp.ge.f32.partialorder %v2375, 0.0
  %vm2632 = vcmp.ge.f32.partialorder %v2376, 0.0
  %vm2633 = vcmp.ge.f32.partialorder %v2377, 0.0
  %vm2634 = vcmp.ge.f32.partialorder %v2378, 0.0
  %vm2635 = vcmp.ge.f32.partialorder %v2379, 0.0
  %vm2636 = vcmp.ge.f32.partialorder %v2380, 0.0
  %vm2637 = vcmp.ge.f32.partialorder %v2381, 0.0
  %vm2638 = vcmp.ge.f32.partialorder %v2382, 0.0
  %vm2639 = vcmp.ge.f32.partialorder %v2383, 0.0
  %vm2640 = vcmp.ge.f32.partialorder %v2384, 0.0
  %vm2641 = vcmp.ge.f32.partialorder %v2385, 0.0
  %vm2642 = vcmp.ge.f32.partialorder %v2386, 0.0
  %vm2643 = vcmp.ge.f32.partialorder %v2387, 0.0
  %vm2644 = vcmp.ge.f32.partialorder %v2388, 0.0
  %vm2645 = vcmp.ge.f32.partialorder %v2389, 0.0
  %vm2646 = vcmp.ge.f32.partialorder %v2390, 0.0
  %vm2647 = vcmp.ge.f32.partialorder %v2391, 0.0
  %vm2648 = vcmp.ge.f32.partialorder %v2392, 0.0
  %vm2649 = vcmp.ge.f32.partialorder %v2393, 0.0
  %vm2650 = vcmp.ge.f32.partialorder %v2394, 0.0
  %vm2651 = vcmp.ge.f32.partialorder %v2395, 0.0
  %vm2652 = vcmp.ge.f32.partialorder %v2396, 0.0
  %vm2653 = vcmp.ge.f32.partialorder %v2397, 0.0
  %vm2654 = vcmp.ge.f32.partialorder %v2398, 0.0
  %vm2655 = vcmp.ge.f32.partialorder %v2399, 0.0
  %vm2656 = vcmp.ge.f32.partialorder %v2400, 0.0
  %vm2657 = vcmp.ge.f32.partialorder %v2401, 0.0
  %vm2658 = vcmp.ge.f32.partialorder %v2402, 0.0
  %vm2659 = vcmp.ge.f32.partialorder %v2403, 0.0
  %vm2660 = vcmp.ge.f32.partialorder %v2404, 0.0
  %vm2661 = vcmp.ge.f32.partialorder %v2405, 0.0
  %vm2662 = vcmp.ge.f32.partialorder %v2406, 0.0
  %vm2663 = vcmp.ge.f32.partialorder %v2407, 0.0
  %vm2664 = vcmp.ge.f32.partialorder %v2408, 0.0
  %vm2665 = vcmp.ge.f32.partialorder %v2409, 0.0
  %vm2666 = vcmp.ge.f32.partialorder %v2410, 0.0
  %vm2667 = vcmp.ge.f32.partialorder %v2411, 0.0
  %vm2668 = vcmp.ge.f32.partialorder %v2412, 0.0
  %vm2669 = vcmp.ge.f32.partialorder %v2413, 0.0
  %vm2670 = vcmp.ge.f32.partialorder %v2414, 0.0
  %vm2671 = vcmp.ge.f32.partialorder %v2415, 0.0
  %vm2672 = vcmp.ge.f32.partialorder %v2416, 0.0
  %vm2673 = vcmp.ge.f32.partialorder %v2417, 0.0
  %vm2674 = vcmp.ge.f32.partialorder %v2418, 0.0
  %vm2675 = vcmp.ge.f32.partialorder %v2419, 0.0
  %vm2676 = vcmp.ge.f32.partialorder %v2420, 0.0
  %vm2677 = vcmp.ge.f32.partialorder %v2421, 0.0
  %vm2678 = vcmp.ge.f32.partialorder %v2422, 0.0
  %vm2679 = vcmp.ge.f32.partialorder %v2423, 0.0
  %vm2680 = vcmp.ge.f32.partialorder %v2424, 0.0
  %vm2681 = vcmp.ge.f32.partialorder %v2425, 0.0
  %vm2682 = vcmp.ge.f32.partialorder %v2426, 0.0
  %vm2683 = vcmp.ge.f32.partialorder %v2427, 0.0
  %vm2684 = vcmp.ge.f32.partialorder %v2428, 0.0
  %vm2685 = vcmp.ge.f32.partialorder %v2429, 0.0
  %vm2686 = vcmp.ge.f32.partialorder %v2430, 0.0
  %vm2687 = vcmp.ge.f32.partialorder %v2431, 0.0
  %vm2688 = vcmp.ge.f32.partialorder %v2432, 0.0
  %vm2689 = vcmp.ge.f32.partialorder %v2433, 0.0
  %vm2690 = vcmp.ge.f32.partialorder %v2434, 0.0
  %vm2691 = vcmp.ge.f32.partialorder %v2435, 0.0
  %vm2692 = vcmp.ge.f32.partialorder %v2436, 0.0
  %vm2693 = vcmp.ge.f32.partialorder %v2437, 0.0
  %vm2694 = vcmp.ge.f32.partialorder %v2438, 0.0
  %vm2695 = vcmp.ge.f32.partialorder %v2439, 0.0
  %vm2696 = vcmp.ge.f32.partialorder %v2440, 0.0
  %vm2697 = vcmp.ge.f32.partialorder %v2441, 0.0
  %vm2698 = vcmp.ge.f32.partialorder %v2442, 0.0
  %vm2699 = vcmp.ge.f32.partialorder %v2443, 0.0
  %vm2700 = vcmp.ge.f32.partialorder %v2444, 0.0
  %vm2701 = vcmp.ge.f32.partialorder %v2445, 0.0
  %vm2702 = vcmp.ge.f32.partialorder %v2446, 0.0
  %vm2703 = vcmp.ge.f32.partialorder %v2447, 0.0
  %vm2704 = vcmp.ge.f32.partialorder %v2448, 0.0
  %vm2705 = vcmp.ge.f32.partialorder %v2449, 0.0
  %vm2706 = vcmp.ge.f32.partialorder %v2450, 0.0
  %vm2707 = vcmp.ge.f32.partialorder %v2451, 0.0
  %vm2708 = vcmp.ge.f32.partialorder %v2452, 0.0
  %vm2709 = vcmp.ge.f32.partialorder %v2453, 0.0
  %vm2710 = vcmp.ge.f32.partialorder %v2454, 0.0
  %vm2711 = vcmp.ge.f32.partialorder %v2455, 0.0
  %vm2712 = vcmp.ge.f32.partialorder %v2456, 0.0
  %vm2713 = vcmp.ge.f32.partialorder %v2457, 0.0
  %vm2714 = vcmp.ge.f32.partialorder %v2458, 0.0
  %vm2715 = vcmp.ge.f32.partialorder %v2459, 0.0
  %vm2716 = vcmp.ge.f32.partialorder %v2460, 0.0
  %vm2717 = vcmp.ge.f32.partialorder %v2461, 0.0
  %vm2718 = vcmp.ge.f32.partialorder %v2462, 0.0
  %vm2719 = vcmp.ge.f32.partialorder %v2463, 0.0
  %vm2720 = vcmp.ge.f32.partialorder %v2464, 0.0
  %vm2721 = vcmp.ge.f32.partialorder %v2465, 0.0
  %vm2722 = vcmp.ge.f32.partialorder %v2466, 0.0
  %vm2723 = vcmp.ge.f32.partialorder %v2467, 0.0
  %vm2724 = vcmp.ge.f32.partialorder %v2468, 0.0
  %vm2725 = vcmp.ge.f32.partialorder %v2469, 0.0
  %vm2726 = vcmp.ge.f32.partialorder %v2470, 0.0
  %vm2727 = vcmp.ge.f32.partialorder %v2471, 0.0
  %vm2728 = vcmp.ge.f32.partialorder %v2472, 0.0
  %vm2729 = vcmp.ge.f32.partialorder %v2473, 0.0
  %vm2730 = vcmp.ge.f32.partialorder %v2474, 0.0
  %vm2731 = vcmp.ge.f32.partialorder %v2475, 0.0
  %vm2732 = vcmp.ge.f32.partialorder %v2476, 0.0
  %vm2733 = vcmp.ge.f32.partialorder %v2477, 0.0
  %vm2734 = vcmp.ge.f32.partialorder %v2478, 0.0
  %vm2735 = vcmp.ge.f32.partialorder %v2479, 0.0
  %vm2736 = vcmp.ge.f32.partialorder %v2480, 0.0
  %vm2737 = vcmp.ge.f32.partialorder %v2481, 0.0
  %vm2738 = vcmp.ge.f32.partialorder %v2482, 0.0
  %vm2739 = vcmp.ge.f32.partialorder %v2483, 0.0
  %vm2740 = vcmp.ge.f32.partialorder %v2484, 0.0
  %vm2741 = vcmp.ge.f32.partialorder %v2485, 0.0
  %vm2742 = vcmp.ge.f32.partialorder %v2486, 0.0
  %vm2743 = vcmp.ge.f32.partialorder %v2487, 0.0
  %vm2744 = vcmp.ge.f32.partialorder %v2488, 0.0
  %vm2745 = vcmp.ge.f32.partialorder %v2489, 0.0
  %vm2746 = vcmp.ge.f32.partialorder %v2490, 0.0
  %vm2747 = vcmp.ge.f32.partialorder %v2491, 0.0
  %vm2748 = vcmp.ge.f32.partialorder %v2492, 0.0
  %vm2749 = vcmp.ge.f32.partialorder %v2493, 0.0
  %vm2750 = vcmp.ge.f32.partialorder %v2494, 0.0
  %vm2751 = vcmp.ge.f32.partialorder %v2495, 0.0
  %vm2752 = vcmp.ge.f32.partialorder %v2496, 0.0
  %vm2753 = vcmp.ge.f32.partialorder %v2497, 0.0
  %vm2754 = vcmp.ge.f32.partialorder %v2498, 0.0
  %vm2755 = vcmp.ge.f32.partialorder %v2499, 0.0
  %vm2756 = vcmp.ge.f32.partialorder %v2500, 0.0
  %vm2757 = vcmp.ge.f32.partialorder %v2501, 0.0
  %vm2758 = vcmp.ge.f32.partialorder %v2502, 0.0
  %vm2759 = vcmp.ge.f32.partialorder %v2503, 0.0
  %vm2760 = vcmp.ge.f32.partialorder %v2504, 0.0
  %vm2761 = vcmp.ge.f32.partialorder %v2505, 0.0
  %vm2762 = vcmp.ge.f32.partialorder %v2506, 0.0
  %vm2763 = vcmp.ge.f32.partialorder %v2507, 0.0
  %vm2764 = vcmp.ge.f32.partialorder %v2508, 0.0
  %vm2765 = vcmp.ge.f32.partialorder %v2509, 0.0
  %vm2766 = vcmp.ge.f32.partialorder %v2510, 0.0
  %vm2767 = vcmp.ge.f32.partialorder %v2511, 0.0
  %vm2768 = vcmp.ge.f32.partialorder %v2512, 0.0
  %vm2769 = vcmp.ge.f32.partialorder %v2513, 0.0
  %vm2770 = vcmp.ge.f32.partialorder %v2514, 0.0
  %vm2771 = vcmp.ge.f32.partialorder %v2515, 0.0
  %vm2772 = vcmp.ge.f32.partialorder %v2516, 0.0
  %vm2773 = vcmp.ge.f32.partialorder %v2517, 0.0
  %vm2774 = vcmp.ge.f32.partialorder %v2518, 0.0
  %vm2775 = vcmp.ge.f32.partialorder %v2519, 0.0
  %vm2776 = vcmp.ge.f32.partialorder %v2520, 0.0
  %vm2777 = vcmp.ge.f32.partialorder %v2521, 0.0
  %vm2778 = vcmp.ge.f32.partialorder %v2522, 0.0
  %vm2779 = vcmp.ge.f32.partialorder %v2523, 0.0
  %vm2780 = vcmp.ge.f32.partialorder %v2524, 0.0
  %vm2781 = vcmp.ge.f32.partialorder %v2525, 0.0
  %vm2782 = vcmp.ge.f32.partialorder %v2526, 0.0
  %vm2783 = vcmp.ge.f32.partialorder %v2527, 0.0
  %vm2784 = vcmp.ge.f32.partialorder %v2528, 0.0
  %vm2785 = vcmp.ge.f32.partialorder %v2529, 0.0
  %vm2786 = vcmp.ge.f32.partialorder %v2530, 0.0
  %vm2787 = vcmp.ge.f32.partialorder %v2531, 0.0
  %vm2788 = vcmp.ge.f32.partialorder %v2532, 0.0
  %vm2789 = vcmp.ge.f32.partialorder %v2533, 0.0
  %vm2790 = vcmp.ge.f32.partialorder %v2534, 0.0
  %vm2791 = vcmp.ge.f32.partialorder %v2535, 0.0
  %vm2792 = vcmp.ge.f32.partialorder %v2536, 0.0
  %vm2793 = vcmp.ge.f32.partialorder %v2537, 0.0
  %vm2794 = vcmp.ge.f32.partialorder %v2538, 0.0
  %vm2795 = vcmp.ge.f32.partialorder %v2539, 0.0
  %vm2796 = vcmp.ge.f32.partialorder %v2540, 0.0
  %vm2797 = vcmp.ge.f32.partialorder %v2541, 0.0
  %vm2798 = vcmp.ge.f32.partialorder %v2542, 0.0
  %vm2799 = vcmp.ge.f32.partialorder %v2543, 0.0
  %vm2800 = vcmp.ge.f32.partialorder %v2544, 0.0
  %vm2801 = vcmp.ge.f32.partialorder %v2545, 0.0
  %vm2802 = vcmp.ge.f32.partialorder %v2546, 0.0
  %vm2803 = vcmp.ge.f32.partialorder %v2547, 0.0
  %vm2804 = vcmp.ge.f32.partialorder %v2548, 0.0
  %vm2805 = vcmp.ge.f32.partialorder %v2549, 0.0
  %vm2806 = vcmp.ge.f32.partialorder %v2550, 0.0
  %vm2807 = vcmp.ge.f32.partialorder %v2551, 0.0
  %vm2808 = vcmp.ge.f32.partialorder %v2552, 0.0
  %vm2809 = vcmp.ge.f32.partialorder %v2553, 0.0
  %vm2810 = vcmp.ge.f32.partialorder %v2554, 0.0
  %vm2811 = vcmp.ge.f32.partialorder %v2555, 0.0
  %vm2812 = vcmp.ge.f32.partialorder %v2556, 0.0
  %vm2813 = vcmp.ge.f32.partialorder %v2557, 0.0
  %vm2814 = vcmp.ge.f32.partialorder %v2558, 0.0
  %vm2815 = vcmp.ge.f32.partialorder %v2559, 0.0
  %vm2816 = vcmp.ge.f32.partialorder %v2560, 0.0
  %vm2817 = vcmp.ge.f32.partialorder %v2561, 0.0
  %vm2818 = vcmp.ge.f32.partialorder %v2562, 0.0
  %vm2819 = vcmp.ge.f32.partialorder %v2563, 0.0
  %vm2820 = vcmp.ge.f32.partialorder %v2564, 0.0
  %vm2821 = vcmp.ge.f32.partialorder %v2565, 0.0
  %vm2822 = vcmp.ge.f32.partialorder %v2566, 0.0
  %vm2823 = vcmp.ge.f32.partialorder %v2567, 0.0
  %vm2824 = vcmp.ge.f32.partialorder %v2568, 0.0
  %vm2825 = vcmp.ge.f32.partialorder %v2569, 0.0
  %vm2826 = vcmp.ge.f32.partialorder %v2570, 0.0
  %vm2827 = vcmp.ge.f32.partialorder %v2571, 0.0
  %vm2828 = vcmp.ge.f32.partialorder %v2572, 0.0
  %vm2829 = vcmp.ge.f32.partialorder %v2573, 0.0
  %vm2830 = vcmp.ge.f32.partialorder %v2574, 0.0
  %vm2831 = vcmp.ge.f32.partialorder %v2575, 0.0
  %vm2832 = vcmp.ge.f32.partialorder %v2576, 0.0
  %vm2833 = vcmp.ge.f32.partialorder %v2577, 0.0
  %vm2834 = vcmp.ge.f32.partialorder %v2578, 0.0
  %vm2835 = vcmp.ge.f32.partialorder %v2579, 0.0
  %vm2836 = vcmp.ge.f32.partialorder %v2580, 0.0
  %vm2837 = vcmp.ge.f32.partialorder %v2581, 0.0
  %vm2838 = vcmp.ge.f32.partialorder %v2582, 0.0
  %vm2839 = vcmp.ge.f32.partialorder %v2583, 0.0
  %vm2840 = vcmp.ge.f32.partialorder %v2584, 0.0
  %vm2841 = vcmp.ge.f32.partialorder %v2585, 0.0
  %vm2842 = vcmp.ge.f32.partialorder %v2586, 0.0
  %vm2843 = vcmp.ge.f32.partialorder %v2587, 0.0
  %vm2844 = vcmp.ge.f32.partialorder %v2588, 0.0
  %vm2845 = vcmp.ge.f32.partialorder %v2589, 0.0
  %vm2846 = vcmp.ge.f32.partialorder %v2590, 0.0
  %vm2847 = vcmp.ge.f32.partialorder %v2591, 0.0
  %vm2848 = vcmp.ge.f32.partialorder %v2592, 0.0
  %vm2849 = vcmp.ge.f32.partialorder %v2593, 0.0
  %vm2850 = vcmp.ge.f32.partialorder %v2594, 0.0
  %vm2851 = vcmp.ge.f32.partialorder %v2595, 0.0
  %vm2852 = vcmp.ge.f32.partialorder %v2596, 0.0
  %v2853 = vmul.f32 %v2341, 0.2
  %v2854 = vmul.f32 %v2342, 0.2
  %v2855 = vmul.f32 %v2343, 0.2
  %v2856 = vmul.f32 %v2344, 0.2
  %v2857 = vmul.f32 %v2345, 0.2
  %v2858 = vmul.f32 %v2346, 0.2
  %v2859 = vmul.f32 %v2347, 0.2
  %v2860 = vmul.f32 %v2348, 0.2
  %v2861 = vmul.f32 %v2349, 0.2
  %v2862 = vmul.f32 %v2350, 0.2
  %v2863 = vmul.f32 %v2351, 0.2
  %v2864 = vmul.f32 %v2352, 0.2
  %v2865 = vmul.f32 %v2353, 0.2
  %v2866 = vmul.f32 %v2354, 0.2
  %v2867 = vmul.f32 %v2355, 0.2
  %v2868 = vmul.f32 %v2356, 0.2
  %v2869 = vmul.f32 %v2357, 0.2
  %v2870 = vmul.f32 %v2358, 0.2
  %v2871 = vmul.f32 %v2359, 0.2
  %v2872 = vmul.f32 %v2360, 0.2
  %v2873 = vmul.f32 %v2361, 0.2
  %v2874 = vmul.f32 %v2362, 0.2
  %v2875 = vmul.f32 %v2363, 0.2
  %v2876 = vmul.f32 %v2364, 0.2
  %v2877 = vmul.f32 %v2365, 0.2
  %v2878 = vmul.f32 %v2366, 0.2
  %v2879 = vmul.f32 %v2367, 0.2
  %v2880 = vmul.f32 %v2368, 0.2
  %v2881 = vmul.f32 %v2369, 0.2
  %v2882 = vmul.f32 %v2370, 0.2
  %v2883 = vmul.f32 %v2371, 0.2
  %v2884 = vmul.f32 %v2372, 0.2
  %v2885 = vmul.f32 %v2373, 0.2
  %v2886 = vmul.f32 %v2374, 0.2
  %v2887 = vmul.f32 %v2375, 0.2
  %v2888 = vmul.f32 %v2376, 0.2
  %v2889 = vmul.f32 %v2377, 0.2
  %v2890 = vmul.f32 %v2378, 0.2
  %v2891 = vmul.f32 %v2379, 0.2
  %v2892 = vmul.f32 %v2380, 0.2
  %v2893 = vmul.f32 %v2381, 0.2
  %v2894 = vmul.f32 %v2382, 0.2
  %v2895 = vmul.f32 %v2383, 0.2
  %v2896 = vmul.f32 %v2384, 0.2
  %v2897 = vmul.f32 %v2385, 0.2
  %v2898 = vmul.f32 %v2386, 0.2
  %v2899 = vmul.f32 %v2387, 0.2
  %v2900 = vmul.f32 %v2388, 0.2
  %v2901 = vmul.f32 %v2389, 0.2
  %v2902 = vmul.f32 %v2390, 0.2
  %v2903 = vmul.f32 %v2391, 0.2
  %v2904 = vmul.f32 %v2392, 0.2
  %v2905 = vmul.f32 %v2393, 0.2
  %v2906 = vmul.f32 %v2394, 0.2
  %v2907 = vmul.f32 %v2395, 0.2
  %v2908 = vmul.f32 %v2396, 0.2
  %v2909 = vmul.f32 %v2397, 0.2
  %v2910 = vmul.f32 %v2398, 0.2
  %v2911 = vmul.f32 %v2399, 0.2
  %v2912 = vmul.f32 %v2400, 0.2
  %v2913 = vmul.f32 %v2401, 0.2
  %v2914 = vmul.f32 %v2402, 0.2
  %v2915 = vmul.f32 %v2403, 0.2
  %v2916 = vmul.f32 %v2404, 0.2
  %v2917 = vmul.f32 %v2405, 0.2
  %v2918 = vmul.f32 %v2406, 0.2
  %v2919 = vmul.f32 %v2407, 0.2
  %v2920 = vmul.f32 %v2408, 0.2
  %v2921 = vmul.f32 %v2409, 0.2
  %v2922 = vmul.f32 %v2410, 0.2
  %v2923 = vmul.f32 %v2411, 0.2
  %v2924 = vmul.f32 %v2412, 0.2
  %v2925 = vmul.f32 %v2413, 0.2
  %v2926 = vmul.f32 %v2414, 0.2
  %v2927 = vmul.f32 %v2415, 0.2
  %v2928 = vmul.f32 %v2416, 0.2
  %v2929 = vmul.f32 %v2417, 0.2
  %v2930 = vmul.f32 %v2418, 0.2
  %v2931 = vmul.f32 %v2419, 0.2
  %v2932 = vmul.f32 %v2420, 0.2
  %v2933 = vmul.f32 %v2421, 0.2
  %v2934 = vmul.f32 %v2422, 0.2
  %v2935 = vmul.f32 %v2423, 0.2
  %v2936 = vmul.f32 %v2424, 0.2
  %v2937 = vmul.f32 %v2425, 0.2
  %v2938 = vmul.f32 %v2426, 0.2
  %v2939 = vmul.f32 %v2427, 0.2
  %v2940 = vmul.f32 %v2428, 0.2
  %v2941 = vmul.f32 %v2429, 0.2
  %v2942 = vmul.f32 %v2430, 0.2
  %v2943 = vmul.f32 %v2431, 0.2
  %v2944 = vmul.f32 %v2432, 0.2
  %v2945 = vmul.f32 %v2433, 0.2
  %v2946 = vmul.f32 %v2434, 0.2
  %v2947 = vmul.f32 %v2435, 0.2
  %v2948 = vmul.f32 %v2436, 0.2
  %v2949 = vmul.f32 %v2437, 0.2
  %v2950 = vmul.f32 %v2438, 0.2
  %v2951 = vmul.f32 %v2439, 0.2
  %v2952 = vmul.f32 %v2440, 0.2
  %v2953 = vmul.f32 %v2441, 0.2
  %v2954 = vmul.f32 %v2442, 0.2
  %v2955 = vmul.f32 %v2443, 0.2
  %v2956 = vmul.f32 %v2444, 0.2
  %v2957 = vmul.f32 %v2445, 0.2
  %v2958 = vmul.f32 %v2446, 0.2
  %v2959 = vmul.f32 %v2447, 0.2
  %v2960 = vmul.f32 %v2448, 0.2
  %v2961 = vmul.f32 %v2449, 0.2
  %v2962 = vmul.f32 %v2450, 0.2
  %v2963 = vmul.f32 %v2451, 0.2
  %v2964 = vmul.f32 %v2452, 0.2
  %v2965 = vmul.f32 %v2453, 0.2
  %v2966 = vmul.f32 %v2454, 0.2
  %v2967 = vmul.f32 %v2455, 0.2
  %v2968 = vmul.f32 %v2456, 0.2
  %v2969 = vmul.f32 %v2457, 0.2
  %v2970 = vmul.f32 %v2458, 0.2
  %v2971 = vmul.f32 %v2459, 0.2
  %v2972 = vmul.f32 %v2460, 0.2
  %v2973 = vmul.f32 %v2461, 0.2
  %v2974 = vmul.f32 %v2462, 0.2
  %v2975 = vmul.f32 %v2463, 0.2
  %v2976 = vmul.f32 %v2464, 0.2
  %v2977 = vmul.f32 %v2465, 0.2
  %v2978 = vmul.f32 %v2466, 0.2
  %v2979 = vmul.f32 %v2467, 0.2
  %v2980 = vmul.f32 %v2468, 0.2
  %v2981 = vmul.f32 %v2469, 0.2
  %v2982 = vmul.f32 %v2470, 0.2
  %v2983 = vmul.f32 %v2471, 0.2
  %v2984 = vmul.f32 %v2472, 0.2
  %v2985 = vmul.f32 %v2473, 0.2
  %v2986 = vmul.f32 %v2474, 0.2
  %v2987 = vmul.f32 %v2475, 0.2
  %v2988 = vmul.f32 %v2476, 0.2
  %v2989 = vmul.f32 %v2477, 0.2
  %v2990 = vmul.f32 %v2478, 0.2
  %v2991 = vmul.f32 %v2479, 0.2
  %v2992 = vmul.f32 %v2480, 0.2
  %v2993 = vmul.f32 %v2481, 0.2
  %v2994 = vmul.f32 %v2482, 0.2
  %v2995 = vmul.f32 %v2483, 0.2
  %v2996 = vmul.f32 %v2484, 0.2
  %v2997 = vmul.f32 %v2485, 0.2
  %v2998 = vmul.f32 %v2486, 0.2
  %v2999 = vmul.f32 %v2487, 0.2
  %v3000 = vmul.f32 %v2488, 0.2
  %v3001 = vmul.f32 %v2489, 0.2
  %v3002 = vmul.f32 %v2490, 0.2
  %v3003 = vmul.f32 %v2491, 0.2
  %v3004 = vmul.f32 %v2492, 0.2
  %v3005 = vmul.f32 %v2493, 0.2
  %v3006 = vmul.f32 %v2494, 0.2
  %v3007 = vmul.f32 %v2495, 0.2
  %v3008 = vmul.f32 %v2496, 0.2
  %v3009 = vmul.f32 %v2497, 0.2
  %v3010 = vmul.f32 %v2498, 0.2
  %v3011 = vmul.f32 %v2499, 0.2
  %v3012 = vmul.f32 %v2500, 0.2
  %v3013 = vmul.f32 %v2501, 0.2
  %v3014 = vmul.f32 %v2502, 0.2
  %v3015 = vmul.f32 %v2503, 0.2
  %v3016 = vmul.f32 %v2504, 0.2
  %v3017 = vmul.f32 %v2505, 0.2
  %v3018 = vmul.f32 %v2506, 0.2
  %v3019 = vmul.f32 %v2507, 0.2
  %v3020 = vmul.f32 %v2508, 0.2
  %v3021 = vmul.f32 %v2509, 0.2
  %v3022 = vmul.f32 %v2510, 0.2
  %v3023 = vmul.f32 %v2511, 0.2
  %v3024 = vmul.f32 %v2512, 0.2
  %v3025 = vmul.f32 %v2513, 0.2
  %v3026 = vmul.f32 %v2514, 0.2
  %v3027 = vmul.f32 %v2515, 0.2
  %v3028 = vmul.f32 %v2516, 0.2
  %v3029 = vmul.f32 %v2517, 0.2
  %v3030 = vmul.f32 %v2518, 0.2
  %v3031 = vmul.f32 %v2519, 0.2
  %v3032 = vmul.f32 %v2520, 0.2
  %v3033 = vmul.f32 %v2521, 0.2
  %v3034 = vmul.f32 %v2522, 0.2
  %v3035 = vmul.f32 %v2523, 0.2
  %v3036 = vmul.f32 %v2524, 0.2
  %v3037 = vmul.f32 %v2525, 0.2
  %v3038 = vmul.f32 %v2526, 0.2
  %v3039 = vmul.f32 %v2527, 0.2
  %v3040 = vmul.f32 %v2528, 0.2
  %v3041 = vmul.f32 %v2529, 0.2
  %v3042 = vmul.f32 %v2530, 0.2
  %v3043 = vmul.f32 %v2531, 0.2
  %v3044 = vmul.f32 %v2532, 0.2
  %v3045 = vmul.f32 %v2533, 0.2
  %v3046 = vmul.f32 %v2534, 0.2
  %v3047 = vmul.f32 %v2535, 0.2
  %v3048 = vmul.f32 %v2536, 0.2
  %v3049 = vmul.f32 %v2537, 0.2
  %v3050 = vmul.f32 %v2538, 0.2
  %v3051 = vmul.f32 %v2539, 0.2
  %v3052 = vmul.f32 %v2540, 0.2
  %v3053 = vmul.f32 %v2541, 0.2
  %v3054 = vmul.f32 %v2542, 0.2
  %v3055 = vmul.f32 %v2543, 0.2
  %v3056 = vmul.f32 %v2544, 0.2
  %v3057 = vmul.f32 %v2545, 0.2
  %v3058 = vmul.f32 %v2546, 0.2
  %v3059 = vmul.f32 %v2547, 0.2
  %v3060 = vmul.f32 %v2548, 0.2
  %v3061 = vmul.f32 %v2549, 0.2
  %v3062 = vmul.f32 %v2550, 0.2
  %v3063 = vmul.f32 %v2551, 0.2
  %v3064 = vmul.f32 %v2552, 0.2
  %v3065 = vmul.f32 %v2553, 0.2
  %v3066 = vmul.f32 %v2554, 0.2
  %v3067 = vmul.f32 %v2555, 0.2
  %v3068 = vmul.f32 %v2556, 0.2
  %v3069 = vmul.f32 %v2557, 0.2
  %v3070 = vmul.f32 %v2558, 0.2
  %v3071 = vmul.f32 %v2559, 0.2
  %v3072 = vmul.f32 %v2560, 0.2
  %v3073 = vmul.f32 %v2561, 0.2
  %v3074 = vmul.f32 %v2562, 0.2
  %v3075 = vmul.f32 %v2563, 0.2
  %v3076 = vmul.f32 %v2564, 0.2
  %v3077 = vmul.f32 %v2565, 0.2
  %v3078 = vmul.f32 %v2566, 0.2
  %v3079 = vmul.f32 %v2567, 0.2
  %v3080 = vmul.f32 %v2568, 0.2
  %v3081 = vmul.f32 %v2569, 0.2
  %v3082 = vmul.f32 %v2570, 0.2
  %v3083 = vmul.f32 %v2571, 0.2
  %v3084 = vmul.f32 %v2572, 0.2
  %v3085 = vmul.f32 %v2573, 0.2
  %v3086 = vmul.f32 %v2574, 0.2
  %v3087 = vmul.f32 %v2575, 0.2
  %v3088 = vmul.f32 %v2576, 0.2
  %v3089 = vmul.f32 %v2577, 0.2
  %v3090 = vmul.f32 %v2578, 0.2
  %v3091 = vmul.f32 %v2579, 0.2
  %v3092 = vmul.f32 %v2580, 0.2
  %v3093 = vmul.f32 %v2581, 0.2
  %v3094 = vmul.f32 %v2582, 0.2
  %v3095 = vmul.f32 %v2583, 0.2
  %v3096 = vmul.f32 %v2584, 0.2
  %v3097 = vmul.f32 %v2585, 0.2
  %v3098 = vmul.f32 %v2586, 0.2
  %v3099 = vmul.f32 %v2587, 0.2
  %v3100 = vmul.f32 %v2588, 0.2
  %v3101 = vmul.f32 %v2589, 0.2
  %v3102 = vmul.f32 %v2590, 0.2
  %v3103 = vmul.f32 %v2591, 0.2
  %v3104 = vmul.f32 %v2592, 0.2
  %v3105 = vmul.f32 %v2593, 0.2
  %v3106 = vmul.f32 %v2594, 0.2
  %v3107 = vmul.f32 %v2595, 0.2
  %v3108 = vmul.f32 %v2596, 0.2
  %v3109 = vsel %vm2597, %v2341, %v2853
  %v3110 = vsel %vm2598, %v2342, %v2854
  %v3111 = vsel %vm2599, %v2343, %v2855
  %v3112 = vsel %vm2600, %v2344, %v2856
  %v3113 = vsel %vm2601, %v2345, %v2857
  %v3114 = vsel %vm2602, %v2346, %v2858
  %v3115 = vsel %vm2603, %v2347, %v2859
  %v3116 = vsel %vm2604, %v2348, %v2860
  %v3117 = vsel %vm2605, %v2349, %v2861
  %v3118 = vsel %vm2606, %v2350, %v2862
  %v3119 = vsel %vm2607, %v2351, %v2863
  %v3120 = vsel %vm2608, %v2352, %v2864
  %v3121 = vsel %vm2609, %v2353, %v2865
  %v3122 = vsel %vm2610, %v2354, %v2866
  %v3123 = vsel %vm2611, %v2355, %v2867
  %v3124 = vsel %vm2612, %v2356, %v2868
  %v3125 = vsel %vm2613, %v2357, %v2869
  %v3126 = vsel %vm2614, %v2358, %v2870
  %v3127 = vsel %vm2615, %v2359, %v2871
  %v3128 = vsel %vm2616, %v2360, %v2872
  %v3129 = vsel %vm2617, %v2361, %v2873
  %v3130 = vsel %vm2618, %v2362, %v2874
  %v3131 = vsel %vm2619, %v2363, %v2875
  %v3132 = vsel %vm2620, %v2364, %v2876
  %v3133 = vsel %vm2621, %v2365, %v2877
  %v3134 = vsel %vm2622, %v2366, %v2878
  %v3135 = vsel %vm2623, %v2367, %v2879
  %v3136 = vsel %vm2624, %v2368, %v2880
  %v3137 = vsel %vm2625, %v2369, %v2881
  %v3138 = vsel %vm2626, %v2370, %v2882
  %v3139 = vsel %vm2627, %v2371, %v2883
  %v3140 = vsel %vm2628, %v2372, %v2884
  %v3141 = vsel %vm2629, %v2373, %v2885
  %v3142 = vsel %vm2630, %v2374, %v2886
  %v3143 = vsel %vm2631, %v2375, %v2887
  %v3144 = vsel %vm2632, %v2376, %v2888
  %v3145 = vsel %vm2633, %v2377, %v2889
  %v3146 = vsel %vm2634, %v2378, %v2890
  %v3147 = vsel %vm2635, %v2379, %v2891
  %v3148 = vsel %vm2636, %v2380, %v2892
  %v3149 = vsel %vm2637, %v2381, %v2893
  %v3150 = vsel %vm2638, %v2382, %v2894
  %v3151 = vsel %vm2639, %v2383, %v2895
  %v3152 = vsel %vm2640, %v2384, %v2896
  %v3153 = vsel %vm2641, %v2385, %v2897
  %v3154 = vsel %vm2642, %v2386, %v2898
  %v3155 = vsel %vm2643, %v2387, %v2899
  %v3156 = vsel %vm2644, %v2388, %v2900
  %v3157 = vsel %vm2645, %v2389, %v2901
  %v3158 = vsel %vm2646, %v2390, %v2902
  %v3159 = vsel %vm2647, %v2391, %v2903
  %v3160 = vsel %vm2648, %v2392, %v2904
  %v3161 = vsel %vm2649, %v2393, %v2905
  %v3162 = vsel %vm2650, %v2394, %v2906
  %v3163 = vsel %vm2651, %v2395, %v2907
  %v3164 = vsel %vm2652, %v2396, %v2908
  %v3165 = vsel %vm2653, %v2397, %v2909
  %v3166 = vsel %vm2654, %v2398, %v2910
  %v3167 = vsel %vm2655, %v2399, %v2911
  %v3168 = vsel %vm2656, %v2400, %v2912
  %v3169 = vsel %vm2657, %v2401, %v2913
  %v3170 = vsel %vm2658, %v2402, %v2914
  %v3171 = vsel %vm2659, %v2403, %v2915
  %v3172 = vsel %vm2660, %v2404, %v2916
  %v3173 = vsel %vm2661, %v2405, %v2917
  %v3174 = vsel %vm2662, %v2406, %v2918
  %v3175 = vsel %vm2663, %v2407, %v2919
  %v3176 = vsel %vm2664, %v2408, %v2920
  %v3177 = vsel %vm2665, %v2409, %v2921
  %v3178 = vsel %vm2666, %v2410, %v2922
  %v3179 = vsel %vm2667, %v2411, %v2923
  %v3180 = vsel %vm2668, %v2412, %v2924
  %v3181 = vsel %vm2669, %v2413, %v2925
  %v3182 = vsel %vm2670, %v2414, %v2926
  %v3183 = vsel %vm2671, %v2415, %v2927
  %v3184 = vsel %vm2672, %v2416, %v2928
  %v3185 = vsel %vm2673, %v2417, %v2929
  %v3186 = vsel %vm2674, %v2418, %v2930
  %v3187 = vsel %vm2675, %v2419, %v2931
  %v3188 = vsel %vm2676, %v2420, %v2932
  %v3189 = vsel %vm2677, %v2421, %v2933
  %v3190 = vsel %vm2678, %v2422, %v2934
  %v3191 = vsel %vm2679, %v2423, %v2935
  %v3192 = vsel %vm2680, %v2424, %v2936
  %v3193 = vsel %vm2681, %v2425, %v2937
  %v3194 = vsel %vm2682, %v2426, %v2938
  %v3195 = vsel %vm2683, %v2427, %v2939
  %v3196 = vsel %vm2684, %v2428, %v2940
  %v3197 = vsel %vm2685, %v2429, %v2941
  %v3198 = vsel %vm2686, %v2430, %v2942
  %v3199 = vsel %vm2687, %v2431, %v2943
  %v3200 = vsel %vm2688, %v2432, %v2944
  %v3201 = vsel %vm2689, %v2433, %v2945
  %v3202 = vsel %vm2690, %v2434, %v2946
  %v3203 = vsel %vm2691, %v2435, %v2947
  %v3204 = vsel %vm2692, %v2436, %v2948
  %v3205 = vsel %vm2693, %v2437, %v2949
  %v3206 = vsel %vm2694, %v2438, %v2950
  %v3207 = vsel %vm2695, %v2439, %v2951
  %v3208 = vsel %vm2696, %v2440, %v2952
  %v3209 = vsel %vm2697, %v2441, %v2953
  %v3210 = vsel %vm2698, %v2442, %v2954
  %v3211 = vsel %vm2699, %v2443, %v2955
  %v3212 = vsel %vm2700, %v2444, %v2956
  %v3213 = vsel %vm2701, %v2445, %v2957
  %v3214 = vsel %vm2702, %v2446, %v2958
  %v3215 = vsel %vm2703, %v2447, %v2959
  %v3216 = vsel %vm2704, %v2448, %v2960
  %v3217 = vsel %vm2705, %v2449, %v2961
  %v3218 = vsel %vm2706, %v2450, %v2962
  %v3219 = vsel %vm2707, %v2451, %v2963
  %v3220 = vsel %vm2708, %v2452, %v2964
  %v3221 = vsel %vm2709, %v2453, %v2965
  %v3222 = vsel %vm2710, %v2454, %v2966
  %v3223 = vsel %vm2711, %v2455, %v2967
  %v3224 = vsel %vm2712, %v2456, %v2968
  %v3225 = vsel %vm2713, %v2457, %v2969
  %v3226 = vsel %vm2714, %v2458, %v2970
  %v3227 = vsel %vm2715, %v2459, %v2971
  %v3228 = vsel %vm2716, %v2460, %v2972
  %v3229 = vsel %vm2717, %v2461, %v2973
  %v3230 = vsel %vm2718, %v2462, %v2974
  %v3231 = vsel %vm2719, %v2463, %v2975
  %v3232 = vsel %vm2720, %v2464, %v2976
  %v3233 = vsel %vm2721, %v2465, %v2977
  %v3234 = vsel %vm2722, %v2466, %v2978
  %v3235 = vsel %vm2723, %v2467, %v2979
  %v3236 = vsel %vm2724, %v2468, %v2980
  %v3237 = vsel %vm2725, %v2469, %v2981
  %v3238 = vsel %vm2726, %v2470, %v2982
  %v3239 = vsel %vm2727, %v2471, %v2983
  %v3240 = vsel %vm2728, %v2472, %v2984
  %v3241 = vsel %vm2729, %v2473, %v2985
  %v3242 = vsel %vm2730, %v2474, %v2986
  %v3243 = vsel %vm2731, %v2475, %v2987
  %v3244 = vsel %vm2732, %v2476, %v2988
  %v3245 = vsel %vm2733, %v2477, %v2989
  %v3246 = vsel %vm2734, %v2478, %v2990
  %v3247 = vsel %vm2735, %v2479, %v2991
  %v3248 = vsel %vm2736, %v2480, %v2992
  %v3249 = vsel %vm2737, %v2481, %v2993
  %v3250 = vsel %vm2738, %v2482, %v2994
  %v3251 = vsel %vm2739, %v2483, %v2995
  %v3252 = vsel %vm2740, %v2484, %v2996
  %v3253 = vsel %vm2741, %v2485, %v2997
  %v3254 = vsel %vm2742, %v2486, %v2998
  %v3255 = vsel %vm2743, %v2487, %v2999
  %v3256 = vsel %vm2744, %v2488, %v3000
  %v3257 = vsel %vm2745, %v2489, %v3001
  %v3258 = vsel %vm2746, %v2490, %v3002
  %v3259 = vsel %vm2747, %v2491, %v3003
  %v3260 = vsel %vm2748, %v2492, %v3004
  %v3261 = vsel %vm2749, %v2493, %v3005
  %v3262 = vsel %vm2750, %v2494, %v3006
  %v3263 = vsel %vm2751, %v2495, %v3007
  %v3264 = vsel %vm2752, %v2496, %v3008
  %v3265 = vsel %vm2753, %v2497, %v3009
  %v3266 = vsel %vm2754, %v2498, %v3010
  %v3267 = vsel %vm2755, %v2499, %v3011
  %v3268 = vsel %vm2756, %v2500, %v3012
  %v3269 = vsel %vm2757, %v2501, %v3013
  %v3270 = vsel %vm2758, %v2502, %v3014
  %v3271 = vsel %vm2759, %v2503, %v3015
  %v3272 = vsel %vm2760, %v2504, %v3016
  %v3273 = vsel %vm2761, %v2505, %v3017
  %v3274 = vsel %vm2762, %v2506, %v3018
  %v3275 = vsel %vm2763, %v2507, %v3019
  %v3276 = vsel %vm2764, %v2508, %v3020
  %v3277 = vsel %vm2765, %v2509, %v3021
  %v3278 = vsel %vm2766, %v2510, %v3022
  %v3279 = vsel %vm2767, %v2511, %v3023
  %v3280 = vsel %vm2768, %v2512, %v3024
  %v3281 = vsel %vm2769, %v2513, %v3025
  %v3282 = vsel %vm2770, %v2514, %v3026
  %v3283 = vsel %vm2771, %v2515, %v3027
  %v3284 = vsel %vm2772, %v2516, %v3028
  %v3285 = vsel %vm2773, %v2517, %v3029
  %v3286 = vsel %vm2774, %v2518, %v3030
  %v3287 = vsel %vm2775, %v2519, %v3031
  %v3288 = vsel %vm2776, %v2520, %v3032
  %v3289 = vsel %vm2777, %v2521, %v3033
  %v3290 = vsel %vm2778, %v2522, %v3034
  %v3291 = vsel %vm2779, %v2523, %v3035
  %v3292 = vsel %vm2780, %v2524, %v3036
  %v3293 = vsel %vm2781, %v2525, %v3037
  %v3294 = vsel %vm2782, %v2526, %v3038
  %v3295 = vsel %vm2783, %v2527, %v3039
  %v3296 = vsel %vm2784, %v2528, %v3040
  %v3297 = vsel %vm2785, %v2529, %v3041
  %v3298 = vsel %vm2786, %v2530, %v3042
  %v3299 = vsel %vm2787, %v2531, %v3043
  %v3300 = vsel %vm2788, %v2532, %v3044
  %v3301 = vsel %vm2789, %v2533, %v3045
  %v3302 = vsel %vm2790, %v2534, %v3046
  %v3303 = vsel %vm2791, %v2535, %v3047
  %v3304 = vsel %vm2792, %v2536, %v3048
  %v3305 = vsel %vm2793, %v2537, %v3049
  %v3306 = vsel %vm2794, %v2538, %v3050
  %v3307 = vsel %vm2795, %v2539, %v3051
  %v3308 = vsel %vm2796, %v2540, %v3052
  %v3309 = vsel %vm2797, %v2541, %v3053
  %v3310 = vsel %vm2798, %v2542, %v3054
  %v3311 = vsel %vm2799, %v2543, %v3055
  %v3312 = vsel %vm2800, %v2544, %v3056
  %v3313 = vsel %vm2801, %v2545, %v3057
  %v3314 = vsel %vm2802, %v2546, %v3058
  %v3315 = vsel %vm2803, %v2547, %v3059
  %v3316 = vsel %vm2804, %v2548, %v3060
  %v3317 = vsel %vm2805, %v2549, %v3061
  %v3318 = vsel %vm2806, %v2550, %v3062
  %v3319 = vsel %vm2807, %v2551, %v3063
  %v3320 = vsel %vm2808, %v2552, %v3064
  %v3321 = vsel %vm2809, %v2553, %v3065
  %v3322 = vsel %vm2810, %v2554, %v3066
  %v3323 = vsel %vm2811, %v2555, %v3067
  %v3324 = vsel %vm2812, %v2556, %v3068
  %v3325 = vsel %vm2813, %v2557, %v3069
  %v3326 = vsel %vm2814, %v2558, %v3070
  %v3327 = vsel %vm2815, %v2559, %v3071
  %v3328 = vsel %vm2816, %v2560, %v3072
  %v3329 = vsel %vm2817, %v2561, %v3073
  %v3330 = vsel %vm2818, %v2562, %v3074
  %v3331 = vsel %vm2819, %v2563, %v3075
  %v3332 = vsel %vm2820, %v2564, %v3076
  %v3333 = vsel %vm2821, %v2565, %v3077
  %v3334 = vsel %vm2822, %v2566, %v3078
  %v3335 = vsel %vm2823, %v2567, %v3079
  %v3336 = vsel %vm2824, %v2568, %v3080
  %v3337 = vsel %vm2825, %v2569, %v3081
  %v3338 = vsel %vm2826, %v2570, %v3082
  %v3339 = vsel %vm2827, %v2571, %v3083
  %v3340 = vsel %vm2828, %v2572, %v3084
  %v3341 = vsel %vm2829, %v2573, %v3085
  %v3342 = vsel %vm2830, %v2574, %v3086
  %v3343 = vsel %vm2831, %v2575, %v3087
  %v3344 = vsel %vm2832, %v2576, %v3088
  %v3345 = vsel %vm2833, %v2577, %v3089
  %v3346 = vsel %vm2834, %v2578, %v3090
  %v3347 = vsel %vm2835, %v2579, %v3091
  %v3348 = vsel %vm2836, %v2580, %v3092
  %v3349 = vsel %vm2837, %v2581, %v3093
  %v3350 = vsel %vm2838, %v2582, %v3094
  %v3351 = vsel %vm2839, %v2583, %v3095
  %v3352 = vsel %vm2840, %v2584, %v3096
  %v3353 = vsel %vm2841, %v2585, %v3097
  %v3354 = vsel %vm2842, %v2586, %v3098
  %v3355 = vsel %vm2843, %v2587, %v3099
  %v3356 = vsel %vm2844, %v2588, %v3100
  %v3357 = vsel %vm2845, %v2589, %v3101
  %v3358 = vsel %vm2846, %v2590, %v3102
  %v3359 = vsel %vm2847, %v2591, %v3103
  %v3360 = vsel %vm2848, %v2592, %v3104
  %v3361 = vsel %vm2849, %v2593, %v3105
  %v3362 = vsel %vm2850, %v2594, %v3106
  %v3363 = vsel %vm2851, %v2595, %v3107
  %v3364 = vsel %vm2852, %v2596, %v3108
  %v3365 = vld [vmem:[%s6] sm:$0xf]
  %v3367 = vlaneseq
  %v3368 = vshrl.u32 %v3367, 7
  %v3369 = vsub.s32 0, %v3368
  %v3370 = vrot.slane %v3365, %v3369
  %v3371 = vlaneseq
  %v3372 = vshrl.u32 %v3371, 7
  %v3373 = vsub.s32 1, %v3372
  %v3374 = vrot.slane %v3365, %v3373
  %v3375 = vlaneseq
  %v3376 = vshrl.u32 %v3375, 7
  %v3377 = vsub.s32 2, %v3376
  %v3378 = vrot.slane %v3365, %v3377
  %v3379 = vlaneseq
  %v3380 = vshrl.u32 %v3379, 7
  %v3381 = vsub.s32 3, %v3380
  %v3382 = vrot.slane %v3365, %v3381
  %v3387 = vmul.f32 %v3109, %v3370
  %v3388 = vmul.f32 %v3110, %v3374
  %v3389 = vmul.f32 %v3111, %v3378
  %v3390 = vmul.f32 %v3112, %v3382
  %v3391 = vmul.f32 %v3113, %v3370
  %v3392 = vmul.f32 %v3114, %v3374
  %v3393 = vmul.f32 %v3115, %v3378
  %v3394 = vmul.f32 %v3116, %v3382
  %v3395 = vmul.f32 %v3117, %v3370
  %v3396 = vmul.f32 %v3118, %v3374
  %v3397 = vmul.f32 %v3119, %v3378
  %v3398 = vmul.f32 %v3120, %v3382
  %v3399 = vmul.f32 %v3121, %v3370
  %v3400 = vmul.f32 %v3122, %v3374
  %v3401 = vmul.f32 %v3123, %v3378
  %v3402 = vmul.f32 %v3124, %v3382
  %v3403 = vmul.f32 %v3125, %v3370
  %v3404 = vmul.f32 %v3126, %v3374
  %v3405 = vmul.f32 %v3127, %v3378
  %v3406 = vmul.f32 %v3128, %v3382
  %v3407 = vmul.f32 %v3129, %v3370
  %v3408 = vmul.f32 %v3130, %v3374
  %v3409 = vmul.f32 %v3131, %v3378
  %v3410 = vmul.f32 %v3132, %v3382
  %v3411 = vmul.f32 %v3133, %v3370
  %v3412 = vmul.f32 %v3134, %v3374
  %v3413 = vmul.f32 %v3135, %v3378
  %v3414 = vmul.f32 %v3136, %v3382
  %v3415 = vmul.f32 %v3137, %v3370
  %v3416 = vmul.f32 %v3138, %v3374
  %v3417 = vmul.f32 %v3139, %v3378
  %v3418 = vmul.f32 %v3140, %v3382
  %v3419 = vmul.f32 %v3141, %v3370
  %v3420 = vmul.f32 %v3142, %v3374
  %v3421 = vmul.f32 %v3143, %v3378
  %v3422 = vmul.f32 %v3144, %v3382
  %v3423 = vmul.f32 %v3145, %v3370
  %v3424 = vmul.f32 %v3146, %v3374
  %v3425 = vmul.f32 %v3147, %v3378
  %v3426 = vmul.f32 %v3148, %v3382
  %v3427 = vmul.f32 %v3149, %v3370
  %v3428 = vmul.f32 %v3150, %v3374
  %v3429 = vmul.f32 %v3151, %v3378
  %v3430 = vmul.f32 %v3152, %v3382
  %v3431 = vmul.f32 %v3153, %v3370
  %v3432 = vmul.f32 %v3154, %v3374
  %v3433 = vmul.f32 %v3155, %v3378
  %v3434 = vmul.f32 %v3156, %v3382
  %v3435 = vmul.f32 %v3157, %v3370
  %v3436 = vmul.f32 %v3158, %v3374
  %v3437 = vmul.f32 %v3159, %v3378
  %v3438 = vmul.f32 %v3160, %v3382
  %v3439 = vmul.f32 %v3161, %v3370
  %v3440 = vmul.f32 %v3162, %v3374
  %v3441 = vmul.f32 %v3163, %v3378
  %v3442 = vmul.f32 %v3164, %v3382
  %v3443 = vmul.f32 %v3165, %v3370
  %v3444 = vmul.f32 %v3166, %v3374
  %v3445 = vmul.f32 %v3167, %v3378
  %v3446 = vmul.f32 %v3168, %v3382
  %v3447 = vmul.f32 %v3169, %v3370
  %v3448 = vmul.f32 %v3170, %v3374
  %v3449 = vmul.f32 %v3171, %v3378
  %v3450 = vmul.f32 %v3172, %v3382
  %v3451 = vmul.f32 %v3173, %v3370
  %v3452 = vmul.f32 %v3174, %v3374
  %v3453 = vmul.f32 %v3175, %v3378
  %v3454 = vmul.f32 %v3176, %v3382
  %v3455 = vmul.f32 %v3177, %v3370
  %v3456 = vmul.f32 %v3178, %v3374
  %v3457 = vmul.f32 %v3179, %v3378
  %v3458 = vmul.f32 %v3180, %v3382
  %v3459 = vmul.f32 %v3181, %v3370
  %v3460 = vmul.f32 %v3182, %v3374
  %v3461 = vmul.f32 %v3183, %v3378
  %v3462 = vmul.f32 %v3184, %v3382
  %v3463 = vmul.f32 %v3185, %v3370
  %v3464 = vmul.f32 %v3186, %v3374
  %v3465 = vmul.f32 %v3187, %v3378
  %v3466 = vmul.f32 %v3188, %v3382
  %v3467 = vmul.f32 %v3189, %v3370
  %v3468 = vmul.f32 %v3190, %v3374
  %v3469 = vmul.f32 %v3191, %v3378
  %v3470 = vmul.f32 %v3192, %v3382
  %v3471 = vmul.f32 %v3193, %v3370
  %v3472 = vmul.f32 %v3194, %v3374
  %v3473 = vmul.f32 %v3195, %v3378
  %v3474 = vmul.f32 %v3196, %v3382
  %v3475 = vmul.f32 %v3197, %v3370
  %v3476 = vmul.f32 %v3198, %v3374
  %v3477 = vmul.f32 %v3199, %v3378
  %v3478 = vmul.f32 %v3200, %v3382
  %v3479 = vmul.f32 %v3201, %v3370
  %v3480 = vmul.f32 %v3202, %v3374
  %v3481 = vmul.f32 %v3203, %v3378
  %v3482 = vmul.f32 %v3204, %v3382
  %v3483 = vmul.f32 %v3205, %v3370
  %v3484 = vmul.f32 %v3206, %v3374
  %v3485 = vmul.f32 %v3207, %v3378
  %v3486 = vmul.f32 %v3208, %v3382
  %v3487 = vmul.f32 %v3209, %v3370
  %v3488 = vmul.f32 %v3210, %v3374
  %v3489 = vmul.f32 %v3211, %v3378
  %v3490 = vmul.f32 %v3212, %v3382
  %v3491 = vmul.f32 %v3213, %v3370
  %v3492 = vmul.f32 %v3214, %v3374
  %v3493 = vmul.f32 %v3215, %v3378
  %v3494 = vmul.f32 %v3216, %v3382
  %v3495 = vmul.f32 %v3217, %v3370
  %v3496 = vmul.f32 %v3218, %v3374
  %v3497 = vmul.f32 %v3219, %v3378
  %v3498 = vmul.f32 %v3220, %v3382
  %v3499 = vmul.f32 %v3221, %v3370
  %v3500 = vmul.f32 %v3222, %v3374
  %v3501 = vmul.f32 %v3223, %v3378
  %v3502 = vmul.f32 %v3224, %v3382
  %v3503 = vmul.f32 %v3225, %v3370
  %v3504 = vmul.f32 %v3226, %v3374
  %v3505 = vmul.f32 %v3227, %v3378
  %v3506 = vmul.f32 %v3228, %v3382
  %v3507 = vmul.f32 %v3229, %v3370
  %v3508 = vmul.f32 %v3230, %v3374
  %v3509 = vmul.f32 %v3231, %v3378
  %v3510 = vmul.f32 %v3232, %v3382
  %v3511 = vmul.f32 %v3233, %v3370
  %v3512 = vmul.f32 %v3234, %v3374
  %v3513 = vmul.f32 %v3235, %v3378
  %v3514 = vmul.f32 %v3236, %v3382
  %v3515 = vmul.f32 %v3237, %v3370
  %v3516 = vmul.f32 %v3238, %v3374
  %v3517 = vmul.f32 %v3239, %v3378
  %v3518 = vmul.f32 %v3240, %v3382
  %v3519 = vmul.f32 %v3241, %v3370
  %v3520 = vmul.f32 %v3242, %v3374
  %v3521 = vmul.f32 %v3243, %v3378
  %v3522 = vmul.f32 %v3244, %v3382
  %v3523 = vmul.f32 %v3245, %v3370
  %v3524 = vmul.f32 %v3246, %v3374
  %v3525 = vmul.f32 %v3247, %v3378
  %v3526 = vmul.f32 %v3248, %v3382
  %v3527 = vmul.f32 %v3249, %v3370
  %v3528 = vmul.f32 %v3250, %v3374
  %v3529 = vmul.f32 %v3251, %v3378
  %v3530 = vmul.f32 %v3252, %v3382
  %v3531 = vmul.f32 %v3253, %v3370
  %v3532 = vmul.f32 %v3254, %v3374
  %v3533 = vmul.f32 %v3255, %v3378
  %v3534 = vmul.f32 %v3256, %v3382
  %v3535 = vmul.f32 %v3257, %v3370
  %v3536 = vmul.f32 %v3258, %v3374
  %v3537 = vmul.f32 %v3259, %v3378
  %v3538 = vmul.f32 %v3260, %v3382
  %v3539 = vmul.f32 %v3261, %v3370
  %v3540 = vmul.f32 %v3262, %v3374
  %v3541 = vmul.f32 %v3263, %v3378
  %v3542 = vmul.f32 %v3264, %v3382
  %v3543 = vmul.f32 %v3265, %v3370
  %v3544 = vmul.f32 %v3266, %v3374
  %v3545 = vmul.f32 %v3267, %v3378
  %v3546 = vmul.f32 %v3268, %v3382
  %v3547 = vmul.f32 %v3269, %v3370
  %v3548 = vmul.f32 %v3270, %v3374
  %v3549 = vmul.f32 %v3271, %v3378
  %v3550 = vmul.f32 %v3272, %v3382
  %v3551 = vmul.f32 %v3273, %v3370
  %v3552 = vmul.f32 %v3274, %v3374
  %v3553 = vmul.f32 %v3275, %v3378
  %v3554 = vmul.f32 %v3276, %v3382
  %v3555 = vmul.f32 %v3277, %v3370
  %v3556 = vmul.f32 %v3278, %v3374
  %v3557 = vmul.f32 %v3279, %v3378
  %v3558 = vmul.f32 %v3280, %v3382
  %v3559 = vmul.f32 %v3281, %v3370
  %v3560 = vmul.f32 %v3282, %v3374
  %v3561 = vmul.f32 %v3283, %v3378
  %v3562 = vmul.f32 %v3284, %v3382
  %v3563 = vmul.f32 %v3285, %v3370
  %v3564 = vmul.f32 %v3286, %v3374
  %v3565 = vmul.f32 %v3287, %v3378
  %v3566 = vmul.f32 %v3288, %v3382
  %v3567 = vmul.f32 %v3289, %v3370
  %v3568 = vmul.f32 %v3290, %v3374
  %v3569 = vmul.f32 %v3291, %v3378
  %v3570 = vmul.f32 %v3292, %v3382
  %v3571 = vmul.f32 %v3293, %v3370
  %v3572 = vmul.f32 %v3294, %v3374
  %v3573 = vmul.f32 %v3295, %v3378
  %v3574 = vmul.f32 %v3296, %v3382
  %v3575 = vmul.f32 %v3297, %v3370
  %v3576 = vmul.f32 %v3298, %v3374
  %v3577 = vmul.f32 %v3299, %v3378
  %v3578 = vmul.f32 %v3300, %v3382
  %v3579 = vmul.f32 %v3301, %v3370
  %v3580 = vmul.f32 %v3302, %v3374
  %v3581 = vmul.f32 %v3303, %v3378
  %v3582 = vmul.f32 %v3304, %v3382
  %v3583 = vmul.f32 %v3305, %v3370
  %v3584 = vmul.f32 %v3306, %v3374
  %v3585 = vmul.f32 %v3307, %v3378
  %v3586 = vmul.f32 %v3308, %v3382
  %v3587 = vmul.f32 %v3309, %v3370
  %v3588 = vmul.f32 %v3310, %v3374
  %v3589 = vmul.f32 %v3311, %v3378
  %v3590 = vmul.f32 %v3312, %v3382
  %v3591 = vmul.f32 %v3313, %v3370
  %v3592 = vmul.f32 %v3314, %v3374
  %v3593 = vmul.f32 %v3315, %v3378
  %v3594 = vmul.f32 %v3316, %v3382
  %v3595 = vmul.f32 %v3317, %v3370
  %v3596 = vmul.f32 %v3318, %v3374
  %v3597 = vmul.f32 %v3319, %v3378
  %v3598 = vmul.f32 %v3320, %v3382
  %v3599 = vmul.f32 %v3321, %v3370
  %v3600 = vmul.f32 %v3322, %v3374
  %v3601 = vmul.f32 %v3323, %v3378
  %v3602 = vmul.f32 %v3324, %v3382
  %v3603 = vmul.f32 %v3325, %v3370
  %v3604 = vmul.f32 %v3326, %v3374
  %v3605 = vmul.f32 %v3327, %v3378
  %v3606 = vmul.f32 %v3328, %v3382
  %v3607 = vmul.f32 %v3329, %v3370
  %v3608 = vmul.f32 %v3330, %v3374
  %v3609 = vmul.f32 %v3331, %v3378
  %v3610 = vmul.f32 %v3332, %v3382
  %v3611 = vmul.f32 %v3333, %v3370
  %v3612 = vmul.f32 %v3334, %v3374
  %v3613 = vmul.f32 %v3335, %v3378
  %v3614 = vmul.f32 %v3336, %v3382
  %v3615 = vmul.f32 %v3337, %v3370
  %v3616 = vmul.f32 %v3338, %v3374
  %v3617 = vmul.f32 %v3339, %v3378
  %v3618 = vmul.f32 %v3340, %v3382
  %v3619 = vmul.f32 %v3341, %v3370
  %v3620 = vmul.f32 %v3342, %v3374
  %v3621 = vmul.f32 %v3343, %v3378
  %v3622 = vmul.f32 %v3344, %v3382
  %v3623 = vmul.f32 %v3345, %v3370
  %v3624 = vmul.f32 %v3346, %v3374
  %v3625 = vmul.f32 %v3347, %v3378
  %v3626 = vmul.f32 %v3348, %v3382
  %v3627 = vmul.f32 %v3349, %v3370
  %v3628 = vmul.f32 %v3350, %v3374
  %v3629 = vmul.f32 %v3351, %v3378
  %v3630 = vmul.f32 %v3352, %v3382
  %v3631 = vmul.f32 %v3353, %v3370
  %v3632 = vmul.f32 %v3354, %v3374
  %v3633 = vmul.f32 %v3355, %v3378
  %v3634 = vmul.f32 %v3356, %v3382
  %v3635 = vmul.f32 %v3357, %v3370
  %v3636 = vmul.f32 %v3358, %v3374
  %v3637 = vmul.f32 %v3359, %v3378
  %v3638 = vmul.f32 %v3360, %v3382
  %v3639 = vmul.f32 %v3361, %v3370
  %v3640 = vmul.f32 %v3362, %v3374
  %v3641 = vmul.f32 %v3363, %v3378
  %v3642 = vmul.f32 %v3364, %v3382
  %v3643 = vadd.f32 %v3387, %v3388
  %v3644 = vadd.f32 %v3643, %v3389
  %v3645 = vadd.f32 %v3644, %v3390
  %3646 = vadd.xlane.f32.xlu0 %v3645
  %v3647 = vpop.xlane.xlu0 %3646
  %v3648 = vadd.f32 %v3391, %v3392
  %v3649 = vadd.f32 %v3648, %v3393
  %v3650 = vadd.f32 %v3649, %v3394
  %3651 = vadd.xlane.f32.xlu0 %v3650
  %v3652 = vpop.xlane.xlu0 %3651
  %v3653 = vadd.f32 %v3395, %v3396
  %v3654 = vadd.f32 %v3653, %v3397
  %v3655 = vadd.f32 %v3654, %v3398
  %3656 = vadd.xlane.f32.xlu0 %v3655
  %v3657 = vpop.xlane.xlu0 %3656
  %v3658 = vadd.f32 %v3399, %v3400
  %v3659 = vadd.f32 %v3658, %v3401
  %v3660 = vadd.f32 %v3659, %v3402
  %3661 = vadd.xlane.f32.xlu0 %v3660
  %v3662 = vpop.xlane.xlu0 %3661
  %v3663 = vadd.f32 %v3403, %v3404
  %v3664 = vadd.f32 %v3663, %v3405
  %v3665 = vadd.f32 %v3664, %v3406
  %3666 = vadd.xlane.f32.xlu0 %v3665
  %v3667 = vpop.xlane.xlu0 %3666
  %v3668 = vadd.f32 %v3407, %v3408
  %v3669 = vadd.f32 %v3668, %v3409
  %v3670 = vadd.f32 %v3669, %v3410
  %3671 = vadd.xlane.f32.xlu0 %v3670
  %v3672 = vpop.xlane.xlu0 %3671
  %v3673 = vadd.f32 %v3411, %v3412
  %v3674 = vadd.f32 %v3673, %v3413
  %v3675 = vadd.f32 %v3674, %v3414
  %3676 = vadd.xlane.f32.xlu0 %v3675
  %v3677 = vpop.xlane.xlu0 %3676
  %v3678 = vadd.f32 %v3415, %v3416
  %v3679 = vadd.f32 %v3678, %v3417
  %v3680 = vadd.f32 %v3679, %v3418
  %3681 = vadd.xlane.f32.xlu0 %v3680
  %v3682 = vpop.xlane.xlu0 %3681
  %v3683 = vadd.f32 %v3419, %v3420
  %v3684 = vadd.f32 %v3683, %v3421
  %v3685 = vadd.f32 %v3684, %v3422
  %3686 = vadd.xlane.f32.xlu0 %v3685
  %v3687 = vpop.xlane.xlu0 %3686
  %v3688 = vadd.f32 %v3423, %v3424
  %v3689 = vadd.f32 %v3688, %v3425
  %v3690 = vadd.f32 %v3689, %v3426
  %3691 = vadd.xlane.f32.xlu0 %v3690
  %v3692 = vpop.xlane.xlu0 %3691
  %v3693 = vadd.f32 %v3427, %v3428
  %v3694 = vadd.f32 %v3693, %v3429
  %v3695 = vadd.f32 %v3694, %v3430
  %3696 = vadd.xlane.f32.xlu0 %v3695
  %v3697 = vpop.xlane.xlu0 %3696
  %v3698 = vadd.f32 %v3431, %v3432
  %v3699 = vadd.f32 %v3698, %v3433
  %v3700 = vadd.f32 %v3699, %v3434
  %3701 = vadd.xlane.f32.xlu0 %v3700
  %v3702 = vpop.xlane.xlu0 %3701
  %v3703 = vadd.f32 %v3435, %v3436
  %v3704 = vadd.f32 %v3703, %v3437
  %v3705 = vadd.f32 %v3704, %v3438
  %3706 = vadd.xlane.f32.xlu0 %v3705
  %v3707 = vpop.xlane.xlu0 %3706
  %v3708 = vadd.f32 %v3439, %v3440
  %v3709 = vadd.f32 %v3708, %v3441
  %v3710 = vadd.f32 %v3709, %v3442
  %3711 = vadd.xlane.f32.xlu0 %v3710
  %v3712 = vpop.xlane.xlu0 %3711
  %v3713 = vadd.f32 %v3443, %v3444
  %v3714 = vadd.f32 %v3713, %v3445
  %v3715 = vadd.f32 %v3714, %v3446
  %3716 = vadd.xlane.f32.xlu0 %v3715
  %v3717 = vpop.xlane.xlu0 %3716
  %v3718 = vadd.f32 %v3447, %v3448
  %v3719 = vadd.f32 %v3718, %v3449
  %v3720 = vadd.f32 %v3719, %v3450
  %3721 = vadd.xlane.f32.xlu0 %v3720
  %v3722 = vpop.xlane.xlu0 %3721
  %v3723 = vadd.f32 %v3451, %v3452
  %v3724 = vadd.f32 %v3723, %v3453
  %v3725 = vadd.f32 %v3724, %v3454
  %3726 = vadd.xlane.f32.xlu0 %v3725
  %v3727 = vpop.xlane.xlu0 %3726
  %v3728 = vadd.f32 %v3455, %v3456
  %v3729 = vadd.f32 %v3728, %v3457
  %v3730 = vadd.f32 %v3729, %v3458
  %3731 = vadd.xlane.f32.xlu0 %v3730
  %v3732 = vpop.xlane.xlu0 %3731
  %v3733 = vadd.f32 %v3459, %v3460
  %v3734 = vadd.f32 %v3733, %v3461
  %v3735 = vadd.f32 %v3734, %v3462
  %3736 = vadd.xlane.f32.xlu0 %v3735
  %v3737 = vpop.xlane.xlu0 %3736
  %v3738 = vadd.f32 %v3463, %v3464
  %v3739 = vadd.f32 %v3738, %v3465
  %v3740 = vadd.f32 %v3739, %v3466
  %3741 = vadd.xlane.f32.xlu0 %v3740
  %v3742 = vpop.xlane.xlu0 %3741
  %v3743 = vadd.f32 %v3467, %v3468
  %v3744 = vadd.f32 %v3743, %v3469
  %v3745 = vadd.f32 %v3744, %v3470
  %3746 = vadd.xlane.f32.xlu0 %v3745
  %v3747 = vpop.xlane.xlu0 %3746
  %v3748 = vadd.f32 %v3471, %v3472
  %v3749 = vadd.f32 %v3748, %v3473
  %v3750 = vadd.f32 %v3749, %v3474
  %3751 = vadd.xlane.f32.xlu0 %v3750
  %v3752 = vpop.xlane.xlu0 %3751
  %v3753 = vadd.f32 %v3475, %v3476
  %v3754 = vadd.f32 %v3753, %v3477
  %v3755 = vadd.f32 %v3754, %v3478
  %3756 = vadd.xlane.f32.xlu0 %v3755
  %v3757 = vpop.xlane.xlu0 %3756
  %v3758 = vadd.f32 %v3479, %v3480
  %v3759 = vadd.f32 %v3758, %v3481
  %v3760 = vadd.f32 %v3759, %v3482
  %3761 = vadd.xlane.f32.xlu0 %v3760
  %v3762 = vpop.xlane.xlu0 %3761
  %v3763 = vadd.f32 %v3483, %v3484
  %v3764 = vadd.f32 %v3763, %v3485
  %v3765 = vadd.f32 %v3764, %v3486
  %3766 = vadd.xlane.f32.xlu0 %v3765
  %v3767 = vpop.xlane.xlu0 %3766
  %v3768 = vadd.f32 %v3487, %v3488
  %v3769 = vadd.f32 %v3768, %v3489
  %v3770 = vadd.f32 %v3769, %v3490
  %3771 = vadd.xlane.f32.xlu0 %v3770
  %v3772 = vpop.xlane.xlu0 %3771
  %v3773 = vadd.f32 %v3491, %v3492
  %v3774 = vadd.f32 %v3773, %v3493
  %v3775 = vadd.f32 %v3774, %v3494
  %3776 = vadd.xlane.f32.xlu0 %v3775
  %v3777 = vpop.xlane.xlu0 %3776
  %v3778 = vadd.f32 %v3495, %v3496
  %v3779 = vadd.f32 %v3778, %v3497
  %v3780 = vadd.f32 %v3779, %v3498
  %3781 = vadd.xlane.f32.xlu0 %v3780
  %v3782 = vpop.xlane.xlu0 %3781
  %v3783 = vadd.f32 %v3499, %v3500
  %v3784 = vadd.f32 %v3783, %v3501
  %v3785 = vadd.f32 %v3784, %v3502
  %3786 = vadd.xlane.f32.xlu0 %v3785
  %v3787 = vpop.xlane.xlu0 %3786
  %v3788 = vadd.f32 %v3503, %v3504
  %v3789 = vadd.f32 %v3788, %v3505
  %v3790 = vadd.f32 %v3789, %v3506
  %3791 = vadd.xlane.f32.xlu0 %v3790
  %v3792 = vpop.xlane.xlu0 %3791
  %v3793 = vadd.f32 %v3507, %v3508
  %v3794 = vadd.f32 %v3793, %v3509
  %v3795 = vadd.f32 %v3794, %v3510
  %3796 = vadd.xlane.f32.xlu0 %v3795
  %v3797 = vpop.xlane.xlu0 %3796
  %v3798 = vadd.f32 %v3511, %v3512
  %v3799 = vadd.f32 %v3798, %v3513
  %v3800 = vadd.f32 %v3799, %v3514
  %3801 = vadd.xlane.f32.xlu0 %v3800
  %v3802 = vpop.xlane.xlu0 %3801
  %v3803 = vadd.f32 %v3515, %v3516
  %v3804 = vadd.f32 %v3803, %v3517
  %v3805 = vadd.f32 %v3804, %v3518
  %3806 = vadd.xlane.f32.xlu0 %v3805
  %v3807 = vpop.xlane.xlu0 %3806
  %v3808 = vadd.f32 %v3519, %v3520
  %v3809 = vadd.f32 %v3808, %v3521
  %v3810 = vadd.f32 %v3809, %v3522
  %3811 = vadd.xlane.f32.xlu0 %v3810
  %v3812 = vpop.xlane.xlu0 %3811
  %v3813 = vadd.f32 %v3523, %v3524
  %v3814 = vadd.f32 %v3813, %v3525
  %v3815 = vadd.f32 %v3814, %v3526
  %3816 = vadd.xlane.f32.xlu0 %v3815
  %v3817 = vpop.xlane.xlu0 %3816
  %v3818 = vadd.f32 %v3527, %v3528
  %v3819 = vadd.f32 %v3818, %v3529
  %v3820 = vadd.f32 %v3819, %v3530
  %3821 = vadd.xlane.f32.xlu0 %v3820
  %v3822 = vpop.xlane.xlu0 %3821
  %v3823 = vadd.f32 %v3531, %v3532
  %v3824 = vadd.f32 %v3823, %v3533
  %v3825 = vadd.f32 %v3824, %v3534
  %3826 = vadd.xlane.f32.xlu0 %v3825
  %v3827 = vpop.xlane.xlu0 %3826
  %v3828 = vadd.f32 %v3535, %v3536
  %v3829 = vadd.f32 %v3828, %v3537
  %v3830 = vadd.f32 %v3829, %v3538
  %3831 = vadd.xlane.f32.xlu0 %v3830
  %v3832 = vpop.xlane.xlu0 %3831
  %v3833 = vadd.f32 %v3539, %v3540
  %v3834 = vadd.f32 %v3833, %v3541
  %v3835 = vadd.f32 %v3834, %v3542
  %3836 = vadd.xlane.f32.xlu0 %v3835
  %v3837 = vpop.xlane.xlu0 %3836
  %v3838 = vadd.f32 %v3543, %v3544
  %v3839 = vadd.f32 %v3838, %v3545
  %v3840 = vadd.f32 %v3839, %v3546
  %3841 = vadd.xlane.f32.xlu0 %v3840
  %v3842 = vpop.xlane.xlu0 %3841
  %v3843 = vadd.f32 %v3547, %v3548
  %v3844 = vadd.f32 %v3843, %v3549
  %v3845 = vadd.f32 %v3844, %v3550
  %3846 = vadd.xlane.f32.xlu0 %v3845
  %v3847 = vpop.xlane.xlu0 %3846
  %v3848 = vadd.f32 %v3551, %v3552
  %v3849 = vadd.f32 %v3848, %v3553
  %v3850 = vadd.f32 %v3849, %v3554
  %3851 = vadd.xlane.f32.xlu0 %v3850
  %v3852 = vpop.xlane.xlu0 %3851
  %v3853 = vadd.f32 %v3555, %v3556
  %v3854 = vadd.f32 %v3853, %v3557
  %v3855 = vadd.f32 %v3854, %v3558
  %3856 = vadd.xlane.f32.xlu0 %v3855
  %v3857 = vpop.xlane.xlu0 %3856
  %v3858 = vadd.f32 %v3559, %v3560
  %v3859 = vadd.f32 %v3858, %v3561
  %v3860 = vadd.f32 %v3859, %v3562
  %3861 = vadd.xlane.f32.xlu0 %v3860
  %v3862 = vpop.xlane.xlu0 %3861
  %v3863 = vadd.f32 %v3563, %v3564
  %v3864 = vadd.f32 %v3863, %v3565
  %v3865 = vadd.f32 %v3864, %v3566
  %3866 = vadd.xlane.f32.xlu0 %v3865
  %v3867 = vpop.xlane.xlu0 %3866
  %v3868 = vadd.f32 %v3567, %v3568
  %v3869 = vadd.f32 %v3868, %v3569
  %v3870 = vadd.f32 %v3869, %v3570
  %3871 = vadd.xlane.f32.xlu0 %v3870
  %v3872 = vpop.xlane.xlu0 %3871
  %v3873 = vadd.f32 %v3571, %v3572
  %v3874 = vadd.f32 %v3873, %v3573
  %v3875 = vadd.f32 %v3874, %v3574
  %3876 = vadd.xlane.f32.xlu0 %v3875
  %v3877 = vpop.xlane.xlu0 %3876
  %v3878 = vadd.f32 %v3575, %v3576
  %v3879 = vadd.f32 %v3878, %v3577
  %v3880 = vadd.f32 %v3879, %v3578
  %3881 = vadd.xlane.f32.xlu0 %v3880
  %v3882 = vpop.xlane.xlu0 %3881
  %v3883 = vadd.f32 %v3579, %v3580
  %v3884 = vadd.f32 %v3883, %v3581
  %v3885 = vadd.f32 %v3884, %v3582
  %3886 = vadd.xlane.f32.xlu0 %v3885
  %v3887 = vpop.xlane.xlu0 %3886
  %v3888 = vadd.f32 %v3583, %v3584
  %v3889 = vadd.f32 %v3888, %v3585
  %v3890 = vadd.f32 %v3889, %v3586
  %3891 = vadd.xlane.f32.xlu0 %v3890
  %v3892 = vpop.xlane.xlu0 %3891
  %v3893 = vadd.f32 %v3587, %v3588
  %v3894 = vadd.f32 %v3893, %v3589
  %v3895 = vadd.f32 %v3894, %v3590
  %3896 = vadd.xlane.f32.xlu0 %v3895
  %v3897 = vpop.xlane.xlu0 %3896
  %v3898 = vadd.f32 %v3591, %v3592
  %v3899 = vadd.f32 %v3898, %v3593
  %v3900 = vadd.f32 %v3899, %v3594
  %3901 = vadd.xlane.f32.xlu0 %v3900
  %v3902 = vpop.xlane.xlu0 %3901
  %v3903 = vadd.f32 %v3595, %v3596
  %v3904 = vadd.f32 %v3903, %v3597
  %v3905 = vadd.f32 %v3904, %v3598
  %3906 = vadd.xlane.f32.xlu0 %v3905
  %v3907 = vpop.xlane.xlu0 %3906
  %v3908 = vadd.f32 %v3599, %v3600
  %v3909 = vadd.f32 %v3908, %v3601
  %v3910 = vadd.f32 %v3909, %v3602
  %3911 = vadd.xlane.f32.xlu0 %v3910
  %v3912 = vpop.xlane.xlu0 %3911
  %v3913 = vadd.f32 %v3603, %v3604
  %v3914 = vadd.f32 %v3913, %v3605
  %v3915 = vadd.f32 %v3914, %v3606
  %3916 = vadd.xlane.f32.xlu0 %v3915
  %v3917 = vpop.xlane.xlu0 %3916
  %v3918 = vadd.f32 %v3607, %v3608
  %v3919 = vadd.f32 %v3918, %v3609
  %v3920 = vadd.f32 %v3919, %v3610
  %3921 = vadd.xlane.f32.xlu0 %v3920
  %v3922 = vpop.xlane.xlu0 %3921
  %v3923 = vadd.f32 %v3611, %v3612
  %v3924 = vadd.f32 %v3923, %v3613
  %v3925 = vadd.f32 %v3924, %v3614
  %3926 = vadd.xlane.f32.xlu0 %v3925
  %v3927 = vpop.xlane.xlu0 %3926
  %v3928 = vadd.f32 %v3615, %v3616
  %v3929 = vadd.f32 %v3928, %v3617
  %v3930 = vadd.f32 %v3929, %v3618
  %3931 = vadd.xlane.f32.xlu0 %v3930
  %v3932 = vpop.xlane.xlu0 %3931
  %v3933 = vadd.f32 %v3619, %v3620
  %v3934 = vadd.f32 %v3933, %v3621
  %v3935 = vadd.f32 %v3934, %v3622
  %3936 = vadd.xlane.f32.xlu0 %v3935
  %v3937 = vpop.xlane.xlu0 %3936
  %v3938 = vadd.f32 %v3623, %v3624
  %v3939 = vadd.f32 %v3938, %v3625
  %v3940 = vadd.f32 %v3939, %v3626
  %3941 = vadd.xlane.f32.xlu0 %v3940
  %v3942 = vpop.xlane.xlu0 %3941
  %v3943 = vadd.f32 %v3627, %v3628
  %v3944 = vadd.f32 %v3943, %v3629
  %v3945 = vadd.f32 %v3944, %v3630
  %3946 = vadd.xlane.f32.xlu0 %v3945
  %v3947 = vpop.xlane.xlu0 %3946
  %v3948 = vadd.f32 %v3631, %v3632
  %v3949 = vadd.f32 %v3948, %v3633
  %v3950 = vadd.f32 %v3949, %v3634
  %3951 = vadd.xlane.f32.xlu0 %v3950
  %v3952 = vpop.xlane.xlu0 %3951
  %v3953 = vadd.f32 %v3635, %v3636
  %v3954 = vadd.f32 %v3953, %v3637
  %v3955 = vadd.f32 %v3954, %v3638
  %3956 = vadd.xlane.f32.xlu0 %v3955
  %v3957 = vpop.xlane.xlu0 %3956
  %v3958 = vadd.f32 %v3639, %v3640
  %v3959 = vadd.f32 %v3958, %v3641
  %v3960 = vadd.f32 %v3959, %v3642
  %3961 = vadd.xlane.f32.xlu0 %v3960
  %v3962 = vpop.xlane.xlu0 %3961
  %v3963 = vld [vmem:[#allocation2] sm:$0x1]
  %v3965 = vlaneseq
  %v3966 = vshrl.u32 %v3965, 7
  %v3967 = vsub.s32 0, %v3966
  %v3968 = vrot.slane %v3963, %v3967
  %v3970 = vadd.f32 %v3647, %v3968
  %v3971 = vadd.f32 %v3652, %v3968
  %v3972 = vadd.f32 %v3657, %v3968
  %v3973 = vadd.f32 %v3662, %v3968
  %v3974 = vadd.f32 %v3667, %v3968
  %v3975 = vadd.f32 %v3672, %v3968
  %v3976 = vadd.f32 %v3677, %v3968
  %v3977 = vadd.f32 %v3682, %v3968
  %v3978 = vadd.f32 %v3687, %v3968
  %v3979 = vadd.f32 %v3692, %v3968
  %v3980 = vadd.f32 %v3697, %v3968
  %v3981 = vadd.f32 %v3702, %v3968
  %v3982 = vadd.f32 %v3707, %v3968
  %v3983 = vadd.f32 %v3712, %v3968
  %v3984 = vadd.f32 %v3717, %v3968
  %v3985 = vadd.f32 %v3722, %v3968
  %v3986 = vadd.f32 %v3727, %v3968
  %v3987 = vadd.f32 %v3732, %v3968
  %v3988 = vadd.f32 %v3737, %v3968
  %v3989 = vadd.f32 %v3742, %v3968
  %v3990 = vadd.f32 %v3747, %v3968
  %v3991 = vadd.f32 %v3752, %v3968
  %v3992 = vadd.f32 %v3757, %v3968
  %v3993 = vadd.f32 %v3762, %v3968
  %v3994 = vadd.f32 %v3767, %v3968
  %v3995 = vadd.f32 %v3772, %v3968
  %v3996 = vadd.f32 %v3777, %v3968
  %v3997 = vadd.f32 %v3782, %v3968
  %v3998 = vadd.f32 %v3787, %v3968
  %v3999 = vadd.f32 %v3792, %v3968
  %v4000 = vadd.f32 %v3797, %v3968
  %v4001 = vadd.f32 %v3802, %v3968
  %v4002 = vadd.f32 %v3807, %v3968
  %v4003 = vadd.f32 %v3812, %v3968
  %v4004 = vadd.f32 %v3817, %v3968
  %v4005 = vadd.f32 %v3822, %v3968
  %v4006 = vadd.f32 %v3827, %v3968
  %v4007 = vadd.f32 %v3832, %v3968
  %v4008 = vadd.f32 %v3837, %v3968
  %v4009 = vadd.f32 %v3842, %v3968
  %v4010 = vadd.f32 %v3847, %v3968
  %v4011 = vadd.f32 %v3852, %v3968
  %v4012 = vadd.f32 %v3857, %v3968
  %v4013 = vadd.f32 %v3862, %v3968
  %v4014 = vadd.f32 %v3867, %v3968
  %v4015 = vadd.f32 %v3872, %v3968
  %v4016 = vadd.f32 %v3877, %v3968
  %v4017 = vadd.f32 %v3882, %v3968
  %v4018 = vadd.f32 %v3887, %v3968
  %v4019 = vadd.f32 %v3892, %v3968
  %v4020 = vadd.f32 %v3897, %v3968
  %v4021 = vadd.f32 %v3902, %v3968
  %v4022 = vadd.f32 %v3907, %v3968
  %v4023 = vadd.f32 %v3912, %v3968
  %v4024 = vadd.f32 %v3917, %v3968
  %v4025 = vadd.f32 %v3922, %v3968
  %v4026 = vadd.f32 %v3927, %v3968
  %v4027 = vadd.f32 %v3932, %v3968
  %v4028 = vadd.f32 %v3937, %v3968
  %v4029 = vadd.f32 %v3942, %v3968
  %v4030 = vadd.f32 %v3947, %v3968
  %v4031 = vadd.f32 %v3952, %v3968
  %v4032 = vadd.f32 %v3957, %v3968
  %v4033 = vadd.f32 %v3962, %v3968
  %vm4034 = vcmask 7168
  %4035 = vst.msk [vmem:[%s8] sm:$0xff] %vm4034, %v3970
  %4036 = vst.msk [vmem:[%s8 + $0x8] sm:$0xff] %vm4034, %v3971
  %4037 = vst.msk [vmem:[%s8 + $0x10] sm:$0xff] %vm4034, %v3972
  %4038 = vst.msk [vmem:[%s8 + $0x18] sm:$0xff] %vm4034, %v3973
  %4039 = vst.msk [vmem:[%s8 + $0x20] sm:$0xff] %vm4034, %v3974
  %4040 = vst.msk [vmem:[%s8 + $0x28] sm:$0xff] %vm4034, %v3975
  %4041 = vst.msk [vmem:[%s8 + $0x30] sm:$0xff] %vm4034, %v3976
  %4042 = vst.msk [vmem:[%s8 + $0x38] sm:$0xff] %vm4034, %v3977
  %4043 = vst.msk [vmem:[%s8 + $0x40] sm:$0xff] %vm4034, %v3978
  %4044 = vst.msk [vmem:[%s8 + $0x48] sm:$0xff] %vm4034, %v3979
  %4045 = vst.msk [vmem:[%s8 + $0x50] sm:$0xff] %vm4034, %v3980
  %4046 = vst.msk [vmem:[%s8 + $0x58] sm:$0xff] %vm4034, %v3981
  %4047 = vst.msk [vmem:[%s8 + $0x60] sm:$0xff] %vm4034, %v3982
  %4048 = vst.msk [vmem:[%s8 + $0x68] sm:$0xff] %vm4034, %v3983
  %4049 = vst.msk [vmem:[%s8 + $0x70] sm:$0xff] %vm4034, %v3984
  %4050 = vst.msk [vmem:[%s8 + $0x78] sm:$0xff] %vm4034, %v3985
  %4051 = vst.msk [vmem:[%s8 + $0x80] sm:$0xff] %vm4034, %v3986
  %4052 = vst.msk [vmem:[%s8 + $0x88] sm:$0xff] %vm4034, %v3987
  %4053 = vst.msk [vmem:[%s8 + $0x90] sm:$0xff] %vm4034, %v3988
  %4054 = vst.msk [vmem:[%s8 + $0x98] sm:$0xff] %vm4034, %v3989
  %4055 = vst.msk [vmem:[%s8 + $0xa0] sm:$0xff] %vm4034, %v3990
  %4056 = vst.msk [vmem:[%s8 + $0xa8] sm:$0xff] %vm4034, %v3991
  %4057 = vst.msk [vmem:[%s8 + $0xb0] sm:$0xff] %vm4034, %v3992
  %4058 = vst.msk [vmem:[%s8 + $0xb8] sm:$0xff] %vm4034, %v3993
  %4059 = vst.msk [vmem:[%s8 + $0xc0] sm:$0xff] %vm4034, %v3994
  %4060 = vst.msk [vmem:[%s8 + $0xc8] sm:$0xff] %vm4034, %v3995
  %4061 = vst.msk [vmem:[%s8 + $0xd0] sm:$0xff] %vm4034, %v3996
  %4062 = vst.msk [vmem:[%s8 + $0xd8] sm:$0xff] %vm4034, %v3997
  %4063 = vst.msk [vmem:[%s8 + $0xe0] sm:$0xff] %vm4034, %v3998
  %4064 = vst.msk [vmem:[%s8 + $0xe8] sm:$0xff] %vm4034, %v3999
  %4065 = vst.msk [vmem:[%s8 + $0xf0] sm:$0xff] %vm4034, %v4000
  %4066 = vst.msk [vmem:[%s8 + $0xf8] sm:$0xff] %vm4034, %v4001
  %4067 = vst.msk [vmem:[%s8 + $0x100] sm:$0xff] %vm4034, %v4002
  %4068 = vst.msk [vmem:[%s8 + $0x108] sm:$0xff] %vm4034, %v4003
  %4069 = vst.msk [vmem:[%s8 + $0x110] sm:$0xff] %vm4034, %v4004
  %4070 = vst.msk [vmem:[%s8 + $0x118] sm:$0xff] %vm4034, %v4005
  %4071 = vst.msk [vmem:[%s8 + $0x120] sm:$0xff] %vm4034, %v4006
  %4072 = vst.msk [vmem:[%s8 + $0x128] sm:$0xff] %vm4034, %v4007
  %4073 = vst.msk [vmem:[%s8 + $0x130] sm:$0xff] %vm4034, %v4008
  %4074 = vst.msk [vmem:[%s8 + $0x138] sm:$0xff] %vm4034, %v4009
  %4075 = vst.msk [vmem:[%s8 + $0x140] sm:$0xff] %vm4034, %v4010
  %4076 = vst.msk [vmem:[%s8 + $0x148] sm:$0xff] %vm4034, %v4011
  %4077 = vst.msk [vmem:[%s8 + $0x150] sm:$0xff] %vm4034, %v4012
  %4078 = vst.msk [vmem:[%s8 + $0x158] sm:$0xff] %vm4034, %v4013
  %4079 = vst.msk [vmem:[%s8 + $0x160] sm:$0xff] %vm4034, %v4014
  %4080 = vst.msk [vmem:[%s8 + $0x168] sm:$0xff] %vm4034, %v4015
  %4081 = vst.msk [vmem:[%s8 + $0x170] sm:$0xff] %vm4034, %v4016
  %4082 = vst.msk [vmem:[%s8 + $0x178] sm:$0xff] %vm4034, %v4017
  %4083 = vst.msk [vmem:[%s8 + $0x180] sm:$0xff] %vm4034, %v4018
  %4084 = vst.msk [vmem:[%s8 + $0x188] sm:$0xff] %vm4034, %v4019
  %4085 = vst.msk [vmem:[%s8 + $0x190] sm:$0xff] %vm4034, %v4020
  %4086 = vst.msk [vmem:[%s8 + $0x198] sm:$0xff] %vm4034, %v4021
  %4087 = vst.msk [vmem:[%s8 + $0x1a0] sm:$0xff] %vm4034, %v4022
  %4088 = vst.msk [vmem:[%s8 + $0x1a8] sm:$0xff] %vm4034, %v4023
  %4089 = vst.msk [vmem:[%s8 + $0x1b0] sm:$0xff] %vm4034, %v4024
  %4090 = vst.msk [vmem:[%s8 + $0x1b8] sm:$0xff] %vm4034, %v4025
  %4091 = vst.msk [vmem:[%s8 + $0x1c0] sm:$0xff] %vm4034, %v4026
  %4092 = vst.msk [vmem:[%s8 + $0x1c8] sm:$0xff] %vm4034, %v4027
  %4093 = vst.msk [vmem:[%s8 + $0x1d0] sm:$0xff] %vm4034, %v4028
  %4094 = vst.msk [vmem:[%s8 + $0x1d8] sm:$0xff] %vm4034, %v4029
  %4095 = vst.msk [vmem:[%s8 + $0x1e0] sm:$0xff] %vm4034, %v4030
  %4096 = vst.msk [vmem:[%s8 + $0x1e8] sm:$0xff] %vm4034, %v4031
  %4097 = vst.msk [vmem:[%s8 + $0x1f0] sm:$0xff] %vm4034, %v4032
  %4098 = vst.msk [vmem:[%s8 + $0x1f8] sm:$0xff] %vm4034, %v4033
  // Predicated region
  $region34: #{nlayer_discriminator_forward.7} parent=0 // pred_check
    _
  $region35: #{nlayer_discriminator_forward.7} parent=0 // pred_check_branch
    %4100 = sbr.rel (0) target = $region37
  $region36: #{nlayer_discriminator_forward.7} parent=0 // pred_region
    _
  $region37: #{nlayer_discriminator_forward.7} parent=0 // pred_fallthru
    _
  // Predicated region
  $region38: #{nlayer_discriminator_forward.7} parent=0 // pred_check
    _
  $region39: #{nlayer_discriminator_forward.7} parent=0 // pred_check_branch
    %4102 = sbr.rel (0) target = $region41
  $region40: #{nlayer_discriminator_forward.7} parent=0 // pred_region
    _
  $region41: #{nlayer_discriminator_forward.7} parent=0 // pred_fallthru
    _

</llo_original>
